<compile_context>
chip_gen: v7x
topology: tpu7x:2x2x1
jax: 0.10.0
libtpu: 0.0.40
codegen_flags: <defaults>
</compile_context>

<pallas_src>
import functools

import jax
import jax.numpy as jnp
from jax.experimental import pallas as pl
from jax.experimental.pallas import tpu as pltpu


def _round_up(x, m):
    return (x + m - 1) // m * m


# ----------------------- fused fc1(+ReLU) -> fc2 kernel ----------------------- #

def _fused_mlp_kernel(x_ref, w1_ref, b1_ref, w2_ref, b2_ref, o_ref, acc_ref):
    """One grid step: logits_acc += relu(x @ W1_blk + b1_blk) @ W2_blk."""
    j = pl.program_id(0)

    @pl.when(j == 0)
    def _():
        acc_ref[...] = jnp.zeros_like(acc_ref)

    # fc1 column block: (Mp, Kp) @ (Kp, tn) -> (Mp, tn), f32 accumulate on MXU.
    h = jnp.dot(x_ref[...], w1_ref[...], preferred_element_type=jnp.float32)
    h = jnp.maximum(h + b1_ref[...], 0.0)          # bias + ReLU fused in VMEM

    # fc2 partial: (Mp, tn) @ (tn, Ncp) -> (Mp, Ncp), accumulated across the grid.
    acc_ref[...] += jnp.dot(h.astype(w2_ref.dtype), w2_ref[...],
                            preferred_element_type=jnp.float32)

    @pl.when(j == pl.num_programs(0) - 1)
    def _():
        o_ref[...] = (acc_ref[...] + b2_ref[...]).astype(o_ref.dtype)


def fused_double_linear(x, w1t, b1, w2t, b2, *, tn):
    """logits = relu(x @ w1t + b1) @ w2t + b2, in one pallas_call.

    x   : (Mp, Kp)   bf16 activations (Mp multiple of 16, Kp multiple of 128)
    w1t : (Kp, Np1)  bf16, pre-transposed fc1 weight
    b1  : (1, Np1)   f32
    w2t : (Np1, Ncp) bf16, pre-transposed/padded fc2 weight
    b2  : (1, Ncp)   f32
    Returns (Mp, Ncp) f32 logits.
    """
    Mp, Kp = x.shape
    Kp1, Np1 = w1t.shape
    Np1b, Ncp = w2t.shape
    assert Kp == Kp1 and Np1 == Np1b
    assert b1.shape == (1, Np1) and b2.shape == (1, Ncp)
    assert Np1 % tn == 0
    grid = (Np1 // tn,)

    flops = 2 * Mp * Kp * Np1 + 2 * Mp * Np1 * Ncp
    bytes_accessed = (x.size * x.dtype.itemsize
                      + w1t.size * w1t.dtype.itemsize
                      + w2t.size * w2t.dtype.itemsize
                      + b1.size * 4 + b2.size * 4
                      + Mp * Ncp * 4)

    return pl.pallas_call(
        _fused_mlp_kernel,
        out_shape=jax.ShapeDtypeStruct((Mp, Ncp), jnp.float32),
        grid_spec=pltpu.PrefetchScalarGridSpec(
            num_scalar_prefetch=0,
            grid=grid,
            in_specs=[
                pl.BlockSpec((Mp, Kp), lambda j: (0, 0)),    # x: resident across steps
                pl.BlockSpec((Kp, tn), lambda j: (0, j)),    # W1 column block (streamed)
                pl.BlockSpec((1, tn), lambda j: (0, j)),     # b1 block
                pl.BlockSpec((tn, Ncp), lambda j: (j, 0)),   # W2 row block (streamed)
                pl.BlockSpec((1, Ncp), lambda j: (0, 0)),    # b2: resident
            ],
            out_specs=pl.BlockSpec((Mp, Ncp), lambda j: (0, 0)),
            scratch_shapes=[pltpu.VMEM((Mp, Ncp), jnp.float32)]),
        compiler_params=pltpu.CompilerParams(
            dimension_semantics=("arbitrary",)),   # grid carries the logits accumulator
        cost_estimate=pl.CostEstimate(flops=flops, transcendentals=0,
                                      bytes_accessed=bytes_accessed),
    )(x, w1t, b1, w2t, b2)


# --------------------------------- init --------------------------------------- #

def init_double_linear(key, feat_dim=2048, num_classes=10, lane=128):
    """PyTorch nn.Linear default init, then pre-transpose/pad/cast once at init."""
    k1, k2, k3, k4 = jax.random.split(key, 4)

    def linear_init(kw, kb, out_f, in_f):
        bound = 1.0 / (in_f ** 0.5)
        w = jax.random.uniform(kw, (out_f, in_f), jnp.float32, -bound, bound)
        b = jax.random.uniform(kb, (out_f,), jnp.float32, -bound, bound)
        return w, b

    w1, b1 = linear_init(k1, k2, feat_dim, feat_dim)
    w2, b2 = linear_init(k3, k4, num_classes, feat_dim)

    def pack(w, b):
        out_f, in_f = w.shape
        np_ = _round_up(out_f, lane)
        kp_ = _round_up(in_f, lane)
        # Padded output columns get zero weight AND zero bias -> zero logits, sliced away.
        w_t = jnp.zeros((kp_, np_), jnp.float32).at[:in_f, :out_f].set(w.T)
        b_p = jnp.zeros((1, np_), jnp.float32).at[0, :out_f].set(b)
        return w_t.astype(jnp.bfloat16), b_p

    w1t, b1p = pack(w1, b1)
    w2t, b2p = pack(w2, b2)
    params = {"w1t": w1t, "b1": b1p, "w2t": w2t, "b2": b2p}
    ref = {"w1": w1, "b1": b1, "w2": w2, "b2": b2}   # f32 copies, reference only
    return params, ref


# -------------------------------- forward ------------------------------------- #

def _pick_tn(np1):
    """fc1 N-tile: 512 on v5e (16 MiB default scoped VMEM), 1024 otherwise."""
    try:
        kind = jax.devices()[0].device_kind.lower()
    except Exception:
        kind = ""
    tn = 512 if ("v5" in kind or "lite" in kind) else 1024
    while np1 % tn != 0:      # always divides for feat_dim=2048; defensive only
        tn //= 2
    return tn


@functools.partial(jax.jit, static_argnames=("num_classes", "tn"))
def _forward_impl(params, features, *, num_classes, tn):
    M, K = features.shape
    Kp, _ = params["w1t"].shape
    Mp = _round_up(M, 16)                          # bf16 sublane-friendly, tiny pad
    x = features.astype(jnp.bfloat16)
    x = jnp.pad(x, ((0, Mp - M), (0, Kp - K)))
    out = fused_double_linear(x, params["w1t"], params["b1"],
                              params["w2t"], params["b2"], tn=tn)
    return out[:M, :num_classes]


def double_linear_forward(params, features, *, num_classes):
    tn = _pick_tn(params["w1t"].shape[1])
    return _forward_impl(params, features, num_classes=num_classes, tn=tn)


# ---------------------------------- main --------------------------------------- #

if __name__ == "__main__":
    FEAT_DIM = 2048        # model_dict['resnet50'] -> feat_dim
    NUM_CLASSES = 10

    key = jax.random.PRNGKey(0)
    pkey, xkey = jax.random.split(key)
    params, ref = init_double_linear(pkey, feat_dim=FEAT_DIM,
                                     num_classes=NUM_CLASSES)
    features = jax.random.normal(xkey, (2, FEAT_DIM), jnp.float32)

    out = double_linear_forward(params, features, num_classes=NUM_CLASSES)
    out = jax.block_until_ready(out)

    assert out.shape == (2, NUM_CLASSES)
    assert bool(jnp.all(jnp.isfinite(out)))

    # Plain-JAX f32 reference (bf16 MXU inputs + bf16 hidden tolerated, loose tol).
    h_ref = jnp.maximum(features @ ref["w1"].T + ref["b1"][None, :], 0.0)
    out_ref = h_ref @ ref["w2"].T + ref["b2"][None, :]
    assert bool(jnp.allclose(out, out_ref, rtol=5e-2, atol=5e-2))

    print("KERNEL_OK")
</pallas_src>

<mosaic_0001>
module attributes {stable_mosaic.version = 11 : i64} {
  func.func @_fused_mlp_kernel(%arg0: i32, %arg1: memref<16x2048xbf16, #tpu.memory_space<vmem>>, %arg2: memref<2048x1024xbf16, #tpu.memory_space<vmem>>, %arg3: memref<1x1024xf32, #tpu.memory_space<vmem>>, %arg4: memref<1024x128xbf16, #tpu.memory_space<vmem>>, %arg5: memref<1x128xf32, #tpu.memory_space<vmem>>, %arg6: memref<16x128xf32, #tpu.memory_space<vmem>>, %arg7: memref<16x128xf32, #tpu.memory_space<vmem>>) attributes {dimension_semantics = [#tpu.dimension_semantics<arbitrary>], iteration_bounds = array<i64: 2>, scalar_prefetch = 0 : i64, scratch_operands = 1 : i64, tpu.core_type = #tpu.core_type<tc>, window_params = [{pipeline_mode = #tpu.pipeline_mode<synchronous>, transform_indices = @transform_0, window_bounds = array<i64: 16, 2048>}, {transform_indices = @transform_1, window_bounds = array<i64: 2048, 1024>}, {transform_indices = @transform_2, window_bounds = array<i64: 1, 1024>}, {transform_indices = @transform_3, window_bounds = array<i64: 1024, 128>}, {pipeline_mode = #tpu.pipeline_mode<synchronous>, transform_indices = @transform_4, window_bounds = array<i64: 1, 128>}, {pipeline_mode = #tpu.pipeline_mode<synchronous>, transform_indices = @transform_5, window_bounds = array<i64: 16, 128>}]} {
    %c0_i32 = arith.constant 0 : i32
    %0 = arith.cmpi eq, %arg0, %c0_i32 : i32
    %1 = arith.extui %0 : i1 to i32
    %c0_i32_0 = arith.constant 0 : i32
    %2 = arith.cmpi ne, %1, %c0_i32_0 : i32
    scf.if %2 {
      %cst_15 = arith.constant 0.000000e+00 : f32
      %20 = vector.broadcast %cst_15 : f32 to vector<16x128xf32>
      %c0_16 = arith.constant 0 : index
      %c0_17 = arith.constant 0 : index
      %21 = vector.load %arg7[%c0_16, %c0_17] : memref<16x128xf32, #tpu.memory_space<vmem>>, vector<16x128xf32>
      tpu.vector_store %arg7[%c0_16, %c0_17], %20 {strides = array<i32>} : memref<16x128xf32, #tpu.memory_space<vmem>>, vector<16x128xf32>,
    } else {
    }
    %c0 = arith.constant 0 : index
    %c0_1 = arith.constant 0 : index
    %3 = vector.load %arg1[%c0, %c0_1] : memref<16x2048xbf16, #tpu.memory_space<vmem>>, vector<16x2048xbf16>
    %c0_2 = arith.constant 0 : index
    %c0_3 = arith.constant 0 : index
    %4 = vector.load %arg2[%c0_2, %c0_3] : memref<2048x1024xbf16, #tpu.memory_space<vmem>>, vector<2048x1024xbf16>
    %cst = arith.constant dense<0.000000e+00> : vector<16x1024xf32>
    %5 = tpu.matmul %3, %4, %cst {dimension_numbers = #tpu.dot_dimension_numbers<[1], [0], [0], [1], [0, 0, 1, 1], [], []>} : vector<16x2048xbf16>, vector<2048x1024xbf16>, vector<16x1024xf32> -> vector<16x1024xf32>
    %c0_4 = arith.constant 0 : index
    %c0_5 = arith.constant 0 : index
    %6 = vector.load %arg3[%c0_4, %c0_5] : memref<1x1024xf32, #tpu.memory_space<vmem>>, vector<1x1024xf32>
    %7 = vector.broadcast %6 : vector<1x1024xf32> to vector<16x1024xf32>
    %8 = arith.addf %5, %7 : vector<16x1024xf32>
    %cst_6 = arith.constant 0.000000e+00 : f32
    %9 = vector.broadcast %cst_6 : f32 to vector<16x1024xf32>
    %10 = arith.maximumf %8, %9 : vector<16x1024xf32>
    %c0_7 = arith.constant 0 : index
    %c0_8 = arith.constant 0 : index
    %11 = vector.load %arg7[%c0_7, %c0_8] : memref<16x128xf32, #tpu.memory_space<vmem>>, vector<16x128xf32>
    %12 = arith.truncf %10 : vector<16x1024xf32> to vector<16x1024xbf16>
    %c0_9 = arith.constant 0 : index
    %c0_10 = arith.constant 0 : index
    %13 = vector.load %arg4[%c0_9, %c0_10] : memref<1024x128xbf16, #tpu.memory_space<vmem>>, vector<1024x128xbf16>
    %cst_11 = arith.constant dense<0.000000e+00> : vector<16x128xf32>
    %14 = tpu.matmul %12, %13, %cst_11 {dimension_numbers = #tpu.dot_dimension_numbers<[1], [0], [0], [1], [0, 0, 1, 1], [], []>} : vector<16x1024xbf16>, vector<1024x128xbf16>, vector<16x128xf32> -> vector<16x128xf32>
    %15 = arith.addf %11, %14 : vector<16x128xf32>
    %c0_12 = arith.constant 0 : index
    %c0_13 = arith.constant 0 : index
    %16 = vector.load %arg7[%c0_12, %c0_13] : memref<16x128xf32, #tpu.memory_space<vmem>>, vector<16x128xf32>
    tpu.vector_store %arg7[%c0_12, %c0_13], %15 {strides = array<i32>} : memref<16x128xf32, #tpu.memory_space<vmem>>, vector<16x128xf32>,
    %c1_i32 = arith.constant 1 : i32
    %17 = arith.cmpi eq, %arg0, %c1_i32 : i32
    %18 = arith.extui %17 : i1 to i32
    %c0_i32_14 = arith.constant 0 : i32
    %19 = arith.cmpi ne, %18, %c0_i32_14 : i32
    scf.if %19 {
      %c0_15 = arith.constant 0 : index
      %c0_16 = arith.constant 0 : index
      %20 = vector.load %arg7[%c0_15, %c0_16] : memref<16x128xf32, #tpu.memory_space<vmem>>, vector<16x128xf32>
      %c0_17 = arith.constant 0 : index
      %c0_18 = arith.constant 0 : index
      %21 = vector.load %arg5[%c0_17, %c0_18] : memref<1x128xf32, #tpu.memory_space<vmem>>, vector<1x128xf32>
      %22 = vector.broadcast %21 : vector<1x128xf32> to vector<16x128xf32>
      %23 = arith.addf %20, %22 : vector<16x128xf32>
      %c0_19 = arith.constant 0 : index
      %c0_20 = arith.constant 0 : index
      %24 = vector.load %arg6[%c0_19, %c0_20] : memref<16x128xf32, #tpu.memory_space<vmem>>, vector<16x128xf32>
      tpu.vector_store %arg6[%c0_19, %c0_20], %23 {strides = array<i32>} : memref<16x128xf32, #tpu.memory_space<vmem>>, vector<16x128xf32>,
    } else {
    }
    return
  }
  func.func @transform_0(%arg0: i32) -> (i32, i32) {
    %c0_i32 = arith.constant 0 : i32
    %c0_i32_0 = arith.constant 0 : i32
    %c0_i32_1 = arith.constant 0 : i32
    return %c0_i32, %c0_i32_0 : i32, i32
  }
  func.func @transform_1(%arg0: i32) -> (i32, i32) {
    %c0_i32 = arith.constant 0 : i32
    %c0_i32_0 = arith.constant 0 : i32
    return %c0_i32, %arg0 : i32, i32
  }
  func.func @transform_2(%arg0: i32) -> (i32, i32) {
    %c0_i32 = arith.constant 0 : i32
    %c0_i32_0 = arith.constant 0 : i32
    return %c0_i32, %arg0 : i32, i32
  }
  func.func @transform_3(%arg0: i32) -> (i32, i32) {
    %c0_i32 = arith.constant 0 : i32
    %c0_i32_0 = arith.constant 0 : i32
    return %arg0, %c0_i32 : i32, i32
  }
  func.func @transform_4(%arg0: i32) -> (i32, i32) {
    %c0_i32 = arith.constant 0 : i32
    %c0_i32_0 = arith.constant 0 : i32
    %c0_i32_1 = arith.constant 0 : i32
    return %c0_i32, %c0_i32_0 : i32, i32
  }
  func.func @transform_5(%arg0: i32) -> (i32, i32) {
    %c0_i32 = arith.constant 0 : i32
    %c0_i32_0 = arith.constant 0 : i32
    %c0_i32_1 = arith.constant 0 : i32
    return %c0_i32, %c0_i32_0 : i32, i32
  }
}

</mosaic_0001>

<llo_original>
// kernel: _forward_impl.1
$region0: #{_forward_impl.1}
  #allocation0 [shape = 'u32[]', space=smem, size = 0x4, offset = 0x4, fixed_abs, tag = 'smem constant byte address 0x4 - core index']
  #allocation1 [shape = 'u32[144,128]{1,0:T(1,128)}', space=vmem, size = 0x12000, scoped, tag = 'internal scratch']
  #allocation2 [shape = 'f32[16,128]{1,0:T(8,128)}', space=vmem, size = 0x2000, scoped, tag = 'scratch operand']
  %s0 = inlined_call_operand.vmem [shape: bf16[16,2048], index: 0, kind: input, shape index: {}]
  %s1 = inlined_call_operand.hbm [shape: bf16[2048,2048], index: 1, kind: input, shape index: {}]
  %s2 = inlined_call_operand.hbm [shape: f32[1,2048], index: 2, kind: input, shape index: {}]
  %s3 = inlined_call_operand.hbm [shape: bf16[2048,128], index: 3, kind: input, shape index: {}]
  %s4 = inlined_call_operand.hbm [shape: f32[1,128], index: 4, kind: input, shape index: {}]
  %s5 = inlined_call_operand.vmem [shape: f32[16,128], index: 5, kind: output, shape index: {}]
  %s6 = sld [smem:[#allocation0]]
  $region77: #{_forward_impl.1} parent=0
    _
  %s8 = ssub.s32 1, %s6
  %s9 = scalar_select 0, %s8, %s6
  $region1: #{_forward_impl.1} parent=0
    #allocation3 [shape = 'u8[8388608]{0}', space=vmem, size = 0x800000, scoped, tag = 'input window, operand 1']
    #allocation4 [shape = 's32[2]{0}', space=sflag, size = 0x8, scoped, tag = 'scoped memory for _forward_impl.1']
    #allocation5 [shape = 'u8[8192]{0}', space=vmem, size = 0x2000, scoped, tag = 'input window, operand 2']
    #allocation6 [shape = 's32[2]{0}', space=sflag, size = 0x8, scoped, tag = 'scoped memory for _forward_impl.1']
    #allocation7 [shape = 'u8[524288]{0}', space=vmem, size = 0x80000, scoped, tag = 'input window, operand 3']
    #allocation8 [shape = 'u8[512]{0}', space=vmem, size = 0x400, scoped, tag = 'input window, operand 4, single buffered']
    #allocation9 [shape = 's32[1]{0}', space=sflag, size = 0x4, scoped, tag = 'scoped memory for _forward_impl.1']
    %10 = vsyncpa [#allocation4], 0
    %s11 = scalar_lea.sflag [#allocation4], 1
    %12 = vsyncpa %s11, 0
    %13 = vsyncpa [#allocation6], 0
    %s14 = scalar_lea.sflag [#allocation6], 1
    %15 = vsyncpa %s14, 0
    %16 = vsyncpa [#allocation9], 0
    loop: start=0, step=1, limit=4
    $region2: #{_forward_impl.1} parent=1 // loop_pre_header
      _
    $region3: #{_forward_impl.1} parent=1 // loop_header
      %s18 = sphi 0, %s22
      %p19 = scmp.ge.s32.totalorder %s18, 4
      %s26 = sphi 0, %s26
      %s28 = sphi 0, %s26
      %s29 = sphi 0, %s28
      %s43 = sphi 0, %s29
      %s49 = sphi 0, %s51
      %s52 = sphi 0, %s49
      %s53 = sphi 0, %s52
      %s69 = sphi 0, %s53
      %s75 = sphi 0, %s77
      %s78 = sphi 0, %s75
      %s79 = sphi 0, %s78
      %s95 = sphi 0, %s79
      %s101 = sphi 0, %s103
      %s104 = sphi 0, %s101
      %s105 = sphi 0, %s104
      %s121 = sphi 0, %s105
      %s125 = sphi 0, %s125
      %s127 = sphi 0, %s125
      %s128 = sphi 0, %s127
      %s142 = sphi 0, %s128
      %s146 = sphi 0, %s146
      %s148 = sphi 0, %s146
      %s149 = sphi 0, %s148
      %s163 = sphi 0, %s149
    $region4: #{_forward_impl.1} parent=1 // loop_header_branch
      %21 = sbr.rel (%p19) target = $region8
    $region5: #{_forward_impl.1} parent=1 // loop_body
      %s23 = ssub.s32 %s18, 1
      %s24 = ssub.s32 %s18, 2
      %s25 = sadd.s32 %s18, 1
      %s27 = sadd.s32 %s26, 1
      %p30 = scmp.eq.s32.totalorder %s18, 1
      %p31 = scmp.ne.s32.totalorder %s26, %s28
      %p32 = scmp.eq.s32.totalorder %s18, 0
      %p33 = por %p31, %p32
      %p34 = scmp.ne.s32.totalorder %s26, %s28
      %p35 = scmp.eq.s32.totalorder %s23, 1
      %p36 = por %p34, %p35
      %p37 = scmp.ne.s32.totalorder %s28, %s29
      %p38 = scmp.eq.s32.totalorder %s23, 0
      %p39 = por %p37, %p38
      %p40 = scmp.ne.s32.totalorder %s28, %s29
      %p41 = scmp.eq.s32.totalorder %s24, 1
      %p42 = por %p40, %p41
      %p44 = scmp.ne.s32.totalorder %s29, %s43
      %p45 = scmp.eq.s32.totalorder %s24, 0
      %p46 = por %p44, %p45
      %s47 = ssub.s32 %s18, %s25
      %p48 = scmp.eq.s32.totalorder %s47, 0
      %s50 = sadd.s32 %s49, 1
      %s51 = scalar_select %p48, %s49, %s50
      %p54 = pneg %p48
      %p55 = scmp.eq.s32.totalorder %s18, 1
      %p56 = por %p54, %p55
      %p57 = scmp.ne.s32.totalorder %s49, %s52
      %p58 = scmp.eq.s32.totalorder %s18, 0
      %p59 = por %p57, %p58
      %p60 = scmp.ne.s32.totalorder %s49, %s52
      %p61 = scmp.eq.s32.totalorder %s23, 1
      %p62 = por %p60, %p61
      %p63 = scmp.ne.s32.totalorder %s52, %s53
      %p64 = scmp.eq.s32.totalorder %s23, 0
      %p65 = por %p63, %p64
      %p66 = scmp.ne.s32.totalorder %s52, %s53
      %p67 = scmp.eq.s32.totalorder %s24, 1
      %p68 = por %p66, %p67
      %p70 = scmp.ne.s32.totalorder %s53, %s69
      %p71 = scmp.eq.s32.totalorder %s24, 0
      %p72 = por %p70, %p71
      %s73 = ssub.s32 %s18, %s25
      %p74 = scmp.eq.s32.totalorder %s73, 0
      %s76 = sadd.s32 %s75, 1
      %s77 = scalar_select %p74, %s75, %s76
      %p80 = pneg %p74
      %p81 = scmp.eq.s32.totalorder %s18, 1
      %p82 = por %p80, %p81
      %p83 = scmp.ne.s32.totalorder %s75, %s78
      %p84 = scmp.eq.s32.totalorder %s18, 0
      %p85 = por %p83, %p84
      %p86 = scmp.ne.s32.totalorder %s75, %s78
      %p87 = scmp.eq.s32.totalorder %s23, 1
      %p88 = por %p86, %p87
      %p89 = scmp.ne.s32.totalorder %s78, %s79
      %p90 = scmp.eq.s32.totalorder %s23, 0
      %p91 = por %p89, %p90
      %p92 = scmp.ne.s32.totalorder %s78, %s79
      %p93 = scmp.eq.s32.totalorder %s24, 1
      %p94 = por %p92, %p93
      %p96 = scmp.ne.s32.totalorder %s79, %s95
      %p97 = scmp.eq.s32.totalorder %s24, 0
      %p98 = por %p96, %p97
      %s99 = ssub.s32 %s18, %s25
      %p100 = scmp.eq.s32.totalorder %s99, 0
      %s102 = sadd.s32 %s101, 1
      %s103 = scalar_select %p100, %s101, %s102
      %p106 = pneg %p100
      %p107 = scmp.eq.s32.totalorder %s18, 1
      %p108 = por %p106, %p107
      %p109 = scmp.ne.s32.totalorder %s101, %s104
      %p110 = scmp.eq.s32.totalorder %s18, 0
      %p111 = por %p109, %p110
      %p112 = scmp.ne.s32.totalorder %s101, %s104
      %p113 = scmp.eq.s32.totalorder %s23, 1
      %p114 = por %p112, %p113
      %p115 = scmp.ne.s32.totalorder %s104, %s105
      %p116 = scmp.eq.s32.totalorder %s23, 0
      %p117 = por %p115, %p116
      %p118 = scmp.ne.s32.totalorder %s104, %s105
      %p119 = scmp.eq.s32.totalorder %s24, 1
      %p120 = por %p118, %p119
      %p122 = scmp.ne.s32.totalorder %s105, %s121
      %p123 = scmp.eq.s32.totalorder %s24, 0
      %p124 = por %p122, %p123
      %s126 = sadd.s32 %s125, 1
      %p129 = scmp.eq.s32.totalorder %s18, 1
      %p130 = scmp.ne.s32.totalorder %s125, %s127
      %p131 = scmp.eq.s32.totalorder %s18, 0
      %p132 = por %p130, %p131
      %p133 = scmp.ne.s32.totalorder %s125, %s127
      %p134 = scmp.eq.s32.totalorder %s23, 1
      %p135 = por %p133, %p134
      %p136 = scmp.ne.s32.totalorder %s127, %s128
      %p137 = scmp.eq.s32.totalorder %s23, 0
      %p138 = por %p136, %p137
      %p139 = scmp.ne.s32.totalorder %s127, %s128
      %p140 = scmp.eq.s32.totalorder %s24, 1
      %p141 = por %p139, %p140
      %p143 = scmp.ne.s32.totalorder %s128, %s142
      %p144 = scmp.eq.s32.totalorder %s24, 0
      %p145 = por %p143, %p144
      %s147 = sadd.s32 %s146, 1
      %p150 = scmp.eq.s32.totalorder %s18, 1
      %p151 = scmp.ne.s32.totalorder %s146, %s148
      %p152 = scmp.eq.s32.totalorder %s18, 0
      %p153 = por %p151, %p152
      %p154 = scmp.ne.s32.totalorder %s146, %s148
      %p155 = scmp.eq.s32.totalorder %s23, 1
      %p156 = por %p154, %p155
      %p157 = scmp.ne.s32.totalorder %s148, %s149
      %p158 = scmp.eq.s32.totalorder %s23, 0
      %p159 = por %p157, %p158
      %p160 = scmp.ne.s32.totalorder %s148, %s149
      %p161 = scmp.eq.s32.totalorder %s24, 1
      %p162 = por %p160, %p161
      %p164 = scmp.ne.s32.totalorder %s149, %s163
      %p165 = scmp.eq.s32.totalorder %s24, 0
      %p166 = por %p164, %p165
      %p167 = scmp.le.s32.totalorder 1, %s18
      %p168 = scmp.lt.s32.totalorder %s18, 3
      %p169 = pnand %p167, %p168
      %p170 = pneg %p169
      // Predicated region
      $region9: #{_forward_impl.1} parent=5 // pred_check
        _
      $region10: #{_forward_impl.1} parent=5 // pred_check_branch
        %172 = sbr.rel (%p169) target = $region12
      $region11: #{_forward_impl.1} parent=5 // pred_region
        %s173 = ssub.s32 %s18, 1
        // Predicated region
        $region13: #{_forward_impl.1} parent=11 // pred_check
          %p174 = pneg %p39
        $region14: #{_forward_impl.1} parent=11 // pred_check_branch
          %176 = sbr.rel (%p174) target = $region16
        $region15: #{_forward_impl.1} parent=11 // pred_region
          _
        $region16: #{_forward_impl.1} parent=11 // pred_fallthru
          _
        // Predicated region
        $region17: #{_forward_impl.1} parent=11 // pred_check
          %p177 = pneg %p138
        $region18: #{_forward_impl.1} parent=11 // pred_check_branch
          %179 = sbr.rel (%p177) target = $region20
        $region19: #{_forward_impl.1} parent=11 // pred_region
          %s181 = ssub.s32 16, 16
          %182 = vsyncadd [#allocation9], %s181
          %s184 = sshll.u32 [#allocation8], 4
          %s185 = int_to_ptr.vmem [resolvable:$true] %s184
          %187 = dma.hbm_to_vmem [thread:$0]  %s4, 16, %s185, [#allocation9]
        $region20: #{_forward_impl.1} parent=11 // pred_fallthru
          _
      $region12: #{_forward_impl.1} parent=5 // pred_fallthru
        _
      %p188 = scmp.lt.s32.totalorder %s18, 2
      // Predicated region
      $region21: #{_forward_impl.1} parent=5 // pred_check
        %p189 = pneg %p188
      $region22: #{_forward_impl.1} parent=5 // pred_check_branch
        %191 = sbr.rel (%p189) target = $region24
      $region23: #{_forward_impl.1} parent=5 // pred_region
        // Predicated region
        $region25: #{_forward_impl.1} parent=23 // pred_check
          %p192 = pneg %p59
        $region26: #{_forward_impl.1} parent=23 // pred_check_branch
          %194 = sbr.rel (%p192) target = $region28
        $region27: #{_forward_impl.1} parent=23 // pred_region
          %s195 = sand.u32 %s49, 1
          %s196 = scalar_lea.sflag [#allocation4], %s195
          %s197 = sand.u32 %s49, 1
          %s198 = smul.addr %s197, 8192
          %s199 = scalar_lea.vmem [#allocation3], %s198
          %s200 = smul.u32 8, %s18
          %s202 = ssub.s32 131072, 131072
          %203 = vsyncadd %s196, %s202
          %s204 = smul.addr %s200, 64
          %s205 = scalar_lea.hbm %s1, %s204
          %s206 = sshll.u32 %s199, 4
          %s207 = int_to_ptr.vmem [resolvable:$true] %s206
          %212 = dma.hbm_to_vmem [thread:$0]  %s205, 131072, %s207, %s196, 1024, 512, 32
        $region28: #{_forward_impl.1} parent=23 // pred_fallthru
          _
        // Predicated region
        $region29: #{_forward_impl.1} parent=23 // pred_check
          %p213 = pneg %p85
        $region30: #{_forward_impl.1} parent=23 // pred_check_branch
          %215 = sbr.rel (%p213) target = $region32
        $region31: #{_forward_impl.1} parent=23 // pred_region
          %s216 = sand.u32 %s18, 1
          %s217 = scalar_lea.sflag [#allocation6], %s216
          %s218 = sand.u32 %s75, 1
          %s219 = smul.addr %s218, 8
          %s220 = scalar_lea.vmem [#allocation5], %s219
          %s221 = smul.u32 8, %s18
          %s223 = ssub.s32 128, 128
          %224 = vsyncadd %s217, %s223
          %s225 = smul.addr %s221, 16
          %s226 = scalar_lea.hbm %s2, %s225
          %s228 = sshll.u32 %s220, 4
          %s229 = int_to_ptr.vmem [resolvable:$true] %s228
          %231 = dma.hbm_to_vmem [thread:$0]  %s226, 128, %s229, %s217
        $region32: #{_forward_impl.1} parent=23 // pred_fallthru
          _
        // Predicated region
        $region33: #{_forward_impl.1} parent=23 // pred_check
          %p232 = pneg %p111
        $region34: #{_forward_impl.1} parent=23 // pred_check_branch
          %234 = sbr.rel (%p232) target = $region36
        $region35: #{_forward_impl.1} parent=23 // pred_region
          %s235 = sand.u32 %s18, 1
          %s236 = scalar_lea.sflag [#allocation6], %s235
          %s237 = sand.u32 %s101, 1
          %s238 = smul.addr %s237, 512
          %s239 = scalar_lea.vmem [#allocation7], %s238
          %s240 = smul.u32 128, %s18
          %s242 = ssub.s32 8192, 8192
          %243 = vsyncadd %s236, %s242
          %s244 = smul.addr %s240, 64
          %s245 = scalar_lea.hbm %s3, %s244
          %s246 = sshll.u32 %s239, 4
          %s247 = int_to_ptr.vmem [resolvable:$true] %s246
          %252 = dma.hbm_to_vmem [thread:$0]  %s245, 8192, %s247, %s236, 64, 64, 4
        $region36: #{_forward_impl.1} parent=23 // pred_fallthru
          _
      $region24: #{_forward_impl.1} parent=5 // pred_fallthru
        _
      %p253 = scmp.le.s32.totalorder 1, %s18
      %p254 = scmp.lt.s32.totalorder %s18, 3
      %p255 = pnand %p253, %p254
      %p256 = pneg %p255
      // Predicated region
      $region37: #{_forward_impl.1} parent=5 // pred_check
        _
      $region38: #{_forward_impl.1} parent=5 // pred_check_branch
        %258 = sbr.rel (%p255) target = $region40
      $region39: #{_forward_impl.1} parent=5 // pred_region
        %s259 = ssub.s32 %s18, 1
        %s260 = sand.u32 %s52, 1
        %s261 = scalar_lea.sflag [#allocation4], %s260
        %s262 = sand.u32 %s52, 1
        %s263 = smul.addr %s262, 8192
        %s264 = scalar_lea.vmem [#allocation3], %s263
        // Predicated region
        $region41: #{_forward_impl.1} parent=39 // pred_check
          %p265 = pneg %p65
        $region42: #{_forward_impl.1} parent=39 // pred_check_branch
          %267 = sbr.rel (%p265) target = $region44
        $region43: #{_forward_impl.1} parent=39 // pred_region
          %268 = dma.done %s261, 131072
        $region44: #{_forward_impl.1} parent=39 // pred_fallthru
          _
        %s269 = sand.u32 %s23, 1
        %s270 = scalar_lea.sflag [#allocation6], %s269
        %s271 = sand.u32 %s78, 1
        %s272 = smul.addr %s271, 8
        %s273 = scalar_lea.vmem [#allocation5], %s272
        // Predicated region
        $region45: #{_forward_impl.1} parent=39 // pred_check
          %p274 = pneg %p91
        $region46: #{_forward_impl.1} parent=39 // pred_check_branch
          %276 = sbr.rel (%p274) target = $region48
        $region47: #{_forward_impl.1} parent=39 // pred_region
          %277 = dma.done %s270, 128
        $region48: #{_forward_impl.1} parent=39 // pred_fallthru
          _
        %s278 = sand.u32 %s23, 1
        %s279 = scalar_lea.sflag [#allocation6], %s278
        %s280 = sand.u32 %s104, 1
        %s281 = smul.addr %s280, 512
        %s282 = scalar_lea.vmem [#allocation7], %s281
        // Predicated region
        $region49: #{_forward_impl.1} parent=39 // pred_check
          %p283 = pneg %p117
        $region50: #{_forward_impl.1} parent=39 // pred_check_branch
          %285 = sbr.rel (%p283) target = $region52
        $region51: #{_forward_impl.1} parent=39 // pred_region
          %286 = dma.done %s279, 8192
        $region52: #{_forward_impl.1} parent=39 // pred_fallthru
          _
        // Predicated region
        $region53: #{_forward_impl.1} parent=39 // pred_check
          %p287 = pneg %p138
        $region54: #{_forward_impl.1} parent=39 // pred_check_branch
          %289 = sbr.rel (%p287) target = $region56
        $region55: #{_forward_impl.1} parent=39 // pred_region
          %290 = dma.done [#allocation9], 16
        $region56: #{_forward_impl.1} parent=39 // pred_fallthru
          _
        %p291 = pneg %p39
        %p292 = pneg %p36
        %s293 = sand.u32 %s52, 1
        %s294 = scalar_lea.sflag [#allocation4], %s293
        %s295 = sand.u32 %s52, 1
        %s296 = smul.addr %s295, 8192
        %s297 = scalar_lea.vmem [#allocation3], %s296
        %p298 = pneg %p65
        %p299 = pneg %p62
        %s300 = sand.u32 %s23, 1
        %s301 = scalar_lea.sflag [#allocation6], %s300
        %s302 = sand.u32 %s78, 1
        %s303 = smul.addr %s302, 8
        %s304 = scalar_lea.vmem [#allocation5], %s303
        %p305 = pneg %p91
        %p306 = pneg %p88
        %s307 = sand.u32 %s23, 1
        %s308 = scalar_lea.sflag [#allocation6], %s307
        %s309 = sand.u32 %s104, 1
        %s310 = smul.addr %s309, 512
        %s311 = scalar_lea.vmem [#allocation7], %s310
        %p312 = pneg %p117
        %p313 = pneg %p114
        %p314 = pneg %p138
        %p315 = pneg %p135
        %p316 = pneg %p159
        %p317 = pneg %p156
        %s318 = smul.u32 8, %s23
        %s319 = smul.u32 8, %s23
        %s320 = smul.u32 128, %s23
        %p322 = scmp.eq.s32.totalorder %s23, 0
        // Predicated region
        $region57: #{_forward_impl.1} parent=39 // pred_check
          %p323 = pneg %p322
        $region58: #{_forward_impl.1} parent=39 // pred_check_branch
          %325 = sbr.rel (%p323) target = $region60
        $region59: #{_forward_impl.1} parent=39 // pred_region
          %326 = vst [vmem:[#allocation2] sm:$0xff] 0.0
          %327 = vst [vmem:[#allocation2 + $0x8] sm:$0xff] 0.0
        $region60: #{_forward_impl.1} parent=39 // pred_fallthru
          _
        %v328 = vld [vmem:[%s0] sm:$0xff]
        %v329 = vld [vmem:[%s0 + $0x8] sm:$0xff]
        %v330 = vld [vmem:[%s0 + $0x10] sm:$0xff]
        %v331 = vld [vmem:[%s0 + $0x18] sm:$0xff]
        %v332 = vld [vmem:[%s0 + $0x20] sm:$0xff]
        %v333 = vld [vmem:[%s0 + $0x28] sm:$0xff]
        %v334 = vld [vmem:[%s0 + $0x30] sm:$0xff]
        %v335 = vld [vmem:[%s0 + $0x38] sm:$0xff]
        %v336 = vld [vmem:[%s0 + $0x40] sm:$0xff]
        %v337 = vld [vmem:[%s0 + $0x48] sm:$0xff]
        %v338 = vld [vmem:[%s0 + $0x50] sm:$0xff]
        %v339 = vld [vmem:[%s0 + $0x58] sm:$0xff]
        %v340 = vld [vmem:[%s0 + $0x60] sm:$0xff]
        %v341 = vld [vmem:[%s0 + $0x68] sm:$0xff]
        %v342 = vld [vmem:[%s0 + $0x70] sm:$0xff]
        %v343 = vld [vmem:[%s0 + $0x78] sm:$0xff]
        %v344 = vld [vmem:[%s264] sm:$0xff]
        %v345 = vld [vmem:[%s264 + $0x8] sm:$0xff]
        %v346 = vld [vmem:[%s264 + $0x10] sm:$0xff]
        %v347 = vld [vmem:[%s264 + $0x18] sm:$0xff]
        %v348 = vld [vmem:[%s264 + $0x20] sm:$0xff]
        %v349 = vld [vmem:[%s264 + $0x28] sm:$0xff]
        %v350 = vld [vmem:[%s264 + $0x30] sm:$0xff]
        %v351 = vld [vmem:[%s264 + $0x38] sm:$0xff]
        %v352 = vld [vmem:[%s264 + $0x40] sm:$0xff]
        %v353 = vld [vmem:[%s264 + $0x48] sm:$0xff]
        %v354 = vld [vmem:[%s264 + $0x50] sm:$0xff]
        %v355 = vld [vmem:[%s264 + $0x58] sm:$0xff]
        %v356 = vld [vmem:[%s264 + $0x60] sm:$0xff]
        %v357 = vld [vmem:[%s264 + $0x68] sm:$0xff]
        %v358 = vld [vmem:[%s264 + $0x70] sm:$0xff]
        %v359 = vld [vmem:[%s264 + $0x78] sm:$0xff]
        %v360 = vld [vmem:[%s264 + $0x80] sm:$0xff]
        %v361 = vld [vmem:[%s264 + $0x88] sm:$0xff]
        %v362 = vld [vmem:[%s264 + $0x90] sm:$0xff]
        %v363 = vld [vmem:[%s264 + $0x98] sm:$0xff]
        %v364 = vld [vmem:[%s264 + $0xa0] sm:$0xff]
        %v365 = vld [vmem:[%s264 + $0xa8] sm:$0xff]
        %v366 = vld [vmem:[%s264 + $0xb0] sm:$0xff]
        %v367 = vld [vmem:[%s264 + $0xb8] sm:$0xff]
        %v368 = vld [vmem:[%s264 + $0xc0] sm:$0xff]
        %v369 = vld [vmem:[%s264 + $0xc8] sm:$0xff]
        %v370 = vld [vmem:[%s264 + $0xd0] sm:$0xff]
        %v371 = vld [vmem:[%s264 + $0xd8] sm:$0xff]
        %v372 = vld [vmem:[%s264 + $0xe0] sm:$0xff]
        %v373 = vld [vmem:[%s264 + $0xe8] sm:$0xff]
        %v374 = vld [vmem:[%s264 + $0xf0] sm:$0xff]
        %v375 = vld [vmem:[%s264 + $0xf8] sm:$0xff]
        %v376 = vld [vmem:[%s264 + $0x100] sm:$0xff]
        %v377 = vld [vmem:[%s264 + $0x108] sm:$0xff]
        %v378 = vld [vmem:[%s264 + $0x110] sm:$0xff]
        %v379 = vld [vmem:[%s264 + $0x118] sm:$0xff]
        %v380 = vld [vmem:[%s264 + $0x120] sm:$0xff]
        %v381 = vld [vmem:[%s264 + $0x128] sm:$0xff]
        %v382 = vld [vmem:[%s264 + $0x130] sm:$0xff]
        %v383 = vld [vmem:[%s264 + $0x138] sm:$0xff]
        %v384 = vld [vmem:[%s264 + $0x140] sm:$0xff]
        %v385 = vld [vmem:[%s264 + $0x148] sm:$0xff]
        %v386 = vld [vmem:[%s264 + $0x150] sm:$0xff]
        %v387 = vld [vmem:[%s264 + $0x158] sm:$0xff]
        %v388 = vld [vmem:[%s264 + $0x160] sm:$0xff]
        %v389 = vld [vmem:[%s264 + $0x168] sm:$0xff]
        %v390 = vld [vmem:[%s264 + $0x170] sm:$0xff]
        %v391 = vld [vmem:[%s264 + $0x178] sm:$0xff]
        %v392 = vld [vmem:[%s264 + $0x180] sm:$0xff]
        %v393 = vld [vmem:[%s264 + $0x188] sm:$0xff]
        %v394 = vld [vmem:[%s264 + $0x190] sm:$0xff]
        %v395 = vld [vmem:[%s264 + $0x198] sm:$0xff]
        %v396 = vld [vmem:[%s264 + $0x1a0] sm:$0xff]
        %v397 = vld [vmem:[%s264 + $0x1a8] sm:$0xff]
        %v398 = vld [vmem:[%s264 + $0x1b0] sm:$0xff]
        %v399 = vld [vmem:[%s264 + $0x1b8] sm:$0xff]
        %v400 = vld [vmem:[%s264 + $0x1c0] sm:$0xff]
        %v401 = vld [vmem:[%s264 + $0x1c8] sm:$0xff]
        %v402 = vld [vmem:[%s264 + $0x1d0] sm:$0xff]
        %v403 = vld [vmem:[%s264 + $0x1d8] sm:$0xff]
        %v404 = vld [vmem:[%s264 + $0x1e0] sm:$0xff]
        %v405 = vld [vmem:[%s264 + $0x1e8] sm:$0xff]
        %v406 = vld [vmem:[%s264 + $0x1f0] sm:$0xff]
        %v407 = vld [vmem:[%s264 + $0x1f8] sm:$0xff]
        %v408 = vld [vmem:[%s264 + $0x200] sm:$0xff]
        %v409 = vld [vmem:[%s264 + $0x208] sm:$0xff]
        %v410 = vld [vmem:[%s264 + $0x210] sm:$0xff]
        %v411 = vld [vmem:[%s264 + $0x218] sm:$0xff]
        %v412 = vld [vmem:[%s264 + $0x220] sm:$0xff]
        %v413 = vld [vmem:[%s264 + $0x228] sm:$0xff]
        %v414 = vld [vmem:[%s264 + $0x230] sm:$0xff]
        %v415 = vld [vmem:[%s264 + $0x238] sm:$0xff]
        %v416 = vld [vmem:[%s264 + $0x240] sm:$0xff]
        %v417 = vld [vmem:[%s264 + $0x248] sm:$0xff]
        %v418 = vld [vmem:[%s264 + $0x250] sm:$0xff]
        %v419 = vld [vmem:[%s264 + $0x258] sm:$0xff]
        %v420 = vld [vmem:[%s264 + $0x260] sm:$0xff]
        %v421 = vld [vmem:[%s264 + $0x268] sm:$0xff]
        %v422 = vld [vmem:[%s264 + $0x270] sm:$0xff]
        %v423 = vld [vmem:[%s264 + $0x278] sm:$0xff]
        %v424 = vld [vmem:[%s264 + $0x280] sm:$0xff]
        %v425 = vld [vmem:[%s264 + $0x288] sm:$0xff]
        %v426 = vld [vmem:[%s264 + $0x290] sm:$0xff]
        %v427 = vld [vmem:[%s264 + $0x298] sm:$0xff]
        %v428 = vld [vmem:[%s264 + $0x2a0] sm:$0xff]
        %v429 = vld [vmem:[%s264 + $0x2a8] sm:$0xff]
        %v430 = vld [vmem:[%s264 + $0x2b0] sm:$0xff]
        %v431 = vld [vmem:[%s264 + $0x2b8] sm:$0xff]
        %v432 = vld [vmem:[%s264 + $0x2c0] sm:$0xff]
        %v433 = vld [vmem:[%s264 + $0x2c8] sm:$0xff]
        %v434 = vld [vmem:[%s264 + $0x2d0] sm:$0xff]
        %v435 = vld [vmem:[%s264 + $0x2d8] sm:$0xff]
        %v436 = vld [vmem:[%s264 + $0x2e0] sm:$0xff]
        %v437 = vld [vmem:[%s264 + $0x2e8] sm:$0xff]
        %v438 = vld [vmem:[%s264 + $0x2f0] sm:$0xff]
        %v439 = vld [vmem:[%s264 + $0x2f8] sm:$0xff]
        %v440 = vld [vmem:[%s264 + $0x300] sm:$0xff]
        %v441 = vld [vmem:[%s264 + $0x308] sm:$0xff]
        %v442 = vld [vmem:[%s264 + $0x310] sm:$0xff]
        %v443 = vld [vmem:[%s264 + $0x318] sm:$0xff]
        %v444 = vld [vmem:[%s264 + $0x320] sm:$0xff]
        %v445 = vld [vmem:[%s264 + $0x328] sm:$0xff]
        %v446 = vld [vmem:[%s264 + $0x330] sm:$0xff]
        %v447 = vld [vmem:[%s264 + $0x338] sm:$0xff]
        %v448 = vld [vmem:[%s264 + $0x340] sm:$0xff]
        %v449 = vld [vmem:[%s264 + $0x348] sm:$0xff]
        %v450 = vld [vmem:[%s264 + $0x350] sm:$0xff]
        %v451 = vld [vmem:[%s264 + $0x358] sm:$0xff]
        %v452 = vld [vmem:[%s264 + $0x360] sm:$0xff]
        %v453 = vld [vmem:[%s264 + $0x368] sm:$0xff]
        %v454 = vld [vmem:[%s264 + $0x370] sm:$0xff]
        %v455 = vld [vmem:[%s264 + $0x378] sm:$0xff]
        %v456 = vld [vmem:[%s264 + $0x380] sm:$0xff]
        %v457 = vld [vmem:[%s264 + $0x388] sm:$0xff]
        %v458 = vld [vmem:[%s264 + $0x390] sm:$0xff]
        %v459 = vld [vmem:[%s264 + $0x398] sm:$0xff]
        %v460 = vld [vmem:[%s264 + $0x3a0] sm:$0xff]
        %v461 = vld [vmem:[%s264 + $0x3a8] sm:$0xff]
        %v462 = vld [vmem:[%s264 + $0x3b0] sm:$0xff]
        %v463 = vld [vmem:[%s264 + $0x3b8] sm:$0xff]
        %v464 = vld [vmem:[%s264 + $0x3c0] sm:$0xff]
        %v465 = vld [vmem:[%s264 + $0x3c8] sm:$0xff]
        %v466 = vld [vmem:[%s264 + $0x3d0] sm:$0xff]
        %v467 = vld [vmem:[%s264 + $0x3d8] sm:$0xff]
        %v468 = vld [vmem:[%s264 + $0x3e0] sm:$0xff]
        %v469 = vld [vmem:[%s264 + $0x3e8] sm:$0xff]
        %v470 = vld [vmem:[%s264 + $0x3f0] sm:$0xff]
        %v471 = vld [vmem:[%s264 + $0x3f8] sm:$0xff]
        %v472 = vld [vmem:[%s264 + $0x400] sm:$0xff]
        %v473 = vld [vmem:[%s264 + $0x408] sm:$0xff]
        %v474 = vld [vmem:[%s264 + $0x410] sm:$0xff]
        %v475 = vld [vmem:[%s264 + $0x418] sm:$0xff]
        %v476 = vld [vmem:[%s264 + $0x420] sm:$0xff]
        %v477 = vld [vmem:[%s264 + $0x428] sm:$0xff]
        %v478 = vld [vmem:[%s264 + $0x430] sm:$0xff]
        %v479 = vld [vmem:[%s264 + $0x438] sm:$0xff]
        %v480 = vld [vmem:[%s264 + $0x440] sm:$0xff]
        %v481 = vld [vmem:[%s264 + $0x448] sm:$0xff]
        %v482 = vld [vmem:[%s264 + $0x450] sm:$0xff]
        %v483 = vld [vmem:[%s264 + $0x458] sm:$0xff]
        %v484 = vld [vmem:[%s264 + $0x460] sm:$0xff]
        %v485 = vld [vmem:[%s264 + $0x468] sm:$0xff]
        %v486 = vld [vmem:[%s264 + $0x470] sm:$0xff]
        %v487 = vld [vmem:[%s264 + $0x478] sm:$0xff]
        %v488 = vld [vmem:[%s264 + $0x480] sm:$0xff]
        %v489 = vld [vmem:[%s264 + $0x488] sm:$0xff]
        %v490 = vld [vmem:[%s264 + $0x490] sm:$0xff]
        %v491 = vld [vmem:[%s264 + $0x498] sm:$0xff]
        %v492 = vld [vmem:[%s264 + $0x4a0] sm:$0xff]
        %v493 = vld [vmem:[%s264 + $0x4a8] sm:$0xff]
        %v494 = vld [vmem:[%s264 + $0x4b0] sm:$0xff]
        %v495 = vld [vmem:[%s264 + $0x4b8] sm:$0xff]
        %v496 = vld [vmem:[%s264 + $0x4c0] sm:$0xff]
        %v497 = vld [vmem:[%s264 + $0x4c8] sm:$0xff]
        %v498 = vld [vmem:[%s264 + $0x4d0] sm:$0xff]
        %v499 = vld [vmem:[%s264 + $0x4d8] sm:$0xff]
        %v500 = vld [vmem:[%s264 + $0x4e0] sm:$0xff]
        %v501 = vld [vmem:[%s264 + $0x4e8] sm:$0xff]
        %v502 = vld [vmem:[%s264 + $0x4f0] sm:$0xff]
        %v503 = vld [vmem:[%s264 + $0x4f8] sm:$0xff]
        %v504 = vld [vmem:[%s264 + $0x500] sm:$0xff]
        %v505 = vld [vmem:[%s264 + $0x508] sm:$0xff]
        %v506 = vld [vmem:[%s264 + $0x510] sm:$0xff]
        %v507 = vld [vmem:[%s264 + $0x518] sm:$0xff]
        %v508 = vld [vmem:[%s264 + $0x520] sm:$0xff]
        %v509 = vld [vmem:[%s264 + $0x528] sm:$0xff]
        %v510 = vld [vmem:[%s264 + $0x530] sm:$0xff]
        %v511 = vld [vmem:[%s264 + $0x538] sm:$0xff]
        %v512 = vld [vmem:[%s264 + $0x540] sm:$0xff]
        %v513 = vld [vmem:[%s264 + $0x548] sm:$0xff]
        %v514 = vld [vmem:[%s264 + $0x550] sm:$0xff]
        %v515 = vld [vmem:[%s264 + $0x558] sm:$0xff]
        %v516 = vld [vmem:[%s264 + $0x560] sm:$0xff]
        %v517 = vld [vmem:[%s264 + $0x568] sm:$0xff]
        %v518 = vld [vmem:[%s264 + $0x570] sm:$0xff]
        %v519 = vld [vmem:[%s264 + $0x578] sm:$0xff]
        %v520 = vld [vmem:[%s264 + $0x580] sm:$0xff]
        %v521 = vld [vmem:[%s264 + $0x588] sm:$0xff]
        %v522 = vld [vmem:[%s264 + $0x590] sm:$0xff]
        %v523 = vld [vmem:[%s264 + $0x598] sm:$0xff]
        %v524 = vld [vmem:[%s264 + $0x5a0] sm:$0xff]
        %v525 = vld [vmem:[%s264 + $0x5a8] sm:$0xff]
        %v526 = vld [vmem:[%s264 + $0x5b0] sm:$0xff]
        %v527 = vld [vmem:[%s264 + $0x5b8] sm:$0xff]
        %v528 = vld [vmem:[%s264 + $0x5c0] sm:$0xff]
        %v529 = vld [vmem:[%s264 + $0x5c8] sm:$0xff]
        %v530 = vld [vmem:[%s264 + $0x5d0] sm:$0xff]
        %v531 = vld [vmem:[%s264 + $0x5d8] sm:$0xff]
        %v532 = vld [vmem:[%s264 + $0x5e0] sm:$0xff]
        %v533 = vld [vmem:[%s264 + $0x5e8] sm:$0xff]
        %v534 = vld [vmem:[%s264 + $0x5f0] sm:$0xff]
        %v535 = vld [vmem:[%s264 + $0x5f8] sm:$0xff]
        %v536 = vld [vmem:[%s264 + $0x600] sm:$0xff]
        %v537 = vld [vmem:[%s264 + $0x608] sm:$0xff]
        %v538 = vld [vmem:[%s264 + $0x610] sm:$0xff]
        %v539 = vld [vmem:[%s264 + $0x618] sm:$0xff]
        %v540 = vld [vmem:[%s264 + $0x620] sm:$0xff]
        %v541 = vld [vmem:[%s264 + $0x628] sm:$0xff]
        %v542 = vld [vmem:[%s264 + $0x630] sm:$0xff]
        %v543 = vld [vmem:[%s264 + $0x638] sm:$0xff]
        %v544 = vld [vmem:[%s264 + $0x640] sm:$0xff]
        %v545 = vld [vmem:[%s264 + $0x648] sm:$0xff]
        %v546 = vld [vmem:[%s264 + $0x650] sm:$0xff]
        %v547 = vld [vmem:[%s264 + $0x658] sm:$0xff]
        %v548 = vld [vmem:[%s264 + $0x660] sm:$0xff]
        %v549 = vld [vmem:[%s264 + $0x668] sm:$0xff]
        %v550 = vld [vmem:[%s264 + $0x670] sm:$0xff]
        %v551 = vld [vmem:[%s264 + $0x678] sm:$0xff]
        %v552 = vld [vmem:[%s264 + $0x680] sm:$0xff]
        %v553 = vld [vmem:[%s264 + $0x688] sm:$0xff]
        %v554 = vld [vmem:[%s264 + $0x690] sm:$0xff]
        %v555 = vld [vmem:[%s264 + $0x698] sm:$0xff]
        %v556 = vld [vmem:[%s264 + $0x6a0] sm:$0xff]
        %v557 = vld [vmem:[%s264 + $0x6a8] sm:$0xff]
        %v558 = vld [vmem:[%s264 + $0x6b0] sm:$0xff]
        %v559 = vld [vmem:[%s264 + $0x6b8] sm:$0xff]
        %v560 = vld [vmem:[%s264 + $0x6c0] sm:$0xff]
        %v561 = vld [vmem:[%s264 + $0x6c8] sm:$0xff]
        %v562 = vld [vmem:[%s264 + $0x6d0] sm:$0xff]
        %v563 = vld [vmem:[%s264 + $0x6d8] sm:$0xff]
        %v564 = vld [vmem:[%s264 + $0x6e0] sm:$0xff]
        %v565 = vld [vmem:[%s264 + $0x6e8] sm:$0xff]
        %v566 = vld [vmem:[%s264 + $0x6f0] sm:$0xff]
        %v567 = vld [vmem:[%s264 + $0x6f8] sm:$0xff]
        %v568 = vld [vmem:[%s264 + $0x700] sm:$0xff]
        %v569 = vld [vmem:[%s264 + $0x708] sm:$0xff]
        %v570 = vld [vmem:[%s264 + $0x710] sm:$0xff]
        %v571 = vld [vmem:[%s264 + $0x718] sm:$0xff]
        %v572 = vld [vmem:[%s264 + $0x720] sm:$0xff]
        %v573 = vld [vmem:[%s264 + $0x728] sm:$0xff]
        %v574 = vld [vmem:[%s264 + $0x730] sm:$0xff]
        %v575 = vld [vmem:[%s264 + $0x738] sm:$0xff]
        %v576 = vld [vmem:[%s264 + $0x740] sm:$0xff]
        %v577 = vld [vmem:[%s264 + $0x748] sm:$0xff]
        %v578 = vld [vmem:[%s264 + $0x750] sm:$0xff]
        %v579 = vld [vmem:[%s264 + $0x758] sm:$0xff]
        %v580 = vld [vmem:[%s264 + $0x760] sm:$0xff]
        %v581 = vld [vmem:[%s264 + $0x768] sm:$0xff]
        %v582 = vld [vmem:[%s264 + $0x770] sm:$0xff]
        %v583 = vld [vmem:[%s264 + $0x778] sm:$0xff]
        %v584 = vld [vmem:[%s264 + $0x780] sm:$0xff]
        %v585 = vld [vmem:[%s264 + $0x788] sm:$0xff]
        %v586 = vld [vmem:[%s264 + $0x790] sm:$0xff]
        %v587 = vld [vmem:[%s264 + $0x798] sm:$0xff]
        %v588 = vld [vmem:[%s264 + $0x7a0] sm:$0xff]
        %v589 = vld [vmem:[%s264 + $0x7a8] sm:$0xff]
        %v590 = vld [vmem:[%s264 + $0x7b0] sm:$0xff]
        %v591 = vld [vmem:[%s264 + $0x7b8] sm:$0xff]
        %v592 = vld [vmem:[%s264 + $0x7c0] sm:$0xff]
        %v593 = vld [vmem:[%s264 + $0x7c8] sm:$0xff]
        %v594 = vld [vmem:[%s264 + $0x7d0] sm:$0xff]
        %v595 = vld [vmem:[%s264 + $0x7d8] sm:$0xff]
        %v596 = vld [vmem:[%s264 + $0x7e0] sm:$0xff]
        %v597 = vld [vmem:[%s264 + $0x7e8] sm:$0xff]
        %v598 = vld [vmem:[%s264 + $0x7f0] sm:$0xff]
        %v599 = vld [vmem:[%s264 + $0x7f8] sm:$0xff]
        %v600 = vld [vmem:[%s264 + $0x800] sm:$0xff]
        %v601 = vld [vmem:[%s264 + $0x808] sm:$0xff]
        %v602 = vld [vmem:[%s264 + $0x810] sm:$0xff]
        %v603 = vld [vmem:[%s264 + $0x818] sm:$0xff]
        %v604 = vld [vmem:[%s264 + $0x820] sm:$0xff]
        %v605 = vld [vmem:[%s264 + $0x828] sm:$0xff]
        %v606 = vld [vmem:[%s264 + $0x830] sm:$0xff]
        %v607 = vld [vmem:[%s264 + $0x838] sm:$0xff]
        %v608 = vld [vmem:[%s264 + $0x840] sm:$0xff]
        %v609 = vld [vmem:[%s264 + $0x848] sm:$0xff]
        %v610 = vld [vmem:[%s264 + $0x850] sm:$0xff]
        %v611 = vld [vmem:[%s264 + $0x858] sm:$0xff]
        %v612 = vld [vmem:[%s264 + $0x860] sm:$0xff]
        %v613 = vld [vmem:[%s264 + $0x868] sm:$0xff]
        %v614 = vld [vmem:[%s264 + $0x870] sm:$0xff]
        %v615 = vld [vmem:[%s264 + $0x878] sm:$0xff]
        %v616 = vld [vmem:[%s264 + $0x880] sm:$0xff]
        %v617 = vld [vmem:[%s264 + $0x888] sm:$0xff]
        %v618 = vld [vmem:[%s264 + $0x890] sm:$0xff]
        %v619 = vld [vmem:[%s264 + $0x898] sm:$0xff]
        %v620 = vld [vmem:[%s264 + $0x8a0] sm:$0xff]
        %v621 = vld [vmem:[%s264 + $0x8a8] sm:$0xff]
        %v622 = vld [vmem:[%s264 + $0x8b0] sm:$0xff]
        %v623 = vld [vmem:[%s264 + $0x8b8] sm:$0xff]
        %v624 = vld [vmem:[%s264 + $0x8c0] sm:$0xff]
        %v625 = vld [vmem:[%s264 + $0x8c8] sm:$0xff]
        %v626 = vld [vmem:[%s264 + $0x8d0] sm:$0xff]
        %v627 = vld [vmem:[%s264 + $0x8d8] sm:$0xff]
        %v628 = vld [vmem:[%s264 + $0x8e0] sm:$0xff]
        %v629 = vld [vmem:[%s264 + $0x8e8] sm:$0xff]
        %v630 = vld [vmem:[%s264 + $0x8f0] sm:$0xff]
        %v631 = vld [vmem:[%s264 + $0x8f8] sm:$0xff]
        %v632 = vld [vmem:[%s264 + $0x900] sm:$0xff]
        %v633 = vld [vmem:[%s264 + $0x908] sm:$0xff]
        %v634 = vld [vmem:[%s264 + $0x910] sm:$0xff]
        %v635 = vld [vmem:[%s264 + $0x918] sm:$0xff]
        %v636 = vld [vmem:[%s264 + $0x920] sm:$0xff]
        %v637 = vld [vmem:[%s264 + $0x928] sm:$0xff]
        %v638 = vld [vmem:[%s264 + $0x930] sm:$0xff]
        %v639 = vld [vmem:[%s264 + $0x938] sm:$0xff]
        %v640 = vld [vmem:[%s264 + $0x940] sm:$0xff]
        %v641 = vld [vmem:[%s264 + $0x948] sm:$0xff]
        %v642 = vld [vmem:[%s264 + $0x950] sm:$0xff]
        %v643 = vld [vmem:[%s264 + $0x958] sm:$0xff]
        %v644 = vld [vmem:[%s264 + $0x960] sm:$0xff]
        %v645 = vld [vmem:[%s264 + $0x968] sm:$0xff]
        %v646 = vld [vmem:[%s264 + $0x970] sm:$0xff]
        %v647 = vld [vmem:[%s264 + $0x978] sm:$0xff]
        %v648 = vld [vmem:[%s264 + $0x980] sm:$0xff]
        %v649 = vld [vmem:[%s264 + $0x988] sm:$0xff]
        %v650 = vld [vmem:[%s264 + $0x990] sm:$0xff]
        %v651 = vld [vmem:[%s264 + $0x998] sm:$0xff]
        %v652 = vld [vmem:[%s264 + $0x9a0] sm:$0xff]
        %v653 = vld [vmem:[%s264 + $0x9a8] sm:$0xff]
        %v654 = vld [vmem:[%s264 + $0x9b0] sm:$0xff]
        %v655 = vld [vmem:[%s264 + $0x9b8] sm:$0xff]
        %v656 = vld [vmem:[%s264 + $0x9c0] sm:$0xff]
        %v657 = vld [vmem:[%s264 + $0x9c8] sm:$0xff]
        %v658 = vld [vmem:[%s264 + $0x9d0] sm:$0xff]
        %v659 = vld [vmem:[%s264 + $0x9d8] sm:$0xff]
        %v660 = vld [vmem:[%s264 + $0x9e0] sm:$0xff]
        %v661 = vld [vmem:[%s264 + $0x9e8] sm:$0xff]
        %v662 = vld [vmem:[%s264 + $0x9f0] sm:$0xff]
        %v663 = vld [vmem:[%s264 + $0x9f8] sm:$0xff]
        %v664 = vld [vmem:[%s264 + $0xa00] sm:$0xff]
        %v665 = vld [vmem:[%s264 + $0xa08] sm:$0xff]
        %v666 = vld [vmem:[%s264 + $0xa10] sm:$0xff]
        %v667 = vld [vmem:[%s264 + $0xa18] sm:$0xff]
        %v668 = vld [vmem:[%s264 + $0xa20] sm:$0xff]
        %v669 = vld [vmem:[%s264 + $0xa28] sm:$0xff]
        %v670 = vld [vmem:[%s264 + $0xa30] sm:$0xff]
        %v671 = vld [vmem:[%s264 + $0xa38] sm:$0xff]
        %v672 = vld [vmem:[%s264 + $0xa40] sm:$0xff]
        %v673 = vld [vmem:[%s264 + $0xa48] sm:$0xff]
        %v674 = vld [vmem:[%s264 + $0xa50] sm:$0xff]
        %v675 = vld [vmem:[%s264 + $0xa58] sm:$0xff]
        %v676 = vld [vmem:[%s264 + $0xa60] sm:$0xff]
        %v677 = vld [vmem:[%s264 + $0xa68] sm:$0xff]
        %v678 = vld [vmem:[%s264 + $0xa70] sm:$0xff]
        %v679 = vld [vmem:[%s264 + $0xa78] sm:$0xff]
        %v680 = vld [vmem:[%s264 + $0xa80] sm:$0xff]
        %v681 = vld [vmem:[%s264 + $0xa88] sm:$0xff]
        %v682 = vld [vmem:[%s264 + $0xa90] sm:$0xff]
        %v683 = vld [vmem:[%s264 + $0xa98] sm:$0xff]
        %v684 = vld [vmem:[%s264 + $0xaa0] sm:$0xff]
        %v685 = vld [vmem:[%s264 + $0xaa8] sm:$0xff]
        %v686 = vld [vmem:[%s264 + $0xab0] sm:$0xff]
        %v687 = vld [vmem:[%s264 + $0xab8] sm:$0xff]
        %v688 = vld [vmem:[%s264 + $0xac0] sm:$0xff]
        %v689 = vld [vmem:[%s264 + $0xac8] sm:$0xff]
        %v690 = vld [vmem:[%s264 + $0xad0] sm:$0xff]
        %v691 = vld [vmem:[%s264 + $0xad8] sm:$0xff]
        %v692 = vld [vmem:[%s264 + $0xae0] sm:$0xff]
        %v693 = vld [vmem:[%s264 + $0xae8] sm:$0xff]
        %v694 = vld [vmem:[%s264 + $0xaf0] sm:$0xff]
        %v695 = vld [vmem:[%s264 + $0xaf8] sm:$0xff]
        %v696 = vld [vmem:[%s264 + $0xb00] sm:$0xff]
        %v697 = vld [vmem:[%s264 + $0xb08] sm:$0xff]
        %v698 = vld [vmem:[%s264 + $0xb10] sm:$0xff]
        %v699 = vld [vmem:[%s264 + $0xb18] sm:$0xff]
        %v700 = vld [vmem:[%s264 + $0xb20] sm:$0xff]
        %v701 = vld [vmem:[%s264 + $0xb28] sm:$0xff]
        %v702 = vld [vmem:[%s264 + $0xb30] sm:$0xff]
        %v703 = vld [vmem:[%s264 + $0xb38] sm:$0xff]
        %v704 = vld [vmem:[%s264 + $0xb40] sm:$0xff]
        %v705 = vld [vmem:[%s264 + $0xb48] sm:$0xff]
        %v706 = vld [vmem:[%s264 + $0xb50] sm:$0xff]
        %v707 = vld [vmem:[%s264 + $0xb58] sm:$0xff]
        %v708 = vld [vmem:[%s264 + $0xb60] sm:$0xff]
        %v709 = vld [vmem:[%s264 + $0xb68] sm:$0xff]
        %v710 = vld [vmem:[%s264 + $0xb70] sm:$0xff]
        %v711 = vld [vmem:[%s264 + $0xb78] sm:$0xff]
        %v712 = vld [vmem:[%s264 + $0xb80] sm:$0xff]
        %v713 = vld [vmem:[%s264 + $0xb88] sm:$0xff]
        %v714 = vld [vmem:[%s264 + $0xb90] sm:$0xff]
        %v715 = vld [vmem:[%s264 + $0xb98] sm:$0xff]
        %v716 = vld [vmem:[%s264 + $0xba0] sm:$0xff]
        %v717 = vld [vmem:[%s264 + $0xba8] sm:$0xff]
        %v718 = vld [vmem:[%s264 + $0xbb0] sm:$0xff]
        %v719 = vld [vmem:[%s264 + $0xbb8] sm:$0xff]
        %v720 = vld [vmem:[%s264 + $0xbc0] sm:$0xff]
        %v721 = vld [vmem:[%s264 + $0xbc8] sm:$0xff]
        %v722 = vld [vmem:[%s264 + $0xbd0] sm:$0xff]
        %v723 = vld [vmem:[%s264 + $0xbd8] sm:$0xff]
        %v724 = vld [vmem:[%s264 + $0xbe0] sm:$0xff]
        %v725 = vld [vmem:[%s264 + $0xbe8] sm:$0xff]
        %v726 = vld [vmem:[%s264 + $0xbf0] sm:$0xff]
        %v727 = vld [vmem:[%s264 + $0xbf8] sm:$0xff]
        %v728 = vld [vmem:[%s264 + $0xc00] sm:$0xff]
        %v729 = vld [vmem:[%s264 + $0xc08] sm:$0xff]
        %v730 = vld [vmem:[%s264 + $0xc10] sm:$0xff]
        %v731 = vld [vmem:[%s264 + $0xc18] sm:$0xff]
        %v732 = vld [vmem:[%s264 + $0xc20] sm:$0xff]
        %v733 = vld [vmem:[%s264 + $0xc28] sm:$0xff]
        %v734 = vld [vmem:[%s264 + $0xc30] sm:$0xff]
        %v735 = vld [vmem:[%s264 + $0xc38] sm:$0xff]
        %v736 = vld [vmem:[%s264 + $0xc40] sm:$0xff]
        %v737 = vld [vmem:[%s264 + $0xc48] sm:$0xff]
        %v738 = vld [vmem:[%s264 + $0xc50] sm:$0xff]
        %v739 = vld [vmem:[%s264 + $0xc58] sm:$0xff]
        %v740 = vld [vmem:[%s264 + $0xc60] sm:$0xff]
        %v741 = vld [vmem:[%s264 + $0xc68] sm:$0xff]
        %v742 = vld [vmem:[%s264 + $0xc70] sm:$0xff]
        %v743 = vld [vmem:[%s264 + $0xc78] sm:$0xff]
        %v744 = vld [vmem:[%s264 + $0xc80] sm:$0xff]
        %v745 = vld [vmem:[%s264 + $0xc88] sm:$0xff]
        %v746 = vld [vmem:[%s264 + $0xc90] sm:$0xff]
        %v747 = vld [vmem:[%s264 + $0xc98] sm:$0xff]
        %v748 = vld [vmem:[%s264 + $0xca0] sm:$0xff]
        %v749 = vld [vmem:[%s264 + $0xca8] sm:$0xff]
        %v750 = vld [vmem:[%s264 + $0xcb0] sm:$0xff]
        %v751 = vld [vmem:[%s264 + $0xcb8] sm:$0xff]
        %v752 = vld [vmem:[%s264 + $0xcc0] sm:$0xff]
        %v753 = vld [vmem:[%s264 + $0xcc8] sm:$0xff]
        %v754 = vld [vmem:[%s264 + $0xcd0] sm:$0xff]
        %v755 = vld [vmem:[%s264 + $0xcd8] sm:$0xff]
        %v756 = vld [vmem:[%s264 + $0xce0] sm:$0xff]
        %v757 = vld [vmem:[%s264 + $0xce8] sm:$0xff]
        %v758 = vld [vmem:[%s264 + $0xcf0] sm:$0xff]
        %v759 = vld [vmem:[%s264 + $0xcf8] sm:$0xff]
        %v760 = vld [vmem:[%s264 + $0xd00] sm:$0xff]
        %v761 = vld [vmem:[%s264 + $0xd08] sm:$0xff]
        %v762 = vld [vmem:[%s264 + $0xd10] sm:$0xff]
        %v763 = vld [vmem:[%s264 + $0xd18] sm:$0xff]
        %v764 = vld [vmem:[%s264 + $0xd20] sm:$0xff]
        %v765 = vld [vmem:[%s264 + $0xd28] sm:$0xff]
        %v766 = vld [vmem:[%s264 + $0xd30] sm:$0xff]
        %v767 = vld [vmem:[%s264 + $0xd38] sm:$0xff]
        %v768 = vld [vmem:[%s264 + $0xd40] sm:$0xff]
        %v769 = vld [vmem:[%s264 + $0xd48] sm:$0xff]
        %v770 = vld [vmem:[%s264 + $0xd50] sm:$0xff]
        %v771 = vld [vmem:[%s264 + $0xd58] sm:$0xff]
        %v772 = vld [vmem:[%s264 + $0xd60] sm:$0xff]
        %v773 = vld [vmem:[%s264 + $0xd68] sm:$0xff]
        %v774 = vld [vmem:[%s264 + $0xd70] sm:$0xff]
        %v775 = vld [vmem:[%s264 + $0xd78] sm:$0xff]
        %v776 = vld [vmem:[%s264 + $0xd80] sm:$0xff]
        %v777 = vld [vmem:[%s264 + $0xd88] sm:$0xff]
        %v778 = vld [vmem:[%s264 + $0xd90] sm:$0xff]
        %v779 = vld [vmem:[%s264 + $0xd98] sm:$0xff]
        %v780 = vld [vmem:[%s264 + $0xda0] sm:$0xff]
        %v781 = vld [vmem:[%s264 + $0xda8] sm:$0xff]
        %v782 = vld [vmem:[%s264 + $0xdb0] sm:$0xff]
        %v783 = vld [vmem:[%s264 + $0xdb8] sm:$0xff]
        %v784 = vld [vmem:[%s264 + $0xdc0] sm:$0xff]
        %v785 = vld [vmem:[%s264 + $0xdc8] sm:$0xff]
        %v786 = vld [vmem:[%s264 + $0xdd0] sm:$0xff]
        %v787 = vld [vmem:[%s264 + $0xdd8] sm:$0xff]
        %v788 = vld [vmem:[%s264 + $0xde0] sm:$0xff]
        %v789 = vld [vmem:[%s264 + $0xde8] sm:$0xff]
        %v790 = vld [vmem:[%s264 + $0xdf0] sm:$0xff]
        %v791 = vld [vmem:[%s264 + $0xdf8] sm:$0xff]
        %v792 = vld [vmem:[%s264 + $0xe00] sm:$0xff]
        %v793 = vld [vmem:[%s264 + $0xe08] sm:$0xff]
        %v794 = vld [vmem:[%s264 + $0xe10] sm:$0xff]
        %v795 = vld [vmem:[%s264 + $0xe18] sm:$0xff]
        %v796 = vld [vmem:[%s264 + $0xe20] sm:$0xff]
        %v797 = vld [vmem:[%s264 + $0xe28] sm:$0xff]
        %v798 = vld [vmem:[%s264 + $0xe30] sm:$0xff]
        %v799 = vld [vmem:[%s264 + $0xe38] sm:$0xff]
        %v800 = vld [vmem:[%s264 + $0xe40] sm:$0xff]
        %v801 = vld [vmem:[%s264 + $0xe48] sm:$0xff]
        %v802 = vld [vmem:[%s264 + $0xe50] sm:$0xff]
        %v803 = vld [vmem:[%s264 + $0xe58] sm:$0xff]
        %v804 = vld [vmem:[%s264 + $0xe60] sm:$0xff]
        %v805 = vld [vmem:[%s264 + $0xe68] sm:$0xff]
        %v806 = vld [vmem:[%s264 + $0xe70] sm:$0xff]
        %v807 = vld [vmem:[%s264 + $0xe78] sm:$0xff]
        %v808 = vld [vmem:[%s264 + $0xe80] sm:$0xff]
        %v809 = vld [vmem:[%s264 + $0xe88] sm:$0xff]
        %v810 = vld [vmem:[%s264 + $0xe90] sm:$0xff]
        %v811 = vld [vmem:[%s264 + $0xe98] sm:$0xff]
        %v812 = vld [vmem:[%s264 + $0xea0] sm:$0xff]
        %v813 = vld [vmem:[%s264 + $0xea8] sm:$0xff]
        %v814 = vld [vmem:[%s264 + $0xeb0] sm:$0xff]
        %v815 = vld [vmem:[%s264 + $0xeb8] sm:$0xff]
        %v816 = vld [vmem:[%s264 + $0xec0] sm:$0xff]
        %v817 = vld [vmem:[%s264 + $0xec8] sm:$0xff]
        %v818 = vld [vmem:[%s264 + $0xed0] sm:$0xff]
        %v819 = vld [vmem:[%s264 + $0xed8] sm:$0xff]
        %v820 = vld [vmem:[%s264 + $0xee0] sm:$0xff]
        %v821 = vld [vmem:[%s264 + $0xee8] sm:$0xff]
        %v822 = vld [vmem:[%s264 + $0xef0] sm:$0xff]
        %v823 = vld [vmem:[%s264 + $0xef8] sm:$0xff]
        %v824 = vld [vmem:[%s264 + $0xf00] sm:$0xff]
        %v825 = vld [vmem:[%s264 + $0xf08] sm:$0xff]
        %v826 = vld [vmem:[%s264 + $0xf10] sm:$0xff]
        %v827 = vld [vmem:[%s264 + $0xf18] sm:$0xff]
        %v828 = vld [vmem:[%s264 + $0xf20] sm:$0xff]
        %v829 = vld [vmem:[%s264 + $0xf28] sm:$0xff]
        %v830 = vld [vmem:[%s264 + $0xf30] sm:$0xff]
        %v831 = vld [vmem:[%s264 + $0xf38] sm:$0xff]
        %v832 = vld [vmem:[%s264 + $0xf40] sm:$0xff]
        %v833 = vld [vmem:[%s264 + $0xf48] sm:$0xff]
        %v834 = vld [vmem:[%s264 + $0xf50] sm:$0xff]
        %v835 = vld [vmem:[%s264 + $0xf58] sm:$0xff]
        %v836 = vld [vmem:[%s264 + $0xf60] sm:$0xff]
        %v837 = vld [vmem:[%s264 + $0xf68] sm:$0xff]
        %v838 = vld [vmem:[%s264 + $0xf70] sm:$0xff]
        %v839 = vld [vmem:[%s264 + $0xf78] sm:$0xff]
        %v840 = vld [vmem:[%s264 + $0xf80] sm:$0xff]
        %v841 = vld [vmem:[%s264 + $0xf88] sm:$0xff]
        %v842 = vld [vmem:[%s264 + $0xf90] sm:$0xff]
        %v843 = vld [vmem:[%s264 + $0xf98] sm:$0xff]
        %v844 = vld [vmem:[%s264 + $0xfa0] sm:$0xff]
        %v845 = vld [vmem:[%s264 + $0xfa8] sm:$0xff]
        %v846 = vld [vmem:[%s264 + $0xfb0] sm:$0xff]
        %v847 = vld [vmem:[%s264 + $0xfb8] sm:$0xff]
        %v848 = vld [vmem:[%s264 + $0xfc0] sm:$0xff]
        %v849 = vld [vmem:[%s264 + $0xfc8] sm:$0xff]
        %v850 = vld [vmem:[%s264 + $0xfd0] sm:$0xff]
        %v851 = vld [vmem:[%s264 + $0xfd8] sm:$0xff]
        %v852 = vld [vmem:[%s264 + $0xfe0] sm:$0xff]
        %v853 = vld [vmem:[%s264 + $0xfe8] sm:$0xff]
        %v854 = vld [vmem:[%s264 + $0xff0] sm:$0xff]
        %v855 = vld [vmem:[%s264 + $0xff8] sm:$0xff]
        %v856 = vld [vmem:[%s264 + $0x1000] sm:$0xff]
        %v857 = vld [vmem:[%s264 + $0x1008] sm:$0xff]
        %v858 = vld [vmem:[%s264 + $0x1010] sm:$0xff]
        %v859 = vld [vmem:[%s264 + $0x1018] sm:$0xff]
        %v860 = vld [vmem:[%s264 + $0x1020] sm:$0xff]
        %v861 = vld [vmem:[%s264 + $0x1028] sm:$0xff]
        %v862 = vld [vmem:[%s264 + $0x1030] sm:$0xff]
        %v863 = vld [vmem:[%s264 + $0x1038] sm:$0xff]
        %v864 = vld [vmem:[%s264 + $0x1040] sm:$0xff]
        %v865 = vld [vmem:[%s264 + $0x1048] sm:$0xff]
        %v866 = vld [vmem:[%s264 + $0x1050] sm:$0xff]
        %v867 = vld [vmem:[%s264 + $0x1058] sm:$0xff]
        %v868 = vld [vmem:[%s264 + $0x1060] sm:$0xff]
        %v869 = vld [vmem:[%s264 + $0x1068] sm:$0xff]
        %v870 = vld [vmem:[%s264 + $0x1070] sm:$0xff]
        %v871 = vld [vmem:[%s264 + $0x1078] sm:$0xff]
        %v872 = vld [vmem:[%s264 + $0x1080] sm:$0xff]
        %v873 = vld [vmem:[%s264 + $0x1088] sm:$0xff]
        %v874 = vld [vmem:[%s264 + $0x1090] sm:$0xff]
        %v875 = vld [vmem:[%s264 + $0x1098] sm:$0xff]
        %v876 = vld [vmem:[%s264 + $0x10a0] sm:$0xff]
        %v877 = vld [vmem:[%s264 + $0x10a8] sm:$0xff]
        %v878 = vld [vmem:[%s264 + $0x10b0] sm:$0xff]
        %v879 = vld [vmem:[%s264 + $0x10b8] sm:$0xff]
        %v880 = vld [vmem:[%s264 + $0x10c0] sm:$0xff]
        %v881 = vld [vmem:[%s264 + $0x10c8] sm:$0xff]
        %v882 = vld [vmem:[%s264 + $0x10d0] sm:$0xff]
        %v883 = vld [vmem:[%s264 + $0x10d8] sm:$0xff]
        %v884 = vld [vmem:[%s264 + $0x10e0] sm:$0xff]
        %v885 = vld [vmem:[%s264 + $0x10e8] sm:$0xff]
        %v886 = vld [vmem:[%s264 + $0x10f0] sm:$0xff]
        %v887 = vld [vmem:[%s264 + $0x10f8] sm:$0xff]
        %v888 = vld [vmem:[%s264 + $0x1100] sm:$0xff]
        %v889 = vld [vmem:[%s264 + $0x1108] sm:$0xff]
        %v890 = vld [vmem:[%s264 + $0x1110] sm:$0xff]
        %v891 = vld [vmem:[%s264 + $0x1118] sm:$0xff]
        %v892 = vld [vmem:[%s264 + $0x1120] sm:$0xff]
        %v893 = vld [vmem:[%s264 + $0x1128] sm:$0xff]
        %v894 = vld [vmem:[%s264 + $0x1130] sm:$0xff]
        %v895 = vld [vmem:[%s264 + $0x1138] sm:$0xff]
        %v896 = vld [vmem:[%s264 + $0x1140] sm:$0xff]
        %v897 = vld [vmem:[%s264 + $0x1148] sm:$0xff]
        %v898 = vld [vmem:[%s264 + $0x1150] sm:$0xff]
        %v899 = vld [vmem:[%s264 + $0x1158] sm:$0xff]
        %v900 = vld [vmem:[%s264 + $0x1160] sm:$0xff]
        %v901 = vld [vmem:[%s264 + $0x1168] sm:$0xff]
        %v902 = vld [vmem:[%s264 + $0x1170] sm:$0xff]
        %v903 = vld [vmem:[%s264 + $0x1178] sm:$0xff]
        %v904 = vld [vmem:[%s264 + $0x1180] sm:$0xff]
        %v905 = vld [vmem:[%s264 + $0x1188] sm:$0xff]
        %v906 = vld [vmem:[%s264 + $0x1190] sm:$0xff]
        %v907 = vld [vmem:[%s264 + $0x1198] sm:$0xff]
        %v908 = vld [vmem:[%s264 + $0x11a0] sm:$0xff]
        %v909 = vld [vmem:[%s264 + $0x11a8] sm:$0xff]
        %v910 = vld [vmem:[%s264 + $0x11b0] sm:$0xff]
        %v911 = vld [vmem:[%s264 + $0x11b8] sm:$0xff]
        %v912 = vld [vmem:[%s264 + $0x11c0] sm:$0xff]
        %v913 = vld [vmem:[%s264 + $0x11c8] sm:$0xff]
        %v914 = vld [vmem:[%s264 + $0x11d0] sm:$0xff]
        %v915 = vld [vmem:[%s264 + $0x11d8] sm:$0xff]
        %v916 = vld [vmem:[%s264 + $0x11e0] sm:$0xff]
        %v917 = vld [vmem:[%s264 + $0x11e8] sm:$0xff]
        %v918 = vld [vmem:[%s264 + $0x11f0] sm:$0xff]
        %v919 = vld [vmem:[%s264 + $0x11f8] sm:$0xff]
        %v920 = vld [vmem:[%s264 + $0x1200] sm:$0xff]
        %v921 = vld [vmem:[%s264 + $0x1208] sm:$0xff]
        %v922 = vld [vmem:[%s264 + $0x1210] sm:$0xff]
        %v923 = vld [vmem:[%s264 + $0x1218] sm:$0xff]
        %v924 = vld [vmem:[%s264 + $0x1220] sm:$0xff]
        %v925 = vld [vmem:[%s264 + $0x1228] sm:$0xff]
        %v926 = vld [vmem:[%s264 + $0x1230] sm:$0xff]
        %v927 = vld [vmem:[%s264 + $0x1238] sm:$0xff]
        %v928 = vld [vmem:[%s264 + $0x1240] sm:$0xff]
        %v929 = vld [vmem:[%s264 + $0x1248] sm:$0xff]
        %v930 = vld [vmem:[%s264 + $0x1250] sm:$0xff]
        %v931 = vld [vmem:[%s264 + $0x1258] sm:$0xff]
        %v932 = vld [vmem:[%s264 + $0x1260] sm:$0xff]
        %v933 = vld [vmem:[%s264 + $0x1268] sm:$0xff]
        %v934 = vld [vmem:[%s264 + $0x1270] sm:$0xff]
        %v935 = vld [vmem:[%s264 + $0x1278] sm:$0xff]
        %v936 = vld [vmem:[%s264 + $0x1280] sm:$0xff]
        %v937 = vld [vmem:[%s264 + $0x1288] sm:$0xff]
        %v938 = vld [vmem:[%s264 + $0x1290] sm:$0xff]
        %v939 = vld [vmem:[%s264 + $0x1298] sm:$0xff]
        %v940 = vld [vmem:[%s264 + $0x12a0] sm:$0xff]
        %v941 = vld [vmem:[%s264 + $0x12a8] sm:$0xff]
        %v942 = vld [vmem:[%s264 + $0x12b0] sm:$0xff]
        %v943 = vld [vmem:[%s264 + $0x12b8] sm:$0xff]
        %v944 = vld [vmem:[%s264 + $0x12c0] sm:$0xff]
        %v945 = vld [vmem:[%s264 + $0x12c8] sm:$0xff]
        %v946 = vld [vmem:[%s264 + $0x12d0] sm:$0xff]
        %v947 = vld [vmem:[%s264 + $0x12d8] sm:$0xff]
        %v948 = vld [vmem:[%s264 + $0x12e0] sm:$0xff]
        %v949 = vld [vmem:[%s264 + $0x12e8] sm:$0xff]
        %v950 = vld [vmem:[%s264 + $0x12f0] sm:$0xff]
        %v951 = vld [vmem:[%s264 + $0x12f8] sm:$0xff]
        %v952 = vld [vmem:[%s264 + $0x1300] sm:$0xff]
        %v953 = vld [vmem:[%s264 + $0x1308] sm:$0xff]
        %v954 = vld [vmem:[%s264 + $0x1310] sm:$0xff]
        %v955 = vld [vmem:[%s264 + $0x1318] sm:$0xff]
        %v956 = vld [vmem:[%s264 + $0x1320] sm:$0xff]
        %v957 = vld [vmem:[%s264 + $0x1328] sm:$0xff]
        %v958 = vld [vmem:[%s264 + $0x1330] sm:$0xff]
        %v959 = vld [vmem:[%s264 + $0x1338] sm:$0xff]
        %v960 = vld [vmem:[%s264 + $0x1340] sm:$0xff]
        %v961 = vld [vmem:[%s264 + $0x1348] sm:$0xff]
        %v962 = vld [vmem:[%s264 + $0x1350] sm:$0xff]
        %v963 = vld [vmem:[%s264 + $0x1358] sm:$0xff]
        %v964 = vld [vmem:[%s264 + $0x1360] sm:$0xff]
        %v965 = vld [vmem:[%s264 + $0x1368] sm:$0xff]
        %v966 = vld [vmem:[%s264 + $0x1370] sm:$0xff]
        %v967 = vld [vmem:[%s264 + $0x1378] sm:$0xff]
        %v968 = vld [vmem:[%s264 + $0x1380] sm:$0xff]
        %v969 = vld [vmem:[%s264 + $0x1388] sm:$0xff]
        %v970 = vld [vmem:[%s264 + $0x1390] sm:$0xff]
        %v971 = vld [vmem:[%s264 + $0x1398] sm:$0xff]
        %v972 = vld [vmem:[%s264 + $0x13a0] sm:$0xff]
        %v973 = vld [vmem:[%s264 + $0x13a8] sm:$0xff]
        %v974 = vld [vmem:[%s264 + $0x13b0] sm:$0xff]
        %v975 = vld [vmem:[%s264 + $0x13b8] sm:$0xff]
        %v976 = vld [vmem:[%s264 + $0x13c0] sm:$0xff]
        %v977 = vld [vmem:[%s264 + $0x13c8] sm:$0xff]
        %v978 = vld [vmem:[%s264 + $0x13d0] sm:$0xff]
        %v979 = vld [vmem:[%s264 + $0x13d8] sm:$0xff]
        %v980 = vld [vmem:[%s264 + $0x13e0] sm:$0xff]
        %v981 = vld [vmem:[%s264 + $0x13e8] sm:$0xff]
        %v982 = vld [vmem:[%s264 + $0x13f0] sm:$0xff]
        %v983 = vld [vmem:[%s264 + $0x13f8] sm:$0xff]
        %v984 = vld [vmem:[%s264 + $0x1400] sm:$0xff]
        %v985 = vld [vmem:[%s264 + $0x1408] sm:$0xff]
        %v986 = vld [vmem:[%s264 + $0x1410] sm:$0xff]
        %v987 = vld [vmem:[%s264 + $0x1418] sm:$0xff]
        %v988 = vld [vmem:[%s264 + $0x1420] sm:$0xff]
        %v989 = vld [vmem:[%s264 + $0x1428] sm:$0xff]
        %v990 = vld [vmem:[%s264 + $0x1430] sm:$0xff]
        %v991 = vld [vmem:[%s264 + $0x1438] sm:$0xff]
        %v992 = vld [vmem:[%s264 + $0x1440] sm:$0xff]
        %v993 = vld [vmem:[%s264 + $0x1448] sm:$0xff]
        %v994 = vld [vmem:[%s264 + $0x1450] sm:$0xff]
        %v995 = vld [vmem:[%s264 + $0x1458] sm:$0xff]
        %v996 = vld [vmem:[%s264 + $0x1460] sm:$0xff]
        %v997 = vld [vmem:[%s264 + $0x1468] sm:$0xff]
        %v998 = vld [vmem:[%s264 + $0x1470] sm:$0xff]
        %v999 = vld [vmem:[%s264 + $0x1478] sm:$0xff]
        %v1000 = vld [vmem:[%s264 + $0x1480] sm:$0xff]
        %v1001 = vld [vmem:[%s264 + $0x1488] sm:$0xff]
        %v1002 = vld [vmem:[%s264 + $0x1490] sm:$0xff]
        %v1003 = vld [vmem:[%s264 + $0x1498] sm:$0xff]
        %v1004 = vld [vmem:[%s264 + $0x14a0] sm:$0xff]
        %v1005 = vld [vmem:[%s264 + $0x14a8] sm:$0xff]
        %v1006 = vld [vmem:[%s264 + $0x14b0] sm:$0xff]
        %v1007 = vld [vmem:[%s264 + $0x14b8] sm:$0xff]
        %v1008 = vld [vmem:[%s264 + $0x14c0] sm:$0xff]
        %v1009 = vld [vmem:[%s264 + $0x14c8] sm:$0xff]
        %v1010 = vld [vmem:[%s264 + $0x14d0] sm:$0xff]
        %v1011 = vld [vmem:[%s264 + $0x14d8] sm:$0xff]
        %v1012 = vld [vmem:[%s264 + $0x14e0] sm:$0xff]
        %v1013 = vld [vmem:[%s264 + $0x14e8] sm:$0xff]
        %v1014 = vld [vmem:[%s264 + $0x14f0] sm:$0xff]
        %v1015 = vld [vmem:[%s264 + $0x14f8] sm:$0xff]
        %v1016 = vld [vmem:[%s264 + $0x1500] sm:$0xff]
        %v1017 = vld [vmem:[%s264 + $0x1508] sm:$0xff]
        %v1018 = vld [vmem:[%s264 + $0x1510] sm:$0xff]
        %v1019 = vld [vmem:[%s264 + $0x1518] sm:$0xff]
        %v1020 = vld [vmem:[%s264 + $0x1520] sm:$0xff]
        %v1021 = vld [vmem:[%s264 + $0x1528] sm:$0xff]
        %v1022 = vld [vmem:[%s264 + $0x1530] sm:$0xff]
        %v1023 = vld [vmem:[%s264 + $0x1538] sm:$0xff]
        %v1024 = vld [vmem:[%s264 + $0x1540] sm:$0xff]
        %v1025 = vld [vmem:[%s264 + $0x1548] sm:$0xff]
        %v1026 = vld [vmem:[%s264 + $0x1550] sm:$0xff]
        %v1027 = vld [vmem:[%s264 + $0x1558] sm:$0xff]
        %v1028 = vld [vmem:[%s264 + $0x1560] sm:$0xff]
        %v1029 = vld [vmem:[%s264 + $0x1568] sm:$0xff]
        %v1030 = vld [vmem:[%s264 + $0x1570] sm:$0xff]
        %v1031 = vld [vmem:[%s264 + $0x1578] sm:$0xff]
        %v1032 = vld [vmem:[%s264 + $0x1580] sm:$0xff]
        %v1033 = vld [vmem:[%s264 + $0x1588] sm:$0xff]
        %v1034 = vld [vmem:[%s264 + $0x1590] sm:$0xff]
        %v1035 = vld [vmem:[%s264 + $0x1598] sm:$0xff]
        %v1036 = vld [vmem:[%s264 + $0x15a0] sm:$0xff]
        %v1037 = vld [vmem:[%s264 + $0x15a8] sm:$0xff]
        %v1038 = vld [vmem:[%s264 + $0x15b0] sm:$0xff]
        %v1039 = vld [vmem:[%s264 + $0x15b8] sm:$0xff]
        %v1040 = vld [vmem:[%s264 + $0x15c0] sm:$0xff]
        %v1041 = vld [vmem:[%s264 + $0x15c8] sm:$0xff]
        %v1042 = vld [vmem:[%s264 + $0x15d0] sm:$0xff]
        %v1043 = vld [vmem:[%s264 + $0x15d8] sm:$0xff]
        %v1044 = vld [vmem:[%s264 + $0x15e0] sm:$0xff]
        %v1045 = vld [vmem:[%s264 + $0x15e8] sm:$0xff]
        %v1046 = vld [vmem:[%s264 + $0x15f0] sm:$0xff]
        %v1047 = vld [vmem:[%s264 + $0x15f8] sm:$0xff]
        %v1048 = vld [vmem:[%s264 + $0x1600] sm:$0xff]
        %v1049 = vld [vmem:[%s264 + $0x1608] sm:$0xff]
        %v1050 = vld [vmem:[%s264 + $0x1610] sm:$0xff]
        %v1051 = vld [vmem:[%s264 + $0x1618] sm:$0xff]
        %v1052 = vld [vmem:[%s264 + $0x1620] sm:$0xff]
        %v1053 = vld [vmem:[%s264 + $0x1628] sm:$0xff]
        %v1054 = vld [vmem:[%s264 + $0x1630] sm:$0xff]
        %v1055 = vld [vmem:[%s264 + $0x1638] sm:$0xff]
        %v1056 = vld [vmem:[%s264 + $0x1640] sm:$0xff]
        %v1057 = vld [vmem:[%s264 + $0x1648] sm:$0xff]
        %v1058 = vld [vmem:[%s264 + $0x1650] sm:$0xff]
        %v1059 = vld [vmem:[%s264 + $0x1658] sm:$0xff]
        %v1060 = vld [vmem:[%s264 + $0x1660] sm:$0xff]
        %v1061 = vld [vmem:[%s264 + $0x1668] sm:$0xff]
        %v1062 = vld [vmem:[%s264 + $0x1670] sm:$0xff]
        %v1063 = vld [vmem:[%s264 + $0x1678] sm:$0xff]
        %v1064 = vld [vmem:[%s264 + $0x1680] sm:$0xff]
        %v1065 = vld [vmem:[%s264 + $0x1688] sm:$0xff]
        %v1066 = vld [vmem:[%s264 + $0x1690] sm:$0xff]
        %v1067 = vld [vmem:[%s264 + $0x1698] sm:$0xff]
        %v1068 = vld [vmem:[%s264 + $0x16a0] sm:$0xff]
        %v1069 = vld [vmem:[%s264 + $0x16a8] sm:$0xff]
        %v1070 = vld [vmem:[%s264 + $0x16b0] sm:$0xff]
        %v1071 = vld [vmem:[%s264 + $0x16b8] sm:$0xff]
        %v1072 = vld [vmem:[%s264 + $0x16c0] sm:$0xff]
        %v1073 = vld [vmem:[%s264 + $0x16c8] sm:$0xff]
        %v1074 = vld [vmem:[%s264 + $0x16d0] sm:$0xff]
        %v1075 = vld [vmem:[%s264 + $0x16d8] sm:$0xff]
        %v1076 = vld [vmem:[%s264 + $0x16e0] sm:$0xff]
        %v1077 = vld [vmem:[%s264 + $0x16e8] sm:$0xff]
        %v1078 = vld [vmem:[%s264 + $0x16f0] sm:$0xff]
        %v1079 = vld [vmem:[%s264 + $0x16f8] sm:$0xff]
        %v1080 = vld [vmem:[%s264 + $0x1700] sm:$0xff]
        %v1081 = vld [vmem:[%s264 + $0x1708] sm:$0xff]
        %v1082 = vld [vmem:[%s264 + $0x1710] sm:$0xff]
        %v1083 = vld [vmem:[%s264 + $0x1718] sm:$0xff]
        %v1084 = vld [vmem:[%s264 + $0x1720] sm:$0xff]
        %v1085 = vld [vmem:[%s264 + $0x1728] sm:$0xff]
        %v1086 = vld [vmem:[%s264 + $0x1730] sm:$0xff]
        %v1087 = vld [vmem:[%s264 + $0x1738] sm:$0xff]
        %v1088 = vld [vmem:[%s264 + $0x1740] sm:$0xff]
        %v1089 = vld [vmem:[%s264 + $0x1748] sm:$0xff]
        %v1090 = vld [vmem:[%s264 + $0x1750] sm:$0xff]
        %v1091 = vld [vmem:[%s264 + $0x1758] sm:$0xff]
        %v1092 = vld [vmem:[%s264 + $0x1760] sm:$0xff]
        %v1093 = vld [vmem:[%s264 + $0x1768] sm:$0xff]
        %v1094 = vld [vmem:[%s264 + $0x1770] sm:$0xff]
        %v1095 = vld [vmem:[%s264 + $0x1778] sm:$0xff]
        %v1096 = vld [vmem:[%s264 + $0x1780] sm:$0xff]
        %v1097 = vld [vmem:[%s264 + $0x1788] sm:$0xff]
        %v1098 = vld [vmem:[%s264 + $0x1790] sm:$0xff]
        %v1099 = vld [vmem:[%s264 + $0x1798] sm:$0xff]
        %v1100 = vld [vmem:[%s264 + $0x17a0] sm:$0xff]
        %v1101 = vld [vmem:[%s264 + $0x17a8] sm:$0xff]
        %v1102 = vld [vmem:[%s264 + $0x17b0] sm:$0xff]
        %v1103 = vld [vmem:[%s264 + $0x17b8] sm:$0xff]
        %v1104 = vld [vmem:[%s264 + $0x17c0] sm:$0xff]
        %v1105 = vld [vmem:[%s264 + $0x17c8] sm:$0xff]
        %v1106 = vld [vmem:[%s264 + $0x17d0] sm:$0xff]
        %v1107 = vld [vmem:[%s264 + $0x17d8] sm:$0xff]
        %v1108 = vld [vmem:[%s264 + $0x17e0] sm:$0xff]
        %v1109 = vld [vmem:[%s264 + $0x17e8] sm:$0xff]
        %v1110 = vld [vmem:[%s264 + $0x17f0] sm:$0xff]
        %v1111 = vld [vmem:[%s264 + $0x17f8] sm:$0xff]
        %v1112 = vld [vmem:[%s264 + $0x1800] sm:$0xff]
        %v1113 = vld [vmem:[%s264 + $0x1808] sm:$0xff]
        %v1114 = vld [vmem:[%s264 + $0x1810] sm:$0xff]
        %v1115 = vld [vmem:[%s264 + $0x1818] sm:$0xff]
        %v1116 = vld [vmem:[%s264 + $0x1820] sm:$0xff]
        %v1117 = vld [vmem:[%s264 + $0x1828] sm:$0xff]
        %v1118 = vld [vmem:[%s264 + $0x1830] sm:$0xff]
        %v1119 = vld [vmem:[%s264 + $0x1838] sm:$0xff]
        %v1120 = vld [vmem:[%s264 + $0x1840] sm:$0xff]
        %v1121 = vld [vmem:[%s264 + $0x1848] sm:$0xff]
        %v1122 = vld [vmem:[%s264 + $0x1850] sm:$0xff]
        %v1123 = vld [vmem:[%s264 + $0x1858] sm:$0xff]
        %v1124 = vld [vmem:[%s264 + $0x1860] sm:$0xff]
        %v1125 = vld [vmem:[%s264 + $0x1868] sm:$0xff]
        %v1126 = vld [vmem:[%s264 + $0x1870] sm:$0xff]
        %v1127 = vld [vmem:[%s264 + $0x1878] sm:$0xff]
        %v1128 = vld [vmem:[%s264 + $0x1880] sm:$0xff]
        %v1129 = vld [vmem:[%s264 + $0x1888] sm:$0xff]
        %v1130 = vld [vmem:[%s264 + $0x1890] sm:$0xff]
        %v1131 = vld [vmem:[%s264 + $0x1898] sm:$0xff]
        %v1132 = vld [vmem:[%s264 + $0x18a0] sm:$0xff]
        %v1133 = vld [vmem:[%s264 + $0x18a8] sm:$0xff]
        %v1134 = vld [vmem:[%s264 + $0x18b0] sm:$0xff]
        %v1135 = vld [vmem:[%s264 + $0x18b8] sm:$0xff]
        %v1136 = vld [vmem:[%s264 + $0x18c0] sm:$0xff]
        %v1137 = vld [vmem:[%s264 + $0x18c8] sm:$0xff]
        %v1138 = vld [vmem:[%s264 + $0x18d0] sm:$0xff]
        %v1139 = vld [vmem:[%s264 + $0x18d8] sm:$0xff]
        %v1140 = vld [vmem:[%s264 + $0x18e0] sm:$0xff]
        %v1141 = vld [vmem:[%s264 + $0x18e8] sm:$0xff]
        %v1142 = vld [vmem:[%s264 + $0x18f0] sm:$0xff]
        %v1143 = vld [vmem:[%s264 + $0x18f8] sm:$0xff]
        %v1144 = vld [vmem:[%s264 + $0x1900] sm:$0xff]
        %v1145 = vld [vmem:[%s264 + $0x1908] sm:$0xff]
        %v1146 = vld [vmem:[%s264 + $0x1910] sm:$0xff]
        %v1147 = vld [vmem:[%s264 + $0x1918] sm:$0xff]
        %v1148 = vld [vmem:[%s264 + $0x1920] sm:$0xff]
        %v1149 = vld [vmem:[%s264 + $0x1928] sm:$0xff]
        %v1150 = vld [vmem:[%s264 + $0x1930] sm:$0xff]
        %v1151 = vld [vmem:[%s264 + $0x1938] sm:$0xff]
        %v1152 = vld [vmem:[%s264 + $0x1940] sm:$0xff]
        %v1153 = vld [vmem:[%s264 + $0x1948] sm:$0xff]
        %v1154 = vld [vmem:[%s264 + $0x1950] sm:$0xff]
        %v1155 = vld [vmem:[%s264 + $0x1958] sm:$0xff]
        %v1156 = vld [vmem:[%s264 + $0x1960] sm:$0xff]
        %v1157 = vld [vmem:[%s264 + $0x1968] sm:$0xff]
        %v1158 = vld [vmem:[%s264 + $0x1970] sm:$0xff]
        %v1159 = vld [vmem:[%s264 + $0x1978] sm:$0xff]
        %v1160 = vld [vmem:[%s264 + $0x1980] sm:$0xff]
        %v1161 = vld [vmem:[%s264 + $0x1988] sm:$0xff]
        %v1162 = vld [vmem:[%s264 + $0x1990] sm:$0xff]
        %v1163 = vld [vmem:[%s264 + $0x1998] sm:$0xff]
        %v1164 = vld [vmem:[%s264 + $0x19a0] sm:$0xff]
        %v1165 = vld [vmem:[%s264 + $0x19a8] sm:$0xff]
        %v1166 = vld [vmem:[%s264 + $0x19b0] sm:$0xff]
        %v1167 = vld [vmem:[%s264 + $0x19b8] sm:$0xff]
        %v1168 = vld [vmem:[%s264 + $0x19c0] sm:$0xff]
        %v1169 = vld [vmem:[%s264 + $0x19c8] sm:$0xff]
        %v1170 = vld [vmem:[%s264 + $0x19d0] sm:$0xff]
        %v1171 = vld [vmem:[%s264 + $0x19d8] sm:$0xff]
        %v1172 = vld [vmem:[%s264 + $0x19e0] sm:$0xff]
        %v1173 = vld [vmem:[%s264 + $0x19e8] sm:$0xff]
        %v1174 = vld [vmem:[%s264 + $0x19f0] sm:$0xff]
        %v1175 = vld [vmem:[%s264 + $0x19f8] sm:$0xff]
        %v1176 = vld [vmem:[%s264 + $0x1a00] sm:$0xff]
        %v1177 = vld [vmem:[%s264 + $0x1a08] sm:$0xff]
        %v1178 = vld [vmem:[%s264 + $0x1a10] sm:$0xff]
        %v1179 = vld [vmem:[%s264 + $0x1a18] sm:$0xff]
        %v1180 = vld [vmem:[%s264 + $0x1a20] sm:$0xff]
        %v1181 = vld [vmem:[%s264 + $0x1a28] sm:$0xff]
        %v1182 = vld [vmem:[%s264 + $0x1a30] sm:$0xff]
        %v1183 = vld [vmem:[%s264 + $0x1a38] sm:$0xff]
        %v1184 = vld [vmem:[%s264 + $0x1a40] sm:$0xff]
        %v1185 = vld [vmem:[%s264 + $0x1a48] sm:$0xff]
        %v1186 = vld [vmem:[%s264 + $0x1a50] sm:$0xff]
        %v1187 = vld [vmem:[%s264 + $0x1a58] sm:$0xff]
        %v1188 = vld [vmem:[%s264 + $0x1a60] sm:$0xff]
        %v1189 = vld [vmem:[%s264 + $0x1a68] sm:$0xff]
        %v1190 = vld [vmem:[%s264 + $0x1a70] sm:$0xff]
        %v1191 = vld [vmem:[%s264 + $0x1a78] sm:$0xff]
        %v1192 = vld [vmem:[%s264 + $0x1a80] sm:$0xff]
        %v1193 = vld [vmem:[%s264 + $0x1a88] sm:$0xff]
        %v1194 = vld [vmem:[%s264 + $0x1a90] sm:$0xff]
        %v1195 = vld [vmem:[%s264 + $0x1a98] sm:$0xff]
        %v1196 = vld [vmem:[%s264 + $0x1aa0] sm:$0xff]
        %v1197 = vld [vmem:[%s264 + $0x1aa8] sm:$0xff]
        %v1198 = vld [vmem:[%s264 + $0x1ab0] sm:$0xff]
        %v1199 = vld [vmem:[%s264 + $0x1ab8] sm:$0xff]
        %v1200 = vld [vmem:[%s264 + $0x1ac0] sm:$0xff]
        %v1201 = vld [vmem:[%s264 + $0x1ac8] sm:$0xff]
        %v1202 = vld [vmem:[%s264 + $0x1ad0] sm:$0xff]
        %v1203 = vld [vmem:[%s264 + $0x1ad8] sm:$0xff]
        %v1204 = vld [vmem:[%s264 + $0x1ae0] sm:$0xff]
        %v1205 = vld [vmem:[%s264 + $0x1ae8] sm:$0xff]
        %v1206 = vld [vmem:[%s264 + $0x1af0] sm:$0xff]
        %v1207 = vld [vmem:[%s264 + $0x1af8] sm:$0xff]
        %v1208 = vld [vmem:[%s264 + $0x1b00] sm:$0xff]
        %v1209 = vld [vmem:[%s264 + $0x1b08] sm:$0xff]
        %v1210 = vld [vmem:[%s264 + $0x1b10] sm:$0xff]
        %v1211 = vld [vmem:[%s264 + $0x1b18] sm:$0xff]
        %v1212 = vld [vmem:[%s264 + $0x1b20] sm:$0xff]
        %v1213 = vld [vmem:[%s264 + $0x1b28] sm:$0xff]
        %v1214 = vld [vmem:[%s264 + $0x1b30] sm:$0xff]
        %v1215 = vld [vmem:[%s264 + $0x1b38] sm:$0xff]
        %v1216 = vld [vmem:[%s264 + $0x1b40] sm:$0xff]
        %v1217 = vld [vmem:[%s264 + $0x1b48] sm:$0xff]
        %v1218 = vld [vmem:[%s264 + $0x1b50] sm:$0xff]
        %v1219 = vld [vmem:[%s264 + $0x1b58] sm:$0xff]
        %v1220 = vld [vmem:[%s264 + $0x1b60] sm:$0xff]
        %v1221 = vld [vmem:[%s264 + $0x1b68] sm:$0xff]
        %v1222 = vld [vmem:[%s264 + $0x1b70] sm:$0xff]
        %v1223 = vld [vmem:[%s264 + $0x1b78] sm:$0xff]
        %v1224 = vld [vmem:[%s264 + $0x1b80] sm:$0xff]
        %v1225 = vld [vmem:[%s264 + $0x1b88] sm:$0xff]
        %v1226 = vld [vmem:[%s264 + $0x1b90] sm:$0xff]
        %v1227 = vld [vmem:[%s264 + $0x1b98] sm:$0xff]
        %v1228 = vld [vmem:[%s264 + $0x1ba0] sm:$0xff]
        %v1229 = vld [vmem:[%s264 + $0x1ba8] sm:$0xff]
        %v1230 = vld [vmem:[%s264 + $0x1bb0] sm:$0xff]
        %v1231 = vld [vmem:[%s264 + $0x1bb8] sm:$0xff]
        %v1232 = vld [vmem:[%s264 + $0x1bc0] sm:$0xff]
        %v1233 = vld [vmem:[%s264 + $0x1bc8] sm:$0xff]
        %v1234 = vld [vmem:[%s264 + $0x1bd0] sm:$0xff]
        %v1235 = vld [vmem:[%s264 + $0x1bd8] sm:$0xff]
        %v1236 = vld [vmem:[%s264 + $0x1be0] sm:$0xff]
        %v1237 = vld [vmem:[%s264 + $0x1be8] sm:$0xff]
        %v1238 = vld [vmem:[%s264 + $0x1bf0] sm:$0xff]
        %v1239 = vld [vmem:[%s264 + $0x1bf8] sm:$0xff]
        %v1240 = vld [vmem:[%s264 + $0x1c00] sm:$0xff]
        %v1241 = vld [vmem:[%s264 + $0x1c08] sm:$0xff]
        %v1242 = vld [vmem:[%s264 + $0x1c10] sm:$0xff]
        %v1243 = vld [vmem:[%s264 + $0x1c18] sm:$0xff]
        %v1244 = vld [vmem:[%s264 + $0x1c20] sm:$0xff]
        %v1245 = vld [vmem:[%s264 + $0x1c28] sm:$0xff]
        %v1246 = vld [vmem:[%s264 + $0x1c30] sm:$0xff]
        %v1247 = vld [vmem:[%s264 + $0x1c38] sm:$0xff]
        %v1248 = vld [vmem:[%s264 + $0x1c40] sm:$0xff]
        %v1249 = vld [vmem:[%s264 + $0x1c48] sm:$0xff]
        %v1250 = vld [vmem:[%s264 + $0x1c50] sm:$0xff]
        %v1251 = vld [vmem:[%s264 + $0x1c58] sm:$0xff]
        %v1252 = vld [vmem:[%s264 + $0x1c60] sm:$0xff]
        %v1253 = vld [vmem:[%s264 + $0x1c68] sm:$0xff]
        %v1254 = vld [vmem:[%s264 + $0x1c70] sm:$0xff]
        %v1255 = vld [vmem:[%s264 + $0x1c78] sm:$0xff]
        %v1256 = vld [vmem:[%s264 + $0x1c80] sm:$0xff]
        %v1257 = vld [vmem:[%s264 + $0x1c88] sm:$0xff]
        %v1258 = vld [vmem:[%s264 + $0x1c90] sm:$0xff]
        %v1259 = vld [vmem:[%s264 + $0x1c98] sm:$0xff]
        %v1260 = vld [vmem:[%s264 + $0x1ca0] sm:$0xff]
        %v1261 = vld [vmem:[%s264 + $0x1ca8] sm:$0xff]
        %v1262 = vld [vmem:[%s264 + $0x1cb0] sm:$0xff]
        %v1263 = vld [vmem:[%s264 + $0x1cb8] sm:$0xff]
        %v1264 = vld [vmem:[%s264 + $0x1cc0] sm:$0xff]
        %v1265 = vld [vmem:[%s264 + $0x1cc8] sm:$0xff]
        %v1266 = vld [vmem:[%s264 + $0x1cd0] sm:$0xff]
        %v1267 = vld [vmem:[%s264 + $0x1cd8] sm:$0xff]
        %v1268 = vld [vmem:[%s264 + $0x1ce0] sm:$0xff]
        %v1269 = vld [vmem:[%s264 + $0x1ce8] sm:$0xff]
        %v1270 = vld [vmem:[%s264 + $0x1cf0] sm:$0xff]
        %v1271 = vld [vmem:[%s264 + $0x1cf8] sm:$0xff]
        %v1272 = vld [vmem:[%s264 + $0x1d00] sm:$0xff]
        %v1273 = vld [vmem:[%s264 + $0x1d08] sm:$0xff]
        %v1274 = vld [vmem:[%s264 + $0x1d10] sm:$0xff]
        %v1275 = vld [vmem:[%s264 + $0x1d18] sm:$0xff]
        %v1276 = vld [vmem:[%s264 + $0x1d20] sm:$0xff]
        %v1277 = vld [vmem:[%s264 + $0x1d28] sm:$0xff]
        %v1278 = vld [vmem:[%s264 + $0x1d30] sm:$0xff]
        %v1279 = vld [vmem:[%s264 + $0x1d38] sm:$0xff]
        %v1280 = vld [vmem:[%s264 + $0x1d40] sm:$0xff]
        %v1281 = vld [vmem:[%s264 + $0x1d48] sm:$0xff]
        %v1282 = vld [vmem:[%s264 + $0x1d50] sm:$0xff]
        %v1283 = vld [vmem:[%s264 + $0x1d58] sm:$0xff]
        %v1284 = vld [vmem:[%s264 + $0x1d60] sm:$0xff]
        %v1285 = vld [vmem:[%s264 + $0x1d68] sm:$0xff]
        %v1286 = vld [vmem:[%s264 + $0x1d70] sm:$0xff]
        %v1287 = vld [vmem:[%s264 + $0x1d78] sm:$0xff]
        %v1288 = vld [vmem:[%s264 + $0x1d80] sm:$0xff]
        %v1289 = vld [vmem:[%s264 + $0x1d88] sm:$0xff]
        %v1290 = vld [vmem:[%s264 + $0x1d90] sm:$0xff]
        %v1291 = vld [vmem:[%s264 + $0x1d98] sm:$0xff]
        %v1292 = vld [vmem:[%s264 + $0x1da0] sm:$0xff]
        %v1293 = vld [vmem:[%s264 + $0x1da8] sm:$0xff]
        %v1294 = vld [vmem:[%s264 + $0x1db0] sm:$0xff]
        %v1295 = vld [vmem:[%s264 + $0x1db8] sm:$0xff]
        %v1296 = vld [vmem:[%s264 + $0x1dc0] sm:$0xff]
        %v1297 = vld [vmem:[%s264 + $0x1dc8] sm:$0xff]
        %v1298 = vld [vmem:[%s264 + $0x1dd0] sm:$0xff]
        %v1299 = vld [vmem:[%s264 + $0x1dd8] sm:$0xff]
        %v1300 = vld [vmem:[%s264 + $0x1de0] sm:$0xff]
        %v1301 = vld [vmem:[%s264 + $0x1de8] sm:$0xff]
        %v1302 = vld [vmem:[%s264 + $0x1df0] sm:$0xff]
        %v1303 = vld [vmem:[%s264 + $0x1df8] sm:$0xff]
        %v1304 = vld [vmem:[%s264 + $0x1e00] sm:$0xff]
        %v1305 = vld [vmem:[%s264 + $0x1e08] sm:$0xff]
        %v1306 = vld [vmem:[%s264 + $0x1e10] sm:$0xff]
        %v1307 = vld [vmem:[%s264 + $0x1e18] sm:$0xff]
        %v1308 = vld [vmem:[%s264 + $0x1e20] sm:$0xff]
        %v1309 = vld [vmem:[%s264 + $0x1e28] sm:$0xff]
        %v1310 = vld [vmem:[%s264 + $0x1e30] sm:$0xff]
        %v1311 = vld [vmem:[%s264 + $0x1e38] sm:$0xff]
        %v1312 = vld [vmem:[%s264 + $0x1e40] sm:$0xff]
        %v1313 = vld [vmem:[%s264 + $0x1e48] sm:$0xff]
        %v1314 = vld [vmem:[%s264 + $0x1e50] sm:$0xff]
        %v1315 = vld [vmem:[%s264 + $0x1e58] sm:$0xff]
        %v1316 = vld [vmem:[%s264 + $0x1e60] sm:$0xff]
        %v1317 = vld [vmem:[%s264 + $0x1e68] sm:$0xff]
        %v1318 = vld [vmem:[%s264 + $0x1e70] sm:$0xff]
        %v1319 = vld [vmem:[%s264 + $0x1e78] sm:$0xff]
        %v1320 = vld [vmem:[%s264 + $0x1e80] sm:$0xff]
        %v1321 = vld [vmem:[%s264 + $0x1e88] sm:$0xff]
        %v1322 = vld [vmem:[%s264 + $0x1e90] sm:$0xff]
        %v1323 = vld [vmem:[%s264 + $0x1e98] sm:$0xff]
        %v1324 = vld [vmem:[%s264 + $0x1ea0] sm:$0xff]
        %v1325 = vld [vmem:[%s264 + $0x1ea8] sm:$0xff]
        %v1326 = vld [vmem:[%s264 + $0x1eb0] sm:$0xff]
        %v1327 = vld [vmem:[%s264 + $0x1eb8] sm:$0xff]
        %v1328 = vld [vmem:[%s264 + $0x1ec0] sm:$0xff]
        %v1329 = vld [vmem:[%s264 + $0x1ec8] sm:$0xff]
        %v1330 = vld [vmem:[%s264 + $0x1ed0] sm:$0xff]
        %v1331 = vld [vmem:[%s264 + $0x1ed8] sm:$0xff]
        %v1332 = vld [vmem:[%s264 + $0x1ee0] sm:$0xff]
        %v1333 = vld [vmem:[%s264 + $0x1ee8] sm:$0xff]
        %v1334 = vld [vmem:[%s264 + $0x1ef0] sm:$0xff]
        %v1335 = vld [vmem:[%s264 + $0x1ef8] sm:$0xff]
        %v1336 = vld [vmem:[%s264 + $0x1f00] sm:$0xff]
        %v1337 = vld [vmem:[%s264 + $0x1f08] sm:$0xff]
        %v1338 = vld [vmem:[%s264 + $0x1f10] sm:$0xff]
        %v1339 = vld [vmem:[%s264 + $0x1f18] sm:$0xff]
        %v1340 = vld [vmem:[%s264 + $0x1f20] sm:$0xff]
        %v1341 = vld [vmem:[%s264 + $0x1f28] sm:$0xff]
        %v1342 = vld [vmem:[%s264 + $0x1f30] sm:$0xff]
        %v1343 = vld [vmem:[%s264 + $0x1f38] sm:$0xff]
        %v1344 = vld [vmem:[%s264 + $0x1f40] sm:$0xff]
        %v1345 = vld [vmem:[%s264 + $0x1f48] sm:$0xff]
        %v1346 = vld [vmem:[%s264 + $0x1f50] sm:$0xff]
        %v1347 = vld [vmem:[%s264 + $0x1f58] sm:$0xff]
        %v1348 = vld [vmem:[%s264 + $0x1f60] sm:$0xff]
        %v1349 = vld [vmem:[%s264 + $0x1f68] sm:$0xff]
        %v1350 = vld [vmem:[%s264 + $0x1f70] sm:$0xff]
        %v1351 = vld [vmem:[%s264 + $0x1f78] sm:$0xff]
        %v1352 = vld [vmem:[%s264 + $0x1f80] sm:$0xff]
        %v1353 = vld [vmem:[%s264 + $0x1f88] sm:$0xff]
        %v1354 = vld [vmem:[%s264 + $0x1f90] sm:$0xff]
        %v1355 = vld [vmem:[%s264 + $0x1f98] sm:$0xff]
        %v1356 = vld [vmem:[%s264 + $0x1fa0] sm:$0xff]
        %v1357 = vld [vmem:[%s264 + $0x1fa8] sm:$0xff]
        %v1358 = vld [vmem:[%s264 + $0x1fb0] sm:$0xff]
        %v1359 = vld [vmem:[%s264 + $0x1fb8] sm:$0xff]
        %v1360 = vld [vmem:[%s264 + $0x1fc0] sm:$0xff]
        %v1361 = vld [vmem:[%s264 + $0x1fc8] sm:$0xff]
        %v1362 = vld [vmem:[%s264 + $0x1fd0] sm:$0xff]
        %v1363 = vld [vmem:[%s264 + $0x1fd8] sm:$0xff]
        %v1364 = vld [vmem:[%s264 + $0x1fe0] sm:$0xff]
        %v1365 = vld [vmem:[%s264 + $0x1fe8] sm:$0xff]
        %v1366 = vld [vmem:[%s264 + $0x1ff0] sm:$0xff]
        %v1367 = vld [vmem:[%s264 + $0x1ff8] sm:$0xff]
        %v1368 = vld [vmem:[%s273] sm:$0xff]
        %v1370 = vlaneseq
        %v1371 = vshrl.u32 %v1370, 7
        %v1372 = vsub.s32 0, %v1371
        %v1373 = vrot.slane %v1368, %v1372
        %v1374 = vlaneseq
        %v1375 = vshrl.u32 %v1374, 7
        %v1376 = vsub.s32 1, %v1375
        %v1377 = vrot.slane %v1368, %v1376
        %v1378 = vlaneseq
        %v1379 = vshrl.u32 %v1378, 7
        %v1380 = vsub.s32 2, %v1379
        %v1381 = vrot.slane %v1368, %v1380
        %v1382 = vlaneseq
        %v1383 = vshrl.u32 %v1382, 7
        %v1384 = vsub.s32 3, %v1383
        %v1385 = vrot.slane %v1368, %v1384
        %v1386 = vlaneseq
        %v1387 = vshrl.u32 %v1386, 7
        %v1388 = vsub.s32 4, %v1387
        %v1389 = vrot.slane %v1368, %v1388
        %v1390 = vlaneseq
        %v1391 = vshrl.u32 %v1390, 7
        %v1392 = vsub.s32 5, %v1391
        %v1393 = vrot.slane %v1368, %v1392
        %v1394 = vlaneseq
        %v1395 = vshrl.u32 %v1394, 7
        %v1396 = vsub.s32 6, %v1395
        %v1397 = vrot.slane %v1368, %v1396
        %v1398 = vlaneseq
        %v1399 = vshrl.u32 %v1398, 7
        %v1400 = vsub.s32 7, %v1399
        %v1401 = vrot.slane %v1368, %v1400
        %v1426 = vunpack.c.l.b16 %v328
        %v1427 = vunpack.c.h.b16 %v328
        %v1428 = vunpack.c.l.b16 %v329
        %v1429 = vunpack.c.h.b16 %v329
        %v1430 = vunpack.c.l.b16 %v330
        %v1431 = vunpack.c.h.b16 %v330
        %v1432 = vunpack.c.l.b16 %v331
        %v1433 = vunpack.c.h.b16 %v331
        %v1434 = vunpack.c.l.b16 %v332
        %v1435 = vunpack.c.h.b16 %v332
        %v1436 = vunpack.c.l.b16 %v333
        %v1437 = vunpack.c.h.b16 %v333
        %v1438 = vunpack.c.l.b16 %v334
        %v1439 = vunpack.c.h.b16 %v334
        %v1440 = vunpack.c.l.b16 %v335
        %v1441 = vunpack.c.h.b16 %v335
        %v1442 = vunpack.c.l.b16 %v336
        %v1443 = vunpack.c.h.b16 %v336
        %v1444 = vunpack.c.l.b16 %v337
        %v1445 = vunpack.c.h.b16 %v337
        %v1446 = vunpack.c.l.b16 %v338
        %v1447 = vunpack.c.h.b16 %v338
        %v1448 = vunpack.c.l.b16 %v339
        %v1449 = vunpack.c.h.b16 %v339
        %v1450 = vunpack.c.l.b16 %v340
        %v1451 = vunpack.c.h.b16 %v340
        %v1452 = vunpack.c.l.b16 %v341
        %v1453 = vunpack.c.h.b16 %v341
        %v1454 = vunpack.c.l.b16 %v342
        %v1455 = vunpack.c.h.b16 %v342
        %v1456 = vunpack.c.l.b16 %v343
        %v1457 = vunpack.c.h.b16 %v343
        %v1458 = vpack.c.b16 %v1442, %v1426
        %v1459 = vpack.c.b16 %v1443, %v1427
        %v1460 = vpack.c.b16 %v1444, %v1428
        %v1461 = vpack.c.b16 %v1445, %v1429
        %v1462 = vpack.c.b16 %v1446, %v1430
        %v1463 = vpack.c.b16 %v1447, %v1431
        %v1464 = vpack.c.b16 %v1448, %v1432
        %v1465 = vpack.c.b16 %v1449, %v1433
        %v1466 = vpack.c.b16 %v1450, %v1434
        %v1467 = vpack.c.b16 %v1451, %v1435
        %v1468 = vpack.c.b16 %v1452, %v1436
        %v1469 = vpack.c.b16 %v1453, %v1437
        %v1470 = vpack.c.b16 %v1454, %v1438
        %v1471 = vpack.c.b16 %v1455, %v1439
        %v1472 = vpack.c.b16 %v1456, %v1440
        %v1473 = vpack.c.b16 %v1457, %v1441
        %v2514 = vunpack.c.l.b16 %v344
        %v2515 = vunpack.c.h.b16 %v344
        %v2516 = vunpack.c.l.b16 %v345
        %v2517 = vunpack.c.h.b16 %v345
        %v2518 = vunpack.c.l.b16 %v346
        %v2519 = vunpack.c.h.b16 %v346
        %v2520 = vunpack.c.l.b16 %v347
        %v2521 = vunpack.c.h.b16 %v347
        %v2522 = vunpack.c.l.b16 %v348
        %v2523 = vunpack.c.h.b16 %v348
        %v2524 = vunpack.c.l.b16 %v349
        %v2525 = vunpack.c.h.b16 %v349
        %v2526 = vunpack.c.l.b16 %v350
        %v2527 = vunpack.c.h.b16 %v350
        %v2528 = vunpack.c.l.b16 %v351
        %v2529 = vunpack.c.h.b16 %v351
        %v2530 = vunpack.c.l.b16 %v352
        %v2531 = vunpack.c.h.b16 %v352
        %v2532 = vunpack.c.l.b16 %v353
        %v2533 = vunpack.c.h.b16 %v353
        %v2534 = vunpack.c.l.b16 %v354
        %v2535 = vunpack.c.h.b16 %v354
        %v2536 = vunpack.c.l.b16 %v355
        %v2537 = vunpack.c.h.b16 %v355
        %v2538 = vunpack.c.l.b16 %v356
        %v2539 = vunpack.c.h.b16 %v356
        %v2540 = vunpack.c.l.b16 %v357
        %v2541 = vunpack.c.h.b16 %v357
        %v2542 = vunpack.c.l.b16 %v358
        %v2543 = vunpack.c.h.b16 %v358
        %v2544 = vunpack.c.l.b16 %v359
        %v2545 = vunpack.c.h.b16 %v359
        %v2546 = vunpack.c.l.b16 %v360
        %v2547 = vunpack.c.h.b16 %v360
        %v2548 = vunpack.c.l.b16 %v361
        %v2549 = vunpack.c.h.b16 %v361
        %v2550 = vunpack.c.l.b16 %v362
        %v2551 = vunpack.c.h.b16 %v362
        %v2552 = vunpack.c.l.b16 %v363
        %v2553 = vunpack.c.h.b16 %v363
        %v2554 = vunpack.c.l.b16 %v364
        %v2555 = vunpack.c.h.b16 %v364
        %v2556 = vunpack.c.l.b16 %v365
        %v2557 = vunpack.c.h.b16 %v365
        %v2558 = vunpack.c.l.b16 %v366
        %v2559 = vunpack.c.h.b16 %v366
        %v2560 = vunpack.c.l.b16 %v367
        %v2561 = vunpack.c.h.b16 %v367
        %v2562 = vunpack.c.l.b16 %v368
        %v2563 = vunpack.c.h.b16 %v368
        %v2564 = vunpack.c.l.b16 %v369
        %v2565 = vunpack.c.h.b16 %v369
        %v2566 = vunpack.c.l.b16 %v370
        %v2567 = vunpack.c.h.b16 %v370
        %v2568 = vunpack.c.l.b16 %v371
        %v2569 = vunpack.c.h.b16 %v371
        %v2570 = vunpack.c.l.b16 %v372
        %v2571 = vunpack.c.h.b16 %v372
        %v2572 = vunpack.c.l.b16 %v373
        %v2573 = vunpack.c.h.b16 %v373
        %v2574 = vunpack.c.l.b16 %v374
        %v2575 = vunpack.c.h.b16 %v374
        %v2576 = vunpack.c.l.b16 %v375
        %v2577 = vunpack.c.h.b16 %v375
        %v2578 = vunpack.c.l.b16 %v376
        %v2579 = vunpack.c.h.b16 %v376
        %v2580 = vunpack.c.l.b16 %v377
        %v2581 = vunpack.c.h.b16 %v377
        %v2582 = vunpack.c.l.b16 %v378
        %v2583 = vunpack.c.h.b16 %v378
        %v2584 = vunpack.c.l.b16 %v379
        %v2585 = vunpack.c.h.b16 %v379
        %v2586 = vunpack.c.l.b16 %v380
        %v2587 = vunpack.c.h.b16 %v380
        %v2588 = vunpack.c.l.b16 %v381
        %v2589 = vunpack.c.h.b16 %v381
        %v2590 = vunpack.c.l.b16 %v382
        %v2591 = vunpack.c.h.b16 %v382
        %v2592 = vunpack.c.l.b16 %v383
        %v2593 = vunpack.c.h.b16 %v383
        %v2594 = vunpack.c.l.b16 %v384
        %v2595 = vunpack.c.h.b16 %v384
        %v2596 = vunpack.c.l.b16 %v385
        %v2597 = vunpack.c.h.b16 %v385
        %v2598 = vunpack.c.l.b16 %v386
        %v2599 = vunpack.c.h.b16 %v386
        %v2600 = vunpack.c.l.b16 %v387
        %v2601 = vunpack.c.h.b16 %v387
        %v2602 = vunpack.c.l.b16 %v388
        %v2603 = vunpack.c.h.b16 %v388
        %v2604 = vunpack.c.l.b16 %v389
        %v2605 = vunpack.c.h.b16 %v389
        %v2606 = vunpack.c.l.b16 %v390
        %v2607 = vunpack.c.h.b16 %v390
        %v2608 = vunpack.c.l.b16 %v391
        %v2609 = vunpack.c.h.b16 %v391
        %v2610 = vunpack.c.l.b16 %v392
        %v2611 = vunpack.c.h.b16 %v392
        %v2612 = vunpack.c.l.b16 %v393
        %v2613 = vunpack.c.h.b16 %v393
        %v2614 = vunpack.c.l.b16 %v394
        %v2615 = vunpack.c.h.b16 %v394
        %v2616 = vunpack.c.l.b16 %v395
        %v2617 = vunpack.c.h.b16 %v395
        %v2618 = vunpack.c.l.b16 %v396
        %v2619 = vunpack.c.h.b16 %v396
        %v2620 = vunpack.c.l.b16 %v397
        %v2621 = vunpack.c.h.b16 %v397
        %v2622 = vunpack.c.l.b16 %v398
        %v2623 = vunpack.c.h.b16 %v398
        %v2624 = vunpack.c.l.b16 %v399
        %v2625 = vunpack.c.h.b16 %v399
        %v2626 = vunpack.c.l.b16 %v400
        %v2627 = vunpack.c.h.b16 %v400
        %v2628 = vunpack.c.l.b16 %v401
        %v2629 = vunpack.c.h.b16 %v401
        %v2630 = vunpack.c.l.b16 %v402
        %v2631 = vunpack.c.h.b16 %v402
        %v2632 = vunpack.c.l.b16 %v403
        %v2633 = vunpack.c.h.b16 %v403
        %v2634 = vunpack.c.l.b16 %v404
        %v2635 = vunpack.c.h.b16 %v404
        %v2636 = vunpack.c.l.b16 %v405
        %v2637 = vunpack.c.h.b16 %v405
        %v2638 = vunpack.c.l.b16 %v406
        %v2639 = vunpack.c.h.b16 %v406
        %v2640 = vunpack.c.l.b16 %v407
        %v2641 = vunpack.c.h.b16 %v407
        %v2642 = vunpack.c.l.b16 %v408
        %v2643 = vunpack.c.h.b16 %v408
        %v2644 = vunpack.c.l.b16 %v409
        %v2645 = vunpack.c.h.b16 %v409
        %v2646 = vunpack.c.l.b16 %v410
        %v2647 = vunpack.c.h.b16 %v410
        %v2648 = vunpack.c.l.b16 %v411
        %v2649 = vunpack.c.h.b16 %v411
        %v2650 = vunpack.c.l.b16 %v412
        %v2651 = vunpack.c.h.b16 %v412
        %v2652 = vunpack.c.l.b16 %v413
        %v2653 = vunpack.c.h.b16 %v413
        %v2654 = vunpack.c.l.b16 %v414
        %v2655 = vunpack.c.h.b16 %v414
        %v2656 = vunpack.c.l.b16 %v415
        %v2657 = vunpack.c.h.b16 %v415
        %v2658 = vunpack.c.l.b16 %v416
        %v2659 = vunpack.c.h.b16 %v416
        %v2660 = vunpack.c.l.b16 %v417
        %v2661 = vunpack.c.h.b16 %v417
        %v2662 = vunpack.c.l.b16 %v418
        %v2663 = vunpack.c.h.b16 %v418
        %v2664 = vunpack.c.l.b16 %v419
        %v2665 = vunpack.c.h.b16 %v419
        %v2666 = vunpack.c.l.b16 %v420
        %v2667 = vunpack.c.h.b16 %v420
        %v2668 = vunpack.c.l.b16 %v421
        %v2669 = vunpack.c.h.b16 %v421
        %v2670 = vunpack.c.l.b16 %v422
        %v2671 = vunpack.c.h.b16 %v422
        %v2672 = vunpack.c.l.b16 %v423
        %v2673 = vunpack.c.h.b16 %v423
        %v2674 = vunpack.c.l.b16 %v424
        %v2675 = vunpack.c.h.b16 %v424
        %v2676 = vunpack.c.l.b16 %v425
        %v2677 = vunpack.c.h.b16 %v425
        %v2678 = vunpack.c.l.b16 %v426
        %v2679 = vunpack.c.h.b16 %v426
        %v2680 = vunpack.c.l.b16 %v427
        %v2681 = vunpack.c.h.b16 %v427
        %v2682 = vunpack.c.l.b16 %v428
        %v2683 = vunpack.c.h.b16 %v428
        %v2684 = vunpack.c.l.b16 %v429
        %v2685 = vunpack.c.h.b16 %v429
        %v2686 = vunpack.c.l.b16 %v430
        %v2687 = vunpack.c.h.b16 %v430
        %v2688 = vunpack.c.l.b16 %v431
        %v2689 = vunpack.c.h.b16 %v431
        %v2690 = vunpack.c.l.b16 %v432
        %v2691 = vunpack.c.h.b16 %v432
        %v2692 = vunpack.c.l.b16 %v433
        %v2693 = vunpack.c.h.b16 %v433
        %v2694 = vunpack.c.l.b16 %v434
        %v2695 = vunpack.c.h.b16 %v434
        %v2696 = vunpack.c.l.b16 %v435
        %v2697 = vunpack.c.h.b16 %v435
        %v2698 = vunpack.c.l.b16 %v436
        %v2699 = vunpack.c.h.b16 %v436
        %v2700 = vunpack.c.l.b16 %v437
        %v2701 = vunpack.c.h.b16 %v437
        %v2702 = vunpack.c.l.b16 %v438
        %v2703 = vunpack.c.h.b16 %v438
        %v2704 = vunpack.c.l.b16 %v439
        %v2705 = vunpack.c.h.b16 %v439
        %v2706 = vunpack.c.l.b16 %v440
        %v2707 = vunpack.c.h.b16 %v440
        %v2708 = vunpack.c.l.b16 %v441
        %v2709 = vunpack.c.h.b16 %v441
        %v2710 = vunpack.c.l.b16 %v442
        %v2711 = vunpack.c.h.b16 %v442
        %v2712 = vunpack.c.l.b16 %v443
        %v2713 = vunpack.c.h.b16 %v443
        %v2714 = vunpack.c.l.b16 %v444
        %v2715 = vunpack.c.h.b16 %v444
        %v2716 = vunpack.c.l.b16 %v445
        %v2717 = vunpack.c.h.b16 %v445
        %v2718 = vunpack.c.l.b16 %v446
        %v2719 = vunpack.c.h.b16 %v446
        %v2720 = vunpack.c.l.b16 %v447
        %v2721 = vunpack.c.h.b16 %v447
        %v2722 = vunpack.c.l.b16 %v448
        %v2723 = vunpack.c.h.b16 %v448
        %v2724 = vunpack.c.l.b16 %v449
        %v2725 = vunpack.c.h.b16 %v449
        %v2726 = vunpack.c.l.b16 %v450
        %v2727 = vunpack.c.h.b16 %v450
        %v2728 = vunpack.c.l.b16 %v451
        %v2729 = vunpack.c.h.b16 %v451
        %v2730 = vunpack.c.l.b16 %v452
        %v2731 = vunpack.c.h.b16 %v452
        %v2732 = vunpack.c.l.b16 %v453
        %v2733 = vunpack.c.h.b16 %v453
        %v2734 = vunpack.c.l.b16 %v454
        %v2735 = vunpack.c.h.b16 %v454
        %v2736 = vunpack.c.l.b16 %v455
        %v2737 = vunpack.c.h.b16 %v455
        %v2738 = vunpack.c.l.b16 %v456
        %v2739 = vunpack.c.h.b16 %v456
        %v2740 = vunpack.c.l.b16 %v457
        %v2741 = vunpack.c.h.b16 %v457
        %v2742 = vunpack.c.l.b16 %v458
        %v2743 = vunpack.c.h.b16 %v458
        %v2744 = vunpack.c.l.b16 %v459
        %v2745 = vunpack.c.h.b16 %v459
        %v2746 = vunpack.c.l.b16 %v460
        %v2747 = vunpack.c.h.b16 %v460
        %v2748 = vunpack.c.l.b16 %v461
        %v2749 = vunpack.c.h.b16 %v461
        %v2750 = vunpack.c.l.b16 %v462
        %v2751 = vunpack.c.h.b16 %v462
        %v2752 = vunpack.c.l.b16 %v463
        %v2753 = vunpack.c.h.b16 %v463
        %v2754 = vunpack.c.l.b16 %v464
        %v2755 = vunpack.c.h.b16 %v464
        %v2756 = vunpack.c.l.b16 %v465
        %v2757 = vunpack.c.h.b16 %v465
        %v2758 = vunpack.c.l.b16 %v466
        %v2759 = vunpack.c.h.b16 %v466
        %v2760 = vunpack.c.l.b16 %v467
        %v2761 = vunpack.c.h.b16 %v467
        %v2762 = vunpack.c.l.b16 %v468
        %v2763 = vunpack.c.h.b16 %v468
        %v2764 = vunpack.c.l.b16 %v469
        %v2765 = vunpack.c.h.b16 %v469
        %v2766 = vunpack.c.l.b16 %v470
        %v2767 = vunpack.c.h.b16 %v470
        %v2768 = vunpack.c.l.b16 %v471
        %v2769 = vunpack.c.h.b16 %v471
        %v2770 = vunpack.c.l.b16 %v472
        %v2771 = vunpack.c.h.b16 %v472
        %v2772 = vunpack.c.l.b16 %v473
        %v2773 = vunpack.c.h.b16 %v473
        %v2774 = vunpack.c.l.b16 %v474
        %v2775 = vunpack.c.h.b16 %v474
        %v2776 = vunpack.c.l.b16 %v475
        %v2777 = vunpack.c.h.b16 %v475
        %v2778 = vunpack.c.l.b16 %v476
        %v2779 = vunpack.c.h.b16 %v476
        %v2780 = vunpack.c.l.b16 %v477
        %v2781 = vunpack.c.h.b16 %v477
        %v2782 = vunpack.c.l.b16 %v478
        %v2783 = vunpack.c.h.b16 %v478
        %v2784 = vunpack.c.l.b16 %v479
        %v2785 = vunpack.c.h.b16 %v479
        %v2786 = vunpack.c.l.b16 %v480
        %v2787 = vunpack.c.h.b16 %v480
        %v2788 = vunpack.c.l.b16 %v481
        %v2789 = vunpack.c.h.b16 %v481
        %v2790 = vunpack.c.l.b16 %v482
        %v2791 = vunpack.c.h.b16 %v482
        %v2792 = vunpack.c.l.b16 %v483
        %v2793 = vunpack.c.h.b16 %v483
        %v2794 = vunpack.c.l.b16 %v484
        %v2795 = vunpack.c.h.b16 %v484
        %v2796 = vunpack.c.l.b16 %v485
        %v2797 = vunpack.c.h.b16 %v485
        %v2798 = vunpack.c.l.b16 %v486
        %v2799 = vunpack.c.h.b16 %v486
        %v2800 = vunpack.c.l.b16 %v487
        %v2801 = vunpack.c.h.b16 %v487
        %v2802 = vunpack.c.l.b16 %v488
        %v2803 = vunpack.c.h.b16 %v488
        %v2804 = vunpack.c.l.b16 %v489
        %v2805 = vunpack.c.h.b16 %v489
        %v2806 = vunpack.c.l.b16 %v490
        %v2807 = vunpack.c.h.b16 %v490
        %v2808 = vunpack.c.l.b16 %v491
        %v2809 = vunpack.c.h.b16 %v491
        %v2810 = vunpack.c.l.b16 %v492
        %v2811 = vunpack.c.h.b16 %v492
        %v2812 = vunpack.c.l.b16 %v493
        %v2813 = vunpack.c.h.b16 %v493
        %v2814 = vunpack.c.l.b16 %v494
        %v2815 = vunpack.c.h.b16 %v494
        %v2816 = vunpack.c.l.b16 %v495
        %v2817 = vunpack.c.h.b16 %v495
        %v2818 = vunpack.c.l.b16 %v496
        %v2819 = vunpack.c.h.b16 %v496
        %v2820 = vunpack.c.l.b16 %v497
        %v2821 = vunpack.c.h.b16 %v497
        %v2822 = vunpack.c.l.b16 %v498
        %v2823 = vunpack.c.h.b16 %v498
        %v2824 = vunpack.c.l.b16 %v499
        %v2825 = vunpack.c.h.b16 %v499
        %v2826 = vunpack.c.l.b16 %v500
        %v2827 = vunpack.c.h.b16 %v500
        %v2828 = vunpack.c.l.b16 %v501
        %v2829 = vunpack.c.h.b16 %v501
        %v2830 = vunpack.c.l.b16 %v502
        %v2831 = vunpack.c.h.b16 %v502
        %v2832 = vunpack.c.l.b16 %v503
        %v2833 = vunpack.c.h.b16 %v503
        %v2834 = vunpack.c.l.b16 %v504
        %v2835 = vunpack.c.h.b16 %v504
        %v2836 = vunpack.c.l.b16 %v505
        %v2837 = vunpack.c.h.b16 %v505
        %v2838 = vunpack.c.l.b16 %v506
        %v2839 = vunpack.c.h.b16 %v506
        %v2840 = vunpack.c.l.b16 %v507
        %v2841 = vunpack.c.h.b16 %v507
        %v2842 = vunpack.c.l.b16 %v508
        %v2843 = vunpack.c.h.b16 %v508
        %v2844 = vunpack.c.l.b16 %v509
        %v2845 = vunpack.c.h.b16 %v509
        %v2846 = vunpack.c.l.b16 %v510
        %v2847 = vunpack.c.h.b16 %v510
        %v2848 = vunpack.c.l.b16 %v511
        %v2849 = vunpack.c.h.b16 %v511
        %v2850 = vunpack.c.l.b16 %v512
        %v2851 = vunpack.c.h.b16 %v512
        %v2852 = vunpack.c.l.b16 %v513
        %v2853 = vunpack.c.h.b16 %v513
        %v2854 = vunpack.c.l.b16 %v514
        %v2855 = vunpack.c.h.b16 %v514
        %v2856 = vunpack.c.l.b16 %v515
        %v2857 = vunpack.c.h.b16 %v515
        %v2858 = vunpack.c.l.b16 %v516
        %v2859 = vunpack.c.h.b16 %v516
        %v2860 = vunpack.c.l.b16 %v517
        %v2861 = vunpack.c.h.b16 %v517
        %v2862 = vunpack.c.l.b16 %v518
        %v2863 = vunpack.c.h.b16 %v518
        %v2864 = vunpack.c.l.b16 %v519
        %v2865 = vunpack.c.h.b16 %v519
        %v2866 = vunpack.c.l.b16 %v520
        %v2867 = vunpack.c.h.b16 %v520
        %v2868 = vunpack.c.l.b16 %v521
        %v2869 = vunpack.c.h.b16 %v521
        %v2870 = vunpack.c.l.b16 %v522
        %v2871 = vunpack.c.h.b16 %v522
        %v2872 = vunpack.c.l.b16 %v523
        %v2873 = vunpack.c.h.b16 %v523
        %v2874 = vunpack.c.l.b16 %v524
        %v2875 = vunpack.c.h.b16 %v524
        %v2876 = vunpack.c.l.b16 %v525
        %v2877 = vunpack.c.h.b16 %v525
        %v2878 = vunpack.c.l.b16 %v526
        %v2879 = vunpack.c.h.b16 %v526
        %v2880 = vunpack.c.l.b16 %v527
        %v2881 = vunpack.c.h.b16 %v527
        %v2882 = vunpack.c.l.b16 %v528
        %v2883 = vunpack.c.h.b16 %v528
        %v2884 = vunpack.c.l.b16 %v529
        %v2885 = vunpack.c.h.b16 %v529
        %v2886 = vunpack.c.l.b16 %v530
        %v2887 = vunpack.c.h.b16 %v530
        %v2888 = vunpack.c.l.b16 %v531
        %v2889 = vunpack.c.h.b16 %v531
        %v2890 = vunpack.c.l.b16 %v532
        %v2891 = vunpack.c.h.b16 %v532
        %v2892 = vunpack.c.l.b16 %v533
        %v2893 = vunpack.c.h.b16 %v533
        %v2894 = vunpack.c.l.b16 %v534
        %v2895 = vunpack.c.h.b16 %v534
        %v2896 = vunpack.c.l.b16 %v535
        %v2897 = vunpack.c.h.b16 %v535
        %v2898 = vunpack.c.l.b16 %v536
        %v2899 = vunpack.c.h.b16 %v536
        %v2900 = vunpack.c.l.b16 %v537
        %v2901 = vunpack.c.h.b16 %v537
        %v2902 = vunpack.c.l.b16 %v538
        %v2903 = vunpack.c.h.b16 %v538
        %v2904 = vunpack.c.l.b16 %v539
        %v2905 = vunpack.c.h.b16 %v539
        %v2906 = vunpack.c.l.b16 %v540
        %v2907 = vunpack.c.h.b16 %v540
        %v2908 = vunpack.c.l.b16 %v541
        %v2909 = vunpack.c.h.b16 %v541
        %v2910 = vunpack.c.l.b16 %v542
        %v2911 = vunpack.c.h.b16 %v542
        %v2912 = vunpack.c.l.b16 %v543
        %v2913 = vunpack.c.h.b16 %v543
        %v2914 = vunpack.c.l.b16 %v544
        %v2915 = vunpack.c.h.b16 %v544
        %v2916 = vunpack.c.l.b16 %v545
        %v2917 = vunpack.c.h.b16 %v545
        %v2918 = vunpack.c.l.b16 %v546
        %v2919 = vunpack.c.h.b16 %v546
        %v2920 = vunpack.c.l.b16 %v547
        %v2921 = vunpack.c.h.b16 %v547
        %v2922 = vunpack.c.l.b16 %v548
        %v2923 = vunpack.c.h.b16 %v548
        %v2924 = vunpack.c.l.b16 %v549
        %v2925 = vunpack.c.h.b16 %v549
        %v2926 = vunpack.c.l.b16 %v550
        %v2927 = vunpack.c.h.b16 %v550
        %v2928 = vunpack.c.l.b16 %v551
        %v2929 = vunpack.c.h.b16 %v551
        %v2930 = vunpack.c.l.b16 %v552
        %v2931 = vunpack.c.h.b16 %v552
        %v2932 = vunpack.c.l.b16 %v553
        %v2933 = vunpack.c.h.b16 %v553
        %v2934 = vunpack.c.l.b16 %v554
        %v2935 = vunpack.c.h.b16 %v554
        %v2936 = vunpack.c.l.b16 %v555
        %v2937 = vunpack.c.h.b16 %v555
        %v2938 = vunpack.c.l.b16 %v556
        %v2939 = vunpack.c.h.b16 %v556
        %v2940 = vunpack.c.l.b16 %v557
        %v2941 = vunpack.c.h.b16 %v557
        %v2942 = vunpack.c.l.b16 %v558
        %v2943 = vunpack.c.h.b16 %v558
        %v2944 = vunpack.c.l.b16 %v559
        %v2945 = vunpack.c.h.b16 %v559
        %v2946 = vunpack.c.l.b16 %v560
        %v2947 = vunpack.c.h.b16 %v560
        %v2948 = vunpack.c.l.b16 %v561
        %v2949 = vunpack.c.h.b16 %v561
        %v2950 = vunpack.c.l.b16 %v562
        %v2951 = vunpack.c.h.b16 %v562
        %v2952 = vunpack.c.l.b16 %v563
        %v2953 = vunpack.c.h.b16 %v563
        %v2954 = vunpack.c.l.b16 %v564
        %v2955 = vunpack.c.h.b16 %v564
        %v2956 = vunpack.c.l.b16 %v565
        %v2957 = vunpack.c.h.b16 %v565
        %v2958 = vunpack.c.l.b16 %v566
        %v2959 = vunpack.c.h.b16 %v566
        %v2960 = vunpack.c.l.b16 %v567
        %v2961 = vunpack.c.h.b16 %v567
        %v2962 = vunpack.c.l.b16 %v568
        %v2963 = vunpack.c.h.b16 %v568
        %v2964 = vunpack.c.l.b16 %v569
        %v2965 = vunpack.c.h.b16 %v569
        %v2966 = vunpack.c.l.b16 %v570
        %v2967 = vunpack.c.h.b16 %v570
        %v2968 = vunpack.c.l.b16 %v571
        %v2969 = vunpack.c.h.b16 %v571
        %v2970 = vunpack.c.l.b16 %v572
        %v2971 = vunpack.c.h.b16 %v572
        %v2972 = vunpack.c.l.b16 %v573
        %v2973 = vunpack.c.h.b16 %v573
        %v2974 = vunpack.c.l.b16 %v574
        %v2975 = vunpack.c.h.b16 %v574
        %v2976 = vunpack.c.l.b16 %v575
        %v2977 = vunpack.c.h.b16 %v575
        %v2978 = vunpack.c.l.b16 %v576
        %v2979 = vunpack.c.h.b16 %v576
        %v2980 = vunpack.c.l.b16 %v577
        %v2981 = vunpack.c.h.b16 %v577
        %v2982 = vunpack.c.l.b16 %v578
        %v2983 = vunpack.c.h.b16 %v578
        %v2984 = vunpack.c.l.b16 %v579
        %v2985 = vunpack.c.h.b16 %v579
        %v2986 = vunpack.c.l.b16 %v580
        %v2987 = vunpack.c.h.b16 %v580
        %v2988 = vunpack.c.l.b16 %v581
        %v2989 = vunpack.c.h.b16 %v581
        %v2990 = vunpack.c.l.b16 %v582
        %v2991 = vunpack.c.h.b16 %v582
        %v2992 = vunpack.c.l.b16 %v583
        %v2993 = vunpack.c.h.b16 %v583
        %v2994 = vunpack.c.l.b16 %v584
        %v2995 = vunpack.c.h.b16 %v584
        %v2996 = vunpack.c.l.b16 %v585
        %v2997 = vunpack.c.h.b16 %v585
        %v2998 = vunpack.c.l.b16 %v586
        %v2999 = vunpack.c.h.b16 %v586
        %v3000 = vunpack.c.l.b16 %v587
        %v3001 = vunpack.c.h.b16 %v587
        %v3002 = vunpack.c.l.b16 %v588
        %v3003 = vunpack.c.h.b16 %v588
        %v3004 = vunpack.c.l.b16 %v589
        %v3005 = vunpack.c.h.b16 %v589
        %v3006 = vunpack.c.l.b16 %v590
        %v3007 = vunpack.c.h.b16 %v590
        %v3008 = vunpack.c.l.b16 %v591
        %v3009 = vunpack.c.h.b16 %v591
        %v3010 = vunpack.c.l.b16 %v592
        %v3011 = vunpack.c.h.b16 %v592
        %v3012 = vunpack.c.l.b16 %v593
        %v3013 = vunpack.c.h.b16 %v593
        %v3014 = vunpack.c.l.b16 %v594
        %v3015 = vunpack.c.h.b16 %v594
        %v3016 = vunpack.c.l.b16 %v595
        %v3017 = vunpack.c.h.b16 %v595
        %v3018 = vunpack.c.l.b16 %v596
        %v3019 = vunpack.c.h.b16 %v596
        %v3020 = vunpack.c.l.b16 %v597
        %v3021 = vunpack.c.h.b16 %v597
        %v3022 = vunpack.c.l.b16 %v598
        %v3023 = vunpack.c.h.b16 %v598
        %v3024 = vunpack.c.l.b16 %v599
        %v3025 = vunpack.c.h.b16 %v599
        %v3026 = vunpack.c.l.b16 %v600
        %v3027 = vunpack.c.h.b16 %v600
        %v3028 = vunpack.c.l.b16 %v601
        %v3029 = vunpack.c.h.b16 %v601
        %v3030 = vunpack.c.l.b16 %v602
        %v3031 = vunpack.c.h.b16 %v602
        %v3032 = vunpack.c.l.b16 %v603
        %v3033 = vunpack.c.h.b16 %v603
        %v3034 = vunpack.c.l.b16 %v604
        %v3035 = vunpack.c.h.b16 %v604
        %v3036 = vunpack.c.l.b16 %v605
        %v3037 = vunpack.c.h.b16 %v605
        %v3038 = vunpack.c.l.b16 %v606
        %v3039 = vunpack.c.h.b16 %v606
        %v3040 = vunpack.c.l.b16 %v607
        %v3041 = vunpack.c.h.b16 %v607
        %v3042 = vunpack.c.l.b16 %v608
        %v3043 = vunpack.c.h.b16 %v608
        %v3044 = vunpack.c.l.b16 %v609
        %v3045 = vunpack.c.h.b16 %v609
        %v3046 = vunpack.c.l.b16 %v610
        %v3047 = vunpack.c.h.b16 %v610
        %v3048 = vunpack.c.l.b16 %v611
        %v3049 = vunpack.c.h.b16 %v611
        %v3050 = vunpack.c.l.b16 %v612
        %v3051 = vunpack.c.h.b16 %v612
        %v3052 = vunpack.c.l.b16 %v613
        %v3053 = vunpack.c.h.b16 %v613
        %v3054 = vunpack.c.l.b16 %v614
        %v3055 = vunpack.c.h.b16 %v614
        %v3056 = vunpack.c.l.b16 %v615
        %v3057 = vunpack.c.h.b16 %v615
        %v3058 = vunpack.c.l.b16 %v616
        %v3059 = vunpack.c.h.b16 %v616
        %v3060 = vunpack.c.l.b16 %v617
        %v3061 = vunpack.c.h.b16 %v617
        %v3062 = vunpack.c.l.b16 %v618
        %v3063 = vunpack.c.h.b16 %v618
        %v3064 = vunpack.c.l.b16 %v619
        %v3065 = vunpack.c.h.b16 %v619
        %v3066 = vunpack.c.l.b16 %v620
        %v3067 = vunpack.c.h.b16 %v620
        %v3068 = vunpack.c.l.b16 %v621
        %v3069 = vunpack.c.h.b16 %v621
        %v3070 = vunpack.c.l.b16 %v622
        %v3071 = vunpack.c.h.b16 %v622
        %v3072 = vunpack.c.l.b16 %v623
        %v3073 = vunpack.c.h.b16 %v623
        %v3074 = vunpack.c.l.b16 %v624
        %v3075 = vunpack.c.h.b16 %v624
        %v3076 = vunpack.c.l.b16 %v625
        %v3077 = vunpack.c.h.b16 %v625
        %v3078 = vunpack.c.l.b16 %v626
        %v3079 = vunpack.c.h.b16 %v626
        %v3080 = vunpack.c.l.b16 %v627
        %v3081 = vunpack.c.h.b16 %v627
        %v3082 = vunpack.c.l.b16 %v628
        %v3083 = vunpack.c.h.b16 %v628
        %v3084 = vunpack.c.l.b16 %v629
        %v3085 = vunpack.c.h.b16 %v629
        %v3086 = vunpack.c.l.b16 %v630
        %v3087 = vunpack.c.h.b16 %v630
        %v3088 = vunpack.c.l.b16 %v631
        %v3089 = vunpack.c.h.b16 %v631
        %v3090 = vunpack.c.l.b16 %v632
        %v3091 = vunpack.c.h.b16 %v632
        %v3092 = vunpack.c.l.b16 %v633
        %v3093 = vunpack.c.h.b16 %v633
        %v3094 = vunpack.c.l.b16 %v634
        %v3095 = vunpack.c.h.b16 %v634
        %v3096 = vunpack.c.l.b16 %v635
        %v3097 = vunpack.c.h.b16 %v635
        %v3098 = vunpack.c.l.b16 %v636
        %v3099 = vunpack.c.h.b16 %v636
        %v3100 = vunpack.c.l.b16 %v637
        %v3101 = vunpack.c.h.b16 %v637
        %v3102 = vunpack.c.l.b16 %v638
        %v3103 = vunpack.c.h.b16 %v638
        %v3104 = vunpack.c.l.b16 %v639
        %v3105 = vunpack.c.h.b16 %v639
        %v3106 = vunpack.c.l.b16 %v640
        %v3107 = vunpack.c.h.b16 %v640
        %v3108 = vunpack.c.l.b16 %v641
        %v3109 = vunpack.c.h.b16 %v641
        %v3110 = vunpack.c.l.b16 %v642
        %v3111 = vunpack.c.h.b16 %v642
        %v3112 = vunpack.c.l.b16 %v643
        %v3113 = vunpack.c.h.b16 %v643
        %v3114 = vunpack.c.l.b16 %v644
        %v3115 = vunpack.c.h.b16 %v644
        %v3116 = vunpack.c.l.b16 %v645
        %v3117 = vunpack.c.h.b16 %v645
        %v3118 = vunpack.c.l.b16 %v646
        %v3119 = vunpack.c.h.b16 %v646
        %v3120 = vunpack.c.l.b16 %v647
        %v3121 = vunpack.c.h.b16 %v647
        %v3122 = vunpack.c.l.b16 %v648
        %v3123 = vunpack.c.h.b16 %v648
        %v3124 = vunpack.c.l.b16 %v649
        %v3125 = vunpack.c.h.b16 %v649
        %v3126 = vunpack.c.l.b16 %v650
        %v3127 = vunpack.c.h.b16 %v650
        %v3128 = vunpack.c.l.b16 %v651
        %v3129 = vunpack.c.h.b16 %v651
        %v3130 = vunpack.c.l.b16 %v652
        %v3131 = vunpack.c.h.b16 %v652
        %v3132 = vunpack.c.l.b16 %v653
        %v3133 = vunpack.c.h.b16 %v653
        %v3134 = vunpack.c.l.b16 %v654
        %v3135 = vunpack.c.h.b16 %v654
        %v3136 = vunpack.c.l.b16 %v655
        %v3137 = vunpack.c.h.b16 %v655
        %v3138 = vunpack.c.l.b16 %v656
        %v3139 = vunpack.c.h.b16 %v656
        %v3140 = vunpack.c.l.b16 %v657
        %v3141 = vunpack.c.h.b16 %v657
        %v3142 = vunpack.c.l.b16 %v658
        %v3143 = vunpack.c.h.b16 %v658
        %v3144 = vunpack.c.l.b16 %v659
        %v3145 = vunpack.c.h.b16 %v659
        %v3146 = vunpack.c.l.b16 %v660
        %v3147 = vunpack.c.h.b16 %v660
        %v3148 = vunpack.c.l.b16 %v661
        %v3149 = vunpack.c.h.b16 %v661
        %v3150 = vunpack.c.l.b16 %v662
        %v3151 = vunpack.c.h.b16 %v662
        %v3152 = vunpack.c.l.b16 %v663
        %v3153 = vunpack.c.h.b16 %v663
        %v3154 = vunpack.c.l.b16 %v664
        %v3155 = vunpack.c.h.b16 %v664
        %v3156 = vunpack.c.l.b16 %v665
        %v3157 = vunpack.c.h.b16 %v665
        %v3158 = vunpack.c.l.b16 %v666
        %v3159 = vunpack.c.h.b16 %v666
        %v3160 = vunpack.c.l.b16 %v667
        %v3161 = vunpack.c.h.b16 %v667
        %v3162 = vunpack.c.l.b16 %v668
        %v3163 = vunpack.c.h.b16 %v668
        %v3164 = vunpack.c.l.b16 %v669
        %v3165 = vunpack.c.h.b16 %v669
        %v3166 = vunpack.c.l.b16 %v670
        %v3167 = vunpack.c.h.b16 %v670
        %v3168 = vunpack.c.l.b16 %v671
        %v3169 = vunpack.c.h.b16 %v671
        %v3170 = vunpack.c.l.b16 %v672
        %v3171 = vunpack.c.h.b16 %v672
        %v3172 = vunpack.c.l.b16 %v673
        %v3173 = vunpack.c.h.b16 %v673
        %v3174 = vunpack.c.l.b16 %v674
        %v3175 = vunpack.c.h.b16 %v674
        %v3176 = vunpack.c.l.b16 %v675
        %v3177 = vunpack.c.h.b16 %v675
        %v3178 = vunpack.c.l.b16 %v676
        %v3179 = vunpack.c.h.b16 %v676
        %v3180 = vunpack.c.l.b16 %v677
        %v3181 = vunpack.c.h.b16 %v677
        %v3182 = vunpack.c.l.b16 %v678
        %v3183 = vunpack.c.h.b16 %v678
        %v3184 = vunpack.c.l.b16 %v679
        %v3185 = vunpack.c.h.b16 %v679
        %v3186 = vunpack.c.l.b16 %v680
        %v3187 = vunpack.c.h.b16 %v680
        %v3188 = vunpack.c.l.b16 %v681
        %v3189 = vunpack.c.h.b16 %v681
        %v3190 = vunpack.c.l.b16 %v682
        %v3191 = vunpack.c.h.b16 %v682
        %v3192 = vunpack.c.l.b16 %v683
        %v3193 = vunpack.c.h.b16 %v683
        %v3194 = vunpack.c.l.b16 %v684
        %v3195 = vunpack.c.h.b16 %v684
        %v3196 = vunpack.c.l.b16 %v685
        %v3197 = vunpack.c.h.b16 %v685
        %v3198 = vunpack.c.l.b16 %v686
        %v3199 = vunpack.c.h.b16 %v686
        %v3200 = vunpack.c.l.b16 %v687
        %v3201 = vunpack.c.h.b16 %v687
        %v3202 = vunpack.c.l.b16 %v688
        %v3203 = vunpack.c.h.b16 %v688
        %v3204 = vunpack.c.l.b16 %v689
        %v3205 = vunpack.c.h.b16 %v689
        %v3206 = vunpack.c.l.b16 %v690
        %v3207 = vunpack.c.h.b16 %v690
        %v3208 = vunpack.c.l.b16 %v691
        %v3209 = vunpack.c.h.b16 %v691
        %v3210 = vunpack.c.l.b16 %v692
        %v3211 = vunpack.c.h.b16 %v692
        %v3212 = vunpack.c.l.b16 %v693
        %v3213 = vunpack.c.h.b16 %v693
        %v3214 = vunpack.c.l.b16 %v694
        %v3215 = vunpack.c.h.b16 %v694
        %v3216 = vunpack.c.l.b16 %v695
        %v3217 = vunpack.c.h.b16 %v695
        %v3218 = vunpack.c.l.b16 %v696
        %v3219 = vunpack.c.h.b16 %v696
        %v3220 = vunpack.c.l.b16 %v697
        %v3221 = vunpack.c.h.b16 %v697
        %v3222 = vunpack.c.l.b16 %v698
        %v3223 = vunpack.c.h.b16 %v698
        %v3224 = vunpack.c.l.b16 %v699
        %v3225 = vunpack.c.h.b16 %v699
        %v3226 = vunpack.c.l.b16 %v700
        %v3227 = vunpack.c.h.b16 %v700
        %v3228 = vunpack.c.l.b16 %v701
        %v3229 = vunpack.c.h.b16 %v701
        %v3230 = vunpack.c.l.b16 %v702
        %v3231 = vunpack.c.h.b16 %v702
        %v3232 = vunpack.c.l.b16 %v703
        %v3233 = vunpack.c.h.b16 %v703
        %v3234 = vunpack.c.l.b16 %v704
        %v3235 = vunpack.c.h.b16 %v704
        %v3236 = vunpack.c.l.b16 %v705
        %v3237 = vunpack.c.h.b16 %v705
        %v3238 = vunpack.c.l.b16 %v706
        %v3239 = vunpack.c.h.b16 %v706
        %v3240 = vunpack.c.l.b16 %v707
        %v3241 = vunpack.c.h.b16 %v707
        %v3242 = vunpack.c.l.b16 %v708
        %v3243 = vunpack.c.h.b16 %v708
        %v3244 = vunpack.c.l.b16 %v709
        %v3245 = vunpack.c.h.b16 %v709
        %v3246 = vunpack.c.l.b16 %v710
        %v3247 = vunpack.c.h.b16 %v710
        %v3248 = vunpack.c.l.b16 %v711
        %v3249 = vunpack.c.h.b16 %v711
        %v3250 = vunpack.c.l.b16 %v712
        %v3251 = vunpack.c.h.b16 %v712
        %v3252 = vunpack.c.l.b16 %v713
        %v3253 = vunpack.c.h.b16 %v713
        %v3254 = vunpack.c.l.b16 %v714
        %v3255 = vunpack.c.h.b16 %v714
        %v3256 = vunpack.c.l.b16 %v715
        %v3257 = vunpack.c.h.b16 %v715
        %v3258 = vunpack.c.l.b16 %v716
        %v3259 = vunpack.c.h.b16 %v716
        %v3260 = vunpack.c.l.b16 %v717
        %v3261 = vunpack.c.h.b16 %v717
        %v3262 = vunpack.c.l.b16 %v718
        %v3263 = vunpack.c.h.b16 %v718
        %v3264 = vunpack.c.l.b16 %v719
        %v3265 = vunpack.c.h.b16 %v719
        %v3266 = vunpack.c.l.b16 %v720
        %v3267 = vunpack.c.h.b16 %v720
        %v3268 = vunpack.c.l.b16 %v721
        %v3269 = vunpack.c.h.b16 %v721
        %v3270 = vunpack.c.l.b16 %v722
        %v3271 = vunpack.c.h.b16 %v722
        %v3272 = vunpack.c.l.b16 %v723
        %v3273 = vunpack.c.h.b16 %v723
        %v3274 = vunpack.c.l.b16 %v724
        %v3275 = vunpack.c.h.b16 %v724
        %v3276 = vunpack.c.l.b16 %v725
        %v3277 = vunpack.c.h.b16 %v725
        %v3278 = vunpack.c.l.b16 %v726
        %v3279 = vunpack.c.h.b16 %v726
        %v3280 = vunpack.c.l.b16 %v727
        %v3281 = vunpack.c.h.b16 %v727
        %v3282 = vunpack.c.l.b16 %v728
        %v3283 = vunpack.c.h.b16 %v728
        %v3284 = vunpack.c.l.b16 %v729
        %v3285 = vunpack.c.h.b16 %v729
        %v3286 = vunpack.c.l.b16 %v730
        %v3287 = vunpack.c.h.b16 %v730
        %v3288 = vunpack.c.l.b16 %v731
        %v3289 = vunpack.c.h.b16 %v731
        %v3290 = vunpack.c.l.b16 %v732
        %v3291 = vunpack.c.h.b16 %v732
        %v3292 = vunpack.c.l.b16 %v733
        %v3293 = vunpack.c.h.b16 %v733
        %v3294 = vunpack.c.l.b16 %v734
        %v3295 = vunpack.c.h.b16 %v734
        %v3296 = vunpack.c.l.b16 %v735
        %v3297 = vunpack.c.h.b16 %v735
        %v3298 = vunpack.c.l.b16 %v736
        %v3299 = vunpack.c.h.b16 %v736
        %v3300 = vunpack.c.l.b16 %v737
        %v3301 = vunpack.c.h.b16 %v737
        %v3302 = vunpack.c.l.b16 %v738
        %v3303 = vunpack.c.h.b16 %v738
        %v3304 = vunpack.c.l.b16 %v739
        %v3305 = vunpack.c.h.b16 %v739
        %v3306 = vunpack.c.l.b16 %v740
        %v3307 = vunpack.c.h.b16 %v740
        %v3308 = vunpack.c.l.b16 %v741
        %v3309 = vunpack.c.h.b16 %v741
        %v3310 = vunpack.c.l.b16 %v742
        %v3311 = vunpack.c.h.b16 %v742
        %v3312 = vunpack.c.l.b16 %v743
        %v3313 = vunpack.c.h.b16 %v743
        %v3314 = vunpack.c.l.b16 %v744
        %v3315 = vunpack.c.h.b16 %v744
        %v3316 = vunpack.c.l.b16 %v745
        %v3317 = vunpack.c.h.b16 %v745
        %v3318 = vunpack.c.l.b16 %v746
        %v3319 = vunpack.c.h.b16 %v746
        %v3320 = vunpack.c.l.b16 %v747
        %v3321 = vunpack.c.h.b16 %v747
        %v3322 = vunpack.c.l.b16 %v748
        %v3323 = vunpack.c.h.b16 %v748
        %v3324 = vunpack.c.l.b16 %v749
        %v3325 = vunpack.c.h.b16 %v749
        %v3326 = vunpack.c.l.b16 %v750
        %v3327 = vunpack.c.h.b16 %v750
        %v3328 = vunpack.c.l.b16 %v751
        %v3329 = vunpack.c.h.b16 %v751
        %v3330 = vunpack.c.l.b16 %v752
        %v3331 = vunpack.c.h.b16 %v752
        %v3332 = vunpack.c.l.b16 %v753
        %v3333 = vunpack.c.h.b16 %v753
        %v3334 = vunpack.c.l.b16 %v754
        %v3335 = vunpack.c.h.b16 %v754
        %v3336 = vunpack.c.l.b16 %v755
        %v3337 = vunpack.c.h.b16 %v755
        %v3338 = vunpack.c.l.b16 %v756
        %v3339 = vunpack.c.h.b16 %v756
        %v3340 = vunpack.c.l.b16 %v757
        %v3341 = vunpack.c.h.b16 %v757
        %v3342 = vunpack.c.l.b16 %v758
        %v3343 = vunpack.c.h.b16 %v758
        %v3344 = vunpack.c.l.b16 %v759
        %v3345 = vunpack.c.h.b16 %v759
        %v3346 = vunpack.c.l.b16 %v760
        %v3347 = vunpack.c.h.b16 %v760
        %v3348 = vunpack.c.l.b16 %v761
        %v3349 = vunpack.c.h.b16 %v761
        %v3350 = vunpack.c.l.b16 %v762
        %v3351 = vunpack.c.h.b16 %v762
        %v3352 = vunpack.c.l.b16 %v763
        %v3353 = vunpack.c.h.b16 %v763
        %v3354 = vunpack.c.l.b16 %v764
        %v3355 = vunpack.c.h.b16 %v764
        %v3356 = vunpack.c.l.b16 %v765
        %v3357 = vunpack.c.h.b16 %v765
        %v3358 = vunpack.c.l.b16 %v766
        %v3359 = vunpack.c.h.b16 %v766
        %v3360 = vunpack.c.l.b16 %v767
        %v3361 = vunpack.c.h.b16 %v767
        %v3362 = vunpack.c.l.b16 %v768
        %v3363 = vunpack.c.h.b16 %v768
        %v3364 = vunpack.c.l.b16 %v769
        %v3365 = vunpack.c.h.b16 %v769
        %v3366 = vunpack.c.l.b16 %v770
        %v3367 = vunpack.c.h.b16 %v770
        %v3368 = vunpack.c.l.b16 %v771
        %v3369 = vunpack.c.h.b16 %v771
        %v3370 = vunpack.c.l.b16 %v772
        %v3371 = vunpack.c.h.b16 %v772
        %v3372 = vunpack.c.l.b16 %v773
        %v3373 = vunpack.c.h.b16 %v773
        %v3374 = vunpack.c.l.b16 %v774
        %v3375 = vunpack.c.h.b16 %v774
        %v3376 = vunpack.c.l.b16 %v775
        %v3377 = vunpack.c.h.b16 %v775
        %v3378 = vunpack.c.l.b16 %v776
        %v3379 = vunpack.c.h.b16 %v776
        %v3380 = vunpack.c.l.b16 %v777
        %v3381 = vunpack.c.h.b16 %v777
        %v3382 = vunpack.c.l.b16 %v778
        %v3383 = vunpack.c.h.b16 %v778
        %v3384 = vunpack.c.l.b16 %v779
        %v3385 = vunpack.c.h.b16 %v779
        %v3386 = vunpack.c.l.b16 %v780
        %v3387 = vunpack.c.h.b16 %v780
        %v3388 = vunpack.c.l.b16 %v781
        %v3389 = vunpack.c.h.b16 %v781
        %v3390 = vunpack.c.l.b16 %v782
        %v3391 = vunpack.c.h.b16 %v782
        %v3392 = vunpack.c.l.b16 %v783
        %v3393 = vunpack.c.h.b16 %v783
        %v3394 = vunpack.c.l.b16 %v784
        %v3395 = vunpack.c.h.b16 %v784
        %v3396 = vunpack.c.l.b16 %v785
        %v3397 = vunpack.c.h.b16 %v785
        %v3398 = vunpack.c.l.b16 %v786
        %v3399 = vunpack.c.h.b16 %v786
        %v3400 = vunpack.c.l.b16 %v787
        %v3401 = vunpack.c.h.b16 %v787
        %v3402 = vunpack.c.l.b16 %v788
        %v3403 = vunpack.c.h.b16 %v788
        %v3404 = vunpack.c.l.b16 %v789
        %v3405 = vunpack.c.h.b16 %v789
        %v3406 = vunpack.c.l.b16 %v790
        %v3407 = vunpack.c.h.b16 %v790
        %v3408 = vunpack.c.l.b16 %v791
        %v3409 = vunpack.c.h.b16 %v791
        %v3410 = vunpack.c.l.b16 %v792
        %v3411 = vunpack.c.h.b16 %v792
        %v3412 = vunpack.c.l.b16 %v793
        %v3413 = vunpack.c.h.b16 %v793
        %v3414 = vunpack.c.l.b16 %v794
        %v3415 = vunpack.c.h.b16 %v794
        %v3416 = vunpack.c.l.b16 %v795
        %v3417 = vunpack.c.h.b16 %v795
        %v3418 = vunpack.c.l.b16 %v796
        %v3419 = vunpack.c.h.b16 %v796
        %v3420 = vunpack.c.l.b16 %v797
        %v3421 = vunpack.c.h.b16 %v797
        %v3422 = vunpack.c.l.b16 %v798
        %v3423 = vunpack.c.h.b16 %v798
        %v3424 = vunpack.c.l.b16 %v799
        %v3425 = vunpack.c.h.b16 %v799
        %v3426 = vunpack.c.l.b16 %v800
        %v3427 = vunpack.c.h.b16 %v800
        %v3428 = vunpack.c.l.b16 %v801
        %v3429 = vunpack.c.h.b16 %v801
        %v3430 = vunpack.c.l.b16 %v802
        %v3431 = vunpack.c.h.b16 %v802
        %v3432 = vunpack.c.l.b16 %v803
        %v3433 = vunpack.c.h.b16 %v803
        %v3434 = vunpack.c.l.b16 %v804
        %v3435 = vunpack.c.h.b16 %v804
        %v3436 = vunpack.c.l.b16 %v805
        %v3437 = vunpack.c.h.b16 %v805
        %v3438 = vunpack.c.l.b16 %v806
        %v3439 = vunpack.c.h.b16 %v806
        %v3440 = vunpack.c.l.b16 %v807
        %v3441 = vunpack.c.h.b16 %v807
        %v3442 = vunpack.c.l.b16 %v808
        %v3443 = vunpack.c.h.b16 %v808
        %v3444 = vunpack.c.l.b16 %v809
        %v3445 = vunpack.c.h.b16 %v809
        %v3446 = vunpack.c.l.b16 %v810
        %v3447 = vunpack.c.h.b16 %v810
        %v3448 = vunpack.c.l.b16 %v811
        %v3449 = vunpack.c.h.b16 %v811
        %v3450 = vunpack.c.l.b16 %v812
        %v3451 = vunpack.c.h.b16 %v812
        %v3452 = vunpack.c.l.b16 %v813
        %v3453 = vunpack.c.h.b16 %v813
        %v3454 = vunpack.c.l.b16 %v814
        %v3455 = vunpack.c.h.b16 %v814
        %v3456 = vunpack.c.l.b16 %v815
        %v3457 = vunpack.c.h.b16 %v815
        %v3458 = vunpack.c.l.b16 %v816
        %v3459 = vunpack.c.h.b16 %v816
        %v3460 = vunpack.c.l.b16 %v817
        %v3461 = vunpack.c.h.b16 %v817
        %v3462 = vunpack.c.l.b16 %v818
        %v3463 = vunpack.c.h.b16 %v818
        %v3464 = vunpack.c.l.b16 %v819
        %v3465 = vunpack.c.h.b16 %v819
        %v3466 = vunpack.c.l.b16 %v820
        %v3467 = vunpack.c.h.b16 %v820
        %v3468 = vunpack.c.l.b16 %v821
        %v3469 = vunpack.c.h.b16 %v821
        %v3470 = vunpack.c.l.b16 %v822
        %v3471 = vunpack.c.h.b16 %v822
        %v3472 = vunpack.c.l.b16 %v823
        %v3473 = vunpack.c.h.b16 %v823
        %v3474 = vunpack.c.l.b16 %v824
        %v3475 = vunpack.c.h.b16 %v824
        %v3476 = vunpack.c.l.b16 %v825
        %v3477 = vunpack.c.h.b16 %v825
        %v3478 = vunpack.c.l.b16 %v826
        %v3479 = vunpack.c.h.b16 %v826
        %v3480 = vunpack.c.l.b16 %v827
        %v3481 = vunpack.c.h.b16 %v827
        %v3482 = vunpack.c.l.b16 %v828
        %v3483 = vunpack.c.h.b16 %v828
        %v3484 = vunpack.c.l.b16 %v829
        %v3485 = vunpack.c.h.b16 %v829
        %v3486 = vunpack.c.l.b16 %v830
        %v3487 = vunpack.c.h.b16 %v830
        %v3488 = vunpack.c.l.b16 %v831
        %v3489 = vunpack.c.h.b16 %v831
        %v3490 = vunpack.c.l.b16 %v832
        %v3491 = vunpack.c.h.b16 %v832
        %v3492 = vunpack.c.l.b16 %v833
        %v3493 = vunpack.c.h.b16 %v833
        %v3494 = vunpack.c.l.b16 %v834
        %v3495 = vunpack.c.h.b16 %v834
        %v3496 = vunpack.c.l.b16 %v835
        %v3497 = vunpack.c.h.b16 %v835
        %v3498 = vunpack.c.l.b16 %v836
        %v3499 = vunpack.c.h.b16 %v836
        %v3500 = vunpack.c.l.b16 %v837
        %v3501 = vunpack.c.h.b16 %v837
        %v3502 = vunpack.c.l.b16 %v838
        %v3503 = vunpack.c.h.b16 %v838
        %v3504 = vunpack.c.l.b16 %v839
        %v3505 = vunpack.c.h.b16 %v839
        %v3506 = vunpack.c.l.b16 %v840
        %v3507 = vunpack.c.h.b16 %v840
        %v3508 = vunpack.c.l.b16 %v841
        %v3509 = vunpack.c.h.b16 %v841
        %v3510 = vunpack.c.l.b16 %v842
        %v3511 = vunpack.c.h.b16 %v842
        %v3512 = vunpack.c.l.b16 %v843
        %v3513 = vunpack.c.h.b16 %v843
        %v3514 = vunpack.c.l.b16 %v844
        %v3515 = vunpack.c.h.b16 %v844
        %v3516 = vunpack.c.l.b16 %v845
        %v3517 = vunpack.c.h.b16 %v845
        %v3518 = vunpack.c.l.b16 %v846
        %v3519 = vunpack.c.h.b16 %v846
        %v3520 = vunpack.c.l.b16 %v847
        %v3521 = vunpack.c.h.b16 %v847
        %v3522 = vunpack.c.l.b16 %v848
        %v3523 = vunpack.c.h.b16 %v848
        %v3524 = vunpack.c.l.b16 %v849
        %v3525 = vunpack.c.h.b16 %v849
        %v3526 = vunpack.c.l.b16 %v850
        %v3527 = vunpack.c.h.b16 %v850
        %v3528 = vunpack.c.l.b16 %v851
        %v3529 = vunpack.c.h.b16 %v851
        %v3530 = vunpack.c.l.b16 %v852
        %v3531 = vunpack.c.h.b16 %v852
        %v3532 = vunpack.c.l.b16 %v853
        %v3533 = vunpack.c.h.b16 %v853
        %v3534 = vunpack.c.l.b16 %v854
        %v3535 = vunpack.c.h.b16 %v854
        %v3536 = vunpack.c.l.b16 %v855
        %v3537 = vunpack.c.h.b16 %v855
        %v3538 = vunpack.c.l.b16 %v856
        %v3539 = vunpack.c.h.b16 %v856
        %v3540 = vunpack.c.l.b16 %v857
        %v3541 = vunpack.c.h.b16 %v857
        %v3542 = vunpack.c.l.b16 %v858
        %v3543 = vunpack.c.h.b16 %v858
        %v3544 = vunpack.c.l.b16 %v859
        %v3545 = vunpack.c.h.b16 %v859
        %v3546 = vunpack.c.l.b16 %v860
        %v3547 = vunpack.c.h.b16 %v860
        %v3548 = vunpack.c.l.b16 %v861
        %v3549 = vunpack.c.h.b16 %v861
        %v3550 = vunpack.c.l.b16 %v862
        %v3551 = vunpack.c.h.b16 %v862
        %v3552 = vunpack.c.l.b16 %v863
        %v3553 = vunpack.c.h.b16 %v863
        %v3554 = vunpack.c.l.b16 %v864
        %v3555 = vunpack.c.h.b16 %v864
        %v3556 = vunpack.c.l.b16 %v865
        %v3557 = vunpack.c.h.b16 %v865
        %v3558 = vunpack.c.l.b16 %v866
        %v3559 = vunpack.c.h.b16 %v866
        %v3560 = vunpack.c.l.b16 %v867
        %v3561 = vunpack.c.h.b16 %v867
        %v3562 = vunpack.c.l.b16 %v868
        %v3563 = vunpack.c.h.b16 %v868
        %v3564 = vunpack.c.l.b16 %v869
        %v3565 = vunpack.c.h.b16 %v869
        %v3566 = vunpack.c.l.b16 %v870
        %v3567 = vunpack.c.h.b16 %v870
        %v3568 = vunpack.c.l.b16 %v871
        %v3569 = vunpack.c.h.b16 %v871
        %v3570 = vunpack.c.l.b16 %v872
        %v3571 = vunpack.c.h.b16 %v872
        %v3572 = vunpack.c.l.b16 %v873
        %v3573 = vunpack.c.h.b16 %v873
        %v3574 = vunpack.c.l.b16 %v874
        %v3575 = vunpack.c.h.b16 %v874
        %v3576 = vunpack.c.l.b16 %v875
        %v3577 = vunpack.c.h.b16 %v875
        %v3578 = vunpack.c.l.b16 %v876
        %v3579 = vunpack.c.h.b16 %v876
        %v3580 = vunpack.c.l.b16 %v877
        %v3581 = vunpack.c.h.b16 %v877
        %v3582 = vunpack.c.l.b16 %v878
        %v3583 = vunpack.c.h.b16 %v878
        %v3584 = vunpack.c.l.b16 %v879
        %v3585 = vunpack.c.h.b16 %v879
        %v3586 = vunpack.c.l.b16 %v880
        %v3587 = vunpack.c.h.b16 %v880
        %v3588 = vunpack.c.l.b16 %v881
        %v3589 = vunpack.c.h.b16 %v881
        %v3590 = vunpack.c.l.b16 %v882
        %v3591 = vunpack.c.h.b16 %v882
        %v3592 = vunpack.c.l.b16 %v883
        %v3593 = vunpack.c.h.b16 %v883
        %v3594 = vunpack.c.l.b16 %v884
        %v3595 = vunpack.c.h.b16 %v884
        %v3596 = vunpack.c.l.b16 %v885
        %v3597 = vunpack.c.h.b16 %v885
        %v3598 = vunpack.c.l.b16 %v886
        %v3599 = vunpack.c.h.b16 %v886
        %v3600 = vunpack.c.l.b16 %v887
        %v3601 = vunpack.c.h.b16 %v887
        %v3602 = vunpack.c.l.b16 %v888
        %v3603 = vunpack.c.h.b16 %v888
        %v3604 = vunpack.c.l.b16 %v889
        %v3605 = vunpack.c.h.b16 %v889
        %v3606 = vunpack.c.l.b16 %v890
        %v3607 = vunpack.c.h.b16 %v890
        %v3608 = vunpack.c.l.b16 %v891
        %v3609 = vunpack.c.h.b16 %v891
        %v3610 = vunpack.c.l.b16 %v892
        %v3611 = vunpack.c.h.b16 %v892
        %v3612 = vunpack.c.l.b16 %v893
        %v3613 = vunpack.c.h.b16 %v893
        %v3614 = vunpack.c.l.b16 %v894
        %v3615 = vunpack.c.h.b16 %v894
        %v3616 = vunpack.c.l.b16 %v895
        %v3617 = vunpack.c.h.b16 %v895
        %v3618 = vunpack.c.l.b16 %v896
        %v3619 = vunpack.c.h.b16 %v896
        %v3620 = vunpack.c.l.b16 %v897
        %v3621 = vunpack.c.h.b16 %v897
        %v3622 = vunpack.c.l.b16 %v898
        %v3623 = vunpack.c.h.b16 %v898
        %v3624 = vunpack.c.l.b16 %v899
        %v3625 = vunpack.c.h.b16 %v899
        %v3626 = vunpack.c.l.b16 %v900
        %v3627 = vunpack.c.h.b16 %v900
        %v3628 = vunpack.c.l.b16 %v901
        %v3629 = vunpack.c.h.b16 %v901
        %v3630 = vunpack.c.l.b16 %v902
        %v3631 = vunpack.c.h.b16 %v902
        %v3632 = vunpack.c.l.b16 %v903
        %v3633 = vunpack.c.h.b16 %v903
        %v3634 = vunpack.c.l.b16 %v904
        %v3635 = vunpack.c.h.b16 %v904
        %v3636 = vunpack.c.l.b16 %v905
        %v3637 = vunpack.c.h.b16 %v905
        %v3638 = vunpack.c.l.b16 %v906
        %v3639 = vunpack.c.h.b16 %v906
        %v3640 = vunpack.c.l.b16 %v907
        %v3641 = vunpack.c.h.b16 %v907
        %v3642 = vunpack.c.l.b16 %v908
        %v3643 = vunpack.c.h.b16 %v908
        %v3644 = vunpack.c.l.b16 %v909
        %v3645 = vunpack.c.h.b16 %v909
        %v3646 = vunpack.c.l.b16 %v910
        %v3647 = vunpack.c.h.b16 %v910
        %v3648 = vunpack.c.l.b16 %v911
        %v3649 = vunpack.c.h.b16 %v911
        %v3650 = vunpack.c.l.b16 %v912
        %v3651 = vunpack.c.h.b16 %v912
        %v3652 = vunpack.c.l.b16 %v913
        %v3653 = vunpack.c.h.b16 %v913
        %v3654 = vunpack.c.l.b16 %v914
        %v3655 = vunpack.c.h.b16 %v914
        %v3656 = vunpack.c.l.b16 %v915
        %v3657 = vunpack.c.h.b16 %v915
        %v3658 = vunpack.c.l.b16 %v916
        %v3659 = vunpack.c.h.b16 %v916
        %v3660 = vunpack.c.l.b16 %v917
        %v3661 = vunpack.c.h.b16 %v917
        %v3662 = vunpack.c.l.b16 %v918
        %v3663 = vunpack.c.h.b16 %v918
        %v3664 = vunpack.c.l.b16 %v919
        %v3665 = vunpack.c.h.b16 %v919
        %v3666 = vunpack.c.l.b16 %v920
        %v3667 = vunpack.c.h.b16 %v920
        %v3668 = vunpack.c.l.b16 %v921
        %v3669 = vunpack.c.h.b16 %v921
        %v3670 = vunpack.c.l.b16 %v922
        %v3671 = vunpack.c.h.b16 %v922
        %v3672 = vunpack.c.l.b16 %v923
        %v3673 = vunpack.c.h.b16 %v923
        %v3674 = vunpack.c.l.b16 %v924
        %v3675 = vunpack.c.h.b16 %v924
        %v3676 = vunpack.c.l.b16 %v925
        %v3677 = vunpack.c.h.b16 %v925
        %v3678 = vunpack.c.l.b16 %v926
        %v3679 = vunpack.c.h.b16 %v926
        %v3680 = vunpack.c.l.b16 %v927
        %v3681 = vunpack.c.h.b16 %v927
        %v3682 = vunpack.c.l.b16 %v928
        %v3683 = vunpack.c.h.b16 %v928
        %v3684 = vunpack.c.l.b16 %v929
        %v3685 = vunpack.c.h.b16 %v929
        %v3686 = vunpack.c.l.b16 %v930
        %v3687 = vunpack.c.h.b16 %v930
        %v3688 = vunpack.c.l.b16 %v931
        %v3689 = vunpack.c.h.b16 %v931
        %v3690 = vunpack.c.l.b16 %v932
        %v3691 = vunpack.c.h.b16 %v932
        %v3692 = vunpack.c.l.b16 %v933
        %v3693 = vunpack.c.h.b16 %v933
        %v3694 = vunpack.c.l.b16 %v934
        %v3695 = vunpack.c.h.b16 %v934
        %v3696 = vunpack.c.l.b16 %v935
        %v3697 = vunpack.c.h.b16 %v935
        %v3698 = vunpack.c.l.b16 %v936
        %v3699 = vunpack.c.h.b16 %v936
        %v3700 = vunpack.c.l.b16 %v937
        %v3701 = vunpack.c.h.b16 %v937
        %v3702 = vunpack.c.l.b16 %v938
        %v3703 = vunpack.c.h.b16 %v938
        %v3704 = vunpack.c.l.b16 %v939
        %v3705 = vunpack.c.h.b16 %v939
        %v3706 = vunpack.c.l.b16 %v940
        %v3707 = vunpack.c.h.b16 %v940
        %v3708 = vunpack.c.l.b16 %v941
        %v3709 = vunpack.c.h.b16 %v941
        %v3710 = vunpack.c.l.b16 %v942
        %v3711 = vunpack.c.h.b16 %v942
        %v3712 = vunpack.c.l.b16 %v943
        %v3713 = vunpack.c.h.b16 %v943
        %v3714 = vunpack.c.l.b16 %v944
        %v3715 = vunpack.c.h.b16 %v944
        %v3716 = vunpack.c.l.b16 %v945
        %v3717 = vunpack.c.h.b16 %v945
        %v3718 = vunpack.c.l.b16 %v946
        %v3719 = vunpack.c.h.b16 %v946
        %v3720 = vunpack.c.l.b16 %v947
        %v3721 = vunpack.c.h.b16 %v947
        %v3722 = vunpack.c.l.b16 %v948
        %v3723 = vunpack.c.h.b16 %v948
        %v3724 = vunpack.c.l.b16 %v949
        %v3725 = vunpack.c.h.b16 %v949
        %v3726 = vunpack.c.l.b16 %v950
        %v3727 = vunpack.c.h.b16 %v950
        %v3728 = vunpack.c.l.b16 %v951
        %v3729 = vunpack.c.h.b16 %v951
        %v3730 = vunpack.c.l.b16 %v952
        %v3731 = vunpack.c.h.b16 %v952
        %v3732 = vunpack.c.l.b16 %v953
        %v3733 = vunpack.c.h.b16 %v953
        %v3734 = vunpack.c.l.b16 %v954
        %v3735 = vunpack.c.h.b16 %v954
        %v3736 = vunpack.c.l.b16 %v955
        %v3737 = vunpack.c.h.b16 %v955
        %v3738 = vunpack.c.l.b16 %v956
        %v3739 = vunpack.c.h.b16 %v956
        %v3740 = vunpack.c.l.b16 %v957
        %v3741 = vunpack.c.h.b16 %v957
        %v3742 = vunpack.c.l.b16 %v958
        %v3743 = vunpack.c.h.b16 %v958
        %v3744 = vunpack.c.l.b16 %v959
        %v3745 = vunpack.c.h.b16 %v959
        %v3746 = vunpack.c.l.b16 %v960
        %v3747 = vunpack.c.h.b16 %v960
        %v3748 = vunpack.c.l.b16 %v961
        %v3749 = vunpack.c.h.b16 %v961
        %v3750 = vunpack.c.l.b16 %v962
        %v3751 = vunpack.c.h.b16 %v962
        %v3752 = vunpack.c.l.b16 %v963
        %v3753 = vunpack.c.h.b16 %v963
        %v3754 = vunpack.c.l.b16 %v964
        %v3755 = vunpack.c.h.b16 %v964
        %v3756 = vunpack.c.l.b16 %v965
        %v3757 = vunpack.c.h.b16 %v965
        %v3758 = vunpack.c.l.b16 %v966
        %v3759 = vunpack.c.h.b16 %v966
        %v3760 = vunpack.c.l.b16 %v967
        %v3761 = vunpack.c.h.b16 %v967
        %v3762 = vunpack.c.l.b16 %v968
        %v3763 = vunpack.c.h.b16 %v968
        %v3764 = vunpack.c.l.b16 %v969
        %v3765 = vunpack.c.h.b16 %v969
        %v3766 = vunpack.c.l.b16 %v970
        %v3767 = vunpack.c.h.b16 %v970
        %v3768 = vunpack.c.l.b16 %v971
        %v3769 = vunpack.c.h.b16 %v971
        %v3770 = vunpack.c.l.b16 %v972
        %v3771 = vunpack.c.h.b16 %v972
        %v3772 = vunpack.c.l.b16 %v973
        %v3773 = vunpack.c.h.b16 %v973
        %v3774 = vunpack.c.l.b16 %v974
        %v3775 = vunpack.c.h.b16 %v974
        %v3776 = vunpack.c.l.b16 %v975
        %v3777 = vunpack.c.h.b16 %v975
        %v3778 = vunpack.c.l.b16 %v976
        %v3779 = vunpack.c.h.b16 %v976
        %v3780 = vunpack.c.l.b16 %v977
        %v3781 = vunpack.c.h.b16 %v977
        %v3782 = vunpack.c.l.b16 %v978
        %v3783 = vunpack.c.h.b16 %v978
        %v3784 = vunpack.c.l.b16 %v979
        %v3785 = vunpack.c.h.b16 %v979
        %v3786 = vunpack.c.l.b16 %v980
        %v3787 = vunpack.c.h.b16 %v980
        %v3788 = vunpack.c.l.b16 %v981
        %v3789 = vunpack.c.h.b16 %v981
        %v3790 = vunpack.c.l.b16 %v982
        %v3791 = vunpack.c.h.b16 %v982
        %v3792 = vunpack.c.l.b16 %v983
        %v3793 = vunpack.c.h.b16 %v983
        %v3794 = vunpack.c.l.b16 %v984
        %v3795 = vunpack.c.h.b16 %v984
        %v3796 = vunpack.c.l.b16 %v985
        %v3797 = vunpack.c.h.b16 %v985
        %v3798 = vunpack.c.l.b16 %v986
        %v3799 = vunpack.c.h.b16 %v986
        %v3800 = vunpack.c.l.b16 %v987
        %v3801 = vunpack.c.h.b16 %v987
        %v3802 = vunpack.c.l.b16 %v988
        %v3803 = vunpack.c.h.b16 %v988
        %v3804 = vunpack.c.l.b16 %v989
        %v3805 = vunpack.c.h.b16 %v989
        %v3806 = vunpack.c.l.b16 %v990
        %v3807 = vunpack.c.h.b16 %v990
        %v3808 = vunpack.c.l.b16 %v991
        %v3809 = vunpack.c.h.b16 %v991
        %v3810 = vunpack.c.l.b16 %v992
        %v3811 = vunpack.c.h.b16 %v992
        %v3812 = vunpack.c.l.b16 %v993
        %v3813 = vunpack.c.h.b16 %v993
        %v3814 = vunpack.c.l.b16 %v994
        %v3815 = vunpack.c.h.b16 %v994
        %v3816 = vunpack.c.l.b16 %v995
        %v3817 = vunpack.c.h.b16 %v995
        %v3818 = vunpack.c.l.b16 %v996
        %v3819 = vunpack.c.h.b16 %v996
        %v3820 = vunpack.c.l.b16 %v997
        %v3821 = vunpack.c.h.b16 %v997
        %v3822 = vunpack.c.l.b16 %v998
        %v3823 = vunpack.c.h.b16 %v998
        %v3824 = vunpack.c.l.b16 %v999
        %v3825 = vunpack.c.h.b16 %v999
        %v3826 = vunpack.c.l.b16 %v1000
        %v3827 = vunpack.c.h.b16 %v1000
        %v3828 = vunpack.c.l.b16 %v1001
        %v3829 = vunpack.c.h.b16 %v1001
        %v3830 = vunpack.c.l.b16 %v1002
        %v3831 = vunpack.c.h.b16 %v1002
        %v3832 = vunpack.c.l.b16 %v1003
        %v3833 = vunpack.c.h.b16 %v1003
        %v3834 = vunpack.c.l.b16 %v1004
        %v3835 = vunpack.c.h.b16 %v1004
        %v3836 = vunpack.c.l.b16 %v1005
        %v3837 = vunpack.c.h.b16 %v1005
        %v3838 = vunpack.c.l.b16 %v1006
        %v3839 = vunpack.c.h.b16 %v1006
        %v3840 = vunpack.c.l.b16 %v1007
        %v3841 = vunpack.c.h.b16 %v1007
        %v3842 = vunpack.c.l.b16 %v1008
        %v3843 = vunpack.c.h.b16 %v1008
        %v3844 = vunpack.c.l.b16 %v1009
        %v3845 = vunpack.c.h.b16 %v1009
        %v3846 = vunpack.c.l.b16 %v1010
        %v3847 = vunpack.c.h.b16 %v1010
        %v3848 = vunpack.c.l.b16 %v1011
        %v3849 = vunpack.c.h.b16 %v1011
        %v3850 = vunpack.c.l.b16 %v1012
        %v3851 = vunpack.c.h.b16 %v1012
        %v3852 = vunpack.c.l.b16 %v1013
        %v3853 = vunpack.c.h.b16 %v1013
        %v3854 = vunpack.c.l.b16 %v1014
        %v3855 = vunpack.c.h.b16 %v1014
        %v3856 = vunpack.c.l.b16 %v1015
        %v3857 = vunpack.c.h.b16 %v1015
        %v3858 = vunpack.c.l.b16 %v1016
        %v3859 = vunpack.c.h.b16 %v1016
        %v3860 = vunpack.c.l.b16 %v1017
        %v3861 = vunpack.c.h.b16 %v1017
        %v3862 = vunpack.c.l.b16 %v1018
        %v3863 = vunpack.c.h.b16 %v1018
        %v3864 = vunpack.c.l.b16 %v1019
        %v3865 = vunpack.c.h.b16 %v1019
        %v3866 = vunpack.c.l.b16 %v1020
        %v3867 = vunpack.c.h.b16 %v1020
        %v3868 = vunpack.c.l.b16 %v1021
        %v3869 = vunpack.c.h.b16 %v1021
        %v3870 = vunpack.c.l.b16 %v1022
        %v3871 = vunpack.c.h.b16 %v1022
        %v3872 = vunpack.c.l.b16 %v1023
        %v3873 = vunpack.c.h.b16 %v1023
        %v3874 = vunpack.c.l.b16 %v1024
        %v3875 = vunpack.c.h.b16 %v1024
        %v3876 = vunpack.c.l.b16 %v1025
        %v3877 = vunpack.c.h.b16 %v1025
        %v3878 = vunpack.c.l.b16 %v1026
        %v3879 = vunpack.c.h.b16 %v1026
        %v3880 = vunpack.c.l.b16 %v1027
        %v3881 = vunpack.c.h.b16 %v1027
        %v3882 = vunpack.c.l.b16 %v1028
        %v3883 = vunpack.c.h.b16 %v1028
        %v3884 = vunpack.c.l.b16 %v1029
        %v3885 = vunpack.c.h.b16 %v1029
        %v3886 = vunpack.c.l.b16 %v1030
        %v3887 = vunpack.c.h.b16 %v1030
        %v3888 = vunpack.c.l.b16 %v1031
        %v3889 = vunpack.c.h.b16 %v1031
        %v3890 = vunpack.c.l.b16 %v1032
        %v3891 = vunpack.c.h.b16 %v1032
        %v3892 = vunpack.c.l.b16 %v1033
        %v3893 = vunpack.c.h.b16 %v1033
        %v3894 = vunpack.c.l.b16 %v1034
        %v3895 = vunpack.c.h.b16 %v1034
        %v3896 = vunpack.c.l.b16 %v1035
        %v3897 = vunpack.c.h.b16 %v1035
        %v3898 = vunpack.c.l.b16 %v1036
        %v3899 = vunpack.c.h.b16 %v1036
        %v3900 = vunpack.c.l.b16 %v1037
        %v3901 = vunpack.c.h.b16 %v1037
        %v3902 = vunpack.c.l.b16 %v1038
        %v3903 = vunpack.c.h.b16 %v1038
        %v3904 = vunpack.c.l.b16 %v1039
        %v3905 = vunpack.c.h.b16 %v1039
        %v3906 = vunpack.c.l.b16 %v1040
        %v3907 = vunpack.c.h.b16 %v1040
        %v3908 = vunpack.c.l.b16 %v1041
        %v3909 = vunpack.c.h.b16 %v1041
        %v3910 = vunpack.c.l.b16 %v1042
        %v3911 = vunpack.c.h.b16 %v1042
        %v3912 = vunpack.c.l.b16 %v1043
        %v3913 = vunpack.c.h.b16 %v1043
        %v3914 = vunpack.c.l.b16 %v1044
        %v3915 = vunpack.c.h.b16 %v1044
        %v3916 = vunpack.c.l.b16 %v1045
        %v3917 = vunpack.c.h.b16 %v1045
        %v3918 = vunpack.c.l.b16 %v1046
        %v3919 = vunpack.c.h.b16 %v1046
        %v3920 = vunpack.c.l.b16 %v1047
        %v3921 = vunpack.c.h.b16 %v1047
        %v3922 = vunpack.c.l.b16 %v1048
        %v3923 = vunpack.c.h.b16 %v1048
        %v3924 = vunpack.c.l.b16 %v1049
        %v3925 = vunpack.c.h.b16 %v1049
        %v3926 = vunpack.c.l.b16 %v1050
        %v3927 = vunpack.c.h.b16 %v1050
        %v3928 = vunpack.c.l.b16 %v1051
        %v3929 = vunpack.c.h.b16 %v1051
        %v3930 = vunpack.c.l.b16 %v1052
        %v3931 = vunpack.c.h.b16 %v1052
        %v3932 = vunpack.c.l.b16 %v1053
        %v3933 = vunpack.c.h.b16 %v1053
        %v3934 = vunpack.c.l.b16 %v1054
        %v3935 = vunpack.c.h.b16 %v1054
        %v3936 = vunpack.c.l.b16 %v1055
        %v3937 = vunpack.c.h.b16 %v1055
        %v3938 = vunpack.c.l.b16 %v1056
        %v3939 = vunpack.c.h.b16 %v1056
        %v3940 = vunpack.c.l.b16 %v1057
        %v3941 = vunpack.c.h.b16 %v1057
        %v3942 = vunpack.c.l.b16 %v1058
        %v3943 = vunpack.c.h.b16 %v1058
        %v3944 = vunpack.c.l.b16 %v1059
        %v3945 = vunpack.c.h.b16 %v1059
        %v3946 = vunpack.c.l.b16 %v1060
        %v3947 = vunpack.c.h.b16 %v1060
        %v3948 = vunpack.c.l.b16 %v1061
        %v3949 = vunpack.c.h.b16 %v1061
        %v3950 = vunpack.c.l.b16 %v1062
        %v3951 = vunpack.c.h.b16 %v1062
        %v3952 = vunpack.c.l.b16 %v1063
        %v3953 = vunpack.c.h.b16 %v1063
        %v3954 = vunpack.c.l.b16 %v1064
        %v3955 = vunpack.c.h.b16 %v1064
        %v3956 = vunpack.c.l.b16 %v1065
        %v3957 = vunpack.c.h.b16 %v1065
        %v3958 = vunpack.c.l.b16 %v1066
        %v3959 = vunpack.c.h.b16 %v1066
        %v3960 = vunpack.c.l.b16 %v1067
        %v3961 = vunpack.c.h.b16 %v1067
        %v3962 = vunpack.c.l.b16 %v1068
        %v3963 = vunpack.c.h.b16 %v1068
        %v3964 = vunpack.c.l.b16 %v1069
        %v3965 = vunpack.c.h.b16 %v1069
        %v3966 = vunpack.c.l.b16 %v1070
        %v3967 = vunpack.c.h.b16 %v1070
        %v3968 = vunpack.c.l.b16 %v1071
        %v3969 = vunpack.c.h.b16 %v1071
        %v3970 = vunpack.c.l.b16 %v1072
        %v3971 = vunpack.c.h.b16 %v1072
        %v3972 = vunpack.c.l.b16 %v1073
        %v3973 = vunpack.c.h.b16 %v1073
        %v3974 = vunpack.c.l.b16 %v1074
        %v3975 = vunpack.c.h.b16 %v1074
        %v3976 = vunpack.c.l.b16 %v1075
        %v3977 = vunpack.c.h.b16 %v1075
        %v3978 = vunpack.c.l.b16 %v1076
        %v3979 = vunpack.c.h.b16 %v1076
        %v3980 = vunpack.c.l.b16 %v1077
        %v3981 = vunpack.c.h.b16 %v1077
        %v3982 = vunpack.c.l.b16 %v1078
        %v3983 = vunpack.c.h.b16 %v1078
        %v3984 = vunpack.c.l.b16 %v1079
        %v3985 = vunpack.c.h.b16 %v1079
        %v3986 = vunpack.c.l.b16 %v1080
        %v3987 = vunpack.c.h.b16 %v1080
        %v3988 = vunpack.c.l.b16 %v1081
        %v3989 = vunpack.c.h.b16 %v1081
        %v3990 = vunpack.c.l.b16 %v1082
        %v3991 = vunpack.c.h.b16 %v1082
        %v3992 = vunpack.c.l.b16 %v1083
        %v3993 = vunpack.c.h.b16 %v1083
        %v3994 = vunpack.c.l.b16 %v1084
        %v3995 = vunpack.c.h.b16 %v1084
        %v3996 = vunpack.c.l.b16 %v1085
        %v3997 = vunpack.c.h.b16 %v1085
        %v3998 = vunpack.c.l.b16 %v1086
        %v3999 = vunpack.c.h.b16 %v1086
        %v4000 = vunpack.c.l.b16 %v1087
        %v4001 = vunpack.c.h.b16 %v1087
        %v4002 = vunpack.c.l.b16 %v1088
        %v4003 = vunpack.c.h.b16 %v1088
        %v4004 = vunpack.c.l.b16 %v1089
        %v4005 = vunpack.c.h.b16 %v1089
        %v4006 = vunpack.c.l.b16 %v1090
        %v4007 = vunpack.c.h.b16 %v1090
        %v4008 = vunpack.c.l.b16 %v1091
        %v4009 = vunpack.c.h.b16 %v1091
        %v4010 = vunpack.c.l.b16 %v1092
        %v4011 = vunpack.c.h.b16 %v1092
        %v4012 = vunpack.c.l.b16 %v1093
        %v4013 = vunpack.c.h.b16 %v1093
        %v4014 = vunpack.c.l.b16 %v1094
        %v4015 = vunpack.c.h.b16 %v1094
        %v4016 = vunpack.c.l.b16 %v1095
        %v4017 = vunpack.c.h.b16 %v1095
        %v4018 = vunpack.c.l.b16 %v1096
        %v4019 = vunpack.c.h.b16 %v1096
        %v4020 = vunpack.c.l.b16 %v1097
        %v4021 = vunpack.c.h.b16 %v1097
        %v4022 = vunpack.c.l.b16 %v1098
        %v4023 = vunpack.c.h.b16 %v1098
        %v4024 = vunpack.c.l.b16 %v1099
        %v4025 = vunpack.c.h.b16 %v1099
        %v4026 = vunpack.c.l.b16 %v1100
        %v4027 = vunpack.c.h.b16 %v1100
        %v4028 = vunpack.c.l.b16 %v1101
        %v4029 = vunpack.c.h.b16 %v1101
        %v4030 = vunpack.c.l.b16 %v1102
        %v4031 = vunpack.c.h.b16 %v1102
        %v4032 = vunpack.c.l.b16 %v1103
        %v4033 = vunpack.c.h.b16 %v1103
        %v4034 = vunpack.c.l.b16 %v1104
        %v4035 = vunpack.c.h.b16 %v1104
        %v4036 = vunpack.c.l.b16 %v1105
        %v4037 = vunpack.c.h.b16 %v1105
        %v4038 = vunpack.c.l.b16 %v1106
        %v4039 = vunpack.c.h.b16 %v1106
        %v4040 = vunpack.c.l.b16 %v1107
        %v4041 = vunpack.c.h.b16 %v1107
        %v4042 = vunpack.c.l.b16 %v1108
        %v4043 = vunpack.c.h.b16 %v1108
        %v4044 = vunpack.c.l.b16 %v1109
        %v4045 = vunpack.c.h.b16 %v1109
        %v4046 = vunpack.c.l.b16 %v1110
        %v4047 = vunpack.c.h.b16 %v1110
        %v4048 = vunpack.c.l.b16 %v1111
        %v4049 = vunpack.c.h.b16 %v1111
        %v4050 = vunpack.c.l.b16 %v1112
        %v4051 = vunpack.c.h.b16 %v1112
        %v4052 = vunpack.c.l.b16 %v1113
        %v4053 = vunpack.c.h.b16 %v1113
        %v4054 = vunpack.c.l.b16 %v1114
        %v4055 = vunpack.c.h.b16 %v1114
        %v4056 = vunpack.c.l.b16 %v1115
        %v4057 = vunpack.c.h.b16 %v1115
        %v4058 = vunpack.c.l.b16 %v1116
        %v4059 = vunpack.c.h.b16 %v1116
        %v4060 = vunpack.c.l.b16 %v1117
        %v4061 = vunpack.c.h.b16 %v1117
        %v4062 = vunpack.c.l.b16 %v1118
        %v4063 = vunpack.c.h.b16 %v1118
        %v4064 = vunpack.c.l.b16 %v1119
        %v4065 = vunpack.c.h.b16 %v1119
        %v4066 = vunpack.c.l.b16 %v1120
        %v4067 = vunpack.c.h.b16 %v1120
        %v4068 = vunpack.c.l.b16 %v1121
        %v4069 = vunpack.c.h.b16 %v1121
        %v4070 = vunpack.c.l.b16 %v1122
        %v4071 = vunpack.c.h.b16 %v1122
        %v4072 = vunpack.c.l.b16 %v1123
        %v4073 = vunpack.c.h.b16 %v1123
        %v4074 = vunpack.c.l.b16 %v1124
        %v4075 = vunpack.c.h.b16 %v1124
        %v4076 = vunpack.c.l.b16 %v1125
        %v4077 = vunpack.c.h.b16 %v1125
        %v4078 = vunpack.c.l.b16 %v1126
        %v4079 = vunpack.c.h.b16 %v1126
        %v4080 = vunpack.c.l.b16 %v1127
        %v4081 = vunpack.c.h.b16 %v1127
        %v4082 = vunpack.c.l.b16 %v1128
        %v4083 = vunpack.c.h.b16 %v1128
        %v4084 = vunpack.c.l.b16 %v1129
        %v4085 = vunpack.c.h.b16 %v1129
        %v4086 = vunpack.c.l.b16 %v1130
        %v4087 = vunpack.c.h.b16 %v1130
        %v4088 = vunpack.c.l.b16 %v1131
        %v4089 = vunpack.c.h.b16 %v1131
        %v4090 = vunpack.c.l.b16 %v1132
        %v4091 = vunpack.c.h.b16 %v1132
        %v4092 = vunpack.c.l.b16 %v1133
        %v4093 = vunpack.c.h.b16 %v1133
        %v4094 = vunpack.c.l.b16 %v1134
        %v4095 = vunpack.c.h.b16 %v1134
        %v4096 = vunpack.c.l.b16 %v1135
        %v4097 = vunpack.c.h.b16 %v1135
        %v4098 = vunpack.c.l.b16 %v1136
        %v4099 = vunpack.c.h.b16 %v1136
        %v4100 = vunpack.c.l.b16 %v1137
        %v4101 = vunpack.c.h.b16 %v1137
        %v4102 = vunpack.c.l.b16 %v1138
        %v4103 = vunpack.c.h.b16 %v1138
        %v4104 = vunpack.c.l.b16 %v1139
        %v4105 = vunpack.c.h.b16 %v1139
        %v4106 = vunpack.c.l.b16 %v1140
        %v4107 = vunpack.c.h.b16 %v1140
        %v4108 = vunpack.c.l.b16 %v1141
        %v4109 = vunpack.c.h.b16 %v1141
        %v4110 = vunpack.c.l.b16 %v1142
        %v4111 = vunpack.c.h.b16 %v1142
        %v4112 = vunpack.c.l.b16 %v1143
        %v4113 = vunpack.c.h.b16 %v1143
        %v4114 = vunpack.c.l.b16 %v1144
        %v4115 = vunpack.c.h.b16 %v1144
        %v4116 = vunpack.c.l.b16 %v1145
        %v4117 = vunpack.c.h.b16 %v1145
        %v4118 = vunpack.c.l.b16 %v1146
        %v4119 = vunpack.c.h.b16 %v1146
        %v4120 = vunpack.c.l.b16 %v1147
        %v4121 = vunpack.c.h.b16 %v1147
        %v4122 = vunpack.c.l.b16 %v1148
        %v4123 = vunpack.c.h.b16 %v1148
        %v4124 = vunpack.c.l.b16 %v1149
        %v4125 = vunpack.c.h.b16 %v1149
        %v4126 = vunpack.c.l.b16 %v1150
        %v4127 = vunpack.c.h.b16 %v1150
        %v4128 = vunpack.c.l.b16 %v1151
        %v4129 = vunpack.c.h.b16 %v1151
        %v4130 = vunpack.c.l.b16 %v1152
        %v4131 = vunpack.c.h.b16 %v1152
        %v4132 = vunpack.c.l.b16 %v1153
        %v4133 = vunpack.c.h.b16 %v1153
        %v4134 = vunpack.c.l.b16 %v1154
        %v4135 = vunpack.c.h.b16 %v1154
        %v4136 = vunpack.c.l.b16 %v1155
        %v4137 = vunpack.c.h.b16 %v1155
        %v4138 = vunpack.c.l.b16 %v1156
        %v4139 = vunpack.c.h.b16 %v1156
        %v4140 = vunpack.c.l.b16 %v1157
        %v4141 = vunpack.c.h.b16 %v1157
        %v4142 = vunpack.c.l.b16 %v1158
        %v4143 = vunpack.c.h.b16 %v1158
        %v4144 = vunpack.c.l.b16 %v1159
        %v4145 = vunpack.c.h.b16 %v1159
        %v4146 = vunpack.c.l.b16 %v1160
        %v4147 = vunpack.c.h.b16 %v1160
        %v4148 = vunpack.c.l.b16 %v1161
        %v4149 = vunpack.c.h.b16 %v1161
        %v4150 = vunpack.c.l.b16 %v1162
        %v4151 = vunpack.c.h.b16 %v1162
        %v4152 = vunpack.c.l.b16 %v1163
        %v4153 = vunpack.c.h.b16 %v1163
        %v4154 = vunpack.c.l.b16 %v1164
        %v4155 = vunpack.c.h.b16 %v1164
        %v4156 = vunpack.c.l.b16 %v1165
        %v4157 = vunpack.c.h.b16 %v1165
        %v4158 = vunpack.c.l.b16 %v1166
        %v4159 = vunpack.c.h.b16 %v1166
        %v4160 = vunpack.c.l.b16 %v1167
        %v4161 = vunpack.c.h.b16 %v1167
        %v4162 = vunpack.c.l.b16 %v1168
        %v4163 = vunpack.c.h.b16 %v1168
        %v4164 = vunpack.c.l.b16 %v1169
        %v4165 = vunpack.c.h.b16 %v1169
        %v4166 = vunpack.c.l.b16 %v1170
        %v4167 = vunpack.c.h.b16 %v1170
        %v4168 = vunpack.c.l.b16 %v1171
        %v4169 = vunpack.c.h.b16 %v1171
        %v4170 = vunpack.c.l.b16 %v1172
        %v4171 = vunpack.c.h.b16 %v1172
        %v4172 = vunpack.c.l.b16 %v1173
        %v4173 = vunpack.c.h.b16 %v1173
        %v4174 = vunpack.c.l.b16 %v1174
        %v4175 = vunpack.c.h.b16 %v1174
        %v4176 = vunpack.c.l.b16 %v1175
        %v4177 = vunpack.c.h.b16 %v1175
        %v4178 = vunpack.c.l.b16 %v1176
        %v4179 = vunpack.c.h.b16 %v1176
        %v4180 = vunpack.c.l.b16 %v1177
        %v4181 = vunpack.c.h.b16 %v1177
        %v4182 = vunpack.c.l.b16 %v1178
        %v4183 = vunpack.c.h.b16 %v1178
        %v4184 = vunpack.c.l.b16 %v1179
        %v4185 = vunpack.c.h.b16 %v1179
        %v4186 = vunpack.c.l.b16 %v1180
        %v4187 = vunpack.c.h.b16 %v1180
        %v4188 = vunpack.c.l.b16 %v1181
        %v4189 = vunpack.c.h.b16 %v1181
        %v4190 = vunpack.c.l.b16 %v1182
        %v4191 = vunpack.c.h.b16 %v1182
        %v4192 = vunpack.c.l.b16 %v1183
        %v4193 = vunpack.c.h.b16 %v1183
        %v4194 = vunpack.c.l.b16 %v1184
        %v4195 = vunpack.c.h.b16 %v1184
        %v4196 = vunpack.c.l.b16 %v1185
        %v4197 = vunpack.c.h.b16 %v1185
        %v4198 = vunpack.c.l.b16 %v1186
        %v4199 = vunpack.c.h.b16 %v1186
        %v4200 = vunpack.c.l.b16 %v1187
        %v4201 = vunpack.c.h.b16 %v1187
        %v4202 = vunpack.c.l.b16 %v1188
        %v4203 = vunpack.c.h.b16 %v1188
        %v4204 = vunpack.c.l.b16 %v1189
        %v4205 = vunpack.c.h.b16 %v1189
        %v4206 = vunpack.c.l.b16 %v1190
        %v4207 = vunpack.c.h.b16 %v1190
        %v4208 = vunpack.c.l.b16 %v1191
        %v4209 = vunpack.c.h.b16 %v1191
        %v4210 = vunpack.c.l.b16 %v1192
        %v4211 = vunpack.c.h.b16 %v1192
        %v4212 = vunpack.c.l.b16 %v1193
        %v4213 = vunpack.c.h.b16 %v1193
        %v4214 = vunpack.c.l.b16 %v1194
        %v4215 = vunpack.c.h.b16 %v1194
        %v4216 = vunpack.c.l.b16 %v1195
        %v4217 = vunpack.c.h.b16 %v1195
        %v4218 = vunpack.c.l.b16 %v1196
        %v4219 = vunpack.c.h.b16 %v1196
        %v4220 = vunpack.c.l.b16 %v1197
        %v4221 = vunpack.c.h.b16 %v1197
        %v4222 = vunpack.c.l.b16 %v1198
        %v4223 = vunpack.c.h.b16 %v1198
        %v4224 = vunpack.c.l.b16 %v1199
        %v4225 = vunpack.c.h.b16 %v1199
        %v4226 = vunpack.c.l.b16 %v1200
        %v4227 = vunpack.c.h.b16 %v1200
        %v4228 = vunpack.c.l.b16 %v1201
        %v4229 = vunpack.c.h.b16 %v1201
        %v4230 = vunpack.c.l.b16 %v1202
        %v4231 = vunpack.c.h.b16 %v1202
        %v4232 = vunpack.c.l.b16 %v1203
        %v4233 = vunpack.c.h.b16 %v1203
        %v4234 = vunpack.c.l.b16 %v1204
        %v4235 = vunpack.c.h.b16 %v1204
        %v4236 = vunpack.c.l.b16 %v1205
        %v4237 = vunpack.c.h.b16 %v1205
        %v4238 = vunpack.c.l.b16 %v1206
        %v4239 = vunpack.c.h.b16 %v1206
        %v4240 = vunpack.c.l.b16 %v1207
        %v4241 = vunpack.c.h.b16 %v1207
        %v4242 = vunpack.c.l.b16 %v1208
        %v4243 = vunpack.c.h.b16 %v1208
        %v4244 = vunpack.c.l.b16 %v1209
        %v4245 = vunpack.c.h.b16 %v1209
        %v4246 = vunpack.c.l.b16 %v1210
        %v4247 = vunpack.c.h.b16 %v1210
        %v4248 = vunpack.c.l.b16 %v1211
        %v4249 = vunpack.c.h.b16 %v1211
        %v4250 = vunpack.c.l.b16 %v1212
        %v4251 = vunpack.c.h.b16 %v1212
        %v4252 = vunpack.c.l.b16 %v1213
        %v4253 = vunpack.c.h.b16 %v1213
        %v4254 = vunpack.c.l.b16 %v1214
        %v4255 = vunpack.c.h.b16 %v1214
        %v4256 = vunpack.c.l.b16 %v1215
        %v4257 = vunpack.c.h.b16 %v1215
        %v4258 = vunpack.c.l.b16 %v1216
        %v4259 = vunpack.c.h.b16 %v1216
        %v4260 = vunpack.c.l.b16 %v1217
        %v4261 = vunpack.c.h.b16 %v1217
        %v4262 = vunpack.c.l.b16 %v1218
        %v4263 = vunpack.c.h.b16 %v1218
        %v4264 = vunpack.c.l.b16 %v1219
        %v4265 = vunpack.c.h.b16 %v1219
        %v4266 = vunpack.c.l.b16 %v1220
        %v4267 = vunpack.c.h.b16 %v1220
        %v4268 = vunpack.c.l.b16 %v1221
        %v4269 = vunpack.c.h.b16 %v1221
        %v4270 = vunpack.c.l.b16 %v1222
        %v4271 = vunpack.c.h.b16 %v1222
        %v4272 = vunpack.c.l.b16 %v1223
        %v4273 = vunpack.c.h.b16 %v1223
        %v4274 = vunpack.c.l.b16 %v1224
        %v4275 = vunpack.c.h.b16 %v1224
        %v4276 = vunpack.c.l.b16 %v1225
        %v4277 = vunpack.c.h.b16 %v1225
        %v4278 = vunpack.c.l.b16 %v1226
        %v4279 = vunpack.c.h.b16 %v1226
        %v4280 = vunpack.c.l.b16 %v1227
        %v4281 = vunpack.c.h.b16 %v1227
        %v4282 = vunpack.c.l.b16 %v1228
        %v4283 = vunpack.c.h.b16 %v1228
        %v4284 = vunpack.c.l.b16 %v1229
        %v4285 = vunpack.c.h.b16 %v1229
        %v4286 = vunpack.c.l.b16 %v1230
        %v4287 = vunpack.c.h.b16 %v1230
        %v4288 = vunpack.c.l.b16 %v1231
        %v4289 = vunpack.c.h.b16 %v1231
        %v4290 = vunpack.c.l.b16 %v1232
        %v4291 = vunpack.c.h.b16 %v1232
        %v4292 = vunpack.c.l.b16 %v1233
        %v4293 = vunpack.c.h.b16 %v1233
        %v4294 = vunpack.c.l.b16 %v1234
        %v4295 = vunpack.c.h.b16 %v1234
        %v4296 = vunpack.c.l.b16 %v1235
        %v4297 = vunpack.c.h.b16 %v1235
        %v4298 = vunpack.c.l.b16 %v1236
        %v4299 = vunpack.c.h.b16 %v1236
        %v4300 = vunpack.c.l.b16 %v1237
        %v4301 = vunpack.c.h.b16 %v1237
        %v4302 = vunpack.c.l.b16 %v1238
        %v4303 = vunpack.c.h.b16 %v1238
        %v4304 = vunpack.c.l.b16 %v1239
        %v4305 = vunpack.c.h.b16 %v1239
        %v4306 = vunpack.c.l.b16 %v1240
        %v4307 = vunpack.c.h.b16 %v1240
        %v4308 = vunpack.c.l.b16 %v1241
        %v4309 = vunpack.c.h.b16 %v1241
        %v4310 = vunpack.c.l.b16 %v1242
        %v4311 = vunpack.c.h.b16 %v1242
        %v4312 = vunpack.c.l.b16 %v1243
        %v4313 = vunpack.c.h.b16 %v1243
        %v4314 = vunpack.c.l.b16 %v1244
        %v4315 = vunpack.c.h.b16 %v1244
        %v4316 = vunpack.c.l.b16 %v1245
        %v4317 = vunpack.c.h.b16 %v1245
        %v4318 = vunpack.c.l.b16 %v1246
        %v4319 = vunpack.c.h.b16 %v1246
        %v4320 = vunpack.c.l.b16 %v1247
        %v4321 = vunpack.c.h.b16 %v1247
        %v4322 = vunpack.c.l.b16 %v1248
        %v4323 = vunpack.c.h.b16 %v1248
        %v4324 = vunpack.c.l.b16 %v1249
        %v4325 = vunpack.c.h.b16 %v1249
        %v4326 = vunpack.c.l.b16 %v1250
        %v4327 = vunpack.c.h.b16 %v1250
        %v4328 = vunpack.c.l.b16 %v1251
        %v4329 = vunpack.c.h.b16 %v1251
        %v4330 = vunpack.c.l.b16 %v1252
        %v4331 = vunpack.c.h.b16 %v1252
        %v4332 = vunpack.c.l.b16 %v1253
        %v4333 = vunpack.c.h.b16 %v1253
        %v4334 = vunpack.c.l.b16 %v1254
        %v4335 = vunpack.c.h.b16 %v1254
        %v4336 = vunpack.c.l.b16 %v1255
        %v4337 = vunpack.c.h.b16 %v1255
        %v4338 = vunpack.c.l.b16 %v1256
        %v4339 = vunpack.c.h.b16 %v1256
        %v4340 = vunpack.c.l.b16 %v1257
        %v4341 = vunpack.c.h.b16 %v1257
        %v4342 = vunpack.c.l.b16 %v1258
        %v4343 = vunpack.c.h.b16 %v1258
        %v4344 = vunpack.c.l.b16 %v1259
        %v4345 = vunpack.c.h.b16 %v1259
        %v4346 = vunpack.c.l.b16 %v1260
        %v4347 = vunpack.c.h.b16 %v1260
        %v4348 = vunpack.c.l.b16 %v1261
        %v4349 = vunpack.c.h.b16 %v1261
        %v4350 = vunpack.c.l.b16 %v1262
        %v4351 = vunpack.c.h.b16 %v1262
        %v4352 = vunpack.c.l.b16 %v1263
        %v4353 = vunpack.c.h.b16 %v1263
        %v4354 = vunpack.c.l.b16 %v1264
        %v4355 = vunpack.c.h.b16 %v1264
        %v4356 = vunpack.c.l.b16 %v1265
        %v4357 = vunpack.c.h.b16 %v1265
        %v4358 = vunpack.c.l.b16 %v1266
        %v4359 = vunpack.c.h.b16 %v1266
        %v4360 = vunpack.c.l.b16 %v1267
        %v4361 = vunpack.c.h.b16 %v1267
        %v4362 = vunpack.c.l.b16 %v1268
        %v4363 = vunpack.c.h.b16 %v1268
        %v4364 = vunpack.c.l.b16 %v1269
        %v4365 = vunpack.c.h.b16 %v1269
        %v4366 = vunpack.c.l.b16 %v1270
        %v4367 = vunpack.c.h.b16 %v1270
        %v4368 = vunpack.c.l.b16 %v1271
        %v4369 = vunpack.c.h.b16 %v1271
        %v4370 = vunpack.c.l.b16 %v1272
        %v4371 = vunpack.c.h.b16 %v1272
        %v4372 = vunpack.c.l.b16 %v1273
        %v4373 = vunpack.c.h.b16 %v1273
        %v4374 = vunpack.c.l.b16 %v1274
        %v4375 = vunpack.c.h.b16 %v1274
        %v4376 = vunpack.c.l.b16 %v1275
        %v4377 = vunpack.c.h.b16 %v1275
        %v4378 = vunpack.c.l.b16 %v1276
        %v4379 = vunpack.c.h.b16 %v1276
        %v4380 = vunpack.c.l.b16 %v1277
        %v4381 = vunpack.c.h.b16 %v1277
        %v4382 = vunpack.c.l.b16 %v1278
        %v4383 = vunpack.c.h.b16 %v1278
        %v4384 = vunpack.c.l.b16 %v1279
        %v4385 = vunpack.c.h.b16 %v1279
        %v4386 = vunpack.c.l.b16 %v1280
        %v4387 = vunpack.c.h.b16 %v1280
        %v4388 = vunpack.c.l.b16 %v1281
        %v4389 = vunpack.c.h.b16 %v1281
        %v4390 = vunpack.c.l.b16 %v1282
        %v4391 = vunpack.c.h.b16 %v1282
        %v4392 = vunpack.c.l.b16 %v1283
        %v4393 = vunpack.c.h.b16 %v1283
        %v4394 = vunpack.c.l.b16 %v1284
        %v4395 = vunpack.c.h.b16 %v1284
        %v4396 = vunpack.c.l.b16 %v1285
        %v4397 = vunpack.c.h.b16 %v1285
        %v4398 = vunpack.c.l.b16 %v1286
        %v4399 = vunpack.c.h.b16 %v1286
        %v4400 = vunpack.c.l.b16 %v1287
        %v4401 = vunpack.c.h.b16 %v1287
        %v4402 = vunpack.c.l.b16 %v1288
        %v4403 = vunpack.c.h.b16 %v1288
        %v4404 = vunpack.c.l.b16 %v1289
        %v4405 = vunpack.c.h.b16 %v1289
        %v4406 = vunpack.c.l.b16 %v1290
        %v4407 = vunpack.c.h.b16 %v1290
        %v4408 = vunpack.c.l.b16 %v1291
        %v4409 = vunpack.c.h.b16 %v1291
        %v4410 = vunpack.c.l.b16 %v1292
        %v4411 = vunpack.c.h.b16 %v1292
        %v4412 = vunpack.c.l.b16 %v1293
        %v4413 = vunpack.c.h.b16 %v1293
        %v4414 = vunpack.c.l.b16 %v1294
        %v4415 = vunpack.c.h.b16 %v1294
        %v4416 = vunpack.c.l.b16 %v1295
        %v4417 = vunpack.c.h.b16 %v1295
        %v4418 = vunpack.c.l.b16 %v1296
        %v4419 = vunpack.c.h.b16 %v1296
        %v4420 = vunpack.c.l.b16 %v1297
        %v4421 = vunpack.c.h.b16 %v1297
        %v4422 = vunpack.c.l.b16 %v1298
        %v4423 = vunpack.c.h.b16 %v1298
        %v4424 = vunpack.c.l.b16 %v1299
        %v4425 = vunpack.c.h.b16 %v1299
        %v4426 = vunpack.c.l.b16 %v1300
        %v4427 = vunpack.c.h.b16 %v1300
        %v4428 = vunpack.c.l.b16 %v1301
        %v4429 = vunpack.c.h.b16 %v1301
        %v4430 = vunpack.c.l.b16 %v1302
        %v4431 = vunpack.c.h.b16 %v1302
        %v4432 = vunpack.c.l.b16 %v1303
        %v4433 = vunpack.c.h.b16 %v1303
        %v4434 = vunpack.c.l.b16 %v1304
        %v4435 = vunpack.c.h.b16 %v1304
        %v4436 = vunpack.c.l.b16 %v1305
        %v4437 = vunpack.c.h.b16 %v1305
        %v4438 = vunpack.c.l.b16 %v1306
        %v4439 = vunpack.c.h.b16 %v1306
        %v4440 = vunpack.c.l.b16 %v1307
        %v4441 = vunpack.c.h.b16 %v1307
        %v4442 = vunpack.c.l.b16 %v1308
        %v4443 = vunpack.c.h.b16 %v1308
        %v4444 = vunpack.c.l.b16 %v1309
        %v4445 = vunpack.c.h.b16 %v1309
        %v4446 = vunpack.c.l.b16 %v1310
        %v4447 = vunpack.c.h.b16 %v1310
        %v4448 = vunpack.c.l.b16 %v1311
        %v4449 = vunpack.c.h.b16 %v1311
        %v4450 = vunpack.c.l.b16 %v1312
        %v4451 = vunpack.c.h.b16 %v1312
        %v4452 = vunpack.c.l.b16 %v1313
        %v4453 = vunpack.c.h.b16 %v1313
        %v4454 = vunpack.c.l.b16 %v1314
        %v4455 = vunpack.c.h.b16 %v1314
        %v4456 = vunpack.c.l.b16 %v1315
        %v4457 = vunpack.c.h.b16 %v1315
        %v4458 = vunpack.c.l.b16 %v1316
        %v4459 = vunpack.c.h.b16 %v1316
        %v4460 = vunpack.c.l.b16 %v1317
        %v4461 = vunpack.c.h.b16 %v1317
        %v4462 = vunpack.c.l.b16 %v1318
        %v4463 = vunpack.c.h.b16 %v1318
        %v4464 = vunpack.c.l.b16 %v1319
        %v4465 = vunpack.c.h.b16 %v1319
        %v4466 = vunpack.c.l.b16 %v1320
        %v4467 = vunpack.c.h.b16 %v1320
        %v4468 = vunpack.c.l.b16 %v1321
        %v4469 = vunpack.c.h.b16 %v1321
        %v4470 = vunpack.c.l.b16 %v1322
        %v4471 = vunpack.c.h.b16 %v1322
        %v4472 = vunpack.c.l.b16 %v1323
        %v4473 = vunpack.c.h.b16 %v1323
        %v4474 = vunpack.c.l.b16 %v1324
        %v4475 = vunpack.c.h.b16 %v1324
        %v4476 = vunpack.c.l.b16 %v1325
        %v4477 = vunpack.c.h.b16 %v1325
        %v4478 = vunpack.c.l.b16 %v1326
        %v4479 = vunpack.c.h.b16 %v1326
        %v4480 = vunpack.c.l.b16 %v1327
        %v4481 = vunpack.c.h.b16 %v1327
        %v4482 = vunpack.c.l.b16 %v1328
        %v4483 = vunpack.c.h.b16 %v1328
        %v4484 = vunpack.c.l.b16 %v1329
        %v4485 = vunpack.c.h.b16 %v1329
        %v4486 = vunpack.c.l.b16 %v1330
        %v4487 = vunpack.c.h.b16 %v1330
        %v4488 = vunpack.c.l.b16 %v1331
        %v4489 = vunpack.c.h.b16 %v1331
        %v4490 = vunpack.c.l.b16 %v1332
        %v4491 = vunpack.c.h.b16 %v1332
        %v4492 = vunpack.c.l.b16 %v1333
        %v4493 = vunpack.c.h.b16 %v1333
        %v4494 = vunpack.c.l.b16 %v1334
        %v4495 = vunpack.c.h.b16 %v1334
        %v4496 = vunpack.c.l.b16 %v1335
        %v4497 = vunpack.c.h.b16 %v1335
        %v4498 = vunpack.c.l.b16 %v1336
        %v4499 = vunpack.c.h.b16 %v1336
        %v4500 = vunpack.c.l.b16 %v1337
        %v4501 = vunpack.c.h.b16 %v1337
        %v4502 = vunpack.c.l.b16 %v1338
        %v4503 = vunpack.c.h.b16 %v1338
        %v4504 = vunpack.c.l.b16 %v1339
        %v4505 = vunpack.c.h.b16 %v1339
        %v4506 = vunpack.c.l.b16 %v1340
        %v4507 = vunpack.c.h.b16 %v1340
        %v4508 = vunpack.c.l.b16 %v1341
        %v4509 = vunpack.c.h.b16 %v1341
        %v4510 = vunpack.c.l.b16 %v1342
        %v4511 = vunpack.c.h.b16 %v1342
        %v4512 = vunpack.c.l.b16 %v1343
        %v4513 = vunpack.c.h.b16 %v1343
        %v4514 = vunpack.c.l.b16 %v1344
        %v4515 = vunpack.c.h.b16 %v1344
        %v4516 = vunpack.c.l.b16 %v1345
        %v4517 = vunpack.c.h.b16 %v1345
        %v4518 = vunpack.c.l.b16 %v1346
        %v4519 = vunpack.c.h.b16 %v1346
        %v4520 = vunpack.c.l.b16 %v1347
        %v4521 = vunpack.c.h.b16 %v1347
        %v4522 = vunpack.c.l.b16 %v1348
        %v4523 = vunpack.c.h.b16 %v1348
        %v4524 = vunpack.c.l.b16 %v1349
        %v4525 = vunpack.c.h.b16 %v1349
        %v4526 = vunpack.c.l.b16 %v1350
        %v4527 = vunpack.c.h.b16 %v1350
        %v4528 = vunpack.c.l.b16 %v1351
        %v4529 = vunpack.c.h.b16 %v1351
        %v4530 = vunpack.c.l.b16 %v1352
        %v4531 = vunpack.c.h.b16 %v1352
        %v4532 = vunpack.c.l.b16 %v1353
        %v4533 = vunpack.c.h.b16 %v1353
        %v4534 = vunpack.c.l.b16 %v1354
        %v4535 = vunpack.c.h.b16 %v1354
        %v4536 = vunpack.c.l.b16 %v1355
        %v4537 = vunpack.c.h.b16 %v1355
        %v4538 = vunpack.c.l.b16 %v1356
        %v4539 = vunpack.c.h.b16 %v1356
        %v4540 = vunpack.c.l.b16 %v1357
        %v4541 = vunpack.c.h.b16 %v1357
        %v4542 = vunpack.c.l.b16 %v1358
        %v4543 = vunpack.c.h.b16 %v1358
        %v4544 = vunpack.c.l.b16 %v1359
        %v4545 = vunpack.c.h.b16 %v1359
        %v4546 = vunpack.c.l.b16 %v1360
        %v4547 = vunpack.c.h.b16 %v1360
        %v4548 = vunpack.c.l.b16 %v1361
        %v4549 = vunpack.c.h.b16 %v1361
        %v4550 = vunpack.c.l.b16 %v1362
        %v4551 = vunpack.c.h.b16 %v1362
        %v4552 = vunpack.c.l.b16 %v1363
        %v4553 = vunpack.c.h.b16 %v1363
        %v4554 = vunpack.c.l.b16 %v1364
        %v4555 = vunpack.c.h.b16 %v1364
        %v4556 = vunpack.c.l.b16 %v1365
        %v4557 = vunpack.c.h.b16 %v1365
        %v4558 = vunpack.c.l.b16 %v1366
        %v4559 = vunpack.c.h.b16 %v1366
        %v4560 = vunpack.c.l.b16 %v1367
        %v4561 = vunpack.c.h.b16 %v1367
        %v4562 = vpack.c.b16 %v2522, %v2514
        %v4563 = vpack.c.b16 %v2523, %v2515
        %v4564 = vpack.c.b16 %v2524, %v2516
        %v4565 = vpack.c.b16 %v2525, %v2517
        %v4566 = vpack.c.b16 %v2526, %v2518
        %v4567 = vpack.c.b16 %v2527, %v2519
        %v4568 = vpack.c.b16 %v2528, %v2520
        %v4569 = vpack.c.b16 %v2529, %v2521
        %v4570 = vpack.c.b16 %v2538, %v2530
        %v4571 = vpack.c.b16 %v2539, %v2531
        %v4572 = vpack.c.b16 %v2540, %v2532
        %v4573 = vpack.c.b16 %v2541, %v2533
        %v4574 = vpack.c.b16 %v2542, %v2534
        %v4575 = vpack.c.b16 %v2543, %v2535
        %v4576 = vpack.c.b16 %v2544, %v2536
        %v4577 = vpack.c.b16 %v2545, %v2537
        %v4578 = vpack.c.b16 %v2554, %v2546
        %v4579 = vpack.c.b16 %v2555, %v2547
        %v4580 = vpack.c.b16 %v2556, %v2548
        %v4581 = vpack.c.b16 %v2557, %v2549
        %v4582 = vpack.c.b16 %v2558, %v2550
        %v4583 = vpack.c.b16 %v2559, %v2551
        %v4584 = vpack.c.b16 %v2560, %v2552
        %v4585 = vpack.c.b16 %v2561, %v2553
        %v4586 = vpack.c.b16 %v2570, %v2562
        %v4587 = vpack.c.b16 %v2571, %v2563
        %v4588 = vpack.c.b16 %v2572, %v2564
        %v4589 = vpack.c.b16 %v2573, %v2565
        %v4590 = vpack.c.b16 %v2574, %v2566
        %v4591 = vpack.c.b16 %v2575, %v2567
        %v4592 = vpack.c.b16 %v2576, %v2568
        %v4593 = vpack.c.b16 %v2577, %v2569
        %v4594 = vpack.c.b16 %v2586, %v2578
        %v4595 = vpack.c.b16 %v2587, %v2579
        %v4596 = vpack.c.b16 %v2588, %v2580
        %v4597 = vpack.c.b16 %v2589, %v2581
        %v4598 = vpack.c.b16 %v2590, %v2582
        %v4599 = vpack.c.b16 %v2591, %v2583
        %v4600 = vpack.c.b16 %v2592, %v2584
        %v4601 = vpack.c.b16 %v2593, %v2585
        %v4602 = vpack.c.b16 %v2602, %v2594
        %v4603 = vpack.c.b16 %v2603, %v2595
        %v4604 = vpack.c.b16 %v2604, %v2596
        %v4605 = vpack.c.b16 %v2605, %v2597
        %v4606 = vpack.c.b16 %v2606, %v2598
        %v4607 = vpack.c.b16 %v2607, %v2599
        %v4608 = vpack.c.b16 %v2608, %v2600
        %v4609 = vpack.c.b16 %v2609, %v2601
        %v4610 = vpack.c.b16 %v2618, %v2610
        %v4611 = vpack.c.b16 %v2619, %v2611
        %v4612 = vpack.c.b16 %v2620, %v2612
        %v4613 = vpack.c.b16 %v2621, %v2613
        %v4614 = vpack.c.b16 %v2622, %v2614
        %v4615 = vpack.c.b16 %v2623, %v2615
        %v4616 = vpack.c.b16 %v2624, %v2616
        %v4617 = vpack.c.b16 %v2625, %v2617
        %v4618 = vpack.c.b16 %v2634, %v2626
        %v4619 = vpack.c.b16 %v2635, %v2627
        %v4620 = vpack.c.b16 %v2636, %v2628
        %v4621 = vpack.c.b16 %v2637, %v2629
        %v4622 = vpack.c.b16 %v2638, %v2630
        %v4623 = vpack.c.b16 %v2639, %v2631
        %v4624 = vpack.c.b16 %v2640, %v2632
        %v4625 = vpack.c.b16 %v2641, %v2633
        %v4626 = vpack.c.b16 %v2650, %v2642
        %v4627 = vpack.c.b16 %v2651, %v2643
        %v4628 = vpack.c.b16 %v2652, %v2644
        %v4629 = vpack.c.b16 %v2653, %v2645
        %v4630 = vpack.c.b16 %v2654, %v2646
        %v4631 = vpack.c.b16 %v2655, %v2647
        %v4632 = vpack.c.b16 %v2656, %v2648
        %v4633 = vpack.c.b16 %v2657, %v2649
        %v4634 = vpack.c.b16 %v2666, %v2658
        %v4635 = vpack.c.b16 %v2667, %v2659
        %v4636 = vpack.c.b16 %v2668, %v2660
        %v4637 = vpack.c.b16 %v2669, %v2661
        %v4638 = vpack.c.b16 %v2670, %v2662
        %v4639 = vpack.c.b16 %v2671, %v2663
        %v4640 = vpack.c.b16 %v2672, %v2664
        %v4641 = vpack.c.b16 %v2673, %v2665
        %v4642 = vpack.c.b16 %v2682, %v2674
        %v4643 = vpack.c.b16 %v2683, %v2675
        %v4644 = vpack.c.b16 %v2684, %v2676
        %v4645 = vpack.c.b16 %v2685, %v2677
        %v4646 = vpack.c.b16 %v2686, %v2678
        %v4647 = vpack.c.b16 %v2687, %v2679
        %v4648 = vpack.c.b16 %v2688, %v2680
        %v4649 = vpack.c.b16 %v2689, %v2681
        %v4650 = vpack.c.b16 %v2698, %v2690
        %v4651 = vpack.c.b16 %v2699, %v2691
        %v4652 = vpack.c.b16 %v2700, %v2692
        %v4653 = vpack.c.b16 %v2701, %v2693
        %v4654 = vpack.c.b16 %v2702, %v2694
        %v4655 = vpack.c.b16 %v2703, %v2695
        %v4656 = vpack.c.b16 %v2704, %v2696
        %v4657 = vpack.c.b16 %v2705, %v2697
        %v4658 = vpack.c.b16 %v2714, %v2706
        %v4659 = vpack.c.b16 %v2715, %v2707
        %v4660 = vpack.c.b16 %v2716, %v2708
        %v4661 = vpack.c.b16 %v2717, %v2709
        %v4662 = vpack.c.b16 %v2718, %v2710
        %v4663 = vpack.c.b16 %v2719, %v2711
        %v4664 = vpack.c.b16 %v2720, %v2712
        %v4665 = vpack.c.b16 %v2721, %v2713
        %v4666 = vpack.c.b16 %v2730, %v2722
        %v4667 = vpack.c.b16 %v2731, %v2723
        %v4668 = vpack.c.b16 %v2732, %v2724
        %v4669 = vpack.c.b16 %v2733, %v2725
        %v4670 = vpack.c.b16 %v2734, %v2726
        %v4671 = vpack.c.b16 %v2735, %v2727
        %v4672 = vpack.c.b16 %v2736, %v2728
        %v4673 = vpack.c.b16 %v2737, %v2729
        %v4674 = vpack.c.b16 %v2746, %v2738
        %v4675 = vpack.c.b16 %v2747, %v2739
        %v4676 = vpack.c.b16 %v2748, %v2740
        %v4677 = vpack.c.b16 %v2749, %v2741
        %v4678 = vpack.c.b16 %v2750, %v2742
        %v4679 = vpack.c.b16 %v2751, %v2743
        %v4680 = vpack.c.b16 %v2752, %v2744
        %v4681 = vpack.c.b16 %v2753, %v2745
        %v4682 = vpack.c.b16 %v2762, %v2754
        %v4683 = vpack.c.b16 %v2763, %v2755
        %v4684 = vpack.c.b16 %v2764, %v2756
        %v4685 = vpack.c.b16 %v2765, %v2757
        %v4686 = vpack.c.b16 %v2766, %v2758
        %v4687 = vpack.c.b16 %v2767, %v2759
        %v4688 = vpack.c.b16 %v2768, %v2760
        %v4689 = vpack.c.b16 %v2769, %v2761
        %v4690 = vpack.c.b16 %v2778, %v2770
        %v4691 = vpack.c.b16 %v2779, %v2771
        %v4692 = vpack.c.b16 %v2780, %v2772
        %v4693 = vpack.c.b16 %v2781, %v2773
        %v4694 = vpack.c.b16 %v2782, %v2774
        %v4695 = vpack.c.b16 %v2783, %v2775
        %v4696 = vpack.c.b16 %v2784, %v2776
        %v4697 = vpack.c.b16 %v2785, %v2777
        %v4698 = vpack.c.b16 %v2794, %v2786
        %v4699 = vpack.c.b16 %v2795, %v2787
        %v4700 = vpack.c.b16 %v2796, %v2788
        %v4701 = vpack.c.b16 %v2797, %v2789
        %v4702 = vpack.c.b16 %v2798, %v2790
        %v4703 = vpack.c.b16 %v2799, %v2791
        %v4704 = vpack.c.b16 %v2800, %v2792
        %v4705 = vpack.c.b16 %v2801, %v2793
        %v4706 = vpack.c.b16 %v2810, %v2802
        %v4707 = vpack.c.b16 %v2811, %v2803
        %v4708 = vpack.c.b16 %v2812, %v2804
        %v4709 = vpack.c.b16 %v2813, %v2805
        %v4710 = vpack.c.b16 %v2814, %v2806
        %v4711 = vpack.c.b16 %v2815, %v2807
        %v4712 = vpack.c.b16 %v2816, %v2808
        %v4713 = vpack.c.b16 %v2817, %v2809
        %v4714 = vpack.c.b16 %v2826, %v2818
        %v4715 = vpack.c.b16 %v2827, %v2819
        %v4716 = vpack.c.b16 %v2828, %v2820
        %v4717 = vpack.c.b16 %v2829, %v2821
        %v4718 = vpack.c.b16 %v2830, %v2822
        %v4719 = vpack.c.b16 %v2831, %v2823
        %v4720 = vpack.c.b16 %v2832, %v2824
        %v4721 = vpack.c.b16 %v2833, %v2825
        %v4722 = vpack.c.b16 %v2842, %v2834
        %v4723 = vpack.c.b16 %v2843, %v2835
        %v4724 = vpack.c.b16 %v2844, %v2836
        %v4725 = vpack.c.b16 %v2845, %v2837
        %v4726 = vpack.c.b16 %v2846, %v2838
        %v4727 = vpack.c.b16 %v2847, %v2839
        %v4728 = vpack.c.b16 %v2848, %v2840
        %v4729 = vpack.c.b16 %v2849, %v2841
        %v4730 = vpack.c.b16 %v2858, %v2850
        %v4731 = vpack.c.b16 %v2859, %v2851
        %v4732 = vpack.c.b16 %v2860, %v2852
        %v4733 = vpack.c.b16 %v2861, %v2853
        %v4734 = vpack.c.b16 %v2862, %v2854
        %v4735 = vpack.c.b16 %v2863, %v2855
        %v4736 = vpack.c.b16 %v2864, %v2856
        %v4737 = vpack.c.b16 %v2865, %v2857
        %v4738 = vpack.c.b16 %v2874, %v2866
        %v4739 = vpack.c.b16 %v2875, %v2867
        %v4740 = vpack.c.b16 %v2876, %v2868
        %v4741 = vpack.c.b16 %v2877, %v2869
        %v4742 = vpack.c.b16 %v2878, %v2870
        %v4743 = vpack.c.b16 %v2879, %v2871
        %v4744 = vpack.c.b16 %v2880, %v2872
        %v4745 = vpack.c.b16 %v2881, %v2873
        %v4746 = vpack.c.b16 %v2890, %v2882
        %v4747 = vpack.c.b16 %v2891, %v2883
        %v4748 = vpack.c.b16 %v2892, %v2884
        %v4749 = vpack.c.b16 %v2893, %v2885
        %v4750 = vpack.c.b16 %v2894, %v2886
        %v4751 = vpack.c.b16 %v2895, %v2887
        %v4752 = vpack.c.b16 %v2896, %v2888
        %v4753 = vpack.c.b16 %v2897, %v2889
        %v4754 = vpack.c.b16 %v2906, %v2898
        %v4755 = vpack.c.b16 %v2907, %v2899
        %v4756 = vpack.c.b16 %v2908, %v2900
        %v4757 = vpack.c.b16 %v2909, %v2901
        %v4758 = vpack.c.b16 %v2910, %v2902
        %v4759 = vpack.c.b16 %v2911, %v2903
        %v4760 = vpack.c.b16 %v2912, %v2904
        %v4761 = vpack.c.b16 %v2913, %v2905
        %v4762 = vpack.c.b16 %v2922, %v2914
        %v4763 = vpack.c.b16 %v2923, %v2915
        %v4764 = vpack.c.b16 %v2924, %v2916
        %v4765 = vpack.c.b16 %v2925, %v2917
        %v4766 = vpack.c.b16 %v2926, %v2918
        %v4767 = vpack.c.b16 %v2927, %v2919
        %v4768 = vpack.c.b16 %v2928, %v2920
        %v4769 = vpack.c.b16 %v2929, %v2921
        %v4770 = vpack.c.b16 %v2938, %v2930
        %v4771 = vpack.c.b16 %v2939, %v2931
        %v4772 = vpack.c.b16 %v2940, %v2932
        %v4773 = vpack.c.b16 %v2941, %v2933
        %v4774 = vpack.c.b16 %v2942, %v2934
        %v4775 = vpack.c.b16 %v2943, %v2935
        %v4776 = vpack.c.b16 %v2944, %v2936
        %v4777 = vpack.c.b16 %v2945, %v2937
        %v4778 = vpack.c.b16 %v2954, %v2946
        %v4779 = vpack.c.b16 %v2955, %v2947
        %v4780 = vpack.c.b16 %v2956, %v2948
        %v4781 = vpack.c.b16 %v2957, %v2949
        %v4782 = vpack.c.b16 %v2958, %v2950
        %v4783 = vpack.c.b16 %v2959, %v2951
        %v4784 = vpack.c.b16 %v2960, %v2952
        %v4785 = vpack.c.b16 %v2961, %v2953
        %v4786 = vpack.c.b16 %v2970, %v2962
        %v4787 = vpack.c.b16 %v2971, %v2963
        %v4788 = vpack.c.b16 %v2972, %v2964
        %v4789 = vpack.c.b16 %v2973, %v2965
        %v4790 = vpack.c.b16 %v2974, %v2966
        %v4791 = vpack.c.b16 %v2975, %v2967
        %v4792 = vpack.c.b16 %v2976, %v2968
        %v4793 = vpack.c.b16 %v2977, %v2969
        %v4794 = vpack.c.b16 %v2986, %v2978
        %v4795 = vpack.c.b16 %v2987, %v2979
        %v4796 = vpack.c.b16 %v2988, %v2980
        %v4797 = vpack.c.b16 %v2989, %v2981
        %v4798 = vpack.c.b16 %v2990, %v2982
        %v4799 = vpack.c.b16 %v2991, %v2983
        %v4800 = vpack.c.b16 %v2992, %v2984
        %v4801 = vpack.c.b16 %v2993, %v2985
        %v4802 = vpack.c.b16 %v3002, %v2994
        %v4803 = vpack.c.b16 %v3003, %v2995
        %v4804 = vpack.c.b16 %v3004, %v2996
        %v4805 = vpack.c.b16 %v3005, %v2997
        %v4806 = vpack.c.b16 %v3006, %v2998
        %v4807 = vpack.c.b16 %v3007, %v2999
        %v4808 = vpack.c.b16 %v3008, %v3000
        %v4809 = vpack.c.b16 %v3009, %v3001
        %v4810 = vpack.c.b16 %v3018, %v3010
        %v4811 = vpack.c.b16 %v3019, %v3011
        %v4812 = vpack.c.b16 %v3020, %v3012
        %v4813 = vpack.c.b16 %v3021, %v3013
        %v4814 = vpack.c.b16 %v3022, %v3014
        %v4815 = vpack.c.b16 %v3023, %v3015
        %v4816 = vpack.c.b16 %v3024, %v3016
        %v4817 = vpack.c.b16 %v3025, %v3017
        %v4818 = vpack.c.b16 %v3034, %v3026
        %v4819 = vpack.c.b16 %v3035, %v3027
        %v4820 = vpack.c.b16 %v3036, %v3028
        %v4821 = vpack.c.b16 %v3037, %v3029
        %v4822 = vpack.c.b16 %v3038, %v3030
        %v4823 = vpack.c.b16 %v3039, %v3031
        %v4824 = vpack.c.b16 %v3040, %v3032
        %v4825 = vpack.c.b16 %v3041, %v3033
        %v4826 = vpack.c.b16 %v3050, %v3042
        %v4827 = vpack.c.b16 %v3051, %v3043
        %v4828 = vpack.c.b16 %v3052, %v3044
        %v4829 = vpack.c.b16 %v3053, %v3045
        %v4830 = vpack.c.b16 %v3054, %v3046
        %v4831 = vpack.c.b16 %v3055, %v3047
        %v4832 = vpack.c.b16 %v3056, %v3048
        %v4833 = vpack.c.b16 %v3057, %v3049
        %v4834 = vpack.c.b16 %v3066, %v3058
        %v4835 = vpack.c.b16 %v3067, %v3059
        %v4836 = vpack.c.b16 %v3068, %v3060
        %v4837 = vpack.c.b16 %v3069, %v3061
        %v4838 = vpack.c.b16 %v3070, %v3062
        %v4839 = vpack.c.b16 %v3071, %v3063
        %v4840 = vpack.c.b16 %v3072, %v3064
        %v4841 = vpack.c.b16 %v3073, %v3065
        %v4842 = vpack.c.b16 %v3082, %v3074
        %v4843 = vpack.c.b16 %v3083, %v3075
        %v4844 = vpack.c.b16 %v3084, %v3076
        %v4845 = vpack.c.b16 %v3085, %v3077
        %v4846 = vpack.c.b16 %v3086, %v3078
        %v4847 = vpack.c.b16 %v3087, %v3079
        %v4848 = vpack.c.b16 %v3088, %v3080
        %v4849 = vpack.c.b16 %v3089, %v3081
        %v4850 = vpack.c.b16 %v3098, %v3090
        %v4851 = vpack.c.b16 %v3099, %v3091
        %v4852 = vpack.c.b16 %v3100, %v3092
        %v4853 = vpack.c.b16 %v3101, %v3093
        %v4854 = vpack.c.b16 %v3102, %v3094
        %v4855 = vpack.c.b16 %v3103, %v3095
        %v4856 = vpack.c.b16 %v3104, %v3096
        %v4857 = vpack.c.b16 %v3105, %v3097
        %v4858 = vpack.c.b16 %v3114, %v3106
        %v4859 = vpack.c.b16 %v3115, %v3107
        %v4860 = vpack.c.b16 %v3116, %v3108
        %v4861 = vpack.c.b16 %v3117, %v3109
        %v4862 = vpack.c.b16 %v3118, %v3110
        %v4863 = vpack.c.b16 %v3119, %v3111
        %v4864 = vpack.c.b16 %v3120, %v3112
        %v4865 = vpack.c.b16 %v3121, %v3113
        %v4866 = vpack.c.b16 %v3130, %v3122
        %v4867 = vpack.c.b16 %v3131, %v3123
        %v4868 = vpack.c.b16 %v3132, %v3124
        %v4869 = vpack.c.b16 %v3133, %v3125
        %v4870 = vpack.c.b16 %v3134, %v3126
        %v4871 = vpack.c.b16 %v3135, %v3127
        %v4872 = vpack.c.b16 %v3136, %v3128
        %v4873 = vpack.c.b16 %v3137, %v3129
        %v4874 = vpack.c.b16 %v3146, %v3138
        %v4875 = vpack.c.b16 %v3147, %v3139
        %v4876 = vpack.c.b16 %v3148, %v3140
        %v4877 = vpack.c.b16 %v3149, %v3141
        %v4878 = vpack.c.b16 %v3150, %v3142
        %v4879 = vpack.c.b16 %v3151, %v3143
        %v4880 = vpack.c.b16 %v3152, %v3144
        %v4881 = vpack.c.b16 %v3153, %v3145
        %v4882 = vpack.c.b16 %v3162, %v3154
        %v4883 = vpack.c.b16 %v3163, %v3155
        %v4884 = vpack.c.b16 %v3164, %v3156
        %v4885 = vpack.c.b16 %v3165, %v3157
        %v4886 = vpack.c.b16 %v3166, %v3158
        %v4887 = vpack.c.b16 %v3167, %v3159
        %v4888 = vpack.c.b16 %v3168, %v3160
        %v4889 = vpack.c.b16 %v3169, %v3161
        %v4890 = vpack.c.b16 %v3178, %v3170
        %v4891 = vpack.c.b16 %v3179, %v3171
        %v4892 = vpack.c.b16 %v3180, %v3172
        %v4893 = vpack.c.b16 %v3181, %v3173
        %v4894 = vpack.c.b16 %v3182, %v3174
        %v4895 = vpack.c.b16 %v3183, %v3175
        %v4896 = vpack.c.b16 %v3184, %v3176
        %v4897 = vpack.c.b16 %v3185, %v3177
        %v4898 = vpack.c.b16 %v3194, %v3186
        %v4899 = vpack.c.b16 %v3195, %v3187
        %v4900 = vpack.c.b16 %v3196, %v3188
        %v4901 = vpack.c.b16 %v3197, %v3189
        %v4902 = vpack.c.b16 %v3198, %v3190
        %v4903 = vpack.c.b16 %v3199, %v3191
        %v4904 = vpack.c.b16 %v3200, %v3192
        %v4905 = vpack.c.b16 %v3201, %v3193
        %v4906 = vpack.c.b16 %v3210, %v3202
        %v4907 = vpack.c.b16 %v3211, %v3203
        %v4908 = vpack.c.b16 %v3212, %v3204
        %v4909 = vpack.c.b16 %v3213, %v3205
        %v4910 = vpack.c.b16 %v3214, %v3206
        %v4911 = vpack.c.b16 %v3215, %v3207
        %v4912 = vpack.c.b16 %v3216, %v3208
        %v4913 = vpack.c.b16 %v3217, %v3209
        %v4914 = vpack.c.b16 %v3226, %v3218
        %v4915 = vpack.c.b16 %v3227, %v3219
        %v4916 = vpack.c.b16 %v3228, %v3220
        %v4917 = vpack.c.b16 %v3229, %v3221
        %v4918 = vpack.c.b16 %v3230, %v3222
        %v4919 = vpack.c.b16 %v3231, %v3223
        %v4920 = vpack.c.b16 %v3232, %v3224
        %v4921 = vpack.c.b16 %v3233, %v3225
        %v4922 = vpack.c.b16 %v3242, %v3234
        %v4923 = vpack.c.b16 %v3243, %v3235
        %v4924 = vpack.c.b16 %v3244, %v3236
        %v4925 = vpack.c.b16 %v3245, %v3237
        %v4926 = vpack.c.b16 %v3246, %v3238
        %v4927 = vpack.c.b16 %v3247, %v3239
        %v4928 = vpack.c.b16 %v3248, %v3240
        %v4929 = vpack.c.b16 %v3249, %v3241
        %v4930 = vpack.c.b16 %v3258, %v3250
        %v4931 = vpack.c.b16 %v3259, %v3251
        %v4932 = vpack.c.b16 %v3260, %v3252
        %v4933 = vpack.c.b16 %v3261, %v3253
        %v4934 = vpack.c.b16 %v3262, %v3254
        %v4935 = vpack.c.b16 %v3263, %v3255
        %v4936 = vpack.c.b16 %v3264, %v3256
        %v4937 = vpack.c.b16 %v3265, %v3257
        %v4938 = vpack.c.b16 %v3274, %v3266
        %v4939 = vpack.c.b16 %v3275, %v3267
        %v4940 = vpack.c.b16 %v3276, %v3268
        %v4941 = vpack.c.b16 %v3277, %v3269
        %v4942 = vpack.c.b16 %v3278, %v3270
        %v4943 = vpack.c.b16 %v3279, %v3271
        %v4944 = vpack.c.b16 %v3280, %v3272
        %v4945 = vpack.c.b16 %v3281, %v3273
        %v4946 = vpack.c.b16 %v3290, %v3282
        %v4947 = vpack.c.b16 %v3291, %v3283
        %v4948 = vpack.c.b16 %v3292, %v3284
        %v4949 = vpack.c.b16 %v3293, %v3285
        %v4950 = vpack.c.b16 %v3294, %v3286
        %v4951 = vpack.c.b16 %v3295, %v3287
        %v4952 = vpack.c.b16 %v3296, %v3288
        %v4953 = vpack.c.b16 %v3297, %v3289
        %v4954 = vpack.c.b16 %v3306, %v3298
        %v4955 = vpack.c.b16 %v3307, %v3299
        %v4956 = vpack.c.b16 %v3308, %v3300
        %v4957 = vpack.c.b16 %v3309, %v3301
        %v4958 = vpack.c.b16 %v3310, %v3302
        %v4959 = vpack.c.b16 %v3311, %v3303
        %v4960 = vpack.c.b16 %v3312, %v3304
        %v4961 = vpack.c.b16 %v3313, %v3305
        %v4962 = vpack.c.b16 %v3322, %v3314
        %v4963 = vpack.c.b16 %v3323, %v3315
        %v4964 = vpack.c.b16 %v3324, %v3316
        %v4965 = vpack.c.b16 %v3325, %v3317
        %v4966 = vpack.c.b16 %v3326, %v3318
        %v4967 = vpack.c.b16 %v3327, %v3319
        %v4968 = vpack.c.b16 %v3328, %v3320
        %v4969 = vpack.c.b16 %v3329, %v3321
        %v4970 = vpack.c.b16 %v3338, %v3330
        %v4971 = vpack.c.b16 %v3339, %v3331
        %v4972 = vpack.c.b16 %v3340, %v3332
        %v4973 = vpack.c.b16 %v3341, %v3333
        %v4974 = vpack.c.b16 %v3342, %v3334
        %v4975 = vpack.c.b16 %v3343, %v3335
        %v4976 = vpack.c.b16 %v3344, %v3336
        %v4977 = vpack.c.b16 %v3345, %v3337
        %v4978 = vpack.c.b16 %v3354, %v3346
        %v4979 = vpack.c.b16 %v3355, %v3347
        %v4980 = vpack.c.b16 %v3356, %v3348
        %v4981 = vpack.c.b16 %v3357, %v3349
        %v4982 = vpack.c.b16 %v3358, %v3350
        %v4983 = vpack.c.b16 %v3359, %v3351
        %v4984 = vpack.c.b16 %v3360, %v3352
        %v4985 = vpack.c.b16 %v3361, %v3353
        %v4986 = vpack.c.b16 %v3370, %v3362
        %v4987 = vpack.c.b16 %v3371, %v3363
        %v4988 = vpack.c.b16 %v3372, %v3364
        %v4989 = vpack.c.b16 %v3373, %v3365
        %v4990 = vpack.c.b16 %v3374, %v3366
        %v4991 = vpack.c.b16 %v3375, %v3367
        %v4992 = vpack.c.b16 %v3376, %v3368
        %v4993 = vpack.c.b16 %v3377, %v3369
        %v4994 = vpack.c.b16 %v3386, %v3378
        %v4995 = vpack.c.b16 %v3387, %v3379
        %v4996 = vpack.c.b16 %v3388, %v3380
        %v4997 = vpack.c.b16 %v3389, %v3381
        %v4998 = vpack.c.b16 %v3390, %v3382
        %v4999 = vpack.c.b16 %v3391, %v3383
        %v5000 = vpack.c.b16 %v3392, %v3384
        %v5001 = vpack.c.b16 %v3393, %v3385
        %v5002 = vpack.c.b16 %v3402, %v3394
        %v5003 = vpack.c.b16 %v3403, %v3395
        %v5004 = vpack.c.b16 %v3404, %v3396
        %v5005 = vpack.c.b16 %v3405, %v3397
        %v5006 = vpack.c.b16 %v3406, %v3398
        %v5007 = vpack.c.b16 %v3407, %v3399
        %v5008 = vpack.c.b16 %v3408, %v3400
        %v5009 = vpack.c.b16 %v3409, %v3401
        %v5010 = vpack.c.b16 %v3418, %v3410
        %v5011 = vpack.c.b16 %v3419, %v3411
        %v5012 = vpack.c.b16 %v3420, %v3412
        %v5013 = vpack.c.b16 %v3421, %v3413
        %v5014 = vpack.c.b16 %v3422, %v3414
        %v5015 = vpack.c.b16 %v3423, %v3415
        %v5016 = vpack.c.b16 %v3424, %v3416
        %v5017 = vpack.c.b16 %v3425, %v3417
        %v5018 = vpack.c.b16 %v3434, %v3426
        %v5019 = vpack.c.b16 %v3435, %v3427
        %v5020 = vpack.c.b16 %v3436, %v3428
        %v5021 = vpack.c.b16 %v3437, %v3429
        %v5022 = vpack.c.b16 %v3438, %v3430
        %v5023 = vpack.c.b16 %v3439, %v3431
        %v5024 = vpack.c.b16 %v3440, %v3432
        %v5025 = vpack.c.b16 %v3441, %v3433
        %v5026 = vpack.c.b16 %v3450, %v3442
        %v5027 = vpack.c.b16 %v3451, %v3443
        %v5028 = vpack.c.b16 %v3452, %v3444
        %v5029 = vpack.c.b16 %v3453, %v3445
        %v5030 = vpack.c.b16 %v3454, %v3446
        %v5031 = vpack.c.b16 %v3455, %v3447
        %v5032 = vpack.c.b16 %v3456, %v3448
        %v5033 = vpack.c.b16 %v3457, %v3449
        %v5034 = vpack.c.b16 %v3466, %v3458
        %v5035 = vpack.c.b16 %v3467, %v3459
        %v5036 = vpack.c.b16 %v3468, %v3460
        %v5037 = vpack.c.b16 %v3469, %v3461
        %v5038 = vpack.c.b16 %v3470, %v3462
        %v5039 = vpack.c.b16 %v3471, %v3463
        %v5040 = vpack.c.b16 %v3472, %v3464
        %v5041 = vpack.c.b16 %v3473, %v3465
        %v5042 = vpack.c.b16 %v3482, %v3474
        %v5043 = vpack.c.b16 %v3483, %v3475
        %v5044 = vpack.c.b16 %v3484, %v3476
        %v5045 = vpack.c.b16 %v3485, %v3477
        %v5046 = vpack.c.b16 %v3486, %v3478
        %v5047 = vpack.c.b16 %v3487, %v3479
        %v5048 = vpack.c.b16 %v3488, %v3480
        %v5049 = vpack.c.b16 %v3489, %v3481
        %v5050 = vpack.c.b16 %v3498, %v3490
        %v5051 = vpack.c.b16 %v3499, %v3491
        %v5052 = vpack.c.b16 %v3500, %v3492
        %v5053 = vpack.c.b16 %v3501, %v3493
        %v5054 = vpack.c.b16 %v3502, %v3494
        %v5055 = vpack.c.b16 %v3503, %v3495
        %v5056 = vpack.c.b16 %v3504, %v3496
        %v5057 = vpack.c.b16 %v3505, %v3497
        %v5058 = vpack.c.b16 %v3514, %v3506
        %v5059 = vpack.c.b16 %v3515, %v3507
        %v5060 = vpack.c.b16 %v3516, %v3508
        %v5061 = vpack.c.b16 %v3517, %v3509
        %v5062 = vpack.c.b16 %v3518, %v3510
        %v5063 = vpack.c.b16 %v3519, %v3511
        %v5064 = vpack.c.b16 %v3520, %v3512
        %v5065 = vpack.c.b16 %v3521, %v3513
        %v5066 = vpack.c.b16 %v3530, %v3522
        %v5067 = vpack.c.b16 %v3531, %v3523
        %v5068 = vpack.c.b16 %v3532, %v3524
        %v5069 = vpack.c.b16 %v3533, %v3525
        %v5070 = vpack.c.b16 %v3534, %v3526
        %v5071 = vpack.c.b16 %v3535, %v3527
        %v5072 = vpack.c.b16 %v3536, %v3528
        %v5073 = vpack.c.b16 %v3537, %v3529
        %v5074 = vpack.c.b16 %v3546, %v3538
        %v5075 = vpack.c.b16 %v3547, %v3539
        %v5076 = vpack.c.b16 %v3548, %v3540
        %v5077 = vpack.c.b16 %v3549, %v3541
        %v5078 = vpack.c.b16 %v3550, %v3542
        %v5079 = vpack.c.b16 %v3551, %v3543
        %v5080 = vpack.c.b16 %v3552, %v3544
        %v5081 = vpack.c.b16 %v3553, %v3545
        %v5082 = vpack.c.b16 %v3562, %v3554
        %v5083 = vpack.c.b16 %v3563, %v3555
        %v5084 = vpack.c.b16 %v3564, %v3556
        %v5085 = vpack.c.b16 %v3565, %v3557
        %v5086 = vpack.c.b16 %v3566, %v3558
        %v5087 = vpack.c.b16 %v3567, %v3559
        %v5088 = vpack.c.b16 %v3568, %v3560
        %v5089 = vpack.c.b16 %v3569, %v3561
        %v5090 = vpack.c.b16 %v3578, %v3570
        %v5091 = vpack.c.b16 %v3579, %v3571
        %v5092 = vpack.c.b16 %v3580, %v3572
        %v5093 = vpack.c.b16 %v3581, %v3573
        %v5094 = vpack.c.b16 %v3582, %v3574
        %v5095 = vpack.c.b16 %v3583, %v3575
        %v5096 = vpack.c.b16 %v3584, %v3576
        %v5097 = vpack.c.b16 %v3585, %v3577
        %v5098 = vpack.c.b16 %v3594, %v3586
        %v5099 = vpack.c.b16 %v3595, %v3587
        %v5100 = vpack.c.b16 %v3596, %v3588
        %v5101 = vpack.c.b16 %v3597, %v3589
        %v5102 = vpack.c.b16 %v3598, %v3590
        %v5103 = vpack.c.b16 %v3599, %v3591
        %v5104 = vpack.c.b16 %v3600, %v3592
        %v5105 = vpack.c.b16 %v3601, %v3593
        %v5106 = vpack.c.b16 %v3610, %v3602
        %v5107 = vpack.c.b16 %v3611, %v3603
        %v5108 = vpack.c.b16 %v3612, %v3604
        %v5109 = vpack.c.b16 %v3613, %v3605
        %v5110 = vpack.c.b16 %v3614, %v3606
        %v5111 = vpack.c.b16 %v3615, %v3607
        %v5112 = vpack.c.b16 %v3616, %v3608
        %v5113 = vpack.c.b16 %v3617, %v3609
        %v5114 = vpack.c.b16 %v3626, %v3618
        %v5115 = vpack.c.b16 %v3627, %v3619
        %v5116 = vpack.c.b16 %v3628, %v3620
        %v5117 = vpack.c.b16 %v3629, %v3621
        %v5118 = vpack.c.b16 %v3630, %v3622
        %v5119 = vpack.c.b16 %v3631, %v3623
        %v5120 = vpack.c.b16 %v3632, %v3624
        %v5121 = vpack.c.b16 %v3633, %v3625
        %v5122 = vpack.c.b16 %v3642, %v3634
        %v5123 = vpack.c.b16 %v3643, %v3635
        %v5124 = vpack.c.b16 %v3644, %v3636
        %v5125 = vpack.c.b16 %v3645, %v3637
        %v5126 = vpack.c.b16 %v3646, %v3638
        %v5127 = vpack.c.b16 %v3647, %v3639
        %v5128 = vpack.c.b16 %v3648, %v3640
        %v5129 = vpack.c.b16 %v3649, %v3641
        %v5130 = vpack.c.b16 %v3658, %v3650
        %v5131 = vpack.c.b16 %v3659, %v3651
        %v5132 = vpack.c.b16 %v3660, %v3652
        %v5133 = vpack.c.b16 %v3661, %v3653
        %v5134 = vpack.c.b16 %v3662, %v3654
        %v5135 = vpack.c.b16 %v3663, %v3655
        %v5136 = vpack.c.b16 %v3664, %v3656
        %v5137 = vpack.c.b16 %v3665, %v3657
        %v5138 = vpack.c.b16 %v3674, %v3666
        %v5139 = vpack.c.b16 %v3675, %v3667
        %v5140 = vpack.c.b16 %v3676, %v3668
        %v5141 = vpack.c.b16 %v3677, %v3669
        %v5142 = vpack.c.b16 %v3678, %v3670
        %v5143 = vpack.c.b16 %v3679, %v3671
        %v5144 = vpack.c.b16 %v3680, %v3672
        %v5145 = vpack.c.b16 %v3681, %v3673
        %v5146 = vpack.c.b16 %v3690, %v3682
        %v5147 = vpack.c.b16 %v3691, %v3683
        %v5148 = vpack.c.b16 %v3692, %v3684
        %v5149 = vpack.c.b16 %v3693, %v3685
        %v5150 = vpack.c.b16 %v3694, %v3686
        %v5151 = vpack.c.b16 %v3695, %v3687
        %v5152 = vpack.c.b16 %v3696, %v3688
        %v5153 = vpack.c.b16 %v3697, %v3689
        %v5154 = vpack.c.b16 %v3706, %v3698
        %v5155 = vpack.c.b16 %v3707, %v3699
        %v5156 = vpack.c.b16 %v3708, %v3700
        %v5157 = vpack.c.b16 %v3709, %v3701
        %v5158 = vpack.c.b16 %v3710, %v3702
        %v5159 = vpack.c.b16 %v3711, %v3703
        %v5160 = vpack.c.b16 %v3712, %v3704
        %v5161 = vpack.c.b16 %v3713, %v3705
        %v5162 = vpack.c.b16 %v3722, %v3714
        %v5163 = vpack.c.b16 %v3723, %v3715
        %v5164 = vpack.c.b16 %v3724, %v3716
        %v5165 = vpack.c.b16 %v3725, %v3717
        %v5166 = vpack.c.b16 %v3726, %v3718
        %v5167 = vpack.c.b16 %v3727, %v3719
        %v5168 = vpack.c.b16 %v3728, %v3720
        %v5169 = vpack.c.b16 %v3729, %v3721
        %v5170 = vpack.c.b16 %v3738, %v3730
        %v5171 = vpack.c.b16 %v3739, %v3731
        %v5172 = vpack.c.b16 %v3740, %v3732
        %v5173 = vpack.c.b16 %v3741, %v3733
        %v5174 = vpack.c.b16 %v3742, %v3734
        %v5175 = vpack.c.b16 %v3743, %v3735
        %v5176 = vpack.c.b16 %v3744, %v3736
        %v5177 = vpack.c.b16 %v3745, %v3737
        %v5178 = vpack.c.b16 %v3754, %v3746
        %v5179 = vpack.c.b16 %v3755, %v3747
        %v5180 = vpack.c.b16 %v3756, %v3748
        %v5181 = vpack.c.b16 %v3757, %v3749
        %v5182 = vpack.c.b16 %v3758, %v3750
        %v5183 = vpack.c.b16 %v3759, %v3751
        %v5184 = vpack.c.b16 %v3760, %v3752
        %v5185 = vpack.c.b16 %v3761, %v3753
        %v5186 = vpack.c.b16 %v3770, %v3762
        %v5187 = vpack.c.b16 %v3771, %v3763
        %v5188 = vpack.c.b16 %v3772, %v3764
        %v5189 = vpack.c.b16 %v3773, %v3765
        %v5190 = vpack.c.b16 %v3774, %v3766
        %v5191 = vpack.c.b16 %v3775, %v3767
        %v5192 = vpack.c.b16 %v3776, %v3768
        %v5193 = vpack.c.b16 %v3777, %v3769
        %v5194 = vpack.c.b16 %v3786, %v3778
        %v5195 = vpack.c.b16 %v3787, %v3779
        %v5196 = vpack.c.b16 %v3788, %v3780
        %v5197 = vpack.c.b16 %v3789, %v3781
        %v5198 = vpack.c.b16 %v3790, %v3782
        %v5199 = vpack.c.b16 %v3791, %v3783
        %v5200 = vpack.c.b16 %v3792, %v3784
        %v5201 = vpack.c.b16 %v3793, %v3785
        %v5202 = vpack.c.b16 %v3802, %v3794
        %v5203 = vpack.c.b16 %v3803, %v3795
        %v5204 = vpack.c.b16 %v3804, %v3796
        %v5205 = vpack.c.b16 %v3805, %v3797
        %v5206 = vpack.c.b16 %v3806, %v3798
        %v5207 = vpack.c.b16 %v3807, %v3799
        %v5208 = vpack.c.b16 %v3808, %v3800
        %v5209 = vpack.c.b16 %v3809, %v3801
        %v5210 = vpack.c.b16 %v3818, %v3810
        %v5211 = vpack.c.b16 %v3819, %v3811
        %v5212 = vpack.c.b16 %v3820, %v3812
        %v5213 = vpack.c.b16 %v3821, %v3813
        %v5214 = vpack.c.b16 %v3822, %v3814
        %v5215 = vpack.c.b16 %v3823, %v3815
        %v5216 = vpack.c.b16 %v3824, %v3816
        %v5217 = vpack.c.b16 %v3825, %v3817
        %v5218 = vpack.c.b16 %v3834, %v3826
        %v5219 = vpack.c.b16 %v3835, %v3827
        %v5220 = vpack.c.b16 %v3836, %v3828
        %v5221 = vpack.c.b16 %v3837, %v3829
        %v5222 = vpack.c.b16 %v3838, %v3830
        %v5223 = vpack.c.b16 %v3839, %v3831
        %v5224 = vpack.c.b16 %v3840, %v3832
        %v5225 = vpack.c.b16 %v3841, %v3833
        %v5226 = vpack.c.b16 %v3850, %v3842
        %v5227 = vpack.c.b16 %v3851, %v3843
        %v5228 = vpack.c.b16 %v3852, %v3844
        %v5229 = vpack.c.b16 %v3853, %v3845
        %v5230 = vpack.c.b16 %v3854, %v3846
        %v5231 = vpack.c.b16 %v3855, %v3847
        %v5232 = vpack.c.b16 %v3856, %v3848
        %v5233 = vpack.c.b16 %v3857, %v3849
        %v5234 = vpack.c.b16 %v3866, %v3858
        %v5235 = vpack.c.b16 %v3867, %v3859
        %v5236 = vpack.c.b16 %v3868, %v3860
        %v5237 = vpack.c.b16 %v3869, %v3861
        %v5238 = vpack.c.b16 %v3870, %v3862
        %v5239 = vpack.c.b16 %v3871, %v3863
        %v5240 = vpack.c.b16 %v3872, %v3864
        %v5241 = vpack.c.b16 %v3873, %v3865
        %v5242 = vpack.c.b16 %v3882, %v3874
        %v5243 = vpack.c.b16 %v3883, %v3875
        %v5244 = vpack.c.b16 %v3884, %v3876
        %v5245 = vpack.c.b16 %v3885, %v3877
        %v5246 = vpack.c.b16 %v3886, %v3878
        %v5247 = vpack.c.b16 %v3887, %v3879
        %v5248 = vpack.c.b16 %v3888, %v3880
        %v5249 = vpack.c.b16 %v3889, %v3881
        %v5250 = vpack.c.b16 %v3898, %v3890
        %v5251 = vpack.c.b16 %v3899, %v3891
        %v5252 = vpack.c.b16 %v3900, %v3892
        %v5253 = vpack.c.b16 %v3901, %v3893
        %v5254 = vpack.c.b16 %v3902, %v3894
        %v5255 = vpack.c.b16 %v3903, %v3895
        %v5256 = vpack.c.b16 %v3904, %v3896
        %v5257 = vpack.c.b16 %v3905, %v3897
        %v5258 = vpack.c.b16 %v3914, %v3906
        %v5259 = vpack.c.b16 %v3915, %v3907
        %v5260 = vpack.c.b16 %v3916, %v3908
        %v5261 = vpack.c.b16 %v3917, %v3909
        %v5262 = vpack.c.b16 %v3918, %v3910
        %v5263 = vpack.c.b16 %v3919, %v3911
        %v5264 = vpack.c.b16 %v3920, %v3912
        %v5265 = vpack.c.b16 %v3921, %v3913
        %v5266 = vpack.c.b16 %v3930, %v3922
        %v5267 = vpack.c.b16 %v3931, %v3923
        %v5268 = vpack.c.b16 %v3932, %v3924
        %v5269 = vpack.c.b16 %v3933, %v3925
        %v5270 = vpack.c.b16 %v3934, %v3926
        %v5271 = vpack.c.b16 %v3935, %v3927
        %v5272 = vpack.c.b16 %v3936, %v3928
        %v5273 = vpack.c.b16 %v3937, %v3929
        %v5274 = vpack.c.b16 %v3946, %v3938
        %v5275 = vpack.c.b16 %v3947, %v3939
        %v5276 = vpack.c.b16 %v3948, %v3940
        %v5277 = vpack.c.b16 %v3949, %v3941
        %v5278 = vpack.c.b16 %v3950, %v3942
        %v5279 = vpack.c.b16 %v3951, %v3943
        %v5280 = vpack.c.b16 %v3952, %v3944
        %v5281 = vpack.c.b16 %v3953, %v3945
        %v5282 = vpack.c.b16 %v3962, %v3954
        %v5283 = vpack.c.b16 %v3963, %v3955
        %v5284 = vpack.c.b16 %v3964, %v3956
        %v5285 = vpack.c.b16 %v3965, %v3957
        %v5286 = vpack.c.b16 %v3966, %v3958
        %v5287 = vpack.c.b16 %v3967, %v3959
        %v5288 = vpack.c.b16 %v3968, %v3960
        %v5289 = vpack.c.b16 %v3969, %v3961
        %v5290 = vpack.c.b16 %v3978, %v3970
        %v5291 = vpack.c.b16 %v3979, %v3971
        %v5292 = vpack.c.b16 %v3980, %v3972
        %v5293 = vpack.c.b16 %v3981, %v3973
        %v5294 = vpack.c.b16 %v3982, %v3974
        %v5295 = vpack.c.b16 %v3983, %v3975
        %v5296 = vpack.c.b16 %v3984, %v3976
        %v5297 = vpack.c.b16 %v3985, %v3977
        %v5298 = vpack.c.b16 %v3994, %v3986
        %v5299 = vpack.c.b16 %v3995, %v3987
        %v5300 = vpack.c.b16 %v3996, %v3988
        %v5301 = vpack.c.b16 %v3997, %v3989
        %v5302 = vpack.c.b16 %v3998, %v3990
        %v5303 = vpack.c.b16 %v3999, %v3991
        %v5304 = vpack.c.b16 %v4000, %v3992
        %v5305 = vpack.c.b16 %v4001, %v3993
        %v5306 = vpack.c.b16 %v4010, %v4002
        %v5307 = vpack.c.b16 %v4011, %v4003
        %v5308 = vpack.c.b16 %v4012, %v4004
        %v5309 = vpack.c.b16 %v4013, %v4005
        %v5310 = vpack.c.b16 %v4014, %v4006
        %v5311 = vpack.c.b16 %v4015, %v4007
        %v5312 = vpack.c.b16 %v4016, %v4008
        %v5313 = vpack.c.b16 %v4017, %v4009
        %v5314 = vpack.c.b16 %v4026, %v4018
        %v5315 = vpack.c.b16 %v4027, %v4019
        %v5316 = vpack.c.b16 %v4028, %v4020
        %v5317 = vpack.c.b16 %v4029, %v4021
        %v5318 = vpack.c.b16 %v4030, %v4022
        %v5319 = vpack.c.b16 %v4031, %v4023
        %v5320 = vpack.c.b16 %v4032, %v4024
        %v5321 = vpack.c.b16 %v4033, %v4025
        %v5322 = vpack.c.b16 %v4042, %v4034
        %v5323 = vpack.c.b16 %v4043, %v4035
        %v5324 = vpack.c.b16 %v4044, %v4036
        %v5325 = vpack.c.b16 %v4045, %v4037
        %v5326 = vpack.c.b16 %v4046, %v4038
        %v5327 = vpack.c.b16 %v4047, %v4039
        %v5328 = vpack.c.b16 %v4048, %v4040
        %v5329 = vpack.c.b16 %v4049, %v4041
        %v5330 = vpack.c.b16 %v4058, %v4050
        %v5331 = vpack.c.b16 %v4059, %v4051
        %v5332 = vpack.c.b16 %v4060, %v4052
        %v5333 = vpack.c.b16 %v4061, %v4053
        %v5334 = vpack.c.b16 %v4062, %v4054
        %v5335 = vpack.c.b16 %v4063, %v4055
        %v5336 = vpack.c.b16 %v4064, %v4056
        %v5337 = vpack.c.b16 %v4065, %v4057
        %v5338 = vpack.c.b16 %v4074, %v4066
        %v5339 = vpack.c.b16 %v4075, %v4067
        %v5340 = vpack.c.b16 %v4076, %v4068
        %v5341 = vpack.c.b16 %v4077, %v4069
        %v5342 = vpack.c.b16 %v4078, %v4070
        %v5343 = vpack.c.b16 %v4079, %v4071
        %v5344 = vpack.c.b16 %v4080, %v4072
        %v5345 = vpack.c.b16 %v4081, %v4073
        %v5346 = vpack.c.b16 %v4090, %v4082
        %v5347 = vpack.c.b16 %v4091, %v4083
        %v5348 = vpack.c.b16 %v4092, %v4084
        %v5349 = vpack.c.b16 %v4093, %v4085
        %v5350 = vpack.c.b16 %v4094, %v4086
        %v5351 = vpack.c.b16 %v4095, %v4087
        %v5352 = vpack.c.b16 %v4096, %v4088
        %v5353 = vpack.c.b16 %v4097, %v4089
        %v5354 = vpack.c.b16 %v4106, %v4098
        %v5355 = vpack.c.b16 %v4107, %v4099
        %v5356 = vpack.c.b16 %v4108, %v4100
        %v5357 = vpack.c.b16 %v4109, %v4101
        %v5358 = vpack.c.b16 %v4110, %v4102
        %v5359 = vpack.c.b16 %v4111, %v4103
        %v5360 = vpack.c.b16 %v4112, %v4104
        %v5361 = vpack.c.b16 %v4113, %v4105
        %v5362 = vpack.c.b16 %v4122, %v4114
        %v5363 = vpack.c.b16 %v4123, %v4115
        %v5364 = vpack.c.b16 %v4124, %v4116
        %v5365 = vpack.c.b16 %v4125, %v4117
        %v5366 = vpack.c.b16 %v4126, %v4118
        %v5367 = vpack.c.b16 %v4127, %v4119
        %v5368 = vpack.c.b16 %v4128, %v4120
        %v5369 = vpack.c.b16 %v4129, %v4121
        %v5370 = vpack.c.b16 %v4138, %v4130
        %v5371 = vpack.c.b16 %v4139, %v4131
        %v5372 = vpack.c.b16 %v4140, %v4132
        %v5373 = vpack.c.b16 %v4141, %v4133
        %v5374 = vpack.c.b16 %v4142, %v4134
        %v5375 = vpack.c.b16 %v4143, %v4135
        %v5376 = vpack.c.b16 %v4144, %v4136
        %v5377 = vpack.c.b16 %v4145, %v4137
        %v5378 = vpack.c.b16 %v4154, %v4146
        %v5379 = vpack.c.b16 %v4155, %v4147
        %v5380 = vpack.c.b16 %v4156, %v4148
        %v5381 = vpack.c.b16 %v4157, %v4149
        %v5382 = vpack.c.b16 %v4158, %v4150
        %v5383 = vpack.c.b16 %v4159, %v4151
        %v5384 = vpack.c.b16 %v4160, %v4152
        %v5385 = vpack.c.b16 %v4161, %v4153
        %v5386 = vpack.c.b16 %v4170, %v4162
        %v5387 = vpack.c.b16 %v4171, %v4163
        %v5388 = vpack.c.b16 %v4172, %v4164
        %v5389 = vpack.c.b16 %v4173, %v4165
        %v5390 = vpack.c.b16 %v4174, %v4166
        %v5391 = vpack.c.b16 %v4175, %v4167
        %v5392 = vpack.c.b16 %v4176, %v4168
        %v5393 = vpack.c.b16 %v4177, %v4169
        %v5394 = vpack.c.b16 %v4186, %v4178
        %v5395 = vpack.c.b16 %v4187, %v4179
        %v5396 = vpack.c.b16 %v4188, %v4180
        %v5397 = vpack.c.b16 %v4189, %v4181
        %v5398 = vpack.c.b16 %v4190, %v4182
        %v5399 = vpack.c.b16 %v4191, %v4183
        %v5400 = vpack.c.b16 %v4192, %v4184
        %v5401 = vpack.c.b16 %v4193, %v4185
        %v5402 = vpack.c.b16 %v4202, %v4194
        %v5403 = vpack.c.b16 %v4203, %v4195
        %v5404 = vpack.c.b16 %v4204, %v4196
        %v5405 = vpack.c.b16 %v4205, %v4197
        %v5406 = vpack.c.b16 %v4206, %v4198
        %v5407 = vpack.c.b16 %v4207, %v4199
        %v5408 = vpack.c.b16 %v4208, %v4200
        %v5409 = vpack.c.b16 %v4209, %v4201
        %v5410 = vpack.c.b16 %v4218, %v4210
        %v5411 = vpack.c.b16 %v4219, %v4211
        %v5412 = vpack.c.b16 %v4220, %v4212
        %v5413 = vpack.c.b16 %v4221, %v4213
        %v5414 = vpack.c.b16 %v4222, %v4214
        %v5415 = vpack.c.b16 %v4223, %v4215
        %v5416 = vpack.c.b16 %v4224, %v4216
        %v5417 = vpack.c.b16 %v4225, %v4217
        %v5418 = vpack.c.b16 %v4234, %v4226
        %v5419 = vpack.c.b16 %v4235, %v4227
        %v5420 = vpack.c.b16 %v4236, %v4228
        %v5421 = vpack.c.b16 %v4237, %v4229
        %v5422 = vpack.c.b16 %v4238, %v4230
        %v5423 = vpack.c.b16 %v4239, %v4231
        %v5424 = vpack.c.b16 %v4240, %v4232
        %v5425 = vpack.c.b16 %v4241, %v4233
        %v5426 = vpack.c.b16 %v4250, %v4242
        %v5427 = vpack.c.b16 %v4251, %v4243
        %v5428 = vpack.c.b16 %v4252, %v4244
        %v5429 = vpack.c.b16 %v4253, %v4245
        %v5430 = vpack.c.b16 %v4254, %v4246
        %v5431 = vpack.c.b16 %v4255, %v4247
        %v5432 = vpack.c.b16 %v4256, %v4248
        %v5433 = vpack.c.b16 %v4257, %v4249
        %v5434 = vpack.c.b16 %v4266, %v4258
        %v5435 = vpack.c.b16 %v4267, %v4259
        %v5436 = vpack.c.b16 %v4268, %v4260
        %v5437 = vpack.c.b16 %v4269, %v4261
        %v5438 = vpack.c.b16 %v4270, %v4262
        %v5439 = vpack.c.b16 %v4271, %v4263
        %v5440 = vpack.c.b16 %v4272, %v4264
        %v5441 = vpack.c.b16 %v4273, %v4265
        %v5442 = vpack.c.b16 %v4282, %v4274
        %v5443 = vpack.c.b16 %v4283, %v4275
        %v5444 = vpack.c.b16 %v4284, %v4276
        %v5445 = vpack.c.b16 %v4285, %v4277
        %v5446 = vpack.c.b16 %v4286, %v4278
        %v5447 = vpack.c.b16 %v4287, %v4279
        %v5448 = vpack.c.b16 %v4288, %v4280
        %v5449 = vpack.c.b16 %v4289, %v4281
        %v5450 = vpack.c.b16 %v4298, %v4290
        %v5451 = vpack.c.b16 %v4299, %v4291
        %v5452 = vpack.c.b16 %v4300, %v4292
        %v5453 = vpack.c.b16 %v4301, %v4293
        %v5454 = vpack.c.b16 %v4302, %v4294
        %v5455 = vpack.c.b16 %v4303, %v4295
        %v5456 = vpack.c.b16 %v4304, %v4296
        %v5457 = vpack.c.b16 %v4305, %v4297
        %v5458 = vpack.c.b16 %v4314, %v4306
        %v5459 = vpack.c.b16 %v4315, %v4307
        %v5460 = vpack.c.b16 %v4316, %v4308
        %v5461 = vpack.c.b16 %v4317, %v4309
        %v5462 = vpack.c.b16 %v4318, %v4310
        %v5463 = vpack.c.b16 %v4319, %v4311
        %v5464 = vpack.c.b16 %v4320, %v4312
        %v5465 = vpack.c.b16 %v4321, %v4313
        %v5466 = vpack.c.b16 %v4330, %v4322
        %v5467 = vpack.c.b16 %v4331, %v4323
        %v5468 = vpack.c.b16 %v4332, %v4324
        %v5469 = vpack.c.b16 %v4333, %v4325
        %v5470 = vpack.c.b16 %v4334, %v4326
        %v5471 = vpack.c.b16 %v4335, %v4327
        %v5472 = vpack.c.b16 %v4336, %v4328
        %v5473 = vpack.c.b16 %v4337, %v4329
        %v5474 = vpack.c.b16 %v4346, %v4338
        %v5475 = vpack.c.b16 %v4347, %v4339
        %v5476 = vpack.c.b16 %v4348, %v4340
        %v5477 = vpack.c.b16 %v4349, %v4341
        %v5478 = vpack.c.b16 %v4350, %v4342
        %v5479 = vpack.c.b16 %v4351, %v4343
        %v5480 = vpack.c.b16 %v4352, %v4344
        %v5481 = vpack.c.b16 %v4353, %v4345
        %v5482 = vpack.c.b16 %v4362, %v4354
        %v5483 = vpack.c.b16 %v4363, %v4355
        %v5484 = vpack.c.b16 %v4364, %v4356
        %v5485 = vpack.c.b16 %v4365, %v4357
        %v5486 = vpack.c.b16 %v4366, %v4358
        %v5487 = vpack.c.b16 %v4367, %v4359
        %v5488 = vpack.c.b16 %v4368, %v4360
        %v5489 = vpack.c.b16 %v4369, %v4361
        %v5490 = vpack.c.b16 %v4378, %v4370
        %v5491 = vpack.c.b16 %v4379, %v4371
        %v5492 = vpack.c.b16 %v4380, %v4372
        %v5493 = vpack.c.b16 %v4381, %v4373
        %v5494 = vpack.c.b16 %v4382, %v4374
        %v5495 = vpack.c.b16 %v4383, %v4375
        %v5496 = vpack.c.b16 %v4384, %v4376
        %v5497 = vpack.c.b16 %v4385, %v4377
        %v5498 = vpack.c.b16 %v4394, %v4386
        %v5499 = vpack.c.b16 %v4395, %v4387
        %v5500 = vpack.c.b16 %v4396, %v4388
        %v5501 = vpack.c.b16 %v4397, %v4389
        %v5502 = vpack.c.b16 %v4398, %v4390
        %v5503 = vpack.c.b16 %v4399, %v4391
        %v5504 = vpack.c.b16 %v4400, %v4392
        %v5505 = vpack.c.b16 %v4401, %v4393
        %v5506 = vpack.c.b16 %v4410, %v4402
        %v5507 = vpack.c.b16 %v4411, %v4403
        %v5508 = vpack.c.b16 %v4412, %v4404
        %v5509 = vpack.c.b16 %v4413, %v4405
        %v5510 = vpack.c.b16 %v4414, %v4406
        %v5511 = vpack.c.b16 %v4415, %v4407
        %v5512 = vpack.c.b16 %v4416, %v4408
        %v5513 = vpack.c.b16 %v4417, %v4409
        %v5514 = vpack.c.b16 %v4426, %v4418
        %v5515 = vpack.c.b16 %v4427, %v4419
        %v5516 = vpack.c.b16 %v4428, %v4420
        %v5517 = vpack.c.b16 %v4429, %v4421
        %v5518 = vpack.c.b16 %v4430, %v4422
        %v5519 = vpack.c.b16 %v4431, %v4423
        %v5520 = vpack.c.b16 %v4432, %v4424
        %v5521 = vpack.c.b16 %v4433, %v4425
        %v5522 = vpack.c.b16 %v4442, %v4434
        %v5523 = vpack.c.b16 %v4443, %v4435
        %v5524 = vpack.c.b16 %v4444, %v4436
        %v5525 = vpack.c.b16 %v4445, %v4437
        %v5526 = vpack.c.b16 %v4446, %v4438
        %v5527 = vpack.c.b16 %v4447, %v4439
        %v5528 = vpack.c.b16 %v4448, %v4440
        %v5529 = vpack.c.b16 %v4449, %v4441
        %v5530 = vpack.c.b16 %v4458, %v4450
        %v5531 = vpack.c.b16 %v4459, %v4451
        %v5532 = vpack.c.b16 %v4460, %v4452
        %v5533 = vpack.c.b16 %v4461, %v4453
        %v5534 = vpack.c.b16 %v4462, %v4454
        %v5535 = vpack.c.b16 %v4463, %v4455
        %v5536 = vpack.c.b16 %v4464, %v4456
        %v5537 = vpack.c.b16 %v4465, %v4457
        %v5538 = vpack.c.b16 %v4474, %v4466
        %v5539 = vpack.c.b16 %v4475, %v4467
        %v5540 = vpack.c.b16 %v4476, %v4468
        %v5541 = vpack.c.b16 %v4477, %v4469
        %v5542 = vpack.c.b16 %v4478, %v4470
        %v5543 = vpack.c.b16 %v4479, %v4471
        %v5544 = vpack.c.b16 %v4480, %v4472
        %v5545 = vpack.c.b16 %v4481, %v4473
        %v5546 = vpack.c.b16 %v4490, %v4482
        %v5547 = vpack.c.b16 %v4491, %v4483
        %v5548 = vpack.c.b16 %v4492, %v4484
        %v5549 = vpack.c.b16 %v4493, %v4485
        %v5550 = vpack.c.b16 %v4494, %v4486
        %v5551 = vpack.c.b16 %v4495, %v4487
        %v5552 = vpack.c.b16 %v4496, %v4488
        %v5553 = vpack.c.b16 %v4497, %v4489
        %v5554 = vpack.c.b16 %v4506, %v4498
        %v5555 = vpack.c.b16 %v4507, %v4499
        %v5556 = vpack.c.b16 %v4508, %v4500
        %v5557 = vpack.c.b16 %v4509, %v4501
        %v5558 = vpack.c.b16 %v4510, %v4502
        %v5559 = vpack.c.b16 %v4511, %v4503
        %v5560 = vpack.c.b16 %v4512, %v4504
        %v5561 = vpack.c.b16 %v4513, %v4505
        %v5562 = vpack.c.b16 %v4522, %v4514
        %v5563 = vpack.c.b16 %v4523, %v4515
        %v5564 = vpack.c.b16 %v4524, %v4516
        %v5565 = vpack.c.b16 %v4525, %v4517
        %v5566 = vpack.c.b16 %v4526, %v4518
        %v5567 = vpack.c.b16 %v4527, %v4519
        %v5568 = vpack.c.b16 %v4528, %v4520
        %v5569 = vpack.c.b16 %v4529, %v4521
        %v5570 = vpack.c.b16 %v4538, %v4530
        %v5571 = vpack.c.b16 %v4539, %v4531
        %v5572 = vpack.c.b16 %v4540, %v4532
        %v5573 = vpack.c.b16 %v4541, %v4533
        %v5574 = vpack.c.b16 %v4542, %v4534
        %v5575 = vpack.c.b16 %v4543, %v4535
        %v5576 = vpack.c.b16 %v4544, %v4536
        %v5577 = vpack.c.b16 %v4545, %v4537
        %v5578 = vpack.c.b16 %v4554, %v4546
        %v5579 = vpack.c.b16 %v4555, %v4547
        %v5580 = vpack.c.b16 %v4556, %v4548
        %v5581 = vpack.c.b16 %v4557, %v4549
        %v5582 = vpack.c.b16 %v4558, %v4550
        %v5583 = vpack.c.b16 %v4559, %v4551
        %v5584 = vpack.c.b16 %v4560, %v4552
        %v5585 = vpack.c.b16 %v4561, %v4553
        %6610 = vmatprep.subr.bf16.mxu0 %v4563
        %6611 = vmatpush1.bf16.msra.mxu0 %v4562
        %6612 = vmatprep.subr.bf16.mxu0 %v4571
        %6613 = vmatpush1.bf16.msra.mxu0 %v4570
        %6614 = vmatprep.subr.bf16.mxu0 %v4579
        %6615 = vmatpush1.bf16.msra.mxu0 %v4578
        %6616 = vmatprep.subr.bf16.mxu0 %v4587
        %6617 = vmatpush1.bf16.msra.mxu0 %v4586
        %6618 = vmatprep.subr.bf16.mxu0 %v4595
        %6619 = vmatpush1.bf16.msra.mxu0 %v4594
        %6620 = vmatprep.subr.bf16.mxu0 %v4603
        %6621 = vmatpush1.bf16.msra.mxu0 %v4602
        %6622 = vmatprep.subr.bf16.mxu0 %v4611
        %6623 = vmatpush1.bf16.msra.mxu0 %v4610
        %6624 = vmatprep.subr.bf16.mxu0 %v4619
        %6625 = vmatpush1.bf16.msra.mxu0 %v4618
        %6626 = vmatprep.subr.bf16.mxu0 %v4627
        %6627 = vmatpush1.bf16.msra.mxu0 %v4626
        %6628 = vmatprep.subr.bf16.mxu0 %v4635
        %6629 = vmatpush1.bf16.msra.mxu0 %v4634
        %6630 = vmatprep.subr.bf16.mxu0 %v4643
        %6631 = vmatpush1.bf16.msra.mxu0 %v4642
        %6632 = vmatprep.subr.bf16.mxu0 %v4651
        %6633 = vmatpush1.bf16.msra.mxu0 %v4650
        %6634 = vmatprep.subr.bf16.mxu0 %v4659
        %6635 = vmatpush1.bf16.msra.mxu0 %v4658
        %6636 = vmatprep.subr.bf16.mxu0 %v4667
        %6637 = vmatpush1.bf16.msra.mxu0 %v4666
        %6638 = vmatprep.subr.bf16.mxu0 %v4675
        %6639 = vmatpush1.bf16.msra.mxu0 %v4674
        %6640 = vmatprep.subr.bf16.mxu0 %v4683
        %6641 = vmatpush1.bf16.msra.mxu0 %v4682
        %6642 = vmatprep.mubr.bf16.mxu0 %v1459
        %6643 = vmatmul.mubr.bf16.gmra.mrb[0].mxu0 %v1458
        %v6644 = vpop.f32.mrb[0].mxu0
        %v6645 = vadd.f32 %v1373, %v6644
        %v6646 = vpop.f32.mrb[0].mxu0
        %v6647 = vadd.f32 %v1377, %v6646
        %v6648 = vpop.f32.mrb[0].mxu0
        %v6649 = vadd.f32 %v1373, %v6648
        %v6650 = vpop.f32.mrb[0].mxu0
        %v6651 = vadd.f32 %v1377, %v6650
        %6652 = vdwg.mxu0
        %6653 = vmatprep.subr.bf16.mxu0 %v4691
        %6654 = vmatpush1.bf16.msra.mxu0 %v4690
        %6655 = vmatprep.subr.bf16.mxu0 %v4699
        %6656 = vmatpush1.bf16.msra.mxu0 %v4698
        %6657 = vmatprep.subr.bf16.mxu0 %v4707
        %6658 = vmatpush1.bf16.msra.mxu0 %v4706
        %6659 = vmatprep.subr.bf16.mxu0 %v4715
        %6660 = vmatpush1.bf16.msra.mxu0 %v4714
        %6661 = vmatprep.subr.bf16.mxu0 %v4723
        %6662 = vmatpush1.bf16.msra.mxu0 %v4722
        %6663 = vmatprep.subr.bf16.mxu0 %v4731
        %6664 = vmatpush1.bf16.msra.mxu0 %v4730
        %6665 = vmatprep.subr.bf16.mxu0 %v4739
        %6666 = vmatpush1.bf16.msra.mxu0 %v4738
        %6667 = vmatprep.subr.bf16.mxu0 %v4747
        %6668 = vmatpush1.bf16.msra.mxu0 %v4746
        %6669 = vmatprep.subr.bf16.mxu0 %v4755
        %6670 = vmatpush1.bf16.msra.mxu0 %v4754
        %6671 = vmatprep.subr.bf16.mxu0 %v4763
        %6672 = vmatpush1.bf16.msra.mxu0 %v4762
        %6673 = vmatprep.subr.bf16.mxu0 %v4771
        %6674 = vmatpush1.bf16.msra.mxu0 %v4770
        %6675 = vmatprep.subr.bf16.mxu0 %v4779
        %6676 = vmatpush1.bf16.msra.mxu0 %v4778
        %6677 = vmatprep.subr.bf16.mxu0 %v4787
        %6678 = vmatpush1.bf16.msra.mxu0 %v4786
        %6679 = vmatprep.subr.bf16.mxu0 %v4795
        %6680 = vmatpush1.bf16.msra.mxu0 %v4794
        %6681 = vmatprep.subr.bf16.mxu0 %v4803
        %6682 = vmatpush1.bf16.msra.mxu0 %v4802
        %6683 = vmatprep.subr.bf16.mxu0 %v4811
        %6684 = vmatpush1.bf16.msra.mxu0 %v4810
        %6685 = vmatprep.mubr.bf16.mxu0 %v1461
        %6686 = vmatmul.mubr.bf16.gmra.mrb[0].mxu0 %v1460
        %v6687 = vpop.f32.mrb[0].mxu0
        %v6688 = vadd.f32 %v6645, %v6687
        %v6689 = vpop.f32.mrb[0].mxu0
        %v6690 = vadd.f32 %v6647, %v6689
        %v6691 = vpop.f32.mrb[0].mxu0
        %v6692 = vadd.f32 %v6649, %v6691
        %v6693 = vpop.f32.mrb[0].mxu0
        %v6694 = vadd.f32 %v6651, %v6693
        %6695 = vdwg.mxu0
        %6696 = vmatprep.subr.bf16.mxu0 %v4819
        %6697 = vmatpush1.bf16.msra.mxu0 %v4818
        %6698 = vmatprep.subr.bf16.mxu0 %v4827
        %6699 = vmatpush1.bf16.msra.mxu0 %v4826
        %6700 = vmatprep.subr.bf16.mxu0 %v4835
        %6701 = vmatpush1.bf16.msra.mxu0 %v4834
        %6702 = vmatprep.subr.bf16.mxu0 %v4843
        %6703 = vmatpush1.bf16.msra.mxu0 %v4842
        %6704 = vmatprep.subr.bf16.mxu0 %v4851
        %6705 = vmatpush1.bf16.msra.mxu0 %v4850
        %6706 = vmatprep.subr.bf16.mxu0 %v4859
        %6707 = vmatpush1.bf16.msra.mxu0 %v4858
        %6708 = vmatprep.subr.bf16.mxu0 %v4867
        %6709 = vmatpush1.bf16.msra.mxu0 %v4866
        %6710 = vmatprep.subr.bf16.mxu0 %v4875
        %6711 = vmatpush1.bf16.msra.mxu0 %v4874
        %6712 = vmatprep.subr.bf16.mxu0 %v4883
        %6713 = vmatpush1.bf16.msra.mxu0 %v4882
        %6714 = vmatprep.subr.bf16.mxu0 %v4891
        %6715 = vmatpush1.bf16.msra.mxu0 %v4890
        %6716 = vmatprep.subr.bf16.mxu0 %v4899
        %6717 = vmatpush1.bf16.msra.mxu0 %v4898
        %6718 = vmatprep.subr.bf16.mxu0 %v4907
        %6719 = vmatpush1.bf16.msra.mxu0 %v4906
        %6720 = vmatprep.subr.bf16.mxu0 %v4915
        %6721 = vmatpush1.bf16.msra.mxu0 %v4914
        %6722 = vmatprep.subr.bf16.mxu0 %v4923
        %6723 = vmatpush1.bf16.msra.mxu0 %v4922
        %6724 = vmatprep.subr.bf16.mxu0 %v4931
        %6725 = vmatpush1.bf16.msra.mxu0 %v4930
        %6726 = vmatprep.subr.bf16.mxu0 %v4939
        %6727 = vmatpush1.bf16.msra.mxu0 %v4938
        %6728 = vmatprep.mubr.bf16.mxu0 %v1463
        %6729 = vmatmul.mubr.bf16.gmra.mrb[0].mxu0 %v1462
        %v6730 = vpop.f32.mrb[0].mxu0
        %v6731 = vadd.f32 %v6688, %v6730
        %v6732 = vpop.f32.mrb[0].mxu0
        %v6733 = vadd.f32 %v6690, %v6732
        %v6734 = vpop.f32.mrb[0].mxu0
        %v6735 = vadd.f32 %v6692, %v6734
        %v6736 = vpop.f32.mrb[0].mxu0
        %v6737 = vadd.f32 %v6694, %v6736
        %6738 = vdwg.mxu0
        %6739 = vmatprep.subr.bf16.mxu0 %v4947
        %6740 = vmatpush1.bf16.msra.mxu0 %v4946
        %6741 = vmatprep.subr.bf16.mxu0 %v4955
        %6742 = vmatpush1.bf16.msra.mxu0 %v4954
        %6743 = vmatprep.subr.bf16.mxu0 %v4963
        %6744 = vmatpush1.bf16.msra.mxu0 %v4962
        %6745 = vmatprep.subr.bf16.mxu0 %v4971
        %6746 = vmatpush1.bf16.msra.mxu0 %v4970
        %6747 = vmatprep.subr.bf16.mxu0 %v4979
        %6748 = vmatpush1.bf16.msra.mxu0 %v4978
        %6749 = vmatprep.subr.bf16.mxu0 %v4987
        %6750 = vmatpush1.bf16.msra.mxu0 %v4986
        %6751 = vmatprep.subr.bf16.mxu0 %v4995
        %6752 = vmatpush1.bf16.msra.mxu0 %v4994
        %6753 = vmatprep.subr.bf16.mxu0 %v5003
        %6754 = vmatpush1.bf16.msra.mxu0 %v5002
        %6755 = vmatprep.subr.bf16.mxu0 %v5011
        %6756 = vmatpush1.bf16.msra.mxu0 %v5010
        %6757 = vmatprep.subr.bf16.mxu0 %v5019
        %6758 = vmatpush1.bf16.msra.mxu0 %v5018
        %6759 = vmatprep.subr.bf16.mxu0 %v5027
        %6760 = vmatpush1.bf16.msra.mxu0 %v5026
        %6761 = vmatprep.subr.bf16.mxu0 %v5035
        %6762 = vmatpush1.bf16.msra.mxu0 %v5034
        %6763 = vmatprep.subr.bf16.mxu0 %v5043
        %6764 = vmatpush1.bf16.msra.mxu0 %v5042
        %6765 = vmatprep.subr.bf16.mxu0 %v5051
        %6766 = vmatpush1.bf16.msra.mxu0 %v5050
        %6767 = vmatprep.subr.bf16.mxu0 %v5059
        %6768 = vmatpush1.bf16.msra.mxu0 %v5058
        %6769 = vmatprep.subr.bf16.mxu0 %v5067
        %6770 = vmatpush1.bf16.msra.mxu0 %v5066
        %6771 = vmatprep.mubr.bf16.mxu0 %v1465
        %6772 = vmatmul.mubr.bf16.gmra.mrb[0].mxu0 %v1464
        %v6773 = vpop.f32.mrb[0].mxu0
        %v6774 = vadd.f32 %v6731, %v6773
        %v6775 = vpop.f32.mrb[0].mxu0
        %v6776 = vadd.f32 %v6733, %v6775
        %v6777 = vpop.f32.mrb[0].mxu0
        %v6778 = vadd.f32 %v6735, %v6777
        %v6779 = vpop.f32.mrb[0].mxu0
        %v6780 = vadd.f32 %v6737, %v6779
        %6781 = vdwg.mxu0
        %6782 = vmatprep.subr.bf16.mxu0 %v5075
        %6783 = vmatpush1.bf16.msra.mxu0 %v5074
        %6784 = vmatprep.subr.bf16.mxu0 %v5083
        %6785 = vmatpush1.bf16.msra.mxu0 %v5082
        %6786 = vmatprep.subr.bf16.mxu0 %v5091
        %6787 = vmatpush1.bf16.msra.mxu0 %v5090
        %6788 = vmatprep.subr.bf16.mxu0 %v5099
        %6789 = vmatpush1.bf16.msra.mxu0 %v5098
        %6790 = vmatprep.subr.bf16.mxu0 %v5107
        %6791 = vmatpush1.bf16.msra.mxu0 %v5106
        %6792 = vmatprep.subr.bf16.mxu0 %v5115
        %6793 = vmatpush1.bf16.msra.mxu0 %v5114
        %6794 = vmatprep.subr.bf16.mxu0 %v5123
        %6795 = vmatpush1.bf16.msra.mxu0 %v5122
        %6796 = vmatprep.subr.bf16.mxu0 %v5131
        %6797 = vmatpush1.bf16.msra.mxu0 %v5130
        %6798 = vmatprep.subr.bf16.mxu0 %v5139
        %6799 = vmatpush1.bf16.msra.mxu0 %v5138
        %6800 = vmatprep.subr.bf16.mxu0 %v5147
        %6801 = vmatpush1.bf16.msra.mxu0 %v5146
        %6802 = vmatprep.subr.bf16.mxu0 %v5155
        %6803 = vmatpush1.bf16.msra.mxu0 %v5154
        %6804 = vmatprep.subr.bf16.mxu0 %v5163
        %6805 = vmatpush1.bf16.msra.mxu0 %v5162
        %6806 = vmatprep.subr.bf16.mxu0 %v5171
        %6807 = vmatpush1.bf16.msra.mxu0 %v5170
        %6808 = vmatprep.subr.bf16.mxu0 %v5179
        %6809 = vmatpush1.bf16.msra.mxu0 %v5178
        %6810 = vmatprep.subr.bf16.mxu0 %v5187
        %6811 = vmatpush1.bf16.msra.mxu0 %v5186
        %6812 = vmatprep.subr.bf16.mxu0 %v5195
        %6813 = vmatpush1.bf16.msra.mxu0 %v5194
        %6814 = vmatprep.mubr.bf16.mxu0 %v1467
        %6815 = vmatmul.mubr.bf16.gmra.mrb[0].mxu0 %v1466
        %v6816 = vpop.f32.mrb[0].mxu0
        %v6817 = vadd.f32 %v6774, %v6816
        %v6818 = vpop.f32.mrb[0].mxu0
        %v6819 = vadd.f32 %v6776, %v6818
        %v6820 = vpop.f32.mrb[0].mxu0
        %v6821 = vadd.f32 %v6778, %v6820
        %v6822 = vpop.f32.mrb[0].mxu0
        %v6823 = vadd.f32 %v6780, %v6822
        %6824 = vdwg.mxu0
        %6825 = vmatprep.subr.bf16.mxu0 %v5203
        %6826 = vmatpush1.bf16.msra.mxu0 %v5202
        %6827 = vmatprep.subr.bf16.mxu0 %v5211
        %6828 = vmatpush1.bf16.msra.mxu0 %v5210
        %6829 = vmatprep.subr.bf16.mxu0 %v5219
        %6830 = vmatpush1.bf16.msra.mxu0 %v5218
        %6831 = vmatprep.subr.bf16.mxu0 %v5227
        %6832 = vmatpush1.bf16.msra.mxu0 %v5226
        %6833 = vmatprep.subr.bf16.mxu0 %v5235
        %6834 = vmatpush1.bf16.msra.mxu0 %v5234
        %6835 = vmatprep.subr.bf16.mxu0 %v5243
        %6836 = vmatpush1.bf16.msra.mxu0 %v5242
        %6837 = vmatprep.subr.bf16.mxu0 %v5251
        %6838 = vmatpush1.bf16.msra.mxu0 %v5250
        %6839 = vmatprep.subr.bf16.mxu0 %v5259
        %6840 = vmatpush1.bf16.msra.mxu0 %v5258
        %6841 = vmatprep.subr.bf16.mxu0 %v5267
        %6842 = vmatpush1.bf16.msra.mxu0 %v5266
        %6843 = vmatprep.subr.bf16.mxu0 %v5275
        %6844 = vmatpush1.bf16.msra.mxu0 %v5274
        %6845 = vmatprep.subr.bf16.mxu0 %v5283
        %6846 = vmatpush1.bf16.msra.mxu0 %v5282
        %6847 = vmatprep.subr.bf16.mxu0 %v5291
        %6848 = vmatpush1.bf16.msra.mxu0 %v5290
        %6849 = vmatprep.subr.bf16.mxu0 %v5299
        %6850 = vmatpush1.bf16.msra.mxu0 %v5298
        %6851 = vmatprep.subr.bf16.mxu0 %v5307
        %6852 = vmatpush1.bf16.msra.mxu0 %v5306
        %6853 = vmatprep.subr.bf16.mxu0 %v5315
        %6854 = vmatpush1.bf16.msra.mxu0 %v5314
        %6855 = vmatprep.subr.bf16.mxu0 %v5323
        %6856 = vmatpush1.bf16.msra.mxu0 %v5322
        %6857 = vmatprep.mubr.bf16.mxu0 %v1469
        %6858 = vmatmul.mubr.bf16.gmra.mrb[0].mxu0 %v1468
        %v6859 = vpop.f32.mrb[0].mxu0
        %v6860 = vadd.f32 %v6817, %v6859
        %v6861 = vpop.f32.mrb[0].mxu0
        %v6862 = vadd.f32 %v6819, %v6861
        %v6863 = vpop.f32.mrb[0].mxu0
        %v6864 = vadd.f32 %v6821, %v6863
        %v6865 = vpop.f32.mrb[0].mxu0
        %v6866 = vadd.f32 %v6823, %v6865
        %6867 = vdwg.mxu0
        %6868 = vmatprep.subr.bf16.mxu0 %v5331
        %6869 = vmatpush1.bf16.msra.mxu0 %v5330
        %6870 = vmatprep.subr.bf16.mxu0 %v5339
        %6871 = vmatpush1.bf16.msra.mxu0 %v5338
        %6872 = vmatprep.subr.bf16.mxu0 %v5347
        %6873 = vmatpush1.bf16.msra.mxu0 %v5346
        %6874 = vmatprep.subr.bf16.mxu0 %v5355
        %6875 = vmatpush1.bf16.msra.mxu0 %v5354
        %6876 = vmatprep.subr.bf16.mxu0 %v5363
        %6877 = vmatpush1.bf16.msra.mxu0 %v5362
        %6878 = vmatprep.subr.bf16.mxu0 %v5371
        %6879 = vmatpush1.bf16.msra.mxu0 %v5370
        %6880 = vmatprep.subr.bf16.mxu0 %v5379
        %6881 = vmatpush1.bf16.msra.mxu0 %v5378
        %6882 = vmatprep.subr.bf16.mxu0 %v5387
        %6883 = vmatpush1.bf16.msra.mxu0 %v5386
        %6884 = vmatprep.subr.bf16.mxu0 %v5395
        %6885 = vmatpush1.bf16.msra.mxu0 %v5394
        %6886 = vmatprep.subr.bf16.mxu0 %v5403
        %6887 = vmatpush1.bf16.msra.mxu0 %v5402
        %6888 = vmatprep.subr.bf16.mxu0 %v5411
        %6889 = vmatpush1.bf16.msra.mxu0 %v5410
        %6890 = vmatprep.subr.bf16.mxu0 %v5419
        %6891 = vmatpush1.bf16.msra.mxu0 %v5418
        %6892 = vmatprep.subr.bf16.mxu0 %v5427
        %6893 = vmatpush1.bf16.msra.mxu0 %v5426
        %6894 = vmatprep.subr.bf16.mxu0 %v5435
        %6895 = vmatpush1.bf16.msra.mxu0 %v5434
        %6896 = vmatprep.subr.bf16.mxu0 %v5443
        %6897 = vmatpush1.bf16.msra.mxu0 %v5442
        %6898 = vmatprep.subr.bf16.mxu0 %v5451
        %6899 = vmatpush1.bf16.msra.mxu0 %v5450
        %6900 = vmatprep.mubr.bf16.mxu0 %v1471
        %6901 = vmatmul.mubr.bf16.gmra.mrb[0].mxu0 %v1470
        %v6902 = vpop.f32.mrb[0].mxu0
        %v6903 = vadd.f32 %v6860, %v6902
        %v6904 = vpop.f32.mrb[0].mxu0
        %v6905 = vadd.f32 %v6862, %v6904
        %v6906 = vpop.f32.mrb[0].mxu0
        %v6907 = vadd.f32 %v6864, %v6906
        %v6908 = vpop.f32.mrb[0].mxu0
        %v6909 = vadd.f32 %v6866, %v6908
        %6910 = vdwg.mxu0
        %6911 = vmatprep.subr.bf16.mxu0 %v5459
        %6912 = vmatpush1.bf16.msra.mxu0 %v5458
        %6913 = vmatprep.subr.bf16.mxu0 %v5467
        %6914 = vmatpush1.bf16.msra.mxu0 %v5466
        %6915 = vmatprep.subr.bf16.mxu0 %v5475
        %6916 = vmatpush1.bf16.msra.mxu0 %v5474
        %6917 = vmatprep.subr.bf16.mxu0 %v5483
        %6918 = vmatpush1.bf16.msra.mxu0 %v5482
        %6919 = vmatprep.subr.bf16.mxu0 %v5491
        %6920 = vmatpush1.bf16.msra.mxu0 %v5490
        %6921 = vmatprep.subr.bf16.mxu0 %v5499
        %6922 = vmatpush1.bf16.msra.mxu0 %v5498
        %6923 = vmatprep.subr.bf16.mxu0 %v5507
        %6924 = vmatpush1.bf16.msra.mxu0 %v5506
        %6925 = vmatprep.subr.bf16.mxu0 %v5515
        %6926 = vmatpush1.bf16.msra.mxu0 %v5514
        %6927 = vmatprep.subr.bf16.mxu0 %v5523
        %6928 = vmatpush1.bf16.msra.mxu0 %v5522
        %6929 = vmatprep.subr.bf16.mxu0 %v5531
        %6930 = vmatpush1.bf16.msra.mxu0 %v5530
        %6931 = vmatprep.subr.bf16.mxu0 %v5539
        %6932 = vmatpush1.bf16.msra.mxu0 %v5538
        %6933 = vmatprep.subr.bf16.mxu0 %v5547
        %6934 = vmatpush1.bf16.msra.mxu0 %v5546
        %6935 = vmatprep.subr.bf16.mxu0 %v5555
        %6936 = vmatpush1.bf16.msra.mxu0 %v5554
        %6937 = vmatprep.subr.bf16.mxu0 %v5563
        %6938 = vmatpush1.bf16.msra.mxu0 %v5562
        %6939 = vmatprep.subr.bf16.mxu0 %v5571
        %6940 = vmatpush1.bf16.msra.mxu0 %v5570
        %6941 = vmatprep.subr.bf16.mxu0 %v5579
        %6942 = vmatpush1.bf16.msra.mxu0 %v5578
        %6943 = vmatprep.mubr.bf16.mxu0 %v1473
        %6944 = vmatmul.mubr.bf16.gmra.mrb[0].mxu0 %v1472
        %v6945 = vpop.f32.mrb[0].mxu0
        %v6946 = vadd.f32 %v6903, %v6945
        %v6947 = vpop.f32.mrb[0].mxu0
        %v6948 = vadd.f32 %v6905, %v6947
        %v6949 = vpop.f32.mrb[0].mxu0
        %v6950 = vadd.f32 %v6907, %v6949
        %v6951 = vpop.f32.mrb[0].mxu0
        %v6952 = vadd.f32 %v6909, %v6951
        %6953 = vdwg.mxu0
        %6954 = vmatprep.subr.bf16.mxu0 %v4565
        %6955 = vmatpush1.bf16.msra.mxu0 %v4564
        %6956 = vmatprep.subr.bf16.mxu0 %v4573
        %6957 = vmatpush1.bf16.msra.mxu0 %v4572
        %6958 = vmatprep.subr.bf16.mxu0 %v4581
        %6959 = vmatpush1.bf16.msra.mxu0 %v4580
        %6960 = vmatprep.subr.bf16.mxu0 %v4589
        %6961 = vmatpush1.bf16.msra.mxu0 %v4588
        %6962 = vmatprep.subr.bf16.mxu0 %v4597
        %6963 = vmatpush1.bf16.msra.mxu0 %v4596
        %6964 = vmatprep.subr.bf16.mxu0 %v4605
        %6965 = vmatpush1.bf16.msra.mxu0 %v4604
        %6966 = vmatprep.subr.bf16.mxu0 %v4613
        %6967 = vmatpush1.bf16.msra.mxu0 %v4612
        %6968 = vmatprep.subr.bf16.mxu0 %v4621
        %6969 = vmatpush1.bf16.msra.mxu0 %v4620
        %6970 = vmatprep.subr.bf16.mxu0 %v4629
        %6971 = vmatpush1.bf16.msra.mxu0 %v4628
        %6972 = vmatprep.subr.bf16.mxu0 %v4637
        %6973 = vmatpush1.bf16.msra.mxu0 %v4636
        %6974 = vmatprep.subr.bf16.mxu0 %v4645
        %6975 = vmatpush1.bf16.msra.mxu0 %v4644
        %6976 = vmatprep.subr.bf16.mxu0 %v4653
        %6977 = vmatpush1.bf16.msra.mxu0 %v4652
        %6978 = vmatprep.subr.bf16.mxu0 %v4661
        %6979 = vmatpush1.bf16.msra.mxu0 %v4660
        %6980 = vmatprep.subr.bf16.mxu0 %v4669
        %6981 = vmatpush1.bf16.msra.mxu0 %v4668
        %6982 = vmatprep.subr.bf16.mxu0 %v4677
        %6983 = vmatpush1.bf16.msra.mxu0 %v4676
        %6984 = vmatprep.subr.bf16.mxu0 %v4685
        %6985 = vmatpush1.bf16.msra.mxu0 %v4684
        %6986 = vmatprep.mubr.bf16.mxu0 %v1459
        %6987 = vmatmul.mubr.bf16.gmra.mrb[0].mxu0 %v1458
        %v6988 = vpop.f32.mrb[0].mxu0
        %v6989 = vadd.f32 %v1381, %v6988
        %v6990 = vpop.f32.mrb[0].mxu0
        %v6991 = vadd.f32 %v1385, %v6990
        %v6992 = vpop.f32.mrb[0].mxu0
        %v6993 = vadd.f32 %v1381, %v6992
        %v6994 = vpop.f32.mrb[0].mxu0
        %v6995 = vadd.f32 %v1385, %v6994
        %6996 = vdwg.mxu0
        %6997 = vmatprep.subr.bf16.mxu0 %v4693
        %6998 = vmatpush1.bf16.msra.mxu0 %v4692
        %6999 = vmatprep.subr.bf16.mxu0 %v4701
        %7000 = vmatpush1.bf16.msra.mxu0 %v4700
        %7001 = vmatprep.subr.bf16.mxu0 %v4709
        %7002 = vmatpush1.bf16.msra.mxu0 %v4708
        %7003 = vmatprep.subr.bf16.mxu0 %v4717
        %7004 = vmatpush1.bf16.msra.mxu0 %v4716
        %7005 = vmatprep.subr.bf16.mxu0 %v4725
        %7006 = vmatpush1.bf16.msra.mxu0 %v4724
        %7007 = vmatprep.subr.bf16.mxu0 %v4733
        %7008 = vmatpush1.bf16.msra.mxu0 %v4732
        %7009 = vmatprep.subr.bf16.mxu0 %v4741
        %7010 = vmatpush1.bf16.msra.mxu0 %v4740
        %7011 = vmatprep.subr.bf16.mxu0 %v4749
        %7012 = vmatpush1.bf16.msra.mxu0 %v4748
        %7013 = vmatprep.subr.bf16.mxu0 %v4757
        %7014 = vmatpush1.bf16.msra.mxu0 %v4756
        %7015 = vmatprep.subr.bf16.mxu0 %v4765
        %7016 = vmatpush1.bf16.msra.mxu0 %v4764
        %7017 = vmatprep.subr.bf16.mxu0 %v4773
        %7018 = vmatpush1.bf16.msra.mxu0 %v4772
        %7019 = vmatprep.subr.bf16.mxu0 %v4781
        %7020 = vmatpush1.bf16.msra.mxu0 %v4780
        %7021 = vmatprep.subr.bf16.mxu0 %v4789
        %7022 = vmatpush1.bf16.msra.mxu0 %v4788
        %7023 = vmatprep.subr.bf16.mxu0 %v4797
        %7024 = vmatpush1.bf16.msra.mxu0 %v4796
        %7025 = vmatprep.subr.bf16.mxu0 %v4805
        %7026 = vmatpush1.bf16.msra.mxu0 %v4804
        %7027 = vmatprep.subr.bf16.mxu0 %v4813
        %7028 = vmatpush1.bf16.msra.mxu0 %v4812
        %7029 = vmatprep.mubr.bf16.mxu0 %v1461
        %7030 = vmatmul.mubr.bf16.gmra.mrb[0].mxu0 %v1460
        %v7031 = vpop.f32.mrb[0].mxu0
        %v7032 = vadd.f32 %v6989, %v7031
        %v7033 = vpop.f32.mrb[0].mxu0
        %v7034 = vadd.f32 %v6991, %v7033
        %v7035 = vpop.f32.mrb[0].mxu0
        %v7036 = vadd.f32 %v6993, %v7035
        %v7037 = vpop.f32.mrb[0].mxu0
        %v7038 = vadd.f32 %v6995, %v7037
        %7039 = vdwg.mxu0
        %7040 = vmatprep.subr.bf16.mxu0 %v4821
        %7041 = vmatpush1.bf16.msra.mxu0 %v4820
        %7042 = vmatprep.subr.bf16.mxu0 %v4829
        %7043 = vmatpush1.bf16.msra.mxu0 %v4828
        %7044 = vmatprep.subr.bf16.mxu0 %v4837
        %7045 = vmatpush1.bf16.msra.mxu0 %v4836
        %7046 = vmatprep.subr.bf16.mxu0 %v4845
        %7047 = vmatpush1.bf16.msra.mxu0 %v4844
        %7048 = vmatprep.subr.bf16.mxu0 %v4853
        %7049 = vmatpush1.bf16.msra.mxu0 %v4852
        %7050 = vmatprep.subr.bf16.mxu0 %v4861
        %7051 = vmatpush1.bf16.msra.mxu0 %v4860
        %7052 = vmatprep.subr.bf16.mxu0 %v4869
        %7053 = vmatpush1.bf16.msra.mxu0 %v4868
        %7054 = vmatprep.subr.bf16.mxu0 %v4877
        %7055 = vmatpush1.bf16.msra.mxu0 %v4876
        %7056 = vmatprep.subr.bf16.mxu0 %v4885
        %7057 = vmatpush1.bf16.msra.mxu0 %v4884
        %7058 = vmatprep.subr.bf16.mxu0 %v4893
        %7059 = vmatpush1.bf16.msra.mxu0 %v4892
        %7060 = vmatprep.subr.bf16.mxu0 %v4901
        %7061 = vmatpush1.bf16.msra.mxu0 %v4900
        %7062 = vmatprep.subr.bf16.mxu0 %v4909
        %7063 = vmatpush1.bf16.msra.mxu0 %v4908
        %7064 = vmatprep.subr.bf16.mxu0 %v4917
        %7065 = vmatpush1.bf16.msra.mxu0 %v4916
        %7066 = vmatprep.subr.bf16.mxu0 %v4925
        %7067 = vmatpush1.bf16.msra.mxu0 %v4924
        %7068 = vmatprep.subr.bf16.mxu0 %v4933
        %7069 = vmatpush1.bf16.msra.mxu0 %v4932
        %7070 = vmatprep.subr.bf16.mxu0 %v4941
        %7071 = vmatpush1.bf16.msra.mxu0 %v4940
        %7072 = vmatprep.mubr.bf16.mxu0 %v1463
        %7073 = vmatmul.mubr.bf16.gmra.mrb[0].mxu0 %v1462
        %v7074 = vpop.f32.mrb[0].mxu0
        %v7075 = vadd.f32 %v7032, %v7074
        %v7076 = vpop.f32.mrb[0].mxu0
        %v7077 = vadd.f32 %v7034, %v7076
        %v7078 = vpop.f32.mrb[0].mxu0
        %v7079 = vadd.f32 %v7036, %v7078
        %v7080 = vpop.f32.mrb[0].mxu0
        %v7081 = vadd.f32 %v7038, %v7080
        %7082 = vdwg.mxu0
        %7083 = vmatprep.subr.bf16.mxu0 %v4949
        %7084 = vmatpush1.bf16.msra.mxu0 %v4948
        %7085 = vmatprep.subr.bf16.mxu0 %v4957
        %7086 = vmatpush1.bf16.msra.mxu0 %v4956
        %7087 = vmatprep.subr.bf16.mxu0 %v4965
        %7088 = vmatpush1.bf16.msra.mxu0 %v4964
        %7089 = vmatprep.subr.bf16.mxu0 %v4973
        %7090 = vmatpush1.bf16.msra.mxu0 %v4972
        %7091 = vmatprep.subr.bf16.mxu0 %v4981
        %7092 = vmatpush1.bf16.msra.mxu0 %v4980
        %7093 = vmatprep.subr.bf16.mxu0 %v4989
        %7094 = vmatpush1.bf16.msra.mxu0 %v4988
        %7095 = vmatprep.subr.bf16.mxu0 %v4997
        %7096 = vmatpush1.bf16.msra.mxu0 %v4996
        %7097 = vmatprep.subr.bf16.mxu0 %v5005
        %7098 = vmatpush1.bf16.msra.mxu0 %v5004
        %7099 = vmatprep.subr.bf16.mxu0 %v5013
        %7100 = vmatpush1.bf16.msra.mxu0 %v5012
        %7101 = vmatprep.subr.bf16.mxu0 %v5021
        %7102 = vmatpush1.bf16.msra.mxu0 %v5020
        %7103 = vmatprep.subr.bf16.mxu0 %v5029
        %7104 = vmatpush1.bf16.msra.mxu0 %v5028
        %7105 = vmatprep.subr.bf16.mxu0 %v5037
        %7106 = vmatpush1.bf16.msra.mxu0 %v5036
        %7107 = vmatprep.subr.bf16.mxu0 %v5045
        %7108 = vmatpush1.bf16.msra.mxu0 %v5044
        %7109 = vmatprep.subr.bf16.mxu0 %v5053
        %7110 = vmatpush1.bf16.msra.mxu0 %v5052
        %7111 = vmatprep.subr.bf16.mxu0 %v5061
        %7112 = vmatpush1.bf16.msra.mxu0 %v5060
        %7113 = vmatprep.subr.bf16.mxu0 %v5069
        %7114 = vmatpush1.bf16.msra.mxu0 %v5068
        %7115 = vmatprep.mubr.bf16.mxu0 %v1465
        %7116 = vmatmul.mubr.bf16.gmra.mrb[0].mxu0 %v1464
        %v7117 = vpop.f32.mrb[0].mxu0
        %v7118 = vadd.f32 %v7075, %v7117
        %v7119 = vpop.f32.mrb[0].mxu0
        %v7120 = vadd.f32 %v7077, %v7119
        %v7121 = vpop.f32.mrb[0].mxu0
        %v7122 = vadd.f32 %v7079, %v7121
        %v7123 = vpop.f32.mrb[0].mxu0
        %v7124 = vadd.f32 %v7081, %v7123
        %7125 = vdwg.mxu0
        %7126 = vmatprep.subr.bf16.mxu0 %v5077
        %7127 = vmatpush1.bf16.msra.mxu0 %v5076
        %7128 = vmatprep.subr.bf16.mxu0 %v5085
        %7129 = vmatpush1.bf16.msra.mxu0 %v5084
        %7130 = vmatprep.subr.bf16.mxu0 %v5093
        %7131 = vmatpush1.bf16.msra.mxu0 %v5092
        %7132 = vmatprep.subr.bf16.mxu0 %v5101
        %7133 = vmatpush1.bf16.msra.mxu0 %v5100
        %7134 = vmatprep.subr.bf16.mxu0 %v5109
        %7135 = vmatpush1.bf16.msra.mxu0 %v5108
        %7136 = vmatprep.subr.bf16.mxu0 %v5117
        %7137 = vmatpush1.bf16.msra.mxu0 %v5116
        %7138 = vmatprep.subr.bf16.mxu0 %v5125
        %7139 = vmatpush1.bf16.msra.mxu0 %v5124
        %7140 = vmatprep.subr.bf16.mxu0 %v5133
        %7141 = vmatpush1.bf16.msra.mxu0 %v5132
        %7142 = vmatprep.subr.bf16.mxu0 %v5141
        %7143 = vmatpush1.bf16.msra.mxu0 %v5140
        %7144 = vmatprep.subr.bf16.mxu0 %v5149
        %7145 = vmatpush1.bf16.msra.mxu0 %v5148
        %7146 = vmatprep.subr.bf16.mxu0 %v5157
        %7147 = vmatpush1.bf16.msra.mxu0 %v5156
        %7148 = vmatprep.subr.bf16.mxu0 %v5165
        %7149 = vmatpush1.bf16.msra.mxu0 %v5164
        %7150 = vmatprep.subr.bf16.mxu0 %v5173
        %7151 = vmatpush1.bf16.msra.mxu0 %v5172
        %7152 = vmatprep.subr.bf16.mxu0 %v5181
        %7153 = vmatpush1.bf16.msra.mxu0 %v5180
        %7154 = vmatprep.subr.bf16.mxu0 %v5189
        %7155 = vmatpush1.bf16.msra.mxu0 %v5188
        %7156 = vmatprep.subr.bf16.mxu0 %v5197
        %7157 = vmatpush1.bf16.msra.mxu0 %v5196
        %7158 = vmatprep.mubr.bf16.mxu0 %v1467
        %7159 = vmatmul.mubr.bf16.gmra.mrb[0].mxu0 %v1466
        %v7160 = vpop.f32.mrb[0].mxu0
        %v7161 = vadd.f32 %v7118, %v7160
        %v7162 = vpop.f32.mrb[0].mxu0
        %v7163 = vadd.f32 %v7120, %v7162
        %v7164 = vpop.f32.mrb[0].mxu0
        %v7165 = vadd.f32 %v7122, %v7164
        %v7166 = vpop.f32.mrb[0].mxu0
        %v7167 = vadd.f32 %v7124, %v7166
        %7168 = vdwg.mxu0
        %7169 = vmatprep.subr.bf16.mxu0 %v5205
        %7170 = vmatpush1.bf16.msra.mxu0 %v5204
        %7171 = vmatprep.subr.bf16.mxu0 %v5213
        %7172 = vmatpush1.bf16.msra.mxu0 %v5212
        %7173 = vmatprep.subr.bf16.mxu0 %v5221
        %7174 = vmatpush1.bf16.msra.mxu0 %v5220
        %7175 = vmatprep.subr.bf16.mxu0 %v5229
        %7176 = vmatpush1.bf16.msra.mxu0 %v5228
        %7177 = vmatprep.subr.bf16.mxu0 %v5237
        %7178 = vmatpush1.bf16.msra.mxu0 %v5236
        %7179 = vmatprep.subr.bf16.mxu0 %v5245
        %7180 = vmatpush1.bf16.msra.mxu0 %v5244
        %7181 = vmatprep.subr.bf16.mxu0 %v5253
        %7182 = vmatpush1.bf16.msra.mxu0 %v5252
        %7183 = vmatprep.subr.bf16.mxu0 %v5261
        %7184 = vmatpush1.bf16.msra.mxu0 %v5260
        %7185 = vmatprep.subr.bf16.mxu0 %v5269
        %7186 = vmatpush1.bf16.msra.mxu0 %v5268
        %7187 = vmatprep.subr.bf16.mxu0 %v5277
        %7188 = vmatpush1.bf16.msra.mxu0 %v5276
        %7189 = vmatprep.subr.bf16.mxu0 %v5285
        %7190 = vmatpush1.bf16.msra.mxu0 %v5284
        %7191 = vmatprep.subr.bf16.mxu0 %v5293
        %7192 = vmatpush1.bf16.msra.mxu0 %v5292
        %7193 = vmatprep.subr.bf16.mxu0 %v5301
        %7194 = vmatpush1.bf16.msra.mxu0 %v5300
        %7195 = vmatprep.subr.bf16.mxu0 %v5309
        %7196 = vmatpush1.bf16.msra.mxu0 %v5308
        %7197 = vmatprep.subr.bf16.mxu0 %v5317
        %7198 = vmatpush1.bf16.msra.mxu0 %v5316
        %7199 = vmatprep.subr.bf16.mxu0 %v5325
        %7200 = vmatpush1.bf16.msra.mxu0 %v5324
        %7201 = vmatprep.mubr.bf16.mxu0 %v1469
        %7202 = vmatmul.mubr.bf16.gmra.mrb[0].mxu0 %v1468
        %v7203 = vpop.f32.mrb[0].mxu0
        %v7204 = vadd.f32 %v7161, %v7203
        %v7205 = vpop.f32.mrb[0].mxu0
        %v7206 = vadd.f32 %v7163, %v7205
        %v7207 = vpop.f32.mrb[0].mxu0
        %v7208 = vadd.f32 %v7165, %v7207
        %v7209 = vpop.f32.mrb[0].mxu0
        %v7210 = vadd.f32 %v7167, %v7209
        %7211 = vdwg.mxu0
        %7212 = vmatprep.subr.bf16.mxu0 %v5333
        %7213 = vmatpush1.bf16.msra.mxu0 %v5332
        %7214 = vmatprep.subr.bf16.mxu0 %v5341
        %7215 = vmatpush1.bf16.msra.mxu0 %v5340
        %7216 = vmatprep.subr.bf16.mxu0 %v5349
        %7217 = vmatpush1.bf16.msra.mxu0 %v5348
        %7218 = vmatprep.subr.bf16.mxu0 %v5357
        %7219 = vmatpush1.bf16.msra.mxu0 %v5356
        %7220 = vmatprep.subr.bf16.mxu0 %v5365
        %7221 = vmatpush1.bf16.msra.mxu0 %v5364
        %7222 = vmatprep.subr.bf16.mxu0 %v5373
        %7223 = vmatpush1.bf16.msra.mxu0 %v5372
        %7224 = vmatprep.subr.bf16.mxu0 %v5381
        %7225 = vmatpush1.bf16.msra.mxu0 %v5380
        %7226 = vmatprep.subr.bf16.mxu0 %v5389
        %7227 = vmatpush1.bf16.msra.mxu0 %v5388
        %7228 = vmatprep.subr.bf16.mxu0 %v5397
        %7229 = vmatpush1.bf16.msra.mxu0 %v5396
        %7230 = vmatprep.subr.bf16.mxu0 %v5405
        %7231 = vmatpush1.bf16.msra.mxu0 %v5404
        %7232 = vmatprep.subr.bf16.mxu0 %v5413
        %7233 = vmatpush1.bf16.msra.mxu0 %v5412
        %7234 = vmatprep.subr.bf16.mxu0 %v5421
        %7235 = vmatpush1.bf16.msra.mxu0 %v5420
        %7236 = vmatprep.subr.bf16.mxu0 %v5429
        %7237 = vmatpush1.bf16.msra.mxu0 %v5428
        %7238 = vmatprep.subr.bf16.mxu0 %v5437
        %7239 = vmatpush1.bf16.msra.mxu0 %v5436
        %7240 = vmatprep.subr.bf16.mxu0 %v5445
        %7241 = vmatpush1.bf16.msra.mxu0 %v5444
        %7242 = vmatprep.subr.bf16.mxu0 %v5453
        %7243 = vmatpush1.bf16.msra.mxu0 %v5452
        %7244 = vmatprep.mubr.bf16.mxu0 %v1471
        %7245 = vmatmul.mubr.bf16.gmra.mrb[0].mxu0 %v1470
        %v7246 = vpop.f32.mrb[0].mxu0
        %v7247 = vadd.f32 %v7204, %v7246
        %v7248 = vpop.f32.mrb[0].mxu0
        %v7249 = vadd.f32 %v7206, %v7248
        %v7250 = vpop.f32.mrb[0].mxu0
        %v7251 = vadd.f32 %v7208, %v7250
        %v7252 = vpop.f32.mrb[0].mxu0
        %v7253 = vadd.f32 %v7210, %v7252
        %7254 = vdwg.mxu0
        %7255 = vmatprep.subr.bf16.mxu0 %v5461
        %7256 = vmatpush1.bf16.msra.mxu0 %v5460
        %7257 = vmatprep.subr.bf16.mxu0 %v5469
        %7258 = vmatpush1.bf16.msra.mxu0 %v5468
        %7259 = vmatprep.subr.bf16.mxu0 %v5477
        %7260 = vmatpush1.bf16.msra.mxu0 %v5476
        %7261 = vmatprep.subr.bf16.mxu0 %v5485
        %7262 = vmatpush1.bf16.msra.mxu0 %v5484
        %7263 = vmatprep.subr.bf16.mxu0 %v5493
        %7264 = vmatpush1.bf16.msra.mxu0 %v5492
        %7265 = vmatprep.subr.bf16.mxu0 %v5501
        %7266 = vmatpush1.bf16.msra.mxu0 %v5500
        %7267 = vmatprep.subr.bf16.mxu0 %v5509
        %7268 = vmatpush1.bf16.msra.mxu0 %v5508
        %7269 = vmatprep.subr.bf16.mxu0 %v5517
        %7270 = vmatpush1.bf16.msra.mxu0 %v5516
        %7271 = vmatprep.subr.bf16.mxu0 %v5525
        %7272 = vmatpush1.bf16.msra.mxu0 %v5524
        %7273 = vmatprep.subr.bf16.mxu0 %v5533
        %7274 = vmatpush1.bf16.msra.mxu0 %v5532
        %7275 = vmatprep.subr.bf16.mxu0 %v5541
        %7276 = vmatpush1.bf16.msra.mxu0 %v5540
        %7277 = vmatprep.subr.bf16.mxu0 %v5549
        %7278 = vmatpush1.bf16.msra.mxu0 %v5548
        %7279 = vmatprep.subr.bf16.mxu0 %v5557
        %7280 = vmatpush1.bf16.msra.mxu0 %v5556
        %7281 = vmatprep.subr.bf16.mxu0 %v5565
        %7282 = vmatpush1.bf16.msra.mxu0 %v5564
        %7283 = vmatprep.subr.bf16.mxu0 %v5573
        %7284 = vmatpush1.bf16.msra.mxu0 %v5572
        %7285 = vmatprep.subr.bf16.mxu0 %v5581
        %7286 = vmatpush1.bf16.msra.mxu0 %v5580
        %7287 = vmatprep.mubr.bf16.mxu0 %v1473
        %7288 = vmatmul.mubr.bf16.gmra.mrb[0].mxu0 %v1472
        %v7289 = vpop.f32.mrb[0].mxu0
        %v7290 = vadd.f32 %v7247, %v7289
        %v7291 = vpop.f32.mrb[0].mxu0
        %v7292 = vadd.f32 %v7249, %v7291
        %v7293 = vpop.f32.mrb[0].mxu0
        %v7294 = vadd.f32 %v7251, %v7293
        %v7295 = vpop.f32.mrb[0].mxu0
        %v7296 = vadd.f32 %v7253, %v7295
        %7297 = vdwg.mxu0
        %7298 = vmatprep.subr.bf16.mxu0 %v4567
        %7299 = vmatpush1.bf16.msra.mxu0 %v4566
        %7300 = vmatprep.subr.bf16.mxu0 %v4575
        %7301 = vmatpush1.bf16.msra.mxu0 %v4574
        %7302 = vmatprep.subr.bf16.mxu0 %v4583
        %7303 = vmatpush1.bf16.msra.mxu0 %v4582
        %7304 = vmatprep.subr.bf16.mxu0 %v4591
        %7305 = vmatpush1.bf16.msra.mxu0 %v4590
        %7306 = vmatprep.subr.bf16.mxu0 %v4599
        %7307 = vmatpush1.bf16.msra.mxu0 %v4598
        %7308 = vmatprep.subr.bf16.mxu0 %v4607
        %7309 = vmatpush1.bf16.msra.mxu0 %v4606
        %7310 = vmatprep.subr.bf16.mxu0 %v4615
        %7311 = vmatpush1.bf16.msra.mxu0 %v4614
        %7312 = vmatprep.subr.bf16.mxu0 %v4623
        %7313 = vmatpush1.bf16.msra.mxu0 %v4622
        %7314 = vmatprep.subr.bf16.mxu0 %v4631
        %7315 = vmatpush1.bf16.msra.mxu0 %v4630
        %7316 = vmatprep.subr.bf16.mxu0 %v4639
        %7317 = vmatpush1.bf16.msra.mxu0 %v4638
        %7318 = vmatprep.subr.bf16.mxu0 %v4647
        %7319 = vmatpush1.bf16.msra.mxu0 %v4646
        %7320 = vmatprep.subr.bf16.mxu0 %v4655
        %7321 = vmatpush1.bf16.msra.mxu0 %v4654
        %7322 = vmatprep.subr.bf16.mxu0 %v4663
        %7323 = vmatpush1.bf16.msra.mxu0 %v4662
        %7324 = vmatprep.subr.bf16.mxu0 %v4671
        %7325 = vmatpush1.bf16.msra.mxu0 %v4670
        %7326 = vmatprep.subr.bf16.mxu0 %v4679
        %7327 = vmatpush1.bf16.msra.mxu0 %v4678
        %7328 = vmatprep.subr.bf16.mxu0 %v4687
        %7329 = vmatpush1.bf16.msra.mxu0 %v4686
        %7330 = vmatprep.mubr.bf16.mxu0 %v1459
        %7331 = vmatmul.mubr.bf16.gmra.mrb[0].mxu0 %v1458
        %v7332 = vpop.f32.mrb[0].mxu0
        %v7333 = vadd.f32 %v1389, %v7332
        %v7334 = vpop.f32.mrb[0].mxu0
        %v7335 = vadd.f32 %v1393, %v7334
        %v7336 = vpop.f32.mrb[0].mxu0
        %v7337 = vadd.f32 %v1389, %v7336
        %v7338 = vpop.f32.mrb[0].mxu0
        %v7339 = vadd.f32 %v1393, %v7338
        %7340 = vdwg.mxu0
        %7341 = vmatprep.subr.bf16.mxu0 %v4695
        %7342 = vmatpush1.bf16.msra.mxu0 %v4694
        %7343 = vmatprep.subr.bf16.mxu0 %v4703
        %7344 = vmatpush1.bf16.msra.mxu0 %v4702
        %7345 = vmatprep.subr.bf16.mxu0 %v4711
        %7346 = vmatpush1.bf16.msra.mxu0 %v4710
        %7347 = vmatprep.subr.bf16.mxu0 %v4719
        %7348 = vmatpush1.bf16.msra.mxu0 %v4718
        %7349 = vmatprep.subr.bf16.mxu0 %v4727
        %7350 = vmatpush1.bf16.msra.mxu0 %v4726
        %7351 = vmatprep.subr.bf16.mxu0 %v4735
        %7352 = vmatpush1.bf16.msra.mxu0 %v4734
        %7353 = vmatprep.subr.bf16.mxu0 %v4743
        %7354 = vmatpush1.bf16.msra.mxu0 %v4742
        %7355 = vmatprep.subr.bf16.mxu0 %v4751
        %7356 = vmatpush1.bf16.msra.mxu0 %v4750
        %7357 = vmatprep.subr.bf16.mxu0 %v4759
        %7358 = vmatpush1.bf16.msra.mxu0 %v4758
        %7359 = vmatprep.subr.bf16.mxu0 %v4767
        %7360 = vmatpush1.bf16.msra.mxu0 %v4766
        %7361 = vmatprep.subr.bf16.mxu0 %v4775
        %7362 = vmatpush1.bf16.msra.mxu0 %v4774
        %7363 = vmatprep.subr.bf16.mxu0 %v4783
        %7364 = vmatpush1.bf16.msra.mxu0 %v4782
        %7365 = vmatprep.subr.bf16.mxu0 %v4791
        %7366 = vmatpush1.bf16.msra.mxu0 %v4790
        %7367 = vmatprep.subr.bf16.mxu0 %v4799
        %7368 = vmatpush1.bf16.msra.mxu0 %v4798
        %7369 = vmatprep.subr.bf16.mxu0 %v4807
        %7370 = vmatpush1.bf16.msra.mxu0 %v4806
        %7371 = vmatprep.subr.bf16.mxu0 %v4815
        %7372 = vmatpush1.bf16.msra.mxu0 %v4814
        %7373 = vmatprep.mubr.bf16.mxu0 %v1461
        %7374 = vmatmul.mubr.bf16.gmra.mrb[0].mxu0 %v1460
        %v7375 = vpop.f32.mrb[0].mxu0
        %v7376 = vadd.f32 %v7333, %v7375
        %v7377 = vpop.f32.mrb[0].mxu0
        %v7378 = vadd.f32 %v7335, %v7377
        %v7379 = vpop.f32.mrb[0].mxu0
        %v7380 = vadd.f32 %v7337, %v7379
        %v7381 = vpop.f32.mrb[0].mxu0
        %v7382 = vadd.f32 %v7339, %v7381
        %7383 = vdwg.mxu0
        %7384 = vmatprep.subr.bf16.mxu0 %v4823
        %7385 = vmatpush1.bf16.msra.mxu0 %v4822
        %7386 = vmatprep.subr.bf16.mxu0 %v4831
        %7387 = vmatpush1.bf16.msra.mxu0 %v4830
        %7388 = vmatprep.subr.bf16.mxu0 %v4839
        %7389 = vmatpush1.bf16.msra.mxu0 %v4838
        %7390 = vmatprep.subr.bf16.mxu0 %v4847
        %7391 = vmatpush1.bf16.msra.mxu0 %v4846
        %7392 = vmatprep.subr.bf16.mxu0 %v4855
        %7393 = vmatpush1.bf16.msra.mxu0 %v4854
        %7394 = vmatprep.subr.bf16.mxu0 %v4863
        %7395 = vmatpush1.bf16.msra.mxu0 %v4862
        %7396 = vmatprep.subr.bf16.mxu0 %v4871
        %7397 = vmatpush1.bf16.msra.mxu0 %v4870
        %7398 = vmatprep.subr.bf16.mxu0 %v4879
        %7399 = vmatpush1.bf16.msra.mxu0 %v4878
        %7400 = vmatprep.subr.bf16.mxu0 %v4887
        %7401 = vmatpush1.bf16.msra.mxu0 %v4886
        %7402 = vmatprep.subr.bf16.mxu0 %v4895
        %7403 = vmatpush1.bf16.msra.mxu0 %v4894
        %7404 = vmatprep.subr.bf16.mxu0 %v4903
        %7405 = vmatpush1.bf16.msra.mxu0 %v4902
        %7406 = vmatprep.subr.bf16.mxu0 %v4911
        %7407 = vmatpush1.bf16.msra.mxu0 %v4910
        %7408 = vmatprep.subr.bf16.mxu0 %v4919
        %7409 = vmatpush1.bf16.msra.mxu0 %v4918
        %7410 = vmatprep.subr.bf16.mxu0 %v4927
        %7411 = vmatpush1.bf16.msra.mxu0 %v4926
        %7412 = vmatprep.subr.bf16.mxu0 %v4935
        %7413 = vmatpush1.bf16.msra.mxu0 %v4934
        %7414 = vmatprep.subr.bf16.mxu0 %v4943
        %7415 = vmatpush1.bf16.msra.mxu0 %v4942
        %7416 = vmatprep.mubr.bf16.mxu0 %v1463
        %7417 = vmatmul.mubr.bf16.gmra.mrb[0].mxu0 %v1462
        %v7418 = vpop.f32.mrb[0].mxu0
        %v7419 = vadd.f32 %v7376, %v7418
        %v7420 = vpop.f32.mrb[0].mxu0
        %v7421 = vadd.f32 %v7378, %v7420
        %v7422 = vpop.f32.mrb[0].mxu0
        %v7423 = vadd.f32 %v7380, %v7422
        %v7424 = vpop.f32.mrb[0].mxu0
        %v7425 = vadd.f32 %v7382, %v7424
        %7426 = vdwg.mxu0
        %7427 = vmatprep.subr.bf16.mxu0 %v4951
        %7428 = vmatpush1.bf16.msra.mxu0 %v4950
        %7429 = vmatprep.subr.bf16.mxu0 %v4959
        %7430 = vmatpush1.bf16.msra.mxu0 %v4958
        %7431 = vmatprep.subr.bf16.mxu0 %v4967
        %7432 = vmatpush1.bf16.msra.mxu0 %v4966
        %7433 = vmatprep.subr.bf16.mxu0 %v4975
        %7434 = vmatpush1.bf16.msra.mxu0 %v4974
        %7435 = vmatprep.subr.bf16.mxu0 %v4983
        %7436 = vmatpush1.bf16.msra.mxu0 %v4982
        %7437 = vmatprep.subr.bf16.mxu0 %v4991
        %7438 = vmatpush1.bf16.msra.mxu0 %v4990
        %7439 = vmatprep.subr.bf16.mxu0 %v4999
        %7440 = vmatpush1.bf16.msra.mxu0 %v4998
        %7441 = vmatprep.subr.bf16.mxu0 %v5007
        %7442 = vmatpush1.bf16.msra.mxu0 %v5006
        %7443 = vmatprep.subr.bf16.mxu0 %v5015
        %7444 = vmatpush1.bf16.msra.mxu0 %v5014
        %7445 = vmatprep.subr.bf16.mxu0 %v5023
        %7446 = vmatpush1.bf16.msra.mxu0 %v5022
        %7447 = vmatprep.subr.bf16.mxu0 %v5031
        %7448 = vmatpush1.bf16.msra.mxu0 %v5030
        %7449 = vmatprep.subr.bf16.mxu0 %v5039
        %7450 = vmatpush1.bf16.msra.mxu0 %v5038
        %7451 = vmatprep.subr.bf16.mxu0 %v5047
        %7452 = vmatpush1.bf16.msra.mxu0 %v5046
        %7453 = vmatprep.subr.bf16.mxu0 %v5055
        %7454 = vmatpush1.bf16.msra.mxu0 %v5054
        %7455 = vmatprep.subr.bf16.mxu0 %v5063
        %7456 = vmatpush1.bf16.msra.mxu0 %v5062
        %7457 = vmatprep.subr.bf16.mxu0 %v5071
        %7458 = vmatpush1.bf16.msra.mxu0 %v5070
        %7459 = vmatprep.mubr.bf16.mxu0 %v1465
        %7460 = vmatmul.mubr.bf16.gmra.mrb[0].mxu0 %v1464
        %v7461 = vpop.f32.mrb[0].mxu0
        %v7462 = vadd.f32 %v7419, %v7461
        %v7463 = vpop.f32.mrb[0].mxu0
        %v7464 = vadd.f32 %v7421, %v7463
        %v7465 = vpop.f32.mrb[0].mxu0
        %v7466 = vadd.f32 %v7423, %v7465
        %v7467 = vpop.f32.mrb[0].mxu0
        %v7468 = vadd.f32 %v7425, %v7467
        %7469 = vdwg.mxu0
        %7470 = vmatprep.subr.bf16.mxu0 %v5079
        %7471 = vmatpush1.bf16.msra.mxu0 %v5078
        %7472 = vmatprep.subr.bf16.mxu0 %v5087
        %7473 = vmatpush1.bf16.msra.mxu0 %v5086
        %7474 = vmatprep.subr.bf16.mxu0 %v5095
        %7475 = vmatpush1.bf16.msra.mxu0 %v5094
        %7476 = vmatprep.subr.bf16.mxu0 %v5103
        %7477 = vmatpush1.bf16.msra.mxu0 %v5102
        %7478 = vmatprep.subr.bf16.mxu0 %v5111
        %7479 = vmatpush1.bf16.msra.mxu0 %v5110
        %7480 = vmatprep.subr.bf16.mxu0 %v5119
        %7481 = vmatpush1.bf16.msra.mxu0 %v5118
        %7482 = vmatprep.subr.bf16.mxu0 %v5127
        %7483 = vmatpush1.bf16.msra.mxu0 %v5126
        %7484 = vmatprep.subr.bf16.mxu0 %v5135
        %7485 = vmatpush1.bf16.msra.mxu0 %v5134
        %7486 = vmatprep.subr.bf16.mxu0 %v5143
        %7487 = vmatpush1.bf16.msra.mxu0 %v5142
        %7488 = vmatprep.subr.bf16.mxu0 %v5151
        %7489 = vmatpush1.bf16.msra.mxu0 %v5150
        %7490 = vmatprep.subr.bf16.mxu0 %v5159
        %7491 = vmatpush1.bf16.msra.mxu0 %v5158
        %7492 = vmatprep.subr.bf16.mxu0 %v5167
        %7493 = vmatpush1.bf16.msra.mxu0 %v5166
        %7494 = vmatprep.subr.bf16.mxu0 %v5175
        %7495 = vmatpush1.bf16.msra.mxu0 %v5174
        %7496 = vmatprep.subr.bf16.mxu0 %v5183
        %7497 = vmatpush1.bf16.msra.mxu0 %v5182
        %7498 = vmatprep.subr.bf16.mxu0 %v5191
        %7499 = vmatpush1.bf16.msra.mxu0 %v5190
        %7500 = vmatprep.subr.bf16.mxu0 %v5199
        %7501 = vmatpush1.bf16.msra.mxu0 %v5198
        %7502 = vmatprep.mubr.bf16.mxu0 %v1467
        %7503 = vmatmul.mubr.bf16.gmra.mrb[0].mxu0 %v1466
        %v7504 = vpop.f32.mrb[0].mxu0
        %v7505 = vadd.f32 %v7462, %v7504
        %v7506 = vpop.f32.mrb[0].mxu0
        %v7507 = vadd.f32 %v7464, %v7506
        %v7508 = vpop.f32.mrb[0].mxu0
        %v7509 = vadd.f32 %v7466, %v7508
        %v7510 = vpop.f32.mrb[0].mxu0
        %v7511 = vadd.f32 %v7468, %v7510
        %7512 = vdwg.mxu0
        %7513 = vmatprep.subr.bf16.mxu0 %v5207
        %7514 = vmatpush1.bf16.msra.mxu0 %v5206
        %7515 = vmatprep.subr.bf16.mxu0 %v5215
        %7516 = vmatpush1.bf16.msra.mxu0 %v5214
        %7517 = vmatprep.subr.bf16.mxu0 %v5223
        %7518 = vmatpush1.bf16.msra.mxu0 %v5222
        %7519 = vmatprep.subr.bf16.mxu0 %v5231
        %7520 = vmatpush1.bf16.msra.mxu0 %v5230
        %7521 = vmatprep.subr.bf16.mxu0 %v5239
        %7522 = vmatpush1.bf16.msra.mxu0 %v5238
        %7523 = vmatprep.subr.bf16.mxu0 %v5247
        %7524 = vmatpush1.bf16.msra.mxu0 %v5246
        %7525 = vmatprep.subr.bf16.mxu0 %v5255
        %7526 = vmatpush1.bf16.msra.mxu0 %v5254
        %7527 = vmatprep.subr.bf16.mxu0 %v5263
        %7528 = vmatpush1.bf16.msra.mxu0 %v5262
        %7529 = vmatprep.subr.bf16.mxu0 %v5271
        %7530 = vmatpush1.bf16.msra.mxu0 %v5270
        %7531 = vmatprep.subr.bf16.mxu0 %v5279
        %7532 = vmatpush1.bf16.msra.mxu0 %v5278
        %7533 = vmatprep.subr.bf16.mxu0 %v5287
        %7534 = vmatpush1.bf16.msra.mxu0 %v5286
        %7535 = vmatprep.subr.bf16.mxu0 %v5295
        %7536 = vmatpush1.bf16.msra.mxu0 %v5294
        %7537 = vmatprep.subr.bf16.mxu0 %v5303
        %7538 = vmatpush1.bf16.msra.mxu0 %v5302
        %7539 = vmatprep.subr.bf16.mxu0 %v5311
        %7540 = vmatpush1.bf16.msra.mxu0 %v5310
        %7541 = vmatprep.subr.bf16.mxu0 %v5319
        %7542 = vmatpush1.bf16.msra.mxu0 %v5318
        %7543 = vmatprep.subr.bf16.mxu0 %v5327
        %7544 = vmatpush1.bf16.msra.mxu0 %v5326
        %7545 = vmatprep.mubr.bf16.mxu0 %v1469
        %7546 = vmatmul.mubr.bf16.gmra.mrb[0].mxu0 %v1468
        %v7547 = vpop.f32.mrb[0].mxu0
        %v7548 = vadd.f32 %v7505, %v7547
        %v7549 = vpop.f32.mrb[0].mxu0
        %v7550 = vadd.f32 %v7507, %v7549
        %v7551 = vpop.f32.mrb[0].mxu0
        %v7552 = vadd.f32 %v7509, %v7551
        %v7553 = vpop.f32.mrb[0].mxu0
        %v7554 = vadd.f32 %v7511, %v7553
        %7555 = vdwg.mxu0
        %7556 = vmatprep.subr.bf16.mxu0 %v5335
        %7557 = vmatpush1.bf16.msra.mxu0 %v5334
        %7558 = vmatprep.subr.bf16.mxu0 %v5343
        %7559 = vmatpush1.bf16.msra.mxu0 %v5342
        %7560 = vmatprep.subr.bf16.mxu0 %v5351
        %7561 = vmatpush1.bf16.msra.mxu0 %v5350
        %7562 = vmatprep.subr.bf16.mxu0 %v5359
        %7563 = vmatpush1.bf16.msra.mxu0 %v5358
        %7564 = vmatprep.subr.bf16.mxu0 %v5367
        %7565 = vmatpush1.bf16.msra.mxu0 %v5366
        %7566 = vmatprep.subr.bf16.mxu0 %v5375
        %7567 = vmatpush1.bf16.msra.mxu0 %v5374
        %7568 = vmatprep.subr.bf16.mxu0 %v5383
        %7569 = vmatpush1.bf16.msra.mxu0 %v5382
        %7570 = vmatprep.subr.bf16.mxu0 %v5391
        %7571 = vmatpush1.bf16.msra.mxu0 %v5390
        %7572 = vmatprep.subr.bf16.mxu0 %v5399
        %7573 = vmatpush1.bf16.msra.mxu0 %v5398
        %7574 = vmatprep.subr.bf16.mxu0 %v5407
        %7575 = vmatpush1.bf16.msra.mxu0 %v5406
        %7576 = vmatprep.subr.bf16.mxu0 %v5415
        %7577 = vmatpush1.bf16.msra.mxu0 %v5414
        %7578 = vmatprep.subr.bf16.mxu0 %v5423
        %7579 = vmatpush1.bf16.msra.mxu0 %v5422
        %7580 = vmatprep.subr.bf16.mxu0 %v5431
        %7581 = vmatpush1.bf16.msra.mxu0 %v5430
        %7582 = vmatprep.subr.bf16.mxu0 %v5439
        %7583 = vmatpush1.bf16.msra.mxu0 %v5438
        %7584 = vmatprep.subr.bf16.mxu0 %v5447
        %7585 = vmatpush1.bf16.msra.mxu0 %v5446
        %7586 = vmatprep.subr.bf16.mxu0 %v5455
        %7587 = vmatpush1.bf16.msra.mxu0 %v5454
        %7588 = vmatprep.mubr.bf16.mxu0 %v1471
        %7589 = vmatmul.mubr.bf16.gmra.mrb[0].mxu0 %v1470
        %v7590 = vpop.f32.mrb[0].mxu0
        %v7591 = vadd.f32 %v7548, %v7590
        %v7592 = vpop.f32.mrb[0].mxu0
        %v7593 = vadd.f32 %v7550, %v7592
        %v7594 = vpop.f32.mrb[0].mxu0
        %v7595 = vadd.f32 %v7552, %v7594
        %v7596 = vpop.f32.mrb[0].mxu0
        %v7597 = vadd.f32 %v7554, %v7596
        %7598 = vdwg.mxu0
        %7599 = vmatprep.subr.bf16.mxu0 %v5463
        %7600 = vmatpush1.bf16.msra.mxu0 %v5462
        %7601 = vmatprep.subr.bf16.mxu0 %v5471
        %7602 = vmatpush1.bf16.msra.mxu0 %v5470
        %7603 = vmatprep.subr.bf16.mxu0 %v5479
        %7604 = vmatpush1.bf16.msra.mxu0 %v5478
        %7605 = vmatprep.subr.bf16.mxu0 %v5487
        %7606 = vmatpush1.bf16.msra.mxu0 %v5486
        %7607 = vmatprep.subr.bf16.mxu0 %v5495
        %7608 = vmatpush1.bf16.msra.mxu0 %v5494
        %7609 = vmatprep.subr.bf16.mxu0 %v5503
        %7610 = vmatpush1.bf16.msra.mxu0 %v5502
        %7611 = vmatprep.subr.bf16.mxu0 %v5511
        %7612 = vmatpush1.bf16.msra.mxu0 %v5510
        %7613 = vmatprep.subr.bf16.mxu0 %v5519
        %7614 = vmatpush1.bf16.msra.mxu0 %v5518
        %7615 = vmatprep.subr.bf16.mxu0 %v5527
        %7616 = vmatpush1.bf16.msra.mxu0 %v5526
        %7617 = vmatprep.subr.bf16.mxu0 %v5535
        %7618 = vmatpush1.bf16.msra.mxu0 %v5534
        %7619 = vmatprep.subr.bf16.mxu0 %v5543
        %7620 = vmatpush1.bf16.msra.mxu0 %v5542
        %7621 = vmatprep.subr.bf16.mxu0 %v5551
        %7622 = vmatpush1.bf16.msra.mxu0 %v5550
        %7623 = vmatprep.subr.bf16.mxu0 %v5559
        %7624 = vmatpush1.bf16.msra.mxu0 %v5558
        %7625 = vmatprep.subr.bf16.mxu0 %v5567
        %7626 = vmatpush1.bf16.msra.mxu0 %v5566
        %7627 = vmatprep.subr.bf16.mxu0 %v5575
        %7628 = vmatpush1.bf16.msra.mxu0 %v5574
        %7629 = vmatprep.subr.bf16.mxu0 %v5583
        %7630 = vmatpush1.bf16.msra.mxu0 %v5582
        %7631 = vmatprep.mubr.bf16.mxu0 %v1473
        %7632 = vmatmul.mubr.bf16.gmra.mrb[0].mxu0 %v1472
        %v7633 = vpop.f32.mrb[0].mxu0
        %v7634 = vadd.f32 %v7591, %v7633
        %v7635 = vpop.f32.mrb[0].mxu0
        %v7636 = vadd.f32 %v7593, %v7635
        %v7637 = vpop.f32.mrb[0].mxu0
        %v7638 = vadd.f32 %v7595, %v7637
        %v7639 = vpop.f32.mrb[0].mxu0
        %v7640 = vadd.f32 %v7597, %v7639
        %7641 = vdwg.mxu0
        %7642 = vmatprep.subr.bf16.mxu0 %v4569
        %7643 = vmatpush1.bf16.msra.mxu0 %v4568
        %7644 = vmatprep.subr.bf16.mxu0 %v4577
        %7645 = vmatpush1.bf16.msra.mxu0 %v4576
        %7646 = vmatprep.subr.bf16.mxu0 %v4585
        %7647 = vmatpush1.bf16.msra.mxu0 %v4584
        %7648 = vmatprep.subr.bf16.mxu0 %v4593
        %7649 = vmatpush1.bf16.msra.mxu0 %v4592
        %7650 = vmatprep.subr.bf16.mxu0 %v4601
        %7651 = vmatpush1.bf16.msra.mxu0 %v4600
        %7652 = vmatprep.subr.bf16.mxu0 %v4609
        %7653 = vmatpush1.bf16.msra.mxu0 %v4608
        %7654 = vmatprep.subr.bf16.mxu0 %v4617
        %7655 = vmatpush1.bf16.msra.mxu0 %v4616
        %7656 = vmatprep.subr.bf16.mxu0 %v4625
        %7657 = vmatpush1.bf16.msra.mxu0 %v4624
        %7658 = vmatprep.subr.bf16.mxu0 %v4633
        %7659 = vmatpush1.bf16.msra.mxu0 %v4632
        %7660 = vmatprep.subr.bf16.mxu0 %v4641
        %7661 = vmatpush1.bf16.msra.mxu0 %v4640
        %7662 = vmatprep.subr.bf16.mxu0 %v4649
        %7663 = vmatpush1.bf16.msra.mxu0 %v4648
        %7664 = vmatprep.subr.bf16.mxu0 %v4657
        %7665 = vmatpush1.bf16.msra.mxu0 %v4656
        %7666 = vmatprep.subr.bf16.mxu0 %v4665
        %7667 = vmatpush1.bf16.msra.mxu0 %v4664
        %7668 = vmatprep.subr.bf16.mxu0 %v4673
        %7669 = vmatpush1.bf16.msra.mxu0 %v4672
        %7670 = vmatprep.subr.bf16.mxu0 %v4681
        %7671 = vmatpush1.bf16.msra.mxu0 %v4680
        %7672 = vmatprep.subr.bf16.mxu0 %v4689
        %7673 = vmatpush1.bf16.msra.mxu0 %v4688
        %7674 = vmatprep.mubr.bf16.mxu0 %v1459
        %7675 = vmatmul.mubr.bf16.gmra.mrb[0].mxu0 %v1458
        %v7676 = vpop.f32.mrb[0].mxu0
        %v7677 = vadd.f32 %v1397, %v7676
        %v7678 = vpop.f32.mrb[0].mxu0
        %v7679 = vadd.f32 %v1401, %v7678
        %v7680 = vpop.f32.mrb[0].mxu0
        %v7681 = vadd.f32 %v1397, %v7680
        %v7682 = vpop.f32.mrb[0].mxu0
        %v7683 = vadd.f32 %v1401, %v7682
        %7684 = vdwg.mxu0
        %7685 = vmatprep.subr.bf16.mxu0 %v4697
        %7686 = vmatpush1.bf16.msra.mxu0 %v4696
        %7687 = vmatprep.subr.bf16.mxu0 %v4705
        %7688 = vmatpush1.bf16.msra.mxu0 %v4704
        %7689 = vmatprep.subr.bf16.mxu0 %v4713
        %7690 = vmatpush1.bf16.msra.mxu0 %v4712
        %7691 = vmatprep.subr.bf16.mxu0 %v4721
        %7692 = vmatpush1.bf16.msra.mxu0 %v4720
        %7693 = vmatprep.subr.bf16.mxu0 %v4729
        %7694 = vmatpush1.bf16.msra.mxu0 %v4728
        %7695 = vmatprep.subr.bf16.mxu0 %v4737
        %7696 = vmatpush1.bf16.msra.mxu0 %v4736
        %7697 = vmatprep.subr.bf16.mxu0 %v4745
        %7698 = vmatpush1.bf16.msra.mxu0 %v4744
        %7699 = vmatprep.subr.bf16.mxu0 %v4753
        %7700 = vmatpush1.bf16.msra.mxu0 %v4752
        %7701 = vmatprep.subr.bf16.mxu0 %v4761
        %7702 = vmatpush1.bf16.msra.mxu0 %v4760
        %7703 = vmatprep.subr.bf16.mxu0 %v4769
        %7704 = vmatpush1.bf16.msra.mxu0 %v4768
        %7705 = vmatprep.subr.bf16.mxu0 %v4777
        %7706 = vmatpush1.bf16.msra.mxu0 %v4776
        %7707 = vmatprep.subr.bf16.mxu0 %v4785
        %7708 = vmatpush1.bf16.msra.mxu0 %v4784
        %7709 = vmatprep.subr.bf16.mxu0 %v4793
        %7710 = vmatpush1.bf16.msra.mxu0 %v4792
        %7711 = vmatprep.subr.bf16.mxu0 %v4801
        %7712 = vmatpush1.bf16.msra.mxu0 %v4800
        %7713 = vmatprep.subr.bf16.mxu0 %v4809
        %7714 = vmatpush1.bf16.msra.mxu0 %v4808
        %7715 = vmatprep.subr.bf16.mxu0 %v4817
        %7716 = vmatpush1.bf16.msra.mxu0 %v4816
        %7717 = vmatprep.mubr.bf16.mxu0 %v1461
        %7718 = vmatmul.mubr.bf16.gmra.mrb[0].mxu0 %v1460
        %v7719 = vpop.f32.mrb[0].mxu0
        %v7720 = vadd.f32 %v7677, %v7719
        %v7721 = vpop.f32.mrb[0].mxu0
        %v7722 = vadd.f32 %v7679, %v7721
        %v7723 = vpop.f32.mrb[0].mxu0
        %v7724 = vadd.f32 %v7681, %v7723
        %v7725 = vpop.f32.mrb[0].mxu0
        %v7726 = vadd.f32 %v7683, %v7725
        %7727 = vdwg.mxu0
        %7728 = vmatprep.subr.bf16.mxu0 %v4825
        %7729 = vmatpush1.bf16.msra.mxu0 %v4824
        %7730 = vmatprep.subr.bf16.mxu0 %v4833
        %7731 = vmatpush1.bf16.msra.mxu0 %v4832
        %7732 = vmatprep.subr.bf16.mxu0 %v4841
        %7733 = vmatpush1.bf16.msra.mxu0 %v4840
        %7734 = vmatprep.subr.bf16.mxu0 %v4849
        %7735 = vmatpush1.bf16.msra.mxu0 %v4848
        %7736 = vmatprep.subr.bf16.mxu0 %v4857
        %7737 = vmatpush1.bf16.msra.mxu0 %v4856
        %7738 = vmatprep.subr.bf16.mxu0 %v4865
        %7739 = vmatpush1.bf16.msra.mxu0 %v4864
        %7740 = vmatprep.subr.bf16.mxu0 %v4873
        %7741 = vmatpush1.bf16.msra.mxu0 %v4872
        %7742 = vmatprep.subr.bf16.mxu0 %v4881
        %7743 = vmatpush1.bf16.msra.mxu0 %v4880
        %7744 = vmatprep.subr.bf16.mxu0 %v4889
        %7745 = vmatpush1.bf16.msra.mxu0 %v4888
        %7746 = vmatprep.subr.bf16.mxu0 %v4897
        %7747 = vmatpush1.bf16.msra.mxu0 %v4896
        %7748 = vmatprep.subr.bf16.mxu0 %v4905
        %7749 = vmatpush1.bf16.msra.mxu0 %v4904
        %7750 = vmatprep.subr.bf16.mxu0 %v4913
        %7751 = vmatpush1.bf16.msra.mxu0 %v4912
        %7752 = vmatprep.subr.bf16.mxu0 %v4921
        %7753 = vmatpush1.bf16.msra.mxu0 %v4920
        %7754 = vmatprep.subr.bf16.mxu0 %v4929
        %7755 = vmatpush1.bf16.msra.mxu0 %v4928
        %7756 = vmatprep.subr.bf16.mxu0 %v4937
        %7757 = vmatpush1.bf16.msra.mxu0 %v4936
        %7758 = vmatprep.subr.bf16.mxu0 %v4945
        %7759 = vmatpush1.bf16.msra.mxu0 %v4944
        %7760 = vmatprep.mubr.bf16.mxu0 %v1463
        %7761 = vmatmul.mubr.bf16.gmra.mrb[0].mxu0 %v1462
        %v7762 = vpop.f32.mrb[0].mxu0
        %v7763 = vadd.f32 %v7720, %v7762
        %v7764 = vpop.f32.mrb[0].mxu0
        %v7765 = vadd.f32 %v7722, %v7764
        %v7766 = vpop.f32.mrb[0].mxu0
        %v7767 = vadd.f32 %v7724, %v7766
        %v7768 = vpop.f32.mrb[0].mxu0
        %v7769 = vadd.f32 %v7726, %v7768
        %7770 = vdwg.mxu0
        %7771 = vmatprep.subr.bf16.mxu0 %v4953
        %7772 = vmatpush1.bf16.msra.mxu0 %v4952
        %7773 = vmatprep.subr.bf16.mxu0 %v4961
        %7774 = vmatpush1.bf16.msra.mxu0 %v4960
        %7775 = vmatprep.subr.bf16.mxu0 %v4969
        %7776 = vmatpush1.bf16.msra.mxu0 %v4968
        %7777 = vmatprep.subr.bf16.mxu0 %v4977
        %7778 = vmatpush1.bf16.msra.mxu0 %v4976
        %7779 = vmatprep.subr.bf16.mxu0 %v4985
        %7780 = vmatpush1.bf16.msra.mxu0 %v4984
        %7781 = vmatprep.subr.bf16.mxu0 %v4993
        %7782 = vmatpush1.bf16.msra.mxu0 %v4992
        %7783 = vmatprep.subr.bf16.mxu0 %v5001
        %7784 = vmatpush1.bf16.msra.mxu0 %v5000
        %7785 = vmatprep.subr.bf16.mxu0 %v5009
        %7786 = vmatpush1.bf16.msra.mxu0 %v5008
        %7787 = vmatprep.subr.bf16.mxu0 %v5017
        %7788 = vmatpush1.bf16.msra.mxu0 %v5016
        %7789 = vmatprep.subr.bf16.mxu0 %v5025
        %7790 = vmatpush1.bf16.msra.mxu0 %v5024
        %7791 = vmatprep.subr.bf16.mxu0 %v5033
        %7792 = vmatpush1.bf16.msra.mxu0 %v5032
        %7793 = vmatprep.subr.bf16.mxu0 %v5041
        %7794 = vmatpush1.bf16.msra.mxu0 %v5040
        %7795 = vmatprep.subr.bf16.mxu0 %v5049
        %7796 = vmatpush1.bf16.msra.mxu0 %v5048
        %7797 = vmatprep.subr.bf16.mxu0 %v5057
        %7798 = vmatpush1.bf16.msra.mxu0 %v5056
        %7799 = vmatprep.subr.bf16.mxu0 %v5065
        %7800 = vmatpush1.bf16.msra.mxu0 %v5064
        %7801 = vmatprep.subr.bf16.mxu0 %v5073
        %7802 = vmatpush1.bf16.msra.mxu0 %v5072
        %7803 = vmatprep.mubr.bf16.mxu0 %v1465
        %7804 = vmatmul.mubr.bf16.gmra.mrb[0].mxu0 %v1464
        %v7805 = vpop.f32.mrb[0].mxu0
        %v7806 = vadd.f32 %v7763, %v7805
        %v7807 = vpop.f32.mrb[0].mxu0
        %v7808 = vadd.f32 %v7765, %v7807
        %v7809 = vpop.f32.mrb[0].mxu0
        %v7810 = vadd.f32 %v7767, %v7809
        %v7811 = vpop.f32.mrb[0].mxu0
        %v7812 = vadd.f32 %v7769, %v7811
        %7813 = vdwg.mxu0
        %7814 = vmatprep.subr.bf16.mxu0 %v5081
        %7815 = vmatpush1.bf16.msra.mxu0 %v5080
        %7816 = vmatprep.subr.bf16.mxu0 %v5089
        %7817 = vmatpush1.bf16.msra.mxu0 %v5088
        %7818 = vmatprep.subr.bf16.mxu0 %v5097
        %7819 = vmatpush1.bf16.msra.mxu0 %v5096
        %7820 = vmatprep.subr.bf16.mxu0 %v5105
        %7821 = vmatpush1.bf16.msra.mxu0 %v5104
        %7822 = vmatprep.subr.bf16.mxu0 %v5113
        %7823 = vmatpush1.bf16.msra.mxu0 %v5112
        %7824 = vmatprep.subr.bf16.mxu0 %v5121
        %7825 = vmatpush1.bf16.msra.mxu0 %v5120
        %7826 = vmatprep.subr.bf16.mxu0 %v5129
        %7827 = vmatpush1.bf16.msra.mxu0 %v5128
        %7828 = vmatprep.subr.bf16.mxu0 %v5137
        %7829 = vmatpush1.bf16.msra.mxu0 %v5136
        %7830 = vmatprep.subr.bf16.mxu0 %v5145
        %7831 = vmatpush1.bf16.msra.mxu0 %v5144
        %7832 = vmatprep.subr.bf16.mxu0 %v5153
        %7833 = vmatpush1.bf16.msra.mxu0 %v5152
        %7834 = vmatprep.subr.bf16.mxu0 %v5161
        %7835 = vmatpush1.bf16.msra.mxu0 %v5160
        %7836 = vmatprep.subr.bf16.mxu0 %v5169
        %7837 = vmatpush1.bf16.msra.mxu0 %v5168
        %7838 = vmatprep.subr.bf16.mxu0 %v5177
        %7839 = vmatpush1.bf16.msra.mxu0 %v5176
        %7840 = vmatprep.subr.bf16.mxu0 %v5185
        %7841 = vmatpush1.bf16.msra.mxu0 %v5184
        %7842 = vmatprep.subr.bf16.mxu0 %v5193
        %7843 = vmatpush1.bf16.msra.mxu0 %v5192
        %7844 = vmatprep.subr.bf16.mxu0 %v5201
        %7845 = vmatpush1.bf16.msra.mxu0 %v5200
        %7846 = vmatprep.mubr.bf16.mxu0 %v1467
        %7847 = vmatmul.mubr.bf16.gmra.mrb[0].mxu0 %v1466
        %v7848 = vpop.f32.mrb[0].mxu0
        %v7849 = vadd.f32 %v7806, %v7848
        %v7850 = vpop.f32.mrb[0].mxu0
        %v7851 = vadd.f32 %v7808, %v7850
        %v7852 = vpop.f32.mrb[0].mxu0
        %v7853 = vadd.f32 %v7810, %v7852
        %v7854 = vpop.f32.mrb[0].mxu0
        %v7855 = vadd.f32 %v7812, %v7854
        %7856 = vdwg.mxu0
        %7857 = vmatprep.subr.bf16.mxu0 %v5209
        %7858 = vmatpush1.bf16.msra.mxu0 %v5208
        %7859 = vmatprep.subr.bf16.mxu0 %v5217
        %7860 = vmatpush1.bf16.msra.mxu0 %v5216
        %7861 = vmatprep.subr.bf16.mxu0 %v5225
        %7862 = vmatpush1.bf16.msra.mxu0 %v5224
        %7863 = vmatprep.subr.bf16.mxu0 %v5233
        %7864 = vmatpush1.bf16.msra.mxu0 %v5232
        %7865 = vmatprep.subr.bf16.mxu0 %v5241
        %7866 = vmatpush1.bf16.msra.mxu0 %v5240
        %7867 = vmatprep.subr.bf16.mxu0 %v5249
        %7868 = vmatpush1.bf16.msra.mxu0 %v5248
        %7869 = vmatprep.subr.bf16.mxu0 %v5257
        %7870 = vmatpush1.bf16.msra.mxu0 %v5256
        %7871 = vmatprep.subr.bf16.mxu0 %v5265
        %7872 = vmatpush1.bf16.msra.mxu0 %v5264
        %7873 = vmatprep.subr.bf16.mxu0 %v5273
        %7874 = vmatpush1.bf16.msra.mxu0 %v5272
        %7875 = vmatprep.subr.bf16.mxu0 %v5281
        %7876 = vmatpush1.bf16.msra.mxu0 %v5280
        %7877 = vmatprep.subr.bf16.mxu0 %v5289
        %7878 = vmatpush1.bf16.msra.mxu0 %v5288
        %7879 = vmatprep.subr.bf16.mxu0 %v5297
        %7880 = vmatpush1.bf16.msra.mxu0 %v5296
        %7881 = vmatprep.subr.bf16.mxu0 %v5305
        %7882 = vmatpush1.bf16.msra.mxu0 %v5304
        %7883 = vmatprep.subr.bf16.mxu0 %v5313
        %7884 = vmatpush1.bf16.msra.mxu0 %v5312
        %7885 = vmatprep.subr.bf16.mxu0 %v5321
        %7886 = vmatpush1.bf16.msra.mxu0 %v5320
        %7887 = vmatprep.subr.bf16.mxu0 %v5329
        %7888 = vmatpush1.bf16.msra.mxu0 %v5328
        %7889 = vmatprep.mubr.bf16.mxu0 %v1469
        %7890 = vmatmul.mubr.bf16.gmra.mrb[0].mxu0 %v1468
        %v7891 = vpop.f32.mrb[0].mxu0
        %v7892 = vadd.f32 %v7849, %v7891
        %v7893 = vpop.f32.mrb[0].mxu0
        %v7894 = vadd.f32 %v7851, %v7893
        %v7895 = vpop.f32.mrb[0].mxu0
        %v7896 = vadd.f32 %v7853, %v7895
        %v7897 = vpop.f32.mrb[0].mxu0
        %v7898 = vadd.f32 %v7855, %v7897
        %7899 = vdwg.mxu0
        %7900 = vmatprep.subr.bf16.mxu0 %v5337
        %7901 = vmatpush1.bf16.msra.mxu0 %v5336
        %7902 = vmatprep.subr.bf16.mxu0 %v5345
        %7903 = vmatpush1.bf16.msra.mxu0 %v5344
        %7904 = vmatprep.subr.bf16.mxu0 %v5353
        %7905 = vmatpush1.bf16.msra.mxu0 %v5352
        %7906 = vmatprep.subr.bf16.mxu0 %v5361
        %7907 = vmatpush1.bf16.msra.mxu0 %v5360
        %7908 = vmatprep.subr.bf16.mxu0 %v5369
        %7909 = vmatpush1.bf16.msra.mxu0 %v5368
        %7910 = vmatprep.subr.bf16.mxu0 %v5377
        %7911 = vmatpush1.bf16.msra.mxu0 %v5376
        %7912 = vmatprep.subr.bf16.mxu0 %v5385
        %7913 = vmatpush1.bf16.msra.mxu0 %v5384
        %7914 = vmatprep.subr.bf16.mxu0 %v5393
        %7915 = vmatpush1.bf16.msra.mxu0 %v5392
        %7916 = vmatprep.subr.bf16.mxu0 %v5401
        %7917 = vmatpush1.bf16.msra.mxu0 %v5400
        %7918 = vmatprep.subr.bf16.mxu0 %v5409
        %7919 = vmatpush1.bf16.msra.mxu0 %v5408
        %7920 = vmatprep.subr.bf16.mxu0 %v5417
        %7921 = vmatpush1.bf16.msra.mxu0 %v5416
        %7922 = vmatprep.subr.bf16.mxu0 %v5425
        %7923 = vmatpush1.bf16.msra.mxu0 %v5424
        %7924 = vmatprep.subr.bf16.mxu0 %v5433
        %7925 = vmatpush1.bf16.msra.mxu0 %v5432
        %7926 = vmatprep.subr.bf16.mxu0 %v5441
        %7927 = vmatpush1.bf16.msra.mxu0 %v5440
        %7928 = vmatprep.subr.bf16.mxu0 %v5449
        %7929 = vmatpush1.bf16.msra.mxu0 %v5448
        %7930 = vmatprep.subr.bf16.mxu0 %v5457
        %7931 = vmatpush1.bf16.msra.mxu0 %v5456
        %7932 = vmatprep.mubr.bf16.mxu0 %v1471
        %7933 = vmatmul.mubr.bf16.gmra.mrb[0].mxu0 %v1470
        %v7934 = vpop.f32.mrb[0].mxu0
        %v7935 = vadd.f32 %v7892, %v7934
        %v7936 = vpop.f32.mrb[0].mxu0
        %v7937 = vadd.f32 %v7894, %v7936
        %v7938 = vpop.f32.mrb[0].mxu0
        %v7939 = vadd.f32 %v7896, %v7938
        %v7940 = vpop.f32.mrb[0].mxu0
        %v7941 = vadd.f32 %v7898, %v7940
        %7942 = vdwg.mxu0
        %7943 = vmatprep.subr.bf16.mxu0 %v5465
        %7944 = vmatpush1.bf16.msra.mxu0 %v5464
        %7945 = vmatprep.subr.bf16.mxu0 %v5473
        %7946 = vmatpush1.bf16.msra.mxu0 %v5472
        %7947 = vmatprep.subr.bf16.mxu0 %v5481
        %7948 = vmatpush1.bf16.msra.mxu0 %v5480
        %7949 = vmatprep.subr.bf16.mxu0 %v5489
        %7950 = vmatpush1.bf16.msra.mxu0 %v5488
        %7951 = vmatprep.subr.bf16.mxu0 %v5497
        %7952 = vmatpush1.bf16.msra.mxu0 %v5496
        %7953 = vmatprep.subr.bf16.mxu0 %v5505
        %7954 = vmatpush1.bf16.msra.mxu0 %v5504
        %7955 = vmatprep.subr.bf16.mxu0 %v5513
        %7956 = vmatpush1.bf16.msra.mxu0 %v5512
        %7957 = vmatprep.subr.bf16.mxu0 %v5521
        %7958 = vmatpush1.bf16.msra.mxu0 %v5520
        %7959 = vmatprep.subr.bf16.mxu0 %v5529
        %7960 = vmatpush1.bf16.msra.mxu0 %v5528
        %7961 = vmatprep.subr.bf16.mxu0 %v5537
        %7962 = vmatpush1.bf16.msra.mxu0 %v5536
        %7963 = vmatprep.subr.bf16.mxu0 %v5545
        %7964 = vmatpush1.bf16.msra.mxu0 %v5544
        %7965 = vmatprep.subr.bf16.mxu0 %v5553
        %7966 = vmatpush1.bf16.msra.mxu0 %v5552
        %7967 = vmatprep.subr.bf16.mxu0 %v5561
        %7968 = vmatpush1.bf16.msra.mxu0 %v5560
        %7969 = vmatprep.subr.bf16.mxu0 %v5569
        %7970 = vmatpush1.bf16.msra.mxu0 %v5568
        %7971 = vmatprep.subr.bf16.mxu0 %v5577
        %7972 = vmatpush1.bf16.msra.mxu0 %v5576
        %7973 = vmatprep.subr.bf16.mxu0 %v5585
        %7974 = vmatpush1.bf16.msra.mxu0 %v5584
        %7975 = vmatprep.mubr.bf16.mxu0 %v1473
        %7976 = vmatmul.mubr.bf16.gmra.mrb[0].mxu0 %v1472
        %v7977 = vpop.f32.mrb[0].mxu0
        %v7978 = vadd.f32 %v7935, %v7977
        %v7979 = vpop.f32.mrb[0].mxu0
        %v7980 = vadd.f32 %v7937, %v7979
        %v7981 = vpop.f32.mrb[0].mxu0
        %v7982 = vadd.f32 %v7939, %v7981
        %v7983 = vpop.f32.mrb[0].mxu0
        %v7984 = vadd.f32 %v7941, %v7983
        %7985 = vdwg.mxu0
        %v7986 = vmax.f32 %v6946, 0.0
        %v7987 = vmax.f32 %v6948, 0.0
        %v7988 = vmax.f32 %v7290, 0.0
        %v7989 = vmax.f32 %v7292, 0.0
        %v7990 = vmax.f32 %v7634, 0.0
        %v7991 = vmax.f32 %v7636, 0.0
        %v7992 = vmax.f32 %v7978, 0.0
        %v7993 = vmax.f32 %v7980, 0.0
        %v7994 = vmax.f32 %v6950, 0.0
        %v7995 = vmax.f32 %v6952, 0.0
        %v7996 = vmax.f32 %v7294, 0.0
        %v7997 = vmax.f32 %v7296, 0.0
        %v7998 = vmax.f32 %v7638, 0.0
        %v7999 = vmax.f32 %v7640, 0.0
        %v8000 = vmax.f32 %v7982, 0.0
        %v8001 = vmax.f32 %v7984, 0.0
        %v8002 = vld [vmem:[#allocation2] sm:$0xff]
        %v8003 = vld [vmem:[#allocation2 + $0x8] sm:$0xff]
        %v8004 = vpack.c.bf16 %v7994, %v7986
        %v8005 = vpack.c.bf16 %v7995, %v7987
        %v8006 = vpack.c.bf16 %v7996, %v7988
        %v8007 = vpack.c.bf16 %v7997, %v7989
        %v8008 = vpack.c.bf16 %v7998, %v7990
        %v8009 = vpack.c.bf16 %v7999, %v7991
        %v8010 = vpack.c.bf16 %v8000, %v7992
        %v8011 = vpack.c.bf16 %v8001, %v7993
        %v8012 = vld [vmem:[%s282] sm:$0xf]
        %v8013 = vld [vmem:[%s282 + $0x4] sm:$0xf]
        %v8014 = vld [vmem:[%s282 + $0x8] sm:$0xf]
        %v8015 = vld [vmem:[%s282 + $0xc] sm:$0xf]
        %v8016 = vld [vmem:[%s282 + $0x10] sm:$0xf]
        %v8017 = vld [vmem:[%s282 + $0x14] sm:$0xf]
        %v8018 = vld [vmem:[%s282 + $0x18] sm:$0xf]
        %v8019 = vld [vmem:[%s282 + $0x1c] sm:$0xf]
        %v8020 = vld [vmem:[%s282 + $0x20] sm:$0xf]
        %v8021 = vld [vmem:[%s282 + $0x24] sm:$0xf]
        %v8022 = vld [vmem:[%s282 + $0x28] sm:$0xf]
        %v8023 = vld [vmem:[%s282 + $0x2c] sm:$0xf]
        %v8024 = vld [vmem:[%s282 + $0x30] sm:$0xf]
        %v8025 = vld [vmem:[%s282 + $0x34] sm:$0xf]
        %v8026 = vld [vmem:[%s282 + $0x38] sm:$0xf]
        %v8027 = vld [vmem:[%s282 + $0x3c] sm:$0xf]
        %v8028 = vld [vmem:[%s282 + $0x40] sm:$0xf]
        %v8029 = vld [vmem:[%s282 + $0x44] sm:$0xf]
        %v8030 = vld [vmem:[%s282 + $0x48] sm:$0xf]
        %v8031 = vld [vmem:[%s282 + $0x4c] sm:$0xf]
        %v8032 = vld [vmem:[%s282 + $0x50] sm:$0xf]
        %v8033 = vld [vmem:[%s282 + $0x54] sm:$0xf]
        %v8034 = vld [vmem:[%s282 + $0x58] sm:$0xf]
        %v8035 = vld [vmem:[%s282 + $0x5c] sm:$0xf]
        %v8036 = vld [vmem:[%s282 + $0x60] sm:$0xf]
        %v8037 = vld [vmem:[%s282 + $0x64] sm:$0xf]
        %v8038 = vld [vmem:[%s282 + $0x68] sm:$0xf]
        %v8039 = vld [vmem:[%s282 + $0x6c] sm:$0xf]
        %v8040 = vld [vmem:[%s282 + $0x70] sm:$0xf]
        %v8041 = vld [vmem:[%s282 + $0x74] sm:$0xf]
        %v8042 = vld [vmem:[%s282 + $0x78] sm:$0xf]
        %v8043 = vld [vmem:[%s282 + $0x7c] sm:$0xf]
        %v8044 = vld [vmem:[%s282 + $0x80] sm:$0xf]
        %v8045 = vld [vmem:[%s282 + $0x84] sm:$0xf]
        %v8046 = vld [vmem:[%s282 + $0x88] sm:$0xf]
        %v8047 = vld [vmem:[%s282 + $0x8c] sm:$0xf]
        %v8048 = vld [vmem:[%s282 + $0x90] sm:$0xf]
        %v8049 = vld [vmem:[%s282 + $0x94] sm:$0xf]
        %v8050 = vld [vmem:[%s282 + $0x98] sm:$0xf]
        %v8051 = vld [vmem:[%s282 + $0x9c] sm:$0xf]
        %v8052 = vld [vmem:[%s282 + $0xa0] sm:$0xf]
        %v8053 = vld [vmem:[%s282 + $0xa4] sm:$0xf]
        %v8054 = vld [vmem:[%s282 + $0xa8] sm:$0xf]
        %v8055 = vld [vmem:[%s282 + $0xac] sm:$0xf]
        %v8056 = vld [vmem:[%s282 + $0xb0] sm:$0xf]
        %v8057 = vld [vmem:[%s282 + $0xb4] sm:$0xf]
        %v8058 = vld [vmem:[%s282 + $0xb8] sm:$0xf]
        %v8059 = vld [vmem:[%s282 + $0xbc] sm:$0xf]
        %v8060 = vld [vmem:[%s282 + $0xc0] sm:$0xf]
        %v8061 = vld [vmem:[%s282 + $0xc4] sm:$0xf]
        %v8062 = vld [vmem:[%s282 + $0xc8] sm:$0xf]
        %v8063 = vld [vmem:[%s282 + $0xcc] sm:$0xf]
        %v8064 = vld [vmem:[%s282 + $0xd0] sm:$0xf]
        %v8065 = vld [vmem:[%s282 + $0xd4] sm:$0xf]
        %v8066 = vld [vmem:[%s282 + $0xd8] sm:$0xf]
        %v8067 = vld [vmem:[%s282 + $0xdc] sm:$0xf]
        %v8068 = vld [vmem:[%s282 + $0xe0] sm:$0xf]
        %v8069 = vld [vmem:[%s282 + $0xe4] sm:$0xf]
        %v8070 = vld [vmem:[%s282 + $0xe8] sm:$0xf]
        %v8071 = vld [vmem:[%s282 + $0xec] sm:$0xf]
        %v8072 = vld [vmem:[%s282 + $0xf0] sm:$0xf]
        %v8073 = vld [vmem:[%s282 + $0xf4] sm:$0xf]
        %v8074 = vld [vmem:[%s282 + $0xf8] sm:$0xf]
        %v8075 = vld [vmem:[%s282 + $0xfc] sm:$0xf]
        %v8076 = vld [vmem:[%s282 + $0x100] sm:$0xf]
        %v8077 = vld [vmem:[%s282 + $0x104] sm:$0xf]
        %v8078 = vld [vmem:[%s282 + $0x108] sm:$0xf]
        %v8079 = vld [vmem:[%s282 + $0x10c] sm:$0xf]
        %v8080 = vld [vmem:[%s282 + $0x110] sm:$0xf]
        %v8081 = vld [vmem:[%s282 + $0x114] sm:$0xf]
        %v8082 = vld [vmem:[%s282 + $0x118] sm:$0xf]
        %v8083 = vld [vmem:[%s282 + $0x11c] sm:$0xf]
        %v8084 = vld [vmem:[%s282 + $0x120] sm:$0xf]
        %v8085 = vld [vmem:[%s282 + $0x124] sm:$0xf]
        %v8086 = vld [vmem:[%s282 + $0x128] sm:$0xf]
        %v8087 = vld [vmem:[%s282 + $0x12c] sm:$0xf]
        %v8088 = vld [vmem:[%s282 + $0x130] sm:$0xf]
        %v8089 = vld [vmem:[%s282 + $0x134] sm:$0xf]
        %v8090 = vld [vmem:[%s282 + $0x138] sm:$0xf]
        %v8091 = vld [vmem:[%s282 + $0x13c] sm:$0xf]
        %v8092 = vld [vmem:[%s282 + $0x140] sm:$0xf]
        %v8093 = vld [vmem:[%s282 + $0x144] sm:$0xf]
        %v8094 = vld [vmem:[%s282 + $0x148] sm:$0xf]
        %v8095 = vld [vmem:[%s282 + $0x14c] sm:$0xf]
        %v8096 = vld [vmem:[%s282 + $0x150] sm:$0xf]
        %v8097 = vld [vmem:[%s282 + $0x154] sm:$0xf]
        %v8098 = vld [vmem:[%s282 + $0x158] sm:$0xf]
        %v8099 = vld [vmem:[%s282 + $0x15c] sm:$0xf]
        %v8100 = vld [vmem:[%s282 + $0x160] sm:$0xf]
        %v8101 = vld [vmem:[%s282 + $0x164] sm:$0xf]
        %v8102 = vld [vmem:[%s282 + $0x168] sm:$0xf]
        %v8103 = vld [vmem:[%s282 + $0x16c] sm:$0xf]
        %v8104 = vld [vmem:[%s282 + $0x170] sm:$0xf]
        %v8105 = vld [vmem:[%s282 + $0x174] sm:$0xf]
        %v8106 = vld [vmem:[%s282 + $0x178] sm:$0xf]
        %v8107 = vld [vmem:[%s282 + $0x17c] sm:$0xf]
        %v8108 = vld [vmem:[%s282 + $0x180] sm:$0xf]
        %v8109 = vld [vmem:[%s282 + $0x184] sm:$0xf]
        %v8110 = vld [vmem:[%s282 + $0x188] sm:$0xf]
        %v8111 = vld [vmem:[%s282 + $0x18c] sm:$0xf]
        %v8112 = vld [vmem:[%s282 + $0x190] sm:$0xf]
        %v8113 = vld [vmem:[%s282 + $0x194] sm:$0xf]
        %v8114 = vld [vmem:[%s282 + $0x198] sm:$0xf]
        %v8115 = vld [vmem:[%s282 + $0x19c] sm:$0xf]
        %v8116 = vld [vmem:[%s282 + $0x1a0] sm:$0xf]
        %v8117 = vld [vmem:[%s282 + $0x1a4] sm:$0xf]
        %v8118 = vld [vmem:[%s282 + $0x1a8] sm:$0xf]
        %v8119 = vld [vmem:[%s282 + $0x1ac] sm:$0xf]
        %v8120 = vld [vmem:[%s282 + $0x1b0] sm:$0xf]
        %v8121 = vld [vmem:[%s282 + $0x1b4] sm:$0xf]
        %v8122 = vld [vmem:[%s282 + $0x1b8] sm:$0xf]
        %v8123 = vld [vmem:[%s282 + $0x1bc] sm:$0xf]
        %v8124 = vld [vmem:[%s282 + $0x1c0] sm:$0xf]
        %v8125 = vld [vmem:[%s282 + $0x1c4] sm:$0xf]
        %v8126 = vld [vmem:[%s282 + $0x1c8] sm:$0xf]
        %v8127 = vld [vmem:[%s282 + $0x1cc] sm:$0xf]
        %v8128 = vld [vmem:[%s282 + $0x1d0] sm:$0xf]
        %v8129 = vld [vmem:[%s282 + $0x1d4] sm:$0xf]
        %v8130 = vld [vmem:[%s282 + $0x1d8] sm:$0xf]
        %v8131 = vld [vmem:[%s282 + $0x1dc] sm:$0xf]
        %v8132 = vld [vmem:[%s282 + $0x1e0] sm:$0xf]
        %v8133 = vld [vmem:[%s282 + $0x1e4] sm:$0xf]
        %v8134 = vld [vmem:[%s282 + $0x1e8] sm:$0xf]
        %v8135 = vld [vmem:[%s282 + $0x1ec] sm:$0xf]
        %v8136 = vld [vmem:[%s282 + $0x1f0] sm:$0xf]
        %v8137 = vld [vmem:[%s282 + $0x1f4] sm:$0xf]
        %v8138 = vld [vmem:[%s282 + $0x1f8] sm:$0xf]
        %v8139 = vld [vmem:[%s282 + $0x1fc] sm:$0xf]
        %v8268 = vunpack.c.l.b16 %v8012
        %v8269 = vunpack.c.l.b16 %v8013
        %v8270 = vunpack.c.l.b16 %v8014
        %v8271 = vunpack.c.l.b16 %v8015
        %v8272 = vunpack.c.l.b16 %v8016
        %v8273 = vunpack.c.l.b16 %v8017
        %v8274 = vunpack.c.l.b16 %v8018
        %v8275 = vunpack.c.l.b16 %v8019
        %v8276 = vunpack.c.l.b16 %v8020
        %v8277 = vunpack.c.l.b16 %v8021
        %v8278 = vunpack.c.l.b16 %v8022
        %v8279 = vunpack.c.l.b16 %v8023
        %v8280 = vunpack.c.l.b16 %v8024
        %v8281 = vunpack.c.l.b16 %v8025
        %v8282 = vunpack.c.l.b16 %v8026
        %v8283 = vunpack.c.l.b16 %v8027
        %v8284 = vunpack.c.l.b16 %v8028
        %v8285 = vunpack.c.l.b16 %v8029
        %v8286 = vunpack.c.l.b16 %v8030
        %v8287 = vunpack.c.l.b16 %v8031
        %v8288 = vunpack.c.l.b16 %v8032
        %v8289 = vunpack.c.l.b16 %v8033
        %v8290 = vunpack.c.l.b16 %v8034
        %v8291 = vunpack.c.l.b16 %v8035
        %v8292 = vunpack.c.l.b16 %v8036
        %v8293 = vunpack.c.l.b16 %v8037
        %v8294 = vunpack.c.l.b16 %v8038
        %v8295 = vunpack.c.l.b16 %v8039
        %v8296 = vunpack.c.l.b16 %v8040
        %v8297 = vunpack.c.l.b16 %v8041
        %v8298 = vunpack.c.l.b16 %v8042
        %v8299 = vunpack.c.l.b16 %v8043
        %v8300 = vunpack.c.l.b16 %v8044
        %v8301 = vunpack.c.l.b16 %v8045
        %v8302 = vunpack.c.l.b16 %v8046
        %v8303 = vunpack.c.l.b16 %v8047
        %v8304 = vunpack.c.l.b16 %v8048
        %v8305 = vunpack.c.l.b16 %v8049
        %v8306 = vunpack.c.l.b16 %v8050
        %v8307 = vunpack.c.l.b16 %v8051
        %v8308 = vunpack.c.l.b16 %v8052
        %v8309 = vunpack.c.l.b16 %v8053
        %v8310 = vunpack.c.l.b16 %v8054
        %v8311 = vunpack.c.l.b16 %v8055
        %v8312 = vunpack.c.l.b16 %v8056
        %v8313 = vunpack.c.l.b16 %v8057
        %v8314 = vunpack.c.l.b16 %v8058
        %v8315 = vunpack.c.l.b16 %v8059
        %v8316 = vunpack.c.l.b16 %v8060
        %v8317 = vunpack.c.l.b16 %v8061
        %v8318 = vunpack.c.l.b16 %v8062
        %v8319 = vunpack.c.l.b16 %v8063
        %v8320 = vunpack.c.l.b16 %v8064
        %v8321 = vunpack.c.l.b16 %v8065
        %v8322 = vunpack.c.l.b16 %v8066
        %v8323 = vunpack.c.l.b16 %v8067
        %v8324 = vunpack.c.l.b16 %v8068
        %v8325 = vunpack.c.l.b16 %v8069
        %v8326 = vunpack.c.l.b16 %v8070
        %v8327 = vunpack.c.l.b16 %v8071
        %v8328 = vunpack.c.l.b16 %v8072
        %v8329 = vunpack.c.l.b16 %v8073
        %v8330 = vunpack.c.l.b16 %v8074
        %v8331 = vunpack.c.l.b16 %v8075
        %v8332 = vunpack.c.l.b16 %v8076
        %v8333 = vunpack.c.l.b16 %v8077
        %v8334 = vunpack.c.l.b16 %v8078
        %v8335 = vunpack.c.l.b16 %v8079
        %v8336 = vunpack.c.l.b16 %v8080
        %v8337 = vunpack.c.l.b16 %v8081
        %v8338 = vunpack.c.l.b16 %v8082
        %v8339 = vunpack.c.l.b16 %v8083
        %v8340 = vunpack.c.l.b16 %v8084
        %v8341 = vunpack.c.l.b16 %v8085
        %v8342 = vunpack.c.l.b16 %v8086
        %v8343 = vunpack.c.l.b16 %v8087
        %v8344 = vunpack.c.l.b16 %v8088
        %v8345 = vunpack.c.l.b16 %v8089
        %v8346 = vunpack.c.l.b16 %v8090
        %v8347 = vunpack.c.l.b16 %v8091
        %v8348 = vunpack.c.l.b16 %v8092
        %v8349 = vunpack.c.l.b16 %v8093
        %v8350 = vunpack.c.l.b16 %v8094
        %v8351 = vunpack.c.l.b16 %v8095
        %v8352 = vunpack.c.l.b16 %v8096
        %v8353 = vunpack.c.l.b16 %v8097
        %v8354 = vunpack.c.l.b16 %v8098
        %v8355 = vunpack.c.l.b16 %v8099
        %v8356 = vunpack.c.l.b16 %v8100
        %v8357 = vunpack.c.l.b16 %v8101
        %v8358 = vunpack.c.l.b16 %v8102
        %v8359 = vunpack.c.l.b16 %v8103
        %v8360 = vunpack.c.l.b16 %v8104
        %v8361 = vunpack.c.l.b16 %v8105
        %v8362 = vunpack.c.l.b16 %v8106
        %v8363 = vunpack.c.l.b16 %v8107
        %v8364 = vunpack.c.l.b16 %v8108
        %v8365 = vunpack.c.l.b16 %v8109
        %v8366 = vunpack.c.l.b16 %v8110
        %v8367 = vunpack.c.l.b16 %v8111
        %v8368 = vunpack.c.l.b16 %v8112
        %v8369 = vunpack.c.l.b16 %v8113
        %v8370 = vunpack.c.l.b16 %v8114
        %v8371 = vunpack.c.l.b16 %v8115
        %v8372 = vunpack.c.l.b16 %v8116
        %v8373 = vunpack.c.l.b16 %v8117
        %v8374 = vunpack.c.l.b16 %v8118
        %v8375 = vunpack.c.l.b16 %v8119
        %v8376 = vunpack.c.l.b16 %v8120
        %v8377 = vunpack.c.l.b16 %v8121
        %v8378 = vunpack.c.l.b16 %v8122
        %v8379 = vunpack.c.l.b16 %v8123
        %v8380 = vunpack.c.l.b16 %v8124
        %v8381 = vunpack.c.l.b16 %v8125
        %v8382 = vunpack.c.l.b16 %v8126
        %v8383 = vunpack.c.l.b16 %v8127
        %v8384 = vunpack.c.l.b16 %v8128
        %v8385 = vunpack.c.l.b16 %v8129
        %v8386 = vunpack.c.l.b16 %v8130
        %v8387 = vunpack.c.l.b16 %v8131
        %v8388 = vunpack.c.l.b16 %v8132
        %v8389 = vunpack.c.l.b16 %v8133
        %v8390 = vunpack.c.l.b16 %v8134
        %v8391 = vunpack.c.l.b16 %v8135
        %v8392 = vunpack.c.l.b16 %v8136
        %v8393 = vunpack.c.l.b16 %v8137
        %v8394 = vunpack.c.l.b16 %v8138
        %v8395 = vunpack.c.l.b16 %v8139
        %v8396 = vpack.c.b16 %v8269, %v8268
        %v8397 = vpack.c.b16 %v8271, %v8270
        %v8398 = vpack.c.b16 %v8273, %v8272
        %v8399 = vpack.c.b16 %v8275, %v8274
        %v8400 = vpack.c.b16 %v8277, %v8276
        %v8401 = vpack.c.b16 %v8279, %v8278
        %v8402 = vpack.c.b16 %v8281, %v8280
        %v8403 = vpack.c.b16 %v8283, %v8282
        %v8404 = vpack.c.b16 %v8285, %v8284
        %v8405 = vpack.c.b16 %v8287, %v8286
        %v8406 = vpack.c.b16 %v8289, %v8288
        %v8407 = vpack.c.b16 %v8291, %v8290
        %v8408 = vpack.c.b16 %v8293, %v8292
        %v8409 = vpack.c.b16 %v8295, %v8294
        %v8410 = vpack.c.b16 %v8297, %v8296
        %v8411 = vpack.c.b16 %v8299, %v8298
        %v8412 = vpack.c.b16 %v8301, %v8300
        %v8413 = vpack.c.b16 %v8303, %v8302
        %v8414 = vpack.c.b16 %v8305, %v8304
        %v8415 = vpack.c.b16 %v8307, %v8306
        %v8416 = vpack.c.b16 %v8309, %v8308
        %v8417 = vpack.c.b16 %v8311, %v8310
        %v8418 = vpack.c.b16 %v8313, %v8312
        %v8419 = vpack.c.b16 %v8315, %v8314
        %v8420 = vpack.c.b16 %v8317, %v8316
        %v8421 = vpack.c.b16 %v8319, %v8318
        %v8422 = vpack.c.b16 %v8321, %v8320
        %v8423 = vpack.c.b16 %v8323, %v8322
        %v8424 = vpack.c.b16 %v8325, %v8324
        %v8425 = vpack.c.b16 %v8327, %v8326
        %v8426 = vpack.c.b16 %v8329, %v8328
        %v8427 = vpack.c.b16 %v8331, %v8330
        %v8428 = vpack.c.b16 %v8333, %v8332
        %v8429 = vpack.c.b16 %v8335, %v8334
        %v8430 = vpack.c.b16 %v8337, %v8336
        %v8431 = vpack.c.b16 %v8339, %v8338
        %v8432 = vpack.c.b16 %v8341, %v8340
        %v8433 = vpack.c.b16 %v8343, %v8342
        %v8434 = vpack.c.b16 %v8345, %v8344
        %v8435 = vpack.c.b16 %v8347, %v8346
        %v8436 = vpack.c.b16 %v8349, %v8348
        %v8437 = vpack.c.b16 %v8351, %v8350
        %v8438 = vpack.c.b16 %v8353, %v8352
        %v8439 = vpack.c.b16 %v8355, %v8354
        %v8440 = vpack.c.b16 %v8357, %v8356
        %v8441 = vpack.c.b16 %v8359, %v8358
        %v8442 = vpack.c.b16 %v8361, %v8360
        %v8443 = vpack.c.b16 %v8363, %v8362
        %v8444 = vpack.c.b16 %v8365, %v8364
        %v8445 = vpack.c.b16 %v8367, %v8366
        %v8446 = vpack.c.b16 %v8369, %v8368
        %v8447 = vpack.c.b16 %v8371, %v8370
        %v8448 = vpack.c.b16 %v8373, %v8372
        %v8449 = vpack.c.b16 %v8375, %v8374
        %v8450 = vpack.c.b16 %v8377, %v8376
        %v8451 = vpack.c.b16 %v8379, %v8378
        %v8452 = vpack.c.b16 %v8381, %v8380
        %v8453 = vpack.c.b16 %v8383, %v8382
        %v8454 = vpack.c.b16 %v8385, %v8384
        %v8455 = vpack.c.b16 %v8387, %v8386
        %v8456 = vpack.c.b16 %v8389, %v8388
        %v8457 = vpack.c.b16 %v8391, %v8390
        %v8458 = vpack.c.b16 %v8393, %v8392
        %v8459 = vpack.c.b16 %v8395, %v8394
        %8524 = vmatprep.subr.bf16.mxu0 0
        %8525 = vmatpush1.bf16.msra.mxu0 %v8396
        %8526 = vmatprep.subr.bf16.mxu0 0
        %8527 = vmatpush1.bf16.msra.mxu0 %v8397
        %8528 = vmatprep.subr.bf16.mxu0 0
        %8529 = vmatpush1.bf16.msra.mxu0 %v8398
        %8530 = vmatprep.subr.bf16.mxu0 0
        %8531 = vmatpush1.bf16.msra.mxu0 %v8399
        %8532 = vmatprep.subr.bf16.mxu0 0
        %8533 = vmatpush1.bf16.msra.mxu0 %v8400
        %8534 = vmatprep.subr.bf16.mxu0 0
        %8535 = vmatpush1.bf16.msra.mxu0 %v8401
        %8536 = vmatprep.subr.bf16.mxu0 0
        %8537 = vmatpush1.bf16.msra.mxu0 %v8402
        %8538 = vmatprep.subr.bf16.mxu0 0
        %8539 = vmatpush1.bf16.msra.mxu0 %v8403
        %8540 = vmatprep.subr.bf16.mxu0 0
        %8541 = vmatpush1.bf16.msra.mxu0 %v8404
        %8542 = vmatprep.subr.bf16.mxu0 0
        %8543 = vmatpush1.bf16.msra.mxu0 %v8405
        %8544 = vmatprep.subr.bf16.mxu0 0
        %8545 = vmatpush1.bf16.msra.mxu0 %v8406
        %8546 = vmatprep.subr.bf16.mxu0 0
        %8547 = vmatpush1.bf16.msra.mxu0 %v8407
        %8548 = vmatprep.subr.bf16.mxu0 0
        %8549 = vmatpush1.bf16.msra.mxu0 %v8408
        %8550 = vmatprep.subr.bf16.mxu0 0
        %8551 = vmatpush1.bf16.msra.mxu0 %v8409
        %8552 = vmatprep.subr.bf16.mxu0 0
        %8553 = vmatpush1.bf16.msra.mxu0 %v8410
        %8554 = vmatprep.subr.bf16.mxu0 0
        %8555 = vmatpush1.bf16.msra.mxu0 %v8411
        %8556 = vmatprep.mubr.bf16.mxu0 %v8005
        %8557 = vmatmul.mubr.bf16.gmra.mrb[0].mxu0 %v8004
        %v8558 = vpop.f32.mrb[0].mxu0
        %v8559 = vadd.f32 0.0, %v8558
        %v8560 = vpop.f32.mrb[0].mxu0
        %v8561 = vpop.f32.mrb[0].mxu0
        %v8562 = vadd.f32 0.0, %v8561
        %v8563 = vpop.f32.mrb[0].mxu0
        %8564 = vdwg.mxu0
        %8565 = vmatprep.subr.bf16.mxu0 0
        %8566 = vmatpush1.bf16.msra.mxu0 %v8412
        %8567 = vmatprep.subr.bf16.mxu0 0
        %8568 = vmatpush1.bf16.msra.mxu0 %v8413
        %8569 = vmatprep.subr.bf16.mxu0 0
        %8570 = vmatpush1.bf16.msra.mxu0 %v8414
        %8571 = vmatprep.subr.bf16.mxu0 0
        %8572 = vmatpush1.bf16.msra.mxu0 %v8415
        %8573 = vmatprep.subr.bf16.mxu0 0
        %8574 = vmatpush1.bf16.msra.mxu0 %v8416
        %8575 = vmatprep.subr.bf16.mxu0 0
        %8576 = vmatpush1.bf16.msra.mxu0 %v8417
        %8577 = vmatprep.subr.bf16.mxu0 0
        %8578 = vmatpush1.bf16.msra.mxu0 %v8418
        %8579 = vmatprep.subr.bf16.mxu0 0
        %8580 = vmatpush1.bf16.msra.mxu0 %v8419
        %8581 = vmatprep.subr.bf16.mxu0 0
        %8582 = vmatpush1.bf16.msra.mxu0 %v8420
        %8583 = vmatprep.subr.bf16.mxu0 0
        %8584 = vmatpush1.bf16.msra.mxu0 %v8421
        %8585 = vmatprep.subr.bf16.mxu0 0
        %8586 = vmatpush1.bf16.msra.mxu0 %v8422
        %8587 = vmatprep.subr.bf16.mxu0 0
        %8588 = vmatpush1.bf16.msra.mxu0 %v8423
        %8589 = vmatprep.subr.bf16.mxu0 0
        %8590 = vmatpush1.bf16.msra.mxu0 %v8424
        %8591 = vmatprep.subr.bf16.mxu0 0
        %8592 = vmatpush1.bf16.msra.mxu0 %v8425
        %8593 = vmatprep.subr.bf16.mxu0 0
        %8594 = vmatpush1.bf16.msra.mxu0 %v8426
        %8595 = vmatprep.subr.bf16.mxu0 0
        %8596 = vmatpush1.bf16.msra.mxu0 %v8427
        %8597 = vmatprep.mubr.bf16.mxu0 %v8007
        %8598 = vmatmul.mubr.bf16.gmra.mrb[0].mxu0 %v8006
        %v8599 = vpop.f32.mrb[0].mxu0
        %v8600 = vadd.f32 %v8559, %v8599
        %v8601 = vpop.f32.mrb[0].mxu0
        %v8602 = vpop.f32.mrb[0].mxu0
        %v8603 = vadd.f32 %v8562, %v8602
        %v8604 = vpop.f32.mrb[0].mxu0
        %8605 = vdwg.mxu0
        %8606 = vmatprep.subr.bf16.mxu0 0
        %8607 = vmatpush1.bf16.msra.mxu0 %v8428
        %8608 = vmatprep.subr.bf16.mxu0 0
        %8609 = vmatpush1.bf16.msra.mxu0 %v8429
        %8610 = vmatprep.subr.bf16.mxu0 0
        %8611 = vmatpush1.bf16.msra.mxu0 %v8430
        %8612 = vmatprep.subr.bf16.mxu0 0
        %8613 = vmatpush1.bf16.msra.mxu0 %v8431
        %8614 = vmatprep.subr.bf16.mxu0 0
        %8615 = vmatpush1.bf16.msra.mxu0 %v8432
        %8616 = vmatprep.subr.bf16.mxu0 0
        %8617 = vmatpush1.bf16.msra.mxu0 %v8433
        %8618 = vmatprep.subr.bf16.mxu0 0
        %8619 = vmatpush1.bf16.msra.mxu0 %v8434
        %8620 = vmatprep.subr.bf16.mxu0 0
        %8621 = vmatpush1.bf16.msra.mxu0 %v8435
        %8622 = vmatprep.subr.bf16.mxu0 0
        %8623 = vmatpush1.bf16.msra.mxu0 %v8436
        %8624 = vmatprep.subr.bf16.mxu0 0
        %8625 = vmatpush1.bf16.msra.mxu0 %v8437
        %8626 = vmatprep.subr.bf16.mxu0 0
        %8627 = vmatpush1.bf16.msra.mxu0 %v8438
        %8628 = vmatprep.subr.bf16.mxu0 0
        %8629 = vmatpush1.bf16.msra.mxu0 %v8439
        %8630 = vmatprep.subr.bf16.mxu0 0
        %8631 = vmatpush1.bf16.msra.mxu0 %v8440
        %8632 = vmatprep.subr.bf16.mxu0 0
        %8633 = vmatpush1.bf16.msra.mxu0 %v8441
        %8634 = vmatprep.subr.bf16.mxu0 0
        %8635 = vmatpush1.bf16.msra.mxu0 %v8442
        %8636 = vmatprep.subr.bf16.mxu0 0
        %8637 = vmatpush1.bf16.msra.mxu0 %v8443
        %8638 = vmatprep.mubr.bf16.mxu0 %v8009
        %8639 = vmatmul.mubr.bf16.gmra.mrb[0].mxu0 %v8008
        %v8640 = vpop.f32.mrb[0].mxu0
        %v8641 = vadd.f32 %v8600, %v8640
        %v8642 = vpop.f32.mrb[0].mxu0
        %v8643 = vpop.f32.mrb[0].mxu0
        %v8644 = vadd.f32 %v8603, %v8643
        %v8645 = vpop.f32.mrb[0].mxu0
        %8646 = vdwg.mxu0
        %8647 = vmatprep.subr.bf16.mxu0 0
        %8648 = vmatpush1.bf16.msra.mxu0 %v8444
        %8649 = vmatprep.subr.bf16.mxu0 0
        %8650 = vmatpush1.bf16.msra.mxu0 %v8445
        %8651 = vmatprep.subr.bf16.mxu0 0
        %8652 = vmatpush1.bf16.msra.mxu0 %v8446
        %8653 = vmatprep.subr.bf16.mxu0 0
        %8654 = vmatpush1.bf16.msra.mxu0 %v8447
        %8655 = vmatprep.subr.bf16.mxu0 0
        %8656 = vmatpush1.bf16.msra.mxu0 %v8448
        %8657 = vmatprep.subr.bf16.mxu0 0
        %8658 = vmatpush1.bf16.msra.mxu0 %v8449
        %8659 = vmatprep.subr.bf16.mxu0 0
        %8660 = vmatpush1.bf16.msra.mxu0 %v8450
        %8661 = vmatprep.subr.bf16.mxu0 0
        %8662 = vmatpush1.bf16.msra.mxu0 %v8451
        %8663 = vmatprep.subr.bf16.mxu0 0
        %8664 = vmatpush1.bf16.msra.mxu0 %v8452
        %8665 = vmatprep.subr.bf16.mxu0 0
        %8666 = vmatpush1.bf16.msra.mxu0 %v8453
        %8667 = vmatprep.subr.bf16.mxu0 0
        %8668 = vmatpush1.bf16.msra.mxu0 %v8454
        %8669 = vmatprep.subr.bf16.mxu0 0
        %8670 = vmatpush1.bf16.msra.mxu0 %v8455
        %8671 = vmatprep.subr.bf16.mxu0 0
        %8672 = vmatpush1.bf16.msra.mxu0 %v8456
        %8673 = vmatprep.subr.bf16.mxu0 0
        %8674 = vmatpush1.bf16.msra.mxu0 %v8457
        %8675 = vmatprep.subr.bf16.mxu0 0
        %8676 = vmatpush1.bf16.msra.mxu0 %v8458
        %8677 = vmatprep.subr.bf16.mxu0 0
        %8678 = vmatpush1.bf16.msra.mxu0 %v8459
        %8679 = vmatprep.mubr.bf16.mxu0 %v8011
        %8680 = vmatmul.mubr.bf16.gmra.mrb[0].mxu0 %v8010
        %v8681 = vpop.f32.mrb[0].mxu0
        %v8682 = vadd.f32 %v8641, %v8681
        %v8683 = vpop.f32.mrb[0].mxu0
        %v8684 = vpop.f32.mrb[0].mxu0
        %v8685 = vadd.f32 %v8644, %v8684
        %v8686 = vpop.f32.mrb[0].mxu0
        %8687 = vdwg.mxu0
        %v8688 = vadd.f32 %v8002, %v8682
        %v8689 = vadd.f32 %v8003, %v8685
        %8690 = vst [vmem:[#allocation2] sm:$0xff] %v8688
        %8691 = vst [vmem:[#allocation2 + $0x8] sm:$0xff] %v8689
        %p8692 = scmp.eq.s32.totalorder %s23, 1
        // Predicated region
        $region61: #{_forward_impl.1} parent=39 // pred_check
          %p8693 = pneg %p8692
        $region62: #{_forward_impl.1} parent=39 // pred_check_branch
          %8695 = sbr.rel (%p8693) target = $region64
        $region63: #{_forward_impl.1} parent=39 // pred_region
          %v8696 = vld [vmem:[#allocation2] sm:$0xff]
          %v8697 = vld [vmem:[#allocation2 + $0x8] sm:$0xff]
          %v8698 = vld [vmem:[#allocation8] sm:$0x1]
          %v8700 = vlaneseq
          %v8701 = vshrl.u32 %v8700, 7
          %v8702 = vsub.s32 0, %v8701
          %v8703 = vrot.slane %v8698, %v8702
          %v8705 = vadd.f32 %v8696, %v8703
          %v8706 = vadd.f32 %v8697, %v8703
          %8707 = vst [vmem:[%s5] sm:$0xff] %v8705
          %8708 = vst [vmem:[%s5 + $0x8] sm:$0xff] %v8706
        $region64: #{_forward_impl.1} parent=39 // pred_fallthru
          _
        // Predicated region
        $region65: #{_forward_impl.1} parent=39 // pred_check
          %p8709 = pneg %p156
        $region66: #{_forward_impl.1} parent=39 // pred_check_branch
          %8711 = sbr.rel (%p8709) target = $region68
        $region67: #{_forward_impl.1} parent=39 // pred_region
          _
        $region68: #{_forward_impl.1} parent=39 // pred_fallthru
          _
        // Predicated region
        $region69: #{_forward_impl.1} parent=39 // pred_check
          %p8712 = pneg %p156
        $region70: #{_forward_impl.1} parent=39 // pred_check_branch
          %8714 = sbr.rel (%p8712) target = $region72
        $region71: #{_forward_impl.1} parent=39 // pred_region
          _
        $region72: #{_forward_impl.1} parent=39 // pred_fallthru
          _
      $region40: #{_forward_impl.1} parent=5 // pred_fallthru
        _
      %p8715 = scmp.le.s32.totalorder 2, %s18
      // Predicated region
      $region73: #{_forward_impl.1} parent=5 // pred_check
        %p8716 = pneg %p8715
      $region74: #{_forward_impl.1} parent=5 // pred_check_branch
        %8718 = sbr.rel (%p8716) target = $region76
      $region75: #{_forward_impl.1} parent=5 // pred_region
        %s8719 = ssub.s32 %s18, 2
      $region76: #{_forward_impl.1} parent=5 // pred_fallthru
        _
    $region6: #{_forward_impl.1} parent=1 // loop_footer
      %s22 = sadd.s32 1, %s18
    $region7: #{_forward_impl.1} parent=1 // loop_footer_branch
      %17 = sbr.rel target = $region3
    $region8: #{_forward_impl.1} parent=1 // loop_exit
      _
    %8720 = vsyncpa [#allocation4], 1
    %s8721 = scalar_lea.sflag [#allocation4], 1
    %8722 = vsyncpa %s8721, 1
    %8723 = vsyncpa [#allocation6], 1
    %s8724 = scalar_lea.sflag [#allocation6], 1
    %8725 = vsyncpa %s8724, 1
    %8726 = vsyncpa [#allocation9], 1

</llo_original>
